<compile_context>
chip_gen: v7x
topology: tpu7x:2x2x1
jax: 0.10.0
libtpu: 0.0.40
codegen_flags: <defaults>
</compile_context>

<pallas_src>
import functools
import math

import jax
import jax.numpy as jnp
import numpy as np
from jax.experimental import pallas as pl
from jax.experimental.pallas import tpu as pltpu

C = 128          # every conv in the module is 128 -> 128
BN_EPS = 1e-5    # nn.BatchNorm2d default eps


def _sigmoid(x):
    # exp -> EUP; approx reciprocal also EUP, keeps the VPU slot free.
    return pl.reciprocal(1.0 + jnp.exp(-x), approx=True)


# --------------------------------------------------------------------------
# The fused kernel (one batch element per grid step, both outputs)
# --------------------------------------------------------------------------
def _fused_kernel(xdp_ref, pln_ref, xsp_ref,
                  l1dw_ref, l1pw_ref, l1b_ref,
                  l2w_ref, l2b_ref,
                  r1w_ref, r1b_ref,
                  r2dw_ref, r2pw_ref, r2b_ref,
                  aw_ref, pw_ref,
                  left_ref, right_ref,
                  *, H, W, Ho, Wo, h, w, up_taps, pool_rows):
    f32 = jnp.float32

    # ---- left1 = 1x1(BN(dw3x3(x_d)))  (dw taps on VPU, BN folded into pw) ---
    xd = xdp_ref[0]                                        # (H+2, W+2, C) bf16
    acc = xd[0:H, 0:W, :] * l1dw_ref[0]                    # f32 (init from tap 0)
    for t in range(1, 9):
        dy, dx = divmod(t, 3)
        acc = acc + xd[dy:dy + H, dx:dx + W, :] * l1dw_ref[t]
    left1 = jnp.dot(acc.reshape(H * W, C).astype(jnp.bfloat16), l1pw_ref[...],
                    preferred_element_type=f32) + l1b_ref[...]
    left1 = left1.reshape(H, W, C)                         # f32

    # ---- right1 = BN(conv3x3(x_s)), single K=9C tap-packed matmul -----------
    xs = xsp_ref[0]                                        # (h+2, w+2, C) bf16
    win1 = jnp.concatenate(
        [xs[dy:dy + h, dx:dx + w, :] for dy in range(3) for dx in range(3)],
        axis=-1)                                           # (h, w, 9C) bf16
    r1 = jnp.dot(win1.reshape(h * w, 9 * C), r1w_ref[...],
                 preferred_element_type=f32) + r1b_ref[...]
    r1 = r1.reshape(h, w, C)                               # f32

    # ---- right2 = 1x1(BN(dw3x3(x_s))) ---------------------------------------
    a2 = xs[0:h, 0:w, :] * r2dw_ref[0]
    for t in range(1, 9):
        dy, dx = divmod(t, 3)
        a2 = a2 + xs[dy:dy + h, dx:dx + w, :] * r2dw_ref[t]
    r2 = jnp.dot(a2.reshape(h * w, C).astype(jnp.bfloat16), r2pw_ref[...],
                 preferred_element_type=f32) + r2b_ref[...]
    r2 = r2.reshape(h, w, C)                               # f32

    # ---- left2 conv: 3x3 stride-2 + folded BN via parity planes, K=9C -------
    pln = pln_ref[0]                                       # (4, Hh, Wh, C) bf16
    parts = []
    for dy in range(3):
        for dx in range(3):
            p = pln[2 * (dy % 2) + (dx % 2)]
            parts.append(p[dy // 2:dy // 2 + Ho, dx // 2:dx // 2 + Wo, :])
    win2 = jnp.concatenate(parts, axis=-1)                 # (Ho, Wo, 9C) bf16
    conv = jnp.dot(win2.reshape(Ho * Wo, 9 * C), l2w_ref[...],
                   preferred_element_type=f32) + l2b_ref[...]
    conv = conv.reshape(Ho, Wo, C)                         # f32

    pw_mat = pw_ref[...]                                   # (w, Wo) f32, 1/9 folded
    aw_mat = aw_ref[...]                                   # (W, w)  f32

    # ---- AvgPool2d(3,2,1,count_include_pad): 3 vertical taps + tiny matmul --
    # then gate:  rr = left2 * sigmoid(right2)  (still at small resolution)
    rr_rows = []
    for i in range(h):
        rows = pool_rows[i]
        vsum = conv[rows[0]]
        for r in rows[1:]:
            vsum = vsum + conv[r]                          # (Wo, C) f32
        pooled = jnp.dot(pw_mat, vsum, preferred_element_type=f32)   # (w, C)
        rr_rows.append(pooled * _sigmoid(r2[i]))

    # ---- separable bilinear upsample (align_corners=True) -------------------
    # horizontal (w -> W): small MXU matmuls per small-res row
    z_gate = [jnp.dot(aw_mat, r1[p], preferred_element_type=f32) for p in range(h)]
    z_rght = [jnp.dot(aw_mat, rr_rows[p], preferred_element_type=f32) for p in range(h)]

    # vertical (h -> H): 2 static taps per output row; fuse gating + row store.
    for i in range(H):
        lo, hi, f = up_taps[i]
        if f == 0.0:
            g = z_gate[lo]
            rgt = z_rght[lo]
        else:
            g = (1.0 - f) * z_gate[lo] + f * z_gate[hi]    # (W, C) f32
            rgt = (1.0 - f) * z_rght[lo] + f * z_rght[hi]
        left_ref[0, i] = left1[i] * _sigmoid(g)
        right_ref[0, i] = rgt


# --------------------------------------------------------------------------
# pallas_call wrapper
# --------------------------------------------------------------------------
def _batch_spec(shape):
    nd = len(shape)
    return pl.BlockSpec((1,) + tuple(shape[1:]),
                        lambda b, _nd=nd: (b,) + (0,) * (_nd - 1))


def _bcast_spec(shape):
    nd = len(shape)
    return pl.BlockSpec(tuple(shape), lambda b, _nd=nd: (0,) * _nd)


def fused_forward(xdp, planes, xsp, params, aw, pw,
                  H, W, Ho, Wo, h, w, up_taps, pool_rows):
    N = xdp.shape[0]
    args = (xdp, planes, xsp,
            params['l1_dw'], params['l1_pw'], params['l1_b'],
            params['l2_w'], params['l2_b'],
            params['r1_w'], params['r1_b'],
            params['r2_dw'], params['r2_pw'], params['r2_b'],
            aw, pw)
    in_specs = ([_batch_spec(xdp.shape), _batch_spec(planes.shape),
                 _batch_spec(xsp.shape)]
                + [_bcast_spec(a.shape) for a in args[3:]])
    out_shape = (jax.ShapeDtypeStruct((N, H, W, C), jnp.float32),
                 jax.ShapeDtypeStruct((N, H, W, C), jnp.float32))
    out_specs = (_batch_spec((N, H, W, C)), _batch_spec((N, H, W, C)))

    # Explicit scoped-VMEM sizing: double-buffered IO blocks + resident weights
    # + headroom for in-kernel intermediates.  Floor at 32 MiB (the old default
    # that is known-good), cap at 64 MiB so it is valid on v7x as well.
    def nbytes(x):
        return int(np.prod(x.shape)) * int(np.dtype(x.dtype).itemsize)
    io = 2 * (nbytes(xdp) + nbytes(planes) + nbytes(xsp)) // N \
        + 2 * 2 * H * W * C * 4
    wts = sum(nbytes(a) for a in args[3:])
    inter = 3 * H * W * C * 4 + Ho * Wo * (9 * C * 2 + 2 * C * 4) \
        + 4 * h * W * C * 4
    vmem_limit = min(64 << 20, max(32 << 20, int(1.5 * (io + wts + inter))))

    kern = functools.partial(_fused_kernel, H=H, W=W, Ho=Ho, Wo=Wo, h=h, w=w,
                             up_taps=up_taps, pool_rows=pool_rows)
    return pl.pallas_call(
        kern,
        out_shape=out_shape,
        grid=(N,),
        in_specs=in_specs,
        out_specs=out_specs,
        compiler_params=pltpu.CompilerParams(
            dimension_semantics=("parallel",),
            vmem_limit_bytes=vmem_limit),
    )(*args)


# --------------------------------------------------------------------------
# Glue: padding, parity planes, separable upsample / pool tables (all static)
# --------------------------------------------------------------------------
def _parity_planes(xp):
    # zero-padded NHWC image -> (N, 4, (H+2)/2, (W+2)/2, C) parity planes.
    # NOTE: requires even H, W (as does the 1/4-resolution semantic branch).
    assert xp.shape[1] % 2 == 0 and xp.shape[2] % 2 == 0
    return jnp.stack([xp[:, a::2, b::2, :] for a in (0, 1) for b in (0, 1)],
                     axis=1)


def _bilinear_taps(out_size, in_size):
    # F.interpolate(mode='bilinear', align_corners=True) 1-D taps (static).
    taps = []
    for i in range(out_size):
        if out_size == 1 or in_size == 1:
            src = 0.0
        else:
            src = i * (in_size - 1) / (out_size - 1)
        lo = 0 if in_size == 1 else max(0, min(int(math.floor(src)), in_size - 2))
        hi = min(lo + 1, in_size - 1)
        taps.append((lo, hi, float(src - lo)))
    return tuple(taps)


def _bilinear_matrix(out_size, in_size):
    A = np.zeros((out_size, in_size), np.float32)
    for i, (lo, hi, f) in enumerate(_bilinear_taps(out_size, in_size)):
        A[i, lo] += 1.0 - f
        A[i, hi] += f
    return jnp.asarray(A)


def _pool_col_matrix(w, Wo):
    # AvgPool2d(3, stride=2, pad=1, count_include_pad=True): divisor always 9.
    P = np.zeros((w, Wo), np.float32)
    for j in range(w):
        for b in (2 * j - 1, 2 * j, 2 * j + 1):
            if 0 <= b < Wo:
                P[j, b] = 1.0
    return jnp.asarray(P / 9.0)


def _pool_row_taps(h, Ho):
    return tuple(tuple(r for r in (2 * i - 1, 2 * i, 2 * i + 1) if 0 <= r < Ho)
                 for i in range(h))


# --------------------------------------------------------------------------
# Parameter init (deterministic; PyTorch layouts -> folded kernel layouts)
# --------------------------------------------------------------------------
def _fold_bn(gamma, beta, mean, var):
    scale = gamma / jnp.sqrt(var + BN_EPS)
    bias = beta - mean * scale
    return scale, bias


def _dw_to_kernel(w):            # torch (C, 1, 3, 3) -> (9, C) f32
    return jnp.transpose(w[:, 0], (1, 2, 0)).reshape(9, C)


def _full3x3_packed9(w, scale):  # torch (Co, Ci, 3, 3) + BN scale -> (9*Ci, Co) bf16
    wk = jnp.transpose(w, (2, 3, 1, 0)) * scale          # (3, 3, Ci, Co) * s[co]
    return wk.reshape(9 * C, C).astype(jnp.bfloat16)


def _pw_folded(w, scale, bias):  # torch pw (Co, Ci, 1, 1); BN (over Ci) precedes pw
    pw = jnp.transpose(w[:, :, 0, 0], (1, 0))            # (Ci, Co)
    pw_f = (pw * scale[:, None]).astype(jnp.bfloat16)    # fold BN scale into rows
    b_f = bias[None, :] @ pw                             # (1, Co): BN bias through pw
    return pw_f, b_f


def init_params(key):
    ks = jax.random.split(key, 10)

    def conv_w(k, shape, s=0.05):
        return s * jax.random.normal(k, shape, jnp.float32)

    def bn(k):
        k1, k2, k3, k4 = jax.random.split(k, 4)
        gamma = 1.0 + 0.1 * jax.random.normal(k1, (C,), jnp.float32)
        beta = 0.1 * jax.random.normal(k2, (C,), jnp.float32)
        mean = 0.1 * jax.random.normal(k3, (C,), jnp.float32)
        var = jax.random.uniform(k4, (C,), jnp.float32, minval=0.5, maxval=1.5)
        return _fold_bn(gamma, beta, mean, var)

    # left1: depthwise 3x3 -> BN -> 1x1 (BN folded into the pointwise)
    l1_dw = _dw_to_kernel(conv_w(ks[0], (C, 1, 3, 3)))
    s, b = bn(ks[1])
    l1_pw, l1_b = _pw_folded(conv_w(ks[2], (C, C, 1, 1)), s, b)

    # left2: 3x3 stride-2 conv -> BN (folded) -> avgpool (no params)
    s, b = bn(ks[4])
    l2_w = _full3x3_packed9(conv_w(ks[3], (C, C, 3, 3)), s)
    l2_b = b.reshape(1, C)

    # right1: 3x3 conv -> BN (folded)
    s, b = bn(ks[6])
    r1_w = _full3x3_packed9(conv_w(ks[5], (C, C, 3, 3)), s)
    r1_b = b.reshape(1, C)

    # right2: depthwise 3x3 -> BN -> 1x1 (BN folded into the pointwise)
    r2_dw = _dw_to_kernel(conv_w(ks[7], (C, 1, 3, 3)))
    s, b = bn(ks[8])
    r2_pw, r2_b = _pw_folded(conv_w(ks[9], (C, C, 1, 1)), s, b)

    # TODO(synk): `self.conv` (3x3 conv + BN + ReLU) is declared in __init__ but
    # never used in forward(); intentionally not instantiated here.
    return dict(l1_dw=l1_dw, l1_pw=l1_pw, l1_b=l1_b,
                l2_w=l2_w, l2_b=l2_b,
                r1_w=r1_w, r1_b=r1_b,
                r2_dw=r2_dw, r2_pw=r2_pw, r2_b=r2_b)


# --------------------------------------------------------------------------
# Forward pass (matches SCWAFusionNet.forward)
# --------------------------------------------------------------------------
def scwa_fusion_forward(x_d, x_s, params):
    """x_d: NCHW (N,128,H,W); x_s: NCHW (N,128,H/4,W/4). Returns (left, right) NCHW f32."""
    # Activations handed to the kernel in bf16 (halves HBM input traffic);
    # accumulation inside the kernel stays f32.
    xd = jnp.transpose(x_d, (0, 2, 3, 1)).astype(jnp.bfloat16)   # NHWC
    xs = jnp.transpose(x_s, (0, 2, 3, 1)).astype(jnp.bfloat16)   # NHWC
    N, H, W, _ = xd.shape
    _, h, w, _ = xs.shape

    Ho, Wo = (H - 1) // 2 + 1, (W - 1) // 2 + 1
    Hp, Wp = (Ho - 1) // 2 + 1, (Wo - 1) // 2 + 1
    assert (Hp, Wp) == (h, w), "left2/right2 spatial sizes must match (as in torch)"

    # TODO(synk): move pad + parity split in-kernel (halo/strided reads) to drop
    # these extra XLA-side HBM passes over the detail tensor.
    xdp = jnp.pad(xd, ((0, 0), (1, 1), (1, 1), (0, 0)))
    xsp = jnp.pad(xs, ((0, 0), (1, 1), (1, 1), (0, 0)))
    planes = _parity_planes(xdp)

    aw = _bilinear_matrix(W, w)          # (W, w) horizontal upsample weights
    pw = _pool_col_matrix(w, Wo)         # (w, Wo) horizontal pool weights (1/9)
    up_taps = _bilinear_taps(H, h)       # static vertical upsample taps
    pool_rows = _pool_row_taps(h, Ho)    # static vertical pool taps

    left, right = fused_forward(xdp, planes, xsp, params, aw, pw,
                                H, W, Ho, Wo, h, w, up_taps, pool_rows)
    return (jnp.transpose(left, (0, 3, 1, 2)),
            jnp.transpose(right, (0, 3, 1, 2)))


if __name__ == "__main__":
    key = jax.random.PRNGKey(0)
    kp, kd, ksem = jax.random.split(key, 3)
    params = init_params(kp)

    # detail branch at full resolution, semantic branch at 1/4 resolution
    x_d = jax.random.normal(kd, (2, 128, 16, 16), jnp.float32)
    x_s = jax.random.normal(ksem, (2, 128, 4, 4), jnp.float32)

    left, right = jax.block_until_ready(scwa_fusion_forward(x_d, x_s, params))
    assert left.shape == (2, 128, 16, 16)
    assert right.shape == (2, 128, 16, 16)
    assert bool(jnp.all(jnp.isfinite(left))) and bool(jnp.all(jnp.isfinite(right)))
    print("KERNEL_OK")
</pallas_src>

<mosaic_0001>
module attributes {stable_mosaic.version = 11 : i64} {
  func.func @_fused_kernel(%arg0: i32, %arg1: memref<1x18x18x128xbf16, #tpu.memory_space<vmem>>, %arg2: memref<1x4x9x9x128xbf16, #tpu.memory_space<vmem>>, %arg3: memref<1x6x6x128xbf16, #tpu.memory_space<vmem>>, %arg4: memref<9x128xf32, #tpu.memory_space<vmem>>, %arg5: memref<128x128xbf16, #tpu.memory_space<vmem>>, %arg6: memref<1x128xf32, #tpu.memory_space<vmem>>, %arg7: memref<1152x128xbf16, #tpu.memory_space<vmem>>, %arg8: memref<1x128xf32, #tpu.memory_space<vmem>>, %arg9: memref<1152x128xbf16, #tpu.memory_space<vmem>>, %arg10: memref<1x128xf32, #tpu.memory_space<vmem>>, %arg11: memref<9x128xf32, #tpu.memory_space<vmem>>, %arg12: memref<128x128xbf16, #tpu.memory_space<vmem>>, %arg13: memref<1x128xf32, #tpu.memory_space<vmem>>, %arg14: memref<16x4xf32, #tpu.memory_space<vmem>>, %arg15: memref<4x8xf32, #tpu.memory_space<vmem>>, %arg16: memref<1x16x16x128xf32, #tpu.memory_space<vmem>>, %arg17: memref<1x16x16x128xf32, #tpu.memory_space<vmem>>) attributes {dimension_semantics = [#tpu.dimension_semantics<parallel>], iteration_bounds = array<i64: 2>, scalar_prefetch = 0 : i64, scratch_operands = 0 : i64, tpu.core_type = #tpu.core_type<tc>, window_params = [{transform_indices = @transform_0, window_bounds = array<i64: 1, 18, 18, 128>}, {transform_indices = @transform_1, window_bounds = array<i64: 1, 4, 9, 9, 128>}, {transform_indices = @transform_2, window_bounds = array<i64: 1, 6, 6, 128>}, {pipeline_mode = #tpu.pipeline_mode<synchronous>, transform_indices = @transform_3, window_bounds = array<i64: 9, 128>}, {pipeline_mode = #tpu.pipeline_mode<synchronous>, transform_indices = @transform_4, window_bounds = array<i64: 128, 128>}, {pipeline_mode = #tpu.pipeline_mode<synchronous>, transform_indices = @transform_5, window_bounds = array<i64: 1, 128>}, {pipeline_mode = #tpu.pipeline_mode<synchronous>, transform_indices = @transform_6, window_bounds = array<i64: 1152, 128>}, {pipeline_mode = #tpu.pipeline_mode<synchronous>, transform_indices = @transform_7, window_bounds = array<i64: 1, 128>}, {pipeline_mode = #tpu.pipeline_mode<synchronous>, transform_indices = @transform_8, window_bounds = array<i64: 1152, 128>}, {pipeline_mode = #tpu.pipeline_mode<synchronous>, transform_indices = @transform_9, window_bounds = array<i64: 1, 128>}, {pipeline_mode = #tpu.pipeline_mode<synchronous>, transform_indices = @transform_10, window_bounds = array<i64: 9, 128>}, {pipeline_mode = #tpu.pipeline_mode<synchronous>, transform_indices = @transform_11, window_bounds = array<i64: 128, 128>}, {pipeline_mode = #tpu.pipeline_mode<synchronous>, transform_indices = @transform_12, window_bounds = array<i64: 1, 128>}, {pipeline_mode = #tpu.pipeline_mode<synchronous>, transform_indices = @transform_13, window_bounds = array<i64: 16, 4>}, {pipeline_mode = #tpu.pipeline_mode<synchronous>, transform_indices = @transform_14, window_bounds = array<i64: 4, 8>}, {transform_indices = @transform_15, window_bounds = array<i64: 1, 16, 16, 128>}, {transform_indices = @transform_16, window_bounds = array<i64: 1, 16, 16, 128>}]} {
    %c0 = arith.constant 0 : index
    %c0_0 = arith.constant 0 : index
    %c0_1 = arith.constant 0 : index
    %c0_2 = arith.constant 0 : index
    %0 = vector.load %arg1[%c0, %c0_0, %c0_1, %c0_2] : memref<1x18x18x128xbf16, #tpu.memory_space<vmem>>, vector<1x18x18x128xbf16>
    %1 = vector.shape_cast %0 : vector<1x18x18x128xbf16> to vector<18x18x128xbf16>
    %2 = vector.extract_strided_slice %1 {offsets = [0, 0, 0], sizes = [16, 16, 128], strides = [1, 1, 1]} : vector<18x18x128xbf16> to vector<16x16x128xbf16>
    %c0_3 = arith.constant 0 : index
    %c0_4 = arith.constant 0 : index
    %3 = vector.load %arg4[%c0_3, %c0_4] : memref<9x128xf32, #tpu.memory_space<vmem>>, vector<1x128xf32>
    %4 = vector.shape_cast %3 : vector<1x128xf32> to vector<128xf32>
    %5 = arith.extf %2 : vector<16x16x128xbf16> to vector<16x16x128xf32>
    %6 = vector.shape_cast %4 : vector<128xf32> to vector<1x1x128xf32>
    %7 = vector.broadcast %6 : vector<1x1x128xf32> to vector<16x16x128xf32>
    %8 = arith.mulf %5, %7 : vector<16x16x128xf32>
    %9 = vector.extract_strided_slice %1 {offsets = [0, 1, 0], sizes = [16, 16, 128], strides = [1, 1, 1]} : vector<18x18x128xbf16> to vector<16x16x128xbf16>
    %c1 = arith.constant 1 : index
    %c0_5 = arith.constant 0 : index
    %10 = vector.load %arg4[%c1, %c0_5] : memref<9x128xf32, #tpu.memory_space<vmem>>, vector<1x128xf32>
    %11 = vector.shape_cast %10 : vector<1x128xf32> to vector<128xf32>
    %12 = arith.extf %9 : vector<16x16x128xbf16> to vector<16x16x128xf32>
    %13 = vector.shape_cast %11 : vector<128xf32> to vector<1x1x128xf32>
    %14 = vector.broadcast %13 : vector<1x1x128xf32> to vector<16x16x128xf32>
    %15 = arith.mulf %12, %14 : vector<16x16x128xf32>
    %16 = arith.addf %8, %15 : vector<16x16x128xf32>
    %17 = vector.extract_strided_slice %1 {offsets = [0, 2, 0], sizes = [16, 16, 128], strides = [1, 1, 1]} : vector<18x18x128xbf16> to vector<16x16x128xbf16>
    %c2 = arith.constant 2 : index
    %c0_6 = arith.constant 0 : index
    %18 = vector.load %arg4[%c2, %c0_6] : memref<9x128xf32, #tpu.memory_space<vmem>>, vector<1x128xf32>
    %19 = vector.shape_cast %18 : vector<1x128xf32> to vector<128xf32>
    %20 = arith.extf %17 : vector<16x16x128xbf16> to vector<16x16x128xf32>
    %21 = vector.shape_cast %19 : vector<128xf32> to vector<1x1x128xf32>
    %22 = vector.broadcast %21 : vector<1x1x128xf32> to vector<16x16x128xf32>
    %23 = arith.mulf %20, %22 : vector<16x16x128xf32>
    %24 = arith.addf %16, %23 : vector<16x16x128xf32>
    %25 = vector.extract_strided_slice %1 {offsets = [1, 0, 0], sizes = [16, 16, 128], strides = [1, 1, 1]} : vector<18x18x128xbf16> to vector<16x16x128xbf16>
    %c3 = arith.constant 3 : index
    %c0_7 = arith.constant 0 : index
    %26 = vector.load %arg4[%c3, %c0_7] : memref<9x128xf32, #tpu.memory_space<vmem>>, vector<1x128xf32>
    %27 = vector.shape_cast %26 : vector<1x128xf32> to vector<128xf32>
    %28 = arith.extf %25 : vector<16x16x128xbf16> to vector<16x16x128xf32>
    %29 = vector.shape_cast %27 : vector<128xf32> to vector<1x1x128xf32>
    %30 = vector.broadcast %29 : vector<1x1x128xf32> to vector<16x16x128xf32>
    %31 = arith.mulf %28, %30 : vector<16x16x128xf32>
    %32 = arith.addf %24, %31 : vector<16x16x128xf32>
    %33 = vector.extract_strided_slice %1 {offsets = [1, 1, 0], sizes = [16, 16, 128], strides = [1, 1, 1]} : vector<18x18x128xbf16> to vector<16x16x128xbf16>
    %c4 = arith.constant 4 : index
    %c0_8 = arith.constant 0 : index
    %34 = vector.load %arg4[%c4, %c0_8] : memref<9x128xf32, #tpu.memory_space<vmem>>, vector<1x128xf32>
    %35 = vector.shape_cast %34 : vector<1x128xf32> to vector<128xf32>
    %36 = arith.extf %33 : vector<16x16x128xbf16> to vector<16x16x128xf32>
    %37 = vector.shape_cast %35 : vector<128xf32> to vector<1x1x128xf32>
    %38 = vector.broadcast %37 : vector<1x1x128xf32> to vector<16x16x128xf32>
    %39 = arith.mulf %36, %38 : vector<16x16x128xf32>
    %40 = arith.addf %32, %39 : vector<16x16x128xf32>
    %41 = vector.extract_strided_slice %1 {offsets = [1, 2, 0], sizes = [16, 16, 128], strides = [1, 1, 1]} : vector<18x18x128xbf16> to vector<16x16x128xbf16>
    %c5 = arith.constant 5 : index
    %c0_9 = arith.constant 0 : index
    %42 = vector.load %arg4[%c5, %c0_9] : memref<9x128xf32, #tpu.memory_space<vmem>>, vector<1x128xf32>
    %43 = vector.shape_cast %42 : vector<1x128xf32> to vector<128xf32>
    %44 = arith.extf %41 : vector<16x16x128xbf16> to vector<16x16x128xf32>
    %45 = vector.shape_cast %43 : vector<128xf32> to vector<1x1x128xf32>
    %46 = vector.broadcast %45 : vector<1x1x128xf32> to vector<16x16x128xf32>
    %47 = arith.mulf %44, %46 : vector<16x16x128xf32>
    %48 = arith.addf %40, %47 : vector<16x16x128xf32>
    %49 = vector.extract_strided_slice %1 {offsets = [2, 0, 0], sizes = [16, 16, 128], strides = [1, 1, 1]} : vector<18x18x128xbf16> to vector<16x16x128xbf16>
    %c6 = arith.constant 6 : index
    %c0_10 = arith.constant 0 : index
    %50 = vector.load %arg4[%c6, %c0_10] : memref<9x128xf32, #tpu.memory_space<vmem>>, vector<1x128xf32>
    %51 = vector.shape_cast %50 : vector<1x128xf32> to vector<128xf32>
    %52 = arith.extf %49 : vector<16x16x128xbf16> to vector<16x16x128xf32>
    %53 = vector.shape_cast %51 : vector<128xf32> to vector<1x1x128xf32>
    %54 = vector.broadcast %53 : vector<1x1x128xf32> to vector<16x16x128xf32>
    %55 = arith.mulf %52, %54 : vector<16x16x128xf32>
    %56 = arith.addf %48, %55 : vector<16x16x128xf32>
    %57 = vector.extract_strided_slice %1 {offsets = [2, 1, 0], sizes = [16, 16, 128], strides = [1, 1, 1]} : vector<18x18x128xbf16> to vector<16x16x128xbf16>
    %c7 = arith.constant 7 : index
    %c0_11 = arith.constant 0 : index
    %58 = vector.load %arg4[%c7, %c0_11] : memref<9x128xf32, #tpu.memory_space<vmem>>, vector<1x128xf32>
    %59 = vector.shape_cast %58 : vector<1x128xf32> to vector<128xf32>
    %60 = arith.extf %57 : vector<16x16x128xbf16> to vector<16x16x128xf32>
    %61 = vector.shape_cast %59 : vector<128xf32> to vector<1x1x128xf32>
    %62 = vector.broadcast %61 : vector<1x1x128xf32> to vector<16x16x128xf32>
    %63 = arith.mulf %60, %62 : vector<16x16x128xf32>
    %64 = arith.addf %56, %63 : vector<16x16x128xf32>
    %65 = vector.extract_strided_slice %1 {offsets = [2, 2, 0], sizes = [16, 16, 128], strides = [1, 1, 1]} : vector<18x18x128xbf16> to vector<16x16x128xbf16>
    %c8 = arith.constant 8 : index
    %c0_12 = arith.constant 0 : index
    %66 = vector.load %arg4[%c8, %c0_12] : memref<9x128xf32, #tpu.memory_space<vmem>>, vector<1x128xf32>
    %67 = vector.shape_cast %66 : vector<1x128xf32> to vector<128xf32>
    %68 = arith.extf %65 : vector<16x16x128xbf16> to vector<16x16x128xf32>
    %69 = vector.shape_cast %67 : vector<128xf32> to vector<1x1x128xf32>
    %70 = vector.broadcast %69 : vector<1x1x128xf32> to vector<16x16x128xf32>
    %71 = arith.mulf %68, %70 : vector<16x16x128xf32>
    %72 = arith.addf %64, %71 : vector<16x16x128xf32>
    %73 = vector.shape_cast %72 : vector<16x16x128xf32> to vector<256x128xf32>
    %74 = arith.truncf %73 : vector<256x128xf32> to vector<256x128xbf16>
    %c0_13 = arith.constant 0 : index
    %c0_14 = arith.constant 0 : index
    %75 = vector.load %arg5[%c0_13, %c0_14] : memref<128x128xbf16, #tpu.memory_space<vmem>>, vector<128x128xbf16>
    %cst = arith.constant dense<0.000000e+00> : vector<256x128xf32>
    %76 = tpu.matmul %74, %75, %cst {dimension_numbers = #tpu.dot_dimension_numbers<[1], [0], [0], [1], [0, 0, 1, 1], [], []>} : vector<256x128xbf16>, vector<128x128xbf16>, vector<256x128xf32> -> vector<256x128xf32>
    %c0_15 = arith.constant 0 : index
    %c0_16 = arith.constant 0 : index
    %77 = vector.load %arg6[%c0_15, %c0_16] : memref<1x128xf32, #tpu.memory_space<vmem>>, vector<1x128xf32>
    %78 = vector.broadcast %77 : vector<1x128xf32> to vector<256x128xf32>
    %79 = arith.addf %76, %78 : vector<256x128xf32>
    %80 = vector.shape_cast %79 : vector<256x128xf32> to vector<16x16x128xf32>
    %c0_17 = arith.constant 0 : index
    %c0_18 = arith.constant 0 : index
    %c0_19 = arith.constant 0 : index
    %c0_20 = arith.constant 0 : index
    %81 = vector.load %arg3[%c0_17, %c0_18, %c0_19, %c0_20] : memref<1x6x6x128xbf16, #tpu.memory_space<vmem>>, vector<1x6x6x128xbf16>
    %82 = vector.shape_cast %81 : vector<1x6x6x128xbf16> to vector<6x6x128xbf16>
    %83 = vector.extract_strided_slice %82 {offsets = [0, 0, 0], sizes = [4, 4, 128], strides = [1, 1, 1]} : vector<6x6x128xbf16> to vector<4x4x128xbf16>
    %84 = vector.extract_strided_slice %82 {offsets = [0, 1, 0], sizes = [4, 4, 128], strides = [1, 1, 1]} : vector<6x6x128xbf16> to vector<4x4x128xbf16>
    %85 = vector.extract_strided_slice %82 {offsets = [0, 2, 0], sizes = [4, 4, 128], strides = [1, 1, 1]} : vector<6x6x128xbf16> to vector<4x4x128xbf16>
    %86 = vector.extract_strided_slice %82 {offsets = [1, 0, 0], sizes = [4, 4, 128], strides = [1, 1, 1]} : vector<6x6x128xbf16> to vector<4x4x128xbf16>
    %87 = vector.extract_strided_slice %82 {offsets = [1, 1, 0], sizes = [4, 4, 128], strides = [1, 1, 1]} : vector<6x6x128xbf16> to vector<4x4x128xbf16>
    %88 = vector.extract_strided_slice %82 {offsets = [1, 2, 0], sizes = [4, 4, 128], strides = [1, 1, 1]} : vector<6x6x128xbf16> to vector<4x4x128xbf16>
    %89 = vector.extract_strided_slice %82 {offsets = [2, 0, 0], sizes = [4, 4, 128], strides = [1, 1, 1]} : vector<6x6x128xbf16> to vector<4x4x128xbf16>
    %90 = vector.extract_strided_slice %82 {offsets = [2, 1, 0], sizes = [4, 4, 128], strides = [1, 1, 1]} : vector<6x6x128xbf16> to vector<4x4x128xbf16>
    %91 = vector.extract_strided_slice %82 {offsets = [2, 2, 0], sizes = [4, 4, 128], strides = [1, 1, 1]} : vector<6x6x128xbf16> to vector<4x4x128xbf16>
    %92 = tpu.concatenate %83, %84, %85, %86, %87, %88, %89, %90, %91 in 2 : vector<4x4x128xbf16>, vector<4x4x128xbf16>, vector<4x4x128xbf16>, vector<4x4x128xbf16>, vector<4x4x128xbf16>, vector<4x4x128xbf16>, vector<4x4x128xbf16>, vector<4x4x128xbf16>, vector<4x4x128xbf16> -> vector<4x4x1152xbf16>
    %93 = vector.shape_cast %92 : vector<4x4x1152xbf16> to vector<16x1152xbf16>
    %c0_21 = arith.constant 0 : index
    %c0_22 = arith.constant 0 : index
    %94 = vector.load %arg9[%c0_21, %c0_22] : memref<1152x128xbf16, #tpu.memory_space<vmem>>, vector<1152x128xbf16>
    %cst_23 = arith.constant dense<0.000000e+00> : vector<16x128xf32>
    %95 = tpu.matmul %93, %94, %cst_23 {dimension_numbers = #tpu.dot_dimension_numbers<[1], [0], [0], [1], [0, 0, 1, 1], [], []>} : vector<16x1152xbf16>, vector<1152x128xbf16>, vector<16x128xf32> -> vector<16x128xf32>
    %c0_24 = arith.constant 0 : index
    %c0_25 = arith.constant 0 : index
    %96 = vector.load %arg10[%c0_24, %c0_25] : memref<1x128xf32, #tpu.memory_space<vmem>>, vector<1x128xf32>
    %97 = vector.broadcast %96 : vector<1x128xf32> to vector<16x128xf32>
    %98 = arith.addf %95, %97 : vector<16x128xf32>
    %99 = vector.shape_cast %98 : vector<16x128xf32> to vector<4x4x128xf32>
    %100 = vector.extract_strided_slice %82 {offsets = [0, 0, 0], sizes = [4, 4, 128], strides = [1, 1, 1]} : vector<6x6x128xbf16> to vector<4x4x128xbf16>
    %c0_26 = arith.constant 0 : index
    %c0_27 = arith.constant 0 : index
    %101 = vector.load %arg11[%c0_26, %c0_27] : memref<9x128xf32, #tpu.memory_space<vmem>>, vector<1x128xf32>
    %102 = vector.shape_cast %101 : vector<1x128xf32> to vector<128xf32>
    %103 = arith.extf %100 : vector<4x4x128xbf16> to vector<4x4x128xf32>
    %104 = vector.shape_cast %102 : vector<128xf32> to vector<1x1x128xf32>
    %105 = vector.broadcast %104 : vector<1x1x128xf32> to vector<4x4x128xf32>
    %106 = arith.mulf %103, %105 : vector<4x4x128xf32>
    %107 = vector.extract_strided_slice %82 {offsets = [0, 1, 0], sizes = [4, 4, 128], strides = [1, 1, 1]} : vector<6x6x128xbf16> to vector<4x4x128xbf16>
    %c1_28 = arith.constant 1 : index
    %c0_29 = arith.constant 0 : index
    %108 = vector.load %arg11[%c1_28, %c0_29] : memref<9x128xf32, #tpu.memory_space<vmem>>, vector<1x128xf32>
    %109 = vector.shape_cast %108 : vector<1x128xf32> to vector<128xf32>
    %110 = arith.extf %107 : vector<4x4x128xbf16> to vector<4x4x128xf32>
    %111 = vector.shape_cast %109 : vector<128xf32> to vector<1x1x128xf32>
    %112 = vector.broadcast %111 : vector<1x1x128xf32> to vector<4x4x128xf32>
    %113 = arith.mulf %110, %112 : vector<4x4x128xf32>
    %114 = arith.addf %106, %113 : vector<4x4x128xf32>
    %115 = vector.extract_strided_slice %82 {offsets = [0, 2, 0], sizes = [4, 4, 128], strides = [1, 1, 1]} : vector<6x6x128xbf16> to vector<4x4x128xbf16>
    %c2_30 = arith.constant 2 : index
    %c0_31 = arith.constant 0 : index
    %116 = vector.load %arg11[%c2_30, %c0_31] : memref<9x128xf32, #tpu.memory_space<vmem>>, vector<1x128xf32>
    %117 = vector.shape_cast %116 : vector<1x128xf32> to vector<128xf32>
    %118 = arith.extf %115 : vector<4x4x128xbf16> to vector<4x4x128xf32>
    %119 = vector.shape_cast %117 : vector<128xf32> to vector<1x1x128xf32>
    %120 = vector.broadcast %119 : vector<1x1x128xf32> to vector<4x4x128xf32>
    %121 = arith.mulf %118, %120 : vector<4x4x128xf32>
    %122 = arith.addf %114, %121 : vector<4x4x128xf32>
    %123 = vector.extract_strided_slice %82 {offsets = [1, 0, 0], sizes = [4, 4, 128], strides = [1, 1, 1]} : vector<6x6x128xbf16> to vector<4x4x128xbf16>
    %c3_32 = arith.constant 3 : index
    %c0_33 = arith.constant 0 : index
    %124 = vector.load %arg11[%c3_32, %c0_33] : memref<9x128xf32, #tpu.memory_space<vmem>>, vector<1x128xf32>
    %125 = vector.shape_cast %124 : vector<1x128xf32> to vector<128xf32>
    %126 = arith.extf %123 : vector<4x4x128xbf16> to vector<4x4x128xf32>
    %127 = vector.shape_cast %125 : vector<128xf32> to vector<1x1x128xf32>
    %128 = vector.broadcast %127 : vector<1x1x128xf32> to vector<4x4x128xf32>
    %129 = arith.mulf %126, %128 : vector<4x4x128xf32>
    %130 = arith.addf %122, %129 : vector<4x4x128xf32>
    %131 = vector.extract_strided_slice %82 {offsets = [1, 1, 0], sizes = [4, 4, 128], strides = [1, 1, 1]} : vector<6x6x128xbf16> to vector<4x4x128xbf16>
    %c4_34 = arith.constant 4 : index
    %c0_35 = arith.constant 0 : index
    %132 = vector.load %arg11[%c4_34, %c0_35] : memref<9x128xf32, #tpu.memory_space<vmem>>, vector<1x128xf32>
    %133 = vector.shape_cast %132 : vector<1x128xf32> to vector<128xf32>
    %134 = arith.extf %131 : vector<4x4x128xbf16> to vector<4x4x128xf32>
    %135 = vector.shape_cast %133 : vector<128xf32> to vector<1x1x128xf32>
    %136 = vector.broadcast %135 : vector<1x1x128xf32> to vector<4x4x128xf32>
    %137 = arith.mulf %134, %136 : vector<4x4x128xf32>
    %138 = arith.addf %130, %137 : vector<4x4x128xf32>
    %139 = vector.extract_strided_slice %82 {offsets = [1, 2, 0], sizes = [4, 4, 128], strides = [1, 1, 1]} : vector<6x6x128xbf16> to vector<4x4x128xbf16>
    %c5_36 = arith.constant 5 : index
    %c0_37 = arith.constant 0 : index
    %140 = vector.load %arg11[%c5_36, %c0_37] : memref<9x128xf32, #tpu.memory_space<vmem>>, vector<1x128xf32>
    %141 = vector.shape_cast %140 : vector<1x128xf32> to vector<128xf32>
    %142 = arith.extf %139 : vector<4x4x128xbf16> to vector<4x4x128xf32>
    %143 = vector.shape_cast %141 : vector<128xf32> to vector<1x1x128xf32>
    %144 = vector.broadcast %143 : vector<1x1x128xf32> to vector<4x4x128xf32>
    %145 = arith.mulf %142, %144 : vector<4x4x128xf32>
    %146 = arith.addf %138, %145 : vector<4x4x128xf32>
    %147 = vector.extract_strided_slice %82 {offsets = [2, 0, 0], sizes = [4, 4, 128], strides = [1, 1, 1]} : vector<6x6x128xbf16> to vector<4x4x128xbf16>
    %c6_38 = arith.constant 6 : index
    %c0_39 = arith.constant 0 : index
    %148 = vector.load %arg11[%c6_38, %c0_39] : memref<9x128xf32, #tpu.memory_space<vmem>>, vector<1x128xf32>
    %149 = vector.shape_cast %148 : vector<1x128xf32> to vector<128xf32>
    %150 = arith.extf %147 : vector<4x4x128xbf16> to vector<4x4x128xf32>
    %151 = vector.shape_cast %149 : vector<128xf32> to vector<1x1x128xf32>
    %152 = vector.broadcast %151 : vector<1x1x128xf32> to vector<4x4x128xf32>
    %153 = arith.mulf %150, %152 : vector<4x4x128xf32>
    %154 = arith.addf %146, %153 : vector<4x4x128xf32>
    %155 = vector.extract_strided_slice %82 {offsets = [2, 1, 0], sizes = [4, 4, 128], strides = [1, 1, 1]} : vector<6x6x128xbf16> to vector<4x4x128xbf16>
    %c7_40 = arith.constant 7 : index
    %c0_41 = arith.constant 0 : index
    %156 = vector.load %arg11[%c7_40, %c0_41] : memref<9x128xf32, #tpu.memory_space<vmem>>, vector<1x128xf32>
    %157 = vector.shape_cast %156 : vector<1x128xf32> to vector<128xf32>
    %158 = arith.extf %155 : vector<4x4x128xbf16> to vector<4x4x128xf32>
    %159 = vector.shape_cast %157 : vector<128xf32> to vector<1x1x128xf32>
    %160 = vector.broadcast %159 : vector<1x1x128xf32> to vector<4x4x128xf32>
    %161 = arith.mulf %158, %160 : vector<4x4x128xf32>
    %162 = arith.addf %154, %161 : vector<4x4x128xf32>
    %163 = vector.extract_strided_slice %82 {offsets = [2, 2, 0], sizes = [4, 4, 128], strides = [1, 1, 1]} : vector<6x6x128xbf16> to vector<4x4x128xbf16>
    %c8_42 = arith.constant 8 : index
    %c0_43 = arith.constant 0 : index
    %164 = vector.load %arg11[%c8_42, %c0_43] : memref<9x128xf32, #tpu.memory_space<vmem>>, vector<1x128xf32>
    %165 = vector.shape_cast %164 : vector<1x128xf32> to vector<128xf32>
    %166 = arith.extf %163 : vector<4x4x128xbf16> to vector<4x4x128xf32>
    %167 = vector.shape_cast %165 : vector<128xf32> to vector<1x1x128xf32>
    %168 = vector.broadcast %167 : vector<1x1x128xf32> to vector<4x4x128xf32>
    %169 = arith.mulf %166, %168 : vector<4x4x128xf32>
    %170 = arith.addf %162, %169 : vector<4x4x128xf32>
    %171 = vector.shape_cast %170 : vector<4x4x128xf32> to vector<16x128xf32>
    %172 = arith.truncf %171 : vector<16x128xf32> to vector<16x128xbf16>
    %c0_44 = arith.constant 0 : index
    %c0_45 = arith.constant 0 : index
    %173 = vector.load %arg12[%c0_44, %c0_45] : memref<128x128xbf16, #tpu.memory_space<vmem>>, vector<128x128xbf16>
    %cst_46 = arith.constant dense<0.000000e+00> : vector<16x128xf32>
    %174 = tpu.matmul %172, %173, %cst_46 {dimension_numbers = #tpu.dot_dimension_numbers<[1], [0], [0], [1], [0, 0, 1, 1], [], []>} : vector<16x128xbf16>, vector<128x128xbf16>, vector<16x128xf32> -> vector<16x128xf32>
    %c0_47 = arith.constant 0 : index
    %c0_48 = arith.constant 0 : index
    %175 = vector.load %arg13[%c0_47, %c0_48] : memref<1x128xf32, #tpu.memory_space<vmem>>, vector<1x128xf32>
    %176 = vector.broadcast %175 : vector<1x128xf32> to vector<16x128xf32>
    %177 = arith.addf %174, %176 : vector<16x128xf32>
    %178 = vector.shape_cast %177 : vector<16x128xf32> to vector<4x4x128xf32>
    %c0_49 = arith.constant 0 : index
    %c0_50 = arith.constant 0 : index
    %c0_51 = arith.constant 0 : index
    %c0_52 = arith.constant 0 : index
    %c0_53 = arith.constant 0 : index
    %179 = vector.load %arg2[%c0_49, %c0_50, %c0_51, %c0_52, %c0_53] : memref<1x4x9x9x128xbf16, #tpu.memory_space<vmem>>, vector<1x4x9x9x128xbf16>
    %180 = vector.shape_cast %179 : vector<1x4x9x9x128xbf16> to vector<4x9x9x128xbf16>
    %181 = vector.extract_strided_slice %180 {offsets = [0, 0, 0, 0], sizes = [1, 9, 9, 128], strides = [1, 1, 1, 1]} : vector<4x9x9x128xbf16> to vector<1x9x9x128xbf16>
    %182 = vector.shape_cast %181 : vector<1x9x9x128xbf16> to vector<9x9x128xbf16>
    %183 = vector.extract_strided_slice %182 {offsets = [0, 0, 0], sizes = [8, 8, 128], strides = [1, 1, 1]} : vector<9x9x128xbf16> to vector<8x8x128xbf16>
    %184 = vector.extract_strided_slice %180 {offsets = [1, 0, 0, 0], sizes = [1, 9, 9, 128], strides = [1, 1, 1, 1]} : vector<4x9x9x128xbf16> to vector<1x9x9x128xbf16>
    %185 = vector.shape_cast %184 : vector<1x9x9x128xbf16> to vector<9x9x128xbf16>
    %186 = vector.extract_strided_slice %185 {offsets = [0, 0, 0], sizes = [8, 8, 128], strides = [1, 1, 1]} : vector<9x9x128xbf16> to vector<8x8x128xbf16>
    %187 = vector.extract_strided_slice %180 {offsets = [0, 0, 0, 0], sizes = [1, 9, 9, 128], strides = [1, 1, 1, 1]} : vector<4x9x9x128xbf16> to vector<1x9x9x128xbf16>
    %188 = vector.shape_cast %187 : vector<1x9x9x128xbf16> to vector<9x9x128xbf16>
    %189 = vector.extract_strided_slice %188 {offsets = [0, 1, 0], sizes = [8, 8, 128], strides = [1, 1, 1]} : vector<9x9x128xbf16> to vector<8x8x128xbf16>
    %190 = vector.extract_strided_slice %180 {offsets = [2, 0, 0, 0], sizes = [1, 9, 9, 128], strides = [1, 1, 1, 1]} : vector<4x9x9x128xbf16> to vector<1x9x9x128xbf16>
    %191 = vector.shape_cast %190 : vector<1x9x9x128xbf16> to vector<9x9x128xbf16>
    %192 = vector.extract_strided_slice %191 {offsets = [0, 0, 0], sizes = [8, 8, 128], strides = [1, 1, 1]} : vector<9x9x128xbf16> to vector<8x8x128xbf16>
    %193 = vector.extract_strided_slice %180 {offsets = [3, 0, 0, 0], sizes = [1, 9, 9, 128], strides = [1, 1, 1, 1]} : vector<4x9x9x128xbf16> to vector<1x9x9x128xbf16>
    %194 = vector.shape_cast %193 : vector<1x9x9x128xbf16> to vector<9x9x128xbf16>
    %195 = vector.extract_strided_slice %194 {offsets = [0, 0, 0], sizes = [8, 8, 128], strides = [1, 1, 1]} : vector<9x9x128xbf16> to vector<8x8x128xbf16>
    %196 = vector.extract_strided_slice %180 {offsets = [2, 0, 0, 0], sizes = [1, 9, 9, 128], strides = [1, 1, 1, 1]} : vector<4x9x9x128xbf16> to vector<1x9x9x128xbf16>
    %197 = vector.shape_cast %196 : vector<1x9x9x128xbf16> to vector<9x9x128xbf16>
    %198 = vector.extract_strided_slice %197 {offsets = [0, 1, 0], sizes = [8, 8, 128], strides = [1, 1, 1]} : vector<9x9x128xbf16> to vector<8x8x128xbf16>
    %199 = vector.extract_strided_slice %180 {offsets = [0, 0, 0, 0], sizes = [1, 9, 9, 128], strides = [1, 1, 1, 1]} : vector<4x9x9x128xbf16> to vector<1x9x9x128xbf16>
    %200 = vector.shape_cast %199 : vector<1x9x9x128xbf16> to vector<9x9x128xbf16>
    %201 = vector.extract_strided_slice %200 {offsets = [1, 0, 0], sizes = [8, 8, 128], strides = [1, 1, 1]} : vector<9x9x128xbf16> to vector<8x8x128xbf16>
    %202 = vector.extract_strided_slice %180 {offsets = [1, 0, 0, 0], sizes = [1, 9, 9, 128], strides = [1, 1, 1, 1]} : vector<4x9x9x128xbf16> to vector<1x9x9x128xbf16>
    %203 = vector.shape_cast %202 : vector<1x9x9x128xbf16> to vector<9x9x128xbf16>
    %204 = vector.extract_strided_slice %203 {offsets = [1, 0, 0], sizes = [8, 8, 128], strides = [1, 1, 1]} : vector<9x9x128xbf16> to vector<8x8x128xbf16>
    %205 = vector.extract_strided_slice %180 {offsets = [0, 0, 0, 0], sizes = [1, 9, 9, 128], strides = [1, 1, 1, 1]} : vector<4x9x9x128xbf16> to vector<1x9x9x128xbf16>
    %206 = vector.shape_cast %205 : vector<1x9x9x128xbf16> to vector<9x9x128xbf16>
    %207 = vector.extract_strided_slice %206 {offsets = [1, 1, 0], sizes = [8, 8, 128], strides = [1, 1, 1]} : vector<9x9x128xbf16> to vector<8x8x128xbf16>
    %208 = tpu.concatenate %183, %186, %189, %192, %195, %198, %201, %204, %207 in 2 : vector<8x8x128xbf16>, vector<8x8x128xbf16>, vector<8x8x128xbf16>, vector<8x8x128xbf16>, vector<8x8x128xbf16>, vector<8x8x128xbf16>, vector<8x8x128xbf16>, vector<8x8x128xbf16>, vector<8x8x128xbf16> -> vector<8x8x1152xbf16>
    %209 = vector.shape_cast %208 : vector<8x8x1152xbf16> to vector<64x1152xbf16>
    %c0_54 = arith.constant 0 : index
    %c0_55 = arith.constant 0 : index
    %210 = vector.load %arg7[%c0_54, %c0_55] : memref<1152x128xbf16, #tpu.memory_space<vmem>>, vector<1152x128xbf16>
    %cst_56 = arith.constant dense<0.000000e+00> : vector<64x128xf32>
    %211 = tpu.matmul %209, %210, %cst_56 {dimension_numbers = #tpu.dot_dimension_numbers<[1], [0], [0], [1], [0, 0, 1, 1], [], []>} : vector<64x1152xbf16>, vector<1152x128xbf16>, vector<64x128xf32> -> vector<64x128xf32>
    %c0_57 = arith.constant 0 : index
    %c0_58 = arith.constant 0 : index
    %212 = vector.load %arg8[%c0_57, %c0_58] : memref<1x128xf32, #tpu.memory_space<vmem>>, vector<1x128xf32>
    %213 = vector.broadcast %212 : vector<1x128xf32> to vector<64x128xf32>
    %214 = arith.addf %211, %213 : vector<64x128xf32>
    %215 = vector.shape_cast %214 : vector<64x128xf32> to vector<8x8x128xf32>
    %c0_59 = arith.constant 0 : index
    %c0_60 = arith.constant 0 : index
    %216 = vector.load %arg15[%c0_59, %c0_60] : memref<4x8xf32, #tpu.memory_space<vmem>>, vector<4x8xf32>
    %c0_61 = arith.constant 0 : index
    %c0_62 = arith.constant 0 : index
    %217 = vector.load %arg14[%c0_61, %c0_62] : memref<16x4xf32, #tpu.memory_space<vmem>>, vector<16x4xf32>
    %218 = vector.extract_strided_slice %215 {offsets = [0, 0, 0], sizes = [1, 8, 128], strides = [1, 1, 1]} : vector<8x8x128xf32> to vector<1x8x128xf32>
    %219 = vector.shape_cast %218 : vector<1x8x128xf32> to vector<8x128xf32>
    %220 = vector.extract_strided_slice %215 {offsets = [1, 0, 0], sizes = [1, 8, 128], strides = [1, 1, 1]} : vector<8x8x128xf32> to vector<1x8x128xf32>
    %221 = vector.shape_cast %220 : vector<1x8x128xf32> to vector<8x128xf32>
    %222 = arith.addf %219, %221 : vector<8x128xf32>
    %cst_63 = arith.constant dense<0.000000e+00> : vector<4x128xf32>
    %223 = tpu.matmul %216, %222, %cst_63 {dimension_numbers = #tpu.dot_dimension_numbers<[1], [0], [0], [1], [0, 0, 1, 1], [], []>} : vector<4x8xf32>, vector<8x128xf32>, vector<4x128xf32> -> vector<4x128xf32>
    %224 = vector.extract_strided_slice %178 {offsets = [0, 0, 0], sizes = [1, 4, 128], strides = [1, 1, 1]} : vector<4x4x128xf32> to vector<1x4x128xf32>
    %225 = vector.shape_cast %224 : vector<1x4x128xf32> to vector<4x128xf32>
    %cst_64 = arith.constant 0.000000e+00 : f32
    %226 = vector.broadcast %cst_64 : f32 to vector<4x128xf32>
    %227 = arith.subf %226, %225 : vector<4x128xf32>
    %228 = math.exp %227 : vector<4x128xf32>
    %cst_65 = arith.constant 1.000000e+00 : f32
    %229 = vector.broadcast %cst_65 : f32 to vector<4x128xf32>
    %230 = arith.addf %229, %228 : vector<4x128xf32>
    %231 = tpu.reciprocal %230 {approx = true} : vector<4x128xf32> -> vector<4x128xf32>
    %232 = arith.mulf %223, %231 : vector<4x128xf32>
    %233 = vector.extract_strided_slice %215 {offsets = [1, 0, 0], sizes = [1, 8, 128], strides = [1, 1, 1]} : vector<8x8x128xf32> to vector<1x8x128xf32>
    %234 = vector.shape_cast %233 : vector<1x8x128xf32> to vector<8x128xf32>
    %235 = vector.extract_strided_slice %215 {offsets = [2, 0, 0], sizes = [1, 8, 128], strides = [1, 1, 1]} : vector<8x8x128xf32> to vector<1x8x128xf32>
    %236 = vector.shape_cast %235 : vector<1x8x128xf32> to vector<8x128xf32>
    %237 = arith.addf %234, %236 : vector<8x128xf32>
    %238 = vector.extract_strided_slice %215 {offsets = [3, 0, 0], sizes = [1, 8, 128], strides = [1, 1, 1]} : vector<8x8x128xf32> to vector<1x8x128xf32>
    %239 = vector.shape_cast %238 : vector<1x8x128xf32> to vector<8x128xf32>
    %240 = arith.addf %237, %239 : vector<8x128xf32>
    %cst_66 = arith.constant dense<0.000000e+00> : vector<4x128xf32>
    %241 = tpu.matmul %216, %240, %cst_66 {dimension_numbers = #tpu.dot_dimension_numbers<[1], [0], [0], [1], [0, 0, 1, 1], [], []>} : vector<4x8xf32>, vector<8x128xf32>, vector<4x128xf32> -> vector<4x128xf32>
    %242 = vector.extract_strided_slice %178 {offsets = [1, 0, 0], sizes = [1, 4, 128], strides = [1, 1, 1]} : vector<4x4x128xf32> to vector<1x4x128xf32>
    %243 = vector.shape_cast %242 : vector<1x4x128xf32> to vector<4x128xf32>
    %cst_67 = arith.constant 0.000000e+00 : f32
    %244 = vector.broadcast %cst_67 : f32 to vector<4x128xf32>
    %245 = arith.subf %244, %243 : vector<4x128xf32>
    %246 = math.exp %245 : vector<4x128xf32>
    %cst_68 = arith.constant 1.000000e+00 : f32
    %247 = vector.broadcast %cst_68 : f32 to vector<4x128xf32>
    %248 = arith.addf %247, %246 : vector<4x128xf32>
    %249 = tpu.reciprocal %248 {approx = true} : vector<4x128xf32> -> vector<4x128xf32>
    %250 = arith.mulf %241, %249 : vector<4x128xf32>
    %251 = vector.extract_strided_slice %215 {offsets = [3, 0, 0], sizes = [1, 8, 128], strides = [1, 1, 1]} : vector<8x8x128xf32> to vector<1x8x128xf32>
    %252 = vector.shape_cast %251 : vector<1x8x128xf32> to vector<8x128xf32>
    %253 = vector.extract_strided_slice %215 {offsets = [4, 0, 0], sizes = [1, 8, 128], strides = [1, 1, 1]} : vector<8x8x128xf32> to vector<1x8x128xf32>
    %254 = vector.shape_cast %253 : vector<1x8x128xf32> to vector<8x128xf32>
    %255 = arith.addf %252, %254 : vector<8x128xf32>
    %256 = vector.extract_strided_slice %215 {offsets = [5, 0, 0], sizes = [1, 8, 128], strides = [1, 1, 1]} : vector<8x8x128xf32> to vector<1x8x128xf32>
    %257 = vector.shape_cast %256 : vector<1x8x128xf32> to vector<8x128xf32>
    %258 = arith.addf %255, %257 : vector<8x128xf32>
    %cst_69 = arith.constant dense<0.000000e+00> : vector<4x128xf32>
    %259 = tpu.matmul %216, %258, %cst_69 {dimension_numbers = #tpu.dot_dimension_numbers<[1], [0], [0], [1], [0, 0, 1, 1], [], []>} : vector<4x8xf32>, vector<8x128xf32>, vector<4x128xf32> -> vector<4x128xf32>
    %260 = vector.extract_strided_slice %178 {offsets = [2, 0, 0], sizes = [1, 4, 128], strides = [1, 1, 1]} : vector<4x4x128xf32> to vector<1x4x128xf32>
    %261 = vector.shape_cast %260 : vector<1x4x128xf32> to vector<4x128xf32>
    %cst_70 = arith.constant 0.000000e+00 : f32
    %262 = vector.broadcast %cst_70 : f32 to vector<4x128xf32>
    %263 = arith.subf %262, %261 : vector<4x128xf32>
    %264 = math.exp %263 : vector<4x128xf32>
    %cst_71 = arith.constant 1.000000e+00 : f32
    %265 = vector.broadcast %cst_71 : f32 to vector<4x128xf32>
    %266 = arith.addf %265, %264 : vector<4x128xf32>
    %267 = tpu.reciprocal %266 {approx = true} : vector<4x128xf32> -> vector<4x128xf32>
    %268 = arith.mulf %259, %267 : vector<4x128xf32>
    %269 = vector.extract_strided_slice %215 {offsets = [5, 0, 0], sizes = [1, 8, 128], strides = [1, 1, 1]} : vector<8x8x128xf32> to vector<1x8x128xf32>
    %270 = vector.shape_cast %269 : vector<1x8x128xf32> to vector<8x128xf32>
    %271 = vector.extract_strided_slice %215 {offsets = [6, 0, 0], sizes = [1, 8, 128], strides = [1, 1, 1]} : vector<8x8x128xf32> to vector<1x8x128xf32>
    %272 = vector.shape_cast %271 : vector<1x8x128xf32> to vector<8x128xf32>
    %273 = arith.addf %270, %272 : vector<8x128xf32>
    %274 = vector.extract_strided_slice %215 {offsets = [7, 0, 0], sizes = [1, 8, 128], strides = [1, 1, 1]} : vector<8x8x128xf32> to vector<1x8x128xf32>
    %275 = vector.shape_cast %274 : vector<1x8x128xf32> to vector<8x128xf32>
    %276 = arith.addf %273, %275 : vector<8x128xf32>
    %cst_72 = arith.constant dense<0.000000e+00> : vector<4x128xf32>
    %277 = tpu.matmul %216, %276, %cst_72 {dimension_numbers = #tpu.dot_dimension_numbers<[1], [0], [0], [1], [0, 0, 1, 1], [], []>} : vector<4x8xf32>, vector<8x128xf32>, vector<4x128xf32> -> vector<4x128xf32>
    %278 = vector.extract_strided_slice %178 {offsets = [3, 0, 0], sizes = [1, 4, 128], strides = [1, 1, 1]} : vector<4x4x128xf32> to vector<1x4x128xf32>
    %279 = vector.shape_cast %278 : vector<1x4x128xf32> to vector<4x128xf32>
    %cst_73 = arith.constant 0.000000e+00 : f32
    %280 = vector.broadcast %cst_73 : f32 to vector<4x128xf32>
    %281 = arith.subf %280, %279 : vector<4x128xf32>
    %282 = math.exp %281 : vector<4x128xf32>
    %cst_74 = arith.constant 1.000000e+00 : f32
    %283 = vector.broadcast %cst_74 : f32 to vector<4x128xf32>
    %284 = arith.addf %283, %282 : vector<4x128xf32>
    %285 = tpu.reciprocal %284 {approx = true} : vector<4x128xf32> -> vector<4x128xf32>
    %286 = arith.mulf %277, %285 : vector<4x128xf32>
    %287 = vector.extract_strided_slice %99 {offsets = [0, 0, 0], sizes = [1, 4, 128], strides = [1, 1, 1]} : vector<4x4x128xf32> to vector<1x4x128xf32>
    %288 = vector.shape_cast %287 : vector<1x4x128xf32> to vector<4x128xf32>
    %cst_75 = arith.constant dense<0.000000e+00> : vector<16x128xf32>
    %289 = tpu.matmul %217, %288, %cst_75 {dimension_numbers = #tpu.dot_dimension_numbers<[1], [0], [0], [1], [0, 0, 1, 1], [], []>} : vector<16x4xf32>, vector<4x128xf32>, vector<16x128xf32> -> vector<16x128xf32>
    %290 = vector.extract_strided_slice %99 {offsets = [1, 0, 0], sizes = [1, 4, 128], strides = [1, 1, 1]} : vector<4x4x128xf32> to vector<1x4x128xf32>
    %291 = vector.shape_cast %290 : vector<1x4x128xf32> to vector<4x128xf32>
    %cst_76 = arith.constant dense<0.000000e+00> : vector<16x128xf32>
    %292 = tpu.matmul %217, %291, %cst_76 {dimension_numbers = #tpu.dot_dimension_numbers<[1], [0], [0], [1], [0, 0, 1, 1], [], []>} : vector<16x4xf32>, vector<4x128xf32>, vector<16x128xf32> -> vector<16x128xf32>
    %293 = vector.extract_strided_slice %99 {offsets = [2, 0, 0], sizes = [1, 4, 128], strides = [1, 1, 1]} : vector<4x4x128xf32> to vector<1x4x128xf32>
    %294 = vector.shape_cast %293 : vector<1x4x128xf32> to vector<4x128xf32>
    %cst_77 = arith.constant dense<0.000000e+00> : vector<16x128xf32>
    %295 = tpu.matmul %217, %294, %cst_77 {dimension_numbers = #tpu.dot_dimension_numbers<[1], [0], [0], [1], [0, 0, 1, 1], [], []>} : vector<16x4xf32>, vector<4x128xf32>, vector<16x128xf32> -> vector<16x128xf32>
    %296 = vector.extract_strided_slice %99 {offsets = [3, 0, 0], sizes = [1, 4, 128], strides = [1, 1, 1]} : vector<4x4x128xf32> to vector<1x4x128xf32>
    %297 = vector.shape_cast %296 : vector<1x4x128xf32> to vector<4x128xf32>
    %cst_78 = arith.constant dense<0.000000e+00> : vector<16x128xf32>
    %298 = tpu.matmul %217, %297, %cst_78 {dimension_numbers = #tpu.dot_dimension_numbers<[1], [0], [0], [1], [0, 0, 1, 1], [], []>} : vector<16x4xf32>, vector<4x128xf32>, vector<16x128xf32> -> vector<16x128xf32>
    %cst_79 = arith.constant dense<0.000000e+00> : vector<16x128xf32>
    %299 = tpu.matmul %217, %232, %cst_79 {dimension_numbers = #tpu.dot_dimension_numbers<[1], [0], [0], [1], [0, 0, 1, 1], [], []>} : vector<16x4xf32>, vector<4x128xf32>, vector<16x128xf32> -> vector<16x128xf32>
    %cst_80 = arith.constant dense<0.000000e+00> : vector<16x128xf32>
    %300 = tpu.matmul %217, %250, %cst_80 {dimension_numbers = #tpu.dot_dimension_numbers<[1], [0], [0], [1], [0, 0, 1, 1], [], []>} : vector<16x4xf32>, vector<4x128xf32>, vector<16x128xf32> -> vector<16x128xf32>
    %cst_81 = arith.constant dense<0.000000e+00> : vector<16x128xf32>
    %301 = tpu.matmul %217, %268, %cst_81 {dimension_numbers = #tpu.dot_dimension_numbers<[1], [0], [0], [1], [0, 0, 1, 1], [], []>} : vector<16x4xf32>, vector<4x128xf32>, vector<16x128xf32> -> vector<16x128xf32>
    %cst_82 = arith.constant dense<0.000000e+00> : vector<16x128xf32>
    %302 = tpu.matmul %217, %286, %cst_82 {dimension_numbers = #tpu.dot_dimension_numbers<[1], [0], [0], [1], [0, 0, 1, 1], [], []>} : vector<16x4xf32>, vector<4x128xf32>, vector<16x128xf32> -> vector<16x128xf32>
    %303 = vector.extract_strided_slice %80 {offsets = [0, 0, 0], sizes = [1, 16, 128], strides = [1, 1, 1]} : vector<16x16x128xf32> to vector<1x16x128xf32>
    %304 = vector.shape_cast %303 : vector<1x16x128xf32> to vector<16x128xf32>
    %cst_83 = arith.constant 0.000000e+00 : f32
    %305 = vector.broadcast %cst_83 : f32 to vector<16x128xf32>
    %306 = arith.subf %305, %289 : vector<16x128xf32>
    %307 = math.exp %306 : vector<16x128xf32>
    %cst_84 = arith.constant 1.000000e+00 : f32
    %308 = vector.broadcast %cst_84 : f32 to vector<16x128xf32>
    %309 = arith.addf %308, %307 : vector<16x128xf32>
    %310 = tpu.reciprocal %309 {approx = true} : vector<16x128xf32> -> vector<16x128xf32>
    %311 = arith.mulf %304, %310 : vector<16x128xf32>
    %c0_85 = arith.constant 0 : index
    %c0_86 = arith.constant 0 : index
    %c0_87 = arith.constant 0 : index
    %c0_88 = arith.constant 0 : index
    %312 = vector.load %arg16[%c0_85, %c0_86, %c0_87, %c0_88] : memref<1x16x16x128xf32, #tpu.memory_space<vmem>>, vector<1x1x16x128xf32>
    %313 = vector.shape_cast %312 : vector<1x1x16x128xf32> to vector<16x128xf32>
    %314 = vector.shape_cast %311 : vector<16x128xf32> to vector<1x1x16x128xf32>
    tpu.vector_store %arg16[%c0_85, %c0_86, %c0_87, %c0_88], %314 {strides = array<i32>} : memref<1x16x16x128xf32, #tpu.memory_space<vmem>>, vector<1x1x16x128xf32>,
    %c0_89 = arith.constant 0 : index
    %c0_90 = arith.constant 0 : index
    %c0_91 = arith.constant 0 : index
    %c0_92 = arith.constant 0 : index
    %315 = vector.load %arg17[%c0_89, %c0_90, %c0_91, %c0_92] : memref<1x16x16x128xf32, #tpu.memory_space<vmem>>, vector<1x1x16x128xf32>
    %316 = vector.shape_cast %315 : vector<1x1x16x128xf32> to vector<16x128xf32>
    %317 = vector.shape_cast %299 : vector<16x128xf32> to vector<1x1x16x128xf32>
    tpu.vector_store %arg17[%c0_89, %c0_90, %c0_91, %c0_92], %317 {strides = array<i32>} : memref<1x16x16x128xf32, #tpu.memory_space<vmem>>, vector<1x1x16x128xf32>,
    %cst_93 = arith.constant 8.000000e-01 : f32
    %318 = vector.broadcast %cst_93 : f32 to vector<16x128xf32>
    %319 = arith.mulf %318, %289 : vector<16x128xf32>
    %cst_94 = arith.constant 2.000000e-01 : f32
    %320 = vector.broadcast %cst_94 : f32 to vector<16x128xf32>
    %321 = arith.mulf %320, %292 : vector<16x128xf32>
    %322 = arith.addf %319, %321 : vector<16x128xf32>
    %cst_95 = arith.constant 8.000000e-01 : f32
    %323 = vector.broadcast %cst_95 : f32 to vector<16x128xf32>
    %324 = arith.mulf %323, %299 : vector<16x128xf32>
    %cst_96 = arith.constant 2.000000e-01 : f32
    %325 = vector.broadcast %cst_96 : f32 to vector<16x128xf32>
    %326 = arith.mulf %325, %300 : vector<16x128xf32>
    %327 = arith.addf %324, %326 : vector<16x128xf32>
    %328 = vector.extract_strided_slice %80 {offsets = [1, 0, 0], sizes = [1, 16, 128], strides = [1, 1, 1]} : vector<16x16x128xf32> to vector<1x16x128xf32>
    %329 = vector.shape_cast %328 : vector<1x16x128xf32> to vector<16x128xf32>
    %cst_97 = arith.constant 0.000000e+00 : f32
    %330 = vector.broadcast %cst_97 : f32 to vector<16x128xf32>
    %331 = arith.subf %330, %322 : vector<16x128xf32>
    %332 = math.exp %331 : vector<16x128xf32>
    %cst_98 = arith.constant 1.000000e+00 : f32
    %333 = vector.broadcast %cst_98 : f32 to vector<16x128xf32>
    %334 = arith.addf %333, %332 : vector<16x128xf32>
    %335 = tpu.reciprocal %334 {approx = true} : vector<16x128xf32> -> vector<16x128xf32>
    %336 = arith.mulf %329, %335 : vector<16x128xf32>
    %c0_99 = arith.constant 0 : index
    %c1_100 = arith.constant 1 : index
    %c0_101 = arith.constant 0 : index
    %c0_102 = arith.constant 0 : index
    %337 = vector.load %arg16[%c0_99, %c1_100, %c0_101, %c0_102] : memref<1x16x16x128xf32, #tpu.memory_space<vmem>>, vector<1x1x16x128xf32>
    %338 = vector.shape_cast %337 : vector<1x1x16x128xf32> to vector<16x128xf32>
    %339 = vector.shape_cast %336 : vector<16x128xf32> to vector<1x1x16x128xf32>
    tpu.vector_store %arg16[%c0_99, %c1_100, %c0_101, %c0_102], %339 {strides = array<i32>} : memref<1x16x16x128xf32, #tpu.memory_space<vmem>>, vector<1x1x16x128xf32>,
    %c0_103 = arith.constant 0 : index
    %c1_104 = arith.constant 1 : index
    %c0_105 = arith.constant 0 : index
    %c0_106 = arith.constant 0 : index
    %340 = vector.load %arg17[%c0_103, %c1_104, %c0_105, %c0_106] : memref<1x16x16x128xf32, #tpu.memory_space<vmem>>, vector<1x1x16x128xf32>
    %341 = vector.shape_cast %340 : vector<1x1x16x128xf32> to vector<16x128xf32>
    %342 = vector.shape_cast %327 : vector<16x128xf32> to vector<1x1x16x128xf32>
    tpu.vector_store %arg17[%c0_103, %c1_104, %c0_105, %c0_106], %342 {strides = array<i32>} : memref<1x16x16x128xf32, #tpu.memory_space<vmem>>, vector<1x1x16x128xf32>,
    %cst_107 = arith.constant 6.000000e-01 : f32
    %343 = vector.broadcast %cst_107 : f32 to vector<16x128xf32>
    %344 = arith.mulf %343, %289 : vector<16x128xf32>
    %cst_108 = arith.constant 4.000000e-01 : f32
    %345 = vector.broadcast %cst_108 : f32 to vector<16x128xf32>
    %346 = arith.mulf %345, %292 : vector<16x128xf32>
    %347 = arith.addf %344, %346 : vector<16x128xf32>
    %cst_109 = arith.constant 6.000000e-01 : f32
    %348 = vector.broadcast %cst_109 : f32 to vector<16x128xf32>
    %349 = arith.mulf %348, %299 : vector<16x128xf32>
    %cst_110 = arith.constant 4.000000e-01 : f32
    %350 = vector.broadcast %cst_110 : f32 to vector<16x128xf32>
    %351 = arith.mulf %350, %300 : vector<16x128xf32>
    %352 = arith.addf %349, %351 : vector<16x128xf32>
    %353 = vector.extract_strided_slice %80 {offsets = [2, 0, 0], sizes = [1, 16, 128], strides = [1, 1, 1]} : vector<16x16x128xf32> to vector<1x16x128xf32>
    %354 = vector.shape_cast %353 : vector<1x16x128xf32> to vector<16x128xf32>
    %cst_111 = arith.constant 0.000000e+00 : f32
    %355 = vector.broadcast %cst_111 : f32 to vector<16x128xf32>
    %356 = arith.subf %355, %347 : vector<16x128xf32>
    %357 = math.exp %356 : vector<16x128xf32>
    %cst_112 = arith.constant 1.000000e+00 : f32
    %358 = vector.broadcast %cst_112 : f32 to vector<16x128xf32>
    %359 = arith.addf %358, %357 : vector<16x128xf32>
    %360 = tpu.reciprocal %359 {approx = true} : vector<16x128xf32> -> vector<16x128xf32>
    %361 = arith.mulf %354, %360 : vector<16x128xf32>
    %c0_113 = arith.constant 0 : index
    %c2_114 = arith.constant 2 : index
    %c0_115 = arith.constant 0 : index
    %c0_116 = arith.constant 0 : index
    %362 = vector.load %arg16[%c0_113, %c2_114, %c0_115, %c0_116] : memref<1x16x16x128xf32, #tpu.memory_space<vmem>>, vector<1x1x16x128xf32>
    %363 = vector.shape_cast %362 : vector<1x1x16x128xf32> to vector<16x128xf32>
    %364 = vector.shape_cast %361 : vector<16x128xf32> to vector<1x1x16x128xf32>
    tpu.vector_store %arg16[%c0_113, %c2_114, %c0_115, %c0_116], %364 {strides = array<i32>} : memref<1x16x16x128xf32, #tpu.memory_space<vmem>>, vector<1x1x16x128xf32>,
    %c0_117 = arith.constant 0 : index
    %c2_118 = arith.constant 2 : index
    %c0_119 = arith.constant 0 : index
    %c0_120 = arith.constant 0 : index
    %365 = vector.load %arg17[%c0_117, %c2_118, %c0_119, %c0_120] : memref<1x16x16x128xf32, #tpu.memory_space<vmem>>, vector<1x1x16x128xf32>
    %366 = vector.shape_cast %365 : vector<1x1x16x128xf32> to vector<16x128xf32>
    %367 = vector.shape_cast %352 : vector<16x128xf32> to vector<1x1x16x128xf32>
    tpu.vector_store %arg17[%c0_117, %c2_118, %c0_119, %c0_120], %367 {strides = array<i32>} : memref<1x16x16x128xf32, #tpu.memory_space<vmem>>, vector<1x1x16x128xf32>,
    %cst_121 = arith.constant 4.000000e-01 : f32
    %368 = vector.broadcast %cst_121 : f32 to vector<16x128xf32>
    %369 = arith.mulf %368, %289 : vector<16x128xf32>
    %cst_122 = arith.constant 6.000000e-01 : f32
    %370 = vector.broadcast %cst_122 : f32 to vector<16x128xf32>
    %371 = arith.mulf %370, %292 : vector<16x128xf32>
    %372 = arith.addf %369, %371 : vector<16x128xf32>
    %cst_123 = arith.constant 4.000000e-01 : f32
    %373 = vector.broadcast %cst_123 : f32 to vector<16x128xf32>
    %374 = arith.mulf %373, %299 : vector<16x128xf32>
    %cst_124 = arith.constant 6.000000e-01 : f32
    %375 = vector.broadcast %cst_124 : f32 to vector<16x128xf32>
    %376 = arith.mulf %375, %300 : vector<16x128xf32>
    %377 = arith.addf %374, %376 : vector<16x128xf32>
    %378 = vector.extract_strided_slice %80 {offsets = [3, 0, 0], sizes = [1, 16, 128], strides = [1, 1, 1]} : vector<16x16x128xf32> to vector<1x16x128xf32>
    %379 = vector.shape_cast %378 : vector<1x16x128xf32> to vector<16x128xf32>
    %cst_125 = arith.constant 0.000000e+00 : f32
    %380 = vector.broadcast %cst_125 : f32 to vector<16x128xf32>
    %381 = arith.subf %380, %372 : vector<16x128xf32>
    %382 = math.exp %381 : vector<16x128xf32>
    %cst_126 = arith.constant 1.000000e+00 : f32
    %383 = vector.broadcast %cst_126 : f32 to vector<16x128xf32>
    %384 = arith.addf %383, %382 : vector<16x128xf32>
    %385 = tpu.reciprocal %384 {approx = true} : vector<16x128xf32> -> vector<16x128xf32>
    %386 = arith.mulf %379, %385 : vector<16x128xf32>
    %c0_127 = arith.constant 0 : index
    %c3_128 = arith.constant 3 : index
    %c0_129 = arith.constant 0 : index
    %c0_130 = arith.constant 0 : index
    %387 = vector.load %arg16[%c0_127, %c3_128, %c0_129, %c0_130] : memref<1x16x16x128xf32, #tpu.memory_space<vmem>>, vector<1x1x16x128xf32>
    %388 = vector.shape_cast %387 : vector<1x1x16x128xf32> to vector<16x128xf32>
    %389 = vector.shape_cast %386 : vector<16x128xf32> to vector<1x1x16x128xf32>
    tpu.vector_store %arg16[%c0_127, %c3_128, %c0_129, %c0_130], %389 {strides = array<i32>} : memref<1x16x16x128xf32, #tpu.memory_space<vmem>>, vector<1x1x16x128xf32>,
    %c0_131 = arith.constant 0 : index
    %c3_132 = arith.constant 3 : index
    %c0_133 = arith.constant 0 : index
    %c0_134 = arith.constant 0 : index
    %390 = vector.load %arg17[%c0_131, %c3_132, %c0_133, %c0_134] : memref<1x16x16x128xf32, #tpu.memory_space<vmem>>, vector<1x1x16x128xf32>
    %391 = vector.shape_cast %390 : vector<1x1x16x128xf32> to vector<16x128xf32>
    %392 = vector.shape_cast %377 : vector<16x128xf32> to vector<1x1x16x128xf32>
    tpu.vector_store %arg17[%c0_131, %c3_132, %c0_133, %c0_134], %392 {strides = array<i32>} : memref<1x16x16x128xf32, #tpu.memory_space<vmem>>, vector<1x1x16x128xf32>,
    %cst_135 = arith.constant 2.000000e-01 : f32
    %393 = vector.broadcast %cst_135 : f32 to vector<16x128xf32>
    %394 = arith.mulf %393, %289 : vector<16x128xf32>
    %cst_136 = arith.constant 8.000000e-01 : f32
    %395 = vector.broadcast %cst_136 : f32 to vector<16x128xf32>
    %396 = arith.mulf %395, %292 : vector<16x128xf32>
    %397 = arith.addf %394, %396 : vector<16x128xf32>
    %cst_137 = arith.constant 2.000000e-01 : f32
    %398 = vector.broadcast %cst_137 : f32 to vector<16x128xf32>
    %399 = arith.mulf %398, %299 : vector<16x128xf32>
    %cst_138 = arith.constant 8.000000e-01 : f32
    %400 = vector.broadcast %cst_138 : f32 to vector<16x128xf32>
    %401 = arith.mulf %400, %300 : vector<16x128xf32>
    %402 = arith.addf %399, %401 : vector<16x128xf32>
    %403 = vector.extract_strided_slice %80 {offsets = [4, 0, 0], sizes = [1, 16, 128], strides = [1, 1, 1]} : vector<16x16x128xf32> to vector<1x16x128xf32>
    %404 = vector.shape_cast %403 : vector<1x16x128xf32> to vector<16x128xf32>
    %cst_139 = arith.constant 0.000000e+00 : f32
    %405 = vector.broadcast %cst_139 : f32 to vector<16x128xf32>
    %406 = arith.subf %405, %397 : vector<16x128xf32>
    %407 = math.exp %406 : vector<16x128xf32>
    %cst_140 = arith.constant 1.000000e+00 : f32
    %408 = vector.broadcast %cst_140 : f32 to vector<16x128xf32>
    %409 = arith.addf %408, %407 : vector<16x128xf32>
    %410 = tpu.reciprocal %409 {approx = true} : vector<16x128xf32> -> vector<16x128xf32>
    %411 = arith.mulf %404, %410 : vector<16x128xf32>
    %c0_141 = arith.constant 0 : index
    %c4_142 = arith.constant 4 : index
    %c0_143 = arith.constant 0 : index
    %c0_144 = arith.constant 0 : index
    %412 = vector.load %arg16[%c0_141, %c4_142, %c0_143, %c0_144] : memref<1x16x16x128xf32, #tpu.memory_space<vmem>>, vector<1x1x16x128xf32>
    %413 = vector.shape_cast %412 : vector<1x1x16x128xf32> to vector<16x128xf32>
    %414 = vector.shape_cast %411 : vector<16x128xf32> to vector<1x1x16x128xf32>
    tpu.vector_store %arg16[%c0_141, %c4_142, %c0_143, %c0_144], %414 {strides = array<i32>} : memref<1x16x16x128xf32, #tpu.memory_space<vmem>>, vector<1x1x16x128xf32>,
    %c0_145 = arith.constant 0 : index
    %c4_146 = arith.constant 4 : index
    %c0_147 = arith.constant 0 : index
    %c0_148 = arith.constant 0 : index
    %415 = vector.load %arg17[%c0_145, %c4_146, %c0_147, %c0_148] : memref<1x16x16x128xf32, #tpu.memory_space<vmem>>, vector<1x1x16x128xf32>
    %416 = vector.shape_cast %415 : vector<1x1x16x128xf32> to vector<16x128xf32>
    %417 = vector.shape_cast %402 : vector<16x128xf32> to vector<1x1x16x128xf32>
    tpu.vector_store %arg17[%c0_145, %c4_146, %c0_147, %c0_148], %417 {strides = array<i32>} : memref<1x16x16x128xf32, #tpu.memory_space<vmem>>, vector<1x1x16x128xf32>,
    %418 = vector.extract_strided_slice %80 {offsets = [5, 0, 0], sizes = [1, 16, 128], strides = [1, 1, 1]} : vector<16x16x128xf32> to vector<1x16x128xf32>
    %419 = vector.shape_cast %418 : vector<1x16x128xf32> to vector<16x128xf32>
    %cst_149 = arith.constant 0.000000e+00 : f32
    %420 = vector.broadcast %cst_149 : f32 to vector<16x128xf32>
    %421 = arith.subf %420, %292 : vector<16x128xf32>
    %422 = math.exp %421 : vector<16x128xf32>
    %cst_150 = arith.constant 1.000000e+00 : f32
    %423 = vector.broadcast %cst_150 : f32 to vector<16x128xf32>
    %424 = arith.addf %423, %422 : vector<16x128xf32>
    %425 = tpu.reciprocal %424 {approx = true} : vector<16x128xf32> -> vector<16x128xf32>
    %426 = arith.mulf %419, %425 : vector<16x128xf32>
    %c0_151 = arith.constant 0 : index
    %c5_152 = arith.constant 5 : index
    %c0_153 = arith.constant 0 : index
    %c0_154 = arith.constant 0 : index
    %427 = vector.load %arg16[%c0_151, %c5_152, %c0_153, %c0_154] : memref<1x16x16x128xf32, #tpu.memory_space<vmem>>, vector<1x1x16x128xf32>
    %428 = vector.shape_cast %427 : vector<1x1x16x128xf32> to vector<16x128xf32>
    %429 = vector.shape_cast %426 : vector<16x128xf32> to vector<1x1x16x128xf32>
    tpu.vector_store %arg16[%c0_151, %c5_152, %c0_153, %c0_154], %429 {strides = array<i32>} : memref<1x16x16x128xf32, #tpu.memory_space<vmem>>, vector<1x1x16x128xf32>,
    %c0_155 = arith.constant 0 : index
    %c5_156 = arith.constant 5 : index
    %c0_157 = arith.constant 0 : index
    %c0_158 = arith.constant 0 : index
    %430 = vector.load %arg17[%c0_155, %c5_156, %c0_157, %c0_158] : memref<1x16x16x128xf32, #tpu.memory_space<vmem>>, vector<1x1x16x128xf32>
    %431 = vector.shape_cast %430 : vector<1x1x16x128xf32> to vector<16x128xf32>
    %432 = vector.shape_cast %300 : vector<16x128xf32> to vector<1x1x16x128xf32>
    tpu.vector_store %arg17[%c0_155, %c5_156, %c0_157, %c0_158], %432 {strides = array<i32>} : memref<1x16x16x128xf32, #tpu.memory_space<vmem>>, vector<1x1x16x128xf32>,
    %cst_159 = arith.constant 8.000000e-01 : f32
    %433 = vector.broadcast %cst_159 : f32 to vector<16x128xf32>
    %434 = arith.mulf %433, %292 : vector<16x128xf32>
    %cst_160 = arith.constant 2.000000e-01 : f32
    %435 = vector.broadcast %cst_160 : f32 to vector<16x128xf32>
    %436 = arith.mulf %435, %295 : vector<16x128xf32>
    %437 = arith.addf %434, %436 : vector<16x128xf32>
    %cst_161 = arith.constant 8.000000e-01 : f32
    %438 = vector.broadcast %cst_161 : f32 to vector<16x128xf32>
    %439 = arith.mulf %438, %300 : vector<16x128xf32>
    %cst_162 = arith.constant 2.000000e-01 : f32
    %440 = vector.broadcast %cst_162 : f32 to vector<16x128xf32>
    %441 = arith.mulf %440, %301 : vector<16x128xf32>
    %442 = arith.addf %439, %441 : vector<16x128xf32>
    %443 = vector.extract_strided_slice %80 {offsets = [6, 0, 0], sizes = [1, 16, 128], strides = [1, 1, 1]} : vector<16x16x128xf32> to vector<1x16x128xf32>
    %444 = vector.shape_cast %443 : vector<1x16x128xf32> to vector<16x128xf32>
    %cst_163 = arith.constant 0.000000e+00 : f32
    %445 = vector.broadcast %cst_163 : f32 to vector<16x128xf32>
    %446 = arith.subf %445, %437 : vector<16x128xf32>
    %447 = math.exp %446 : vector<16x128xf32>
    %cst_164 = arith.constant 1.000000e+00 : f32
    %448 = vector.broadcast %cst_164 : f32 to vector<16x128xf32>
    %449 = arith.addf %448, %447 : vector<16x128xf32>
    %450 = tpu.reciprocal %449 {approx = true} : vector<16x128xf32> -> vector<16x128xf32>
    %451 = arith.mulf %444, %450 : vector<16x128xf32>
    %c0_165 = arith.constant 0 : index
    %c6_166 = arith.constant 6 : index
    %c0_167 = arith.constant 0 : index
    %c0_168 = arith.constant 0 : index
    %452 = vector.load %arg16[%c0_165, %c6_166, %c0_167, %c0_168] : memref<1x16x16x128xf32, #tpu.memory_space<vmem>>, vector<1x1x16x128xf32>
    %453 = vector.shape_cast %452 : vector<1x1x16x128xf32> to vector<16x128xf32>
    %454 = vector.shape_cast %451 : vector<16x128xf32> to vector<1x1x16x128xf32>
    tpu.vector_store %arg16[%c0_165, %c6_166, %c0_167, %c0_168], %454 {strides = array<i32>} : memref<1x16x16x128xf32, #tpu.memory_space<vmem>>, vector<1x1x16x128xf32>,
    %c0_169 = arith.constant 0 : index
    %c6_170 = arith.constant 6 : index
    %c0_171 = arith.constant 0 : index
    %c0_172 = arith.constant 0 : index
    %455 = vector.load %arg17[%c0_169, %c6_170, %c0_171, %c0_172] : memref<1x16x16x128xf32, #tpu.memory_space<vmem>>, vector<1x1x16x128xf32>
    %456 = vector.shape_cast %455 : vector<1x1x16x128xf32> to vector<16x128xf32>
    %457 = vector.shape_cast %442 : vector<16x128xf32> to vector<1x1x16x128xf32>
    tpu.vector_store %arg17[%c0_169, %c6_170, %c0_171, %c0_172], %457 {strides = array<i32>} : memref<1x16x16x128xf32, #tpu.memory_space<vmem>>, vector<1x1x16x128xf32>,
    %cst_173 = arith.constant 6.000000e-01 : f32
    %458 = vector.broadcast %cst_173 : f32 to vector<16x128xf32>
    %459 = arith.mulf %458, %292 : vector<16x128xf32>
    %cst_174 = arith.constant 4.000000e-01 : f32
    %460 = vector.broadcast %cst_174 : f32 to vector<16x128xf32>
    %461 = arith.mulf %460, %295 : vector<16x128xf32>
    %462 = arith.addf %459, %461 : vector<16x128xf32>
    %cst_175 = arith.constant 6.000000e-01 : f32
    %463 = vector.broadcast %cst_175 : f32 to vector<16x128xf32>
    %464 = arith.mulf %463, %300 : vector<16x128xf32>
    %cst_176 = arith.constant 4.000000e-01 : f32
    %465 = vector.broadcast %cst_176 : f32 to vector<16x128xf32>
    %466 = arith.mulf %465, %301 : vector<16x128xf32>
    %467 = arith.addf %464, %466 : vector<16x128xf32>
    %468 = vector.extract_strided_slice %80 {offsets = [7, 0, 0], sizes = [1, 16, 128], strides = [1, 1, 1]} : vector<16x16x128xf32> to vector<1x16x128xf32>
    %469 = vector.shape_cast %468 : vector<1x16x128xf32> to vector<16x128xf32>
    %cst_177 = arith.constant 0.000000e+00 : f32
    %470 = vector.broadcast %cst_177 : f32 to vector<16x128xf32>
    %471 = arith.subf %470, %462 : vector<16x128xf32>
    %472 = math.exp %471 : vector<16x128xf32>
    %cst_178 = arith.constant 1.000000e+00 : f32
    %473 = vector.broadcast %cst_178 : f32 to vector<16x128xf32>
    %474 = arith.addf %473, %472 : vector<16x128xf32>
    %475 = tpu.reciprocal %474 {approx = true} : vector<16x128xf32> -> vector<16x128xf32>
    %476 = arith.mulf %469, %475 : vector<16x128xf32>
    %c0_179 = arith.constant 0 : index
    %c7_180 = arith.constant 7 : index
    %c0_181 = arith.constant 0 : index
    %c0_182 = arith.constant 0 : index
    %477 = vector.load %arg16[%c0_179, %c7_180, %c0_181, %c0_182] : memref<1x16x16x128xf32, #tpu.memory_space<vmem>>, vector<1x1x16x128xf32>
    %478 = vector.shape_cast %477 : vector<1x1x16x128xf32> to vector<16x128xf32>
    %479 = vector.shape_cast %476 : vector<16x128xf32> to vector<1x1x16x128xf32>
    tpu.vector_store %arg16[%c0_179, %c7_180, %c0_181, %c0_182], %479 {strides = array<i32>} : memref<1x16x16x128xf32, #tpu.memory_space<vmem>>, vector<1x1x16x128xf32>,
    %c0_183 = arith.constant 0 : index
    %c7_184 = arith.constant 7 : index
    %c0_185 = arith.constant 0 : index
    %c0_186 = arith.constant 0 : index
    %480 = vector.load %arg17[%c0_183, %c7_184, %c0_185, %c0_186] : memref<1x16x16x128xf32, #tpu.memory_space<vmem>>, vector<1x1x16x128xf32>
    %481 = vector.shape_cast %480 : vector<1x1x16x128xf32> to vector<16x128xf32>
    %482 = vector.shape_cast %467 : vector<16x128xf32> to vector<1x1x16x128xf32>
    tpu.vector_store %arg17[%c0_183, %c7_184, %c0_185, %c0_186], %482 {strides = array<i32>} : memref<1x16x16x128xf32, #tpu.memory_space<vmem>>, vector<1x1x16x128xf32>,
    %cst_187 = arith.constant 4.000000e-01 : f32
    %483 = vector.broadcast %cst_187 : f32 to vector<16x128xf32>
    %484 = arith.mulf %483, %292 : vector<16x128xf32>
    %cst_188 = arith.constant 6.000000e-01 : f32
    %485 = vector.broadcast %cst_188 : f32 to vector<16x128xf32>
    %486 = arith.mulf %485, %295 : vector<16x128xf32>
    %487 = arith.addf %484, %486 : vector<16x128xf32>
    %cst_189 = arith.constant 4.000000e-01 : f32
    %488 = vector.broadcast %cst_189 : f32 to vector<16x128xf32>
    %489 = arith.mulf %488, %300 : vector<16x128xf32>
    %cst_190 = arith.constant 6.000000e-01 : f32
    %490 = vector.broadcast %cst_190 : f32 to vector<16x128xf32>
    %491 = arith.mulf %490, %301 : vector<16x128xf32>
    %492 = arith.addf %489, %491 : vector<16x128xf32>
    %493 = vector.extract_strided_slice %80 {offsets = [8, 0, 0], sizes = [1, 16, 128], strides = [1, 1, 1]} : vector<16x16x128xf32> to vector<1x16x128xf32>
    %494 = vector.shape_cast %493 : vector<1x16x128xf32> to vector<16x128xf32>
    %cst_191 = arith.constant 0.000000e+00 : f32
    %495 = vector.broadcast %cst_191 : f32 to vector<16x128xf32>
    %496 = arith.subf %495, %487 : vector<16x128xf32>
    %497 = math.exp %496 : vector<16x128xf32>
    %cst_192 = arith.constant 1.000000e+00 : f32
    %498 = vector.broadcast %cst_192 : f32 to vector<16x128xf32>
    %499 = arith.addf %498, %497 : vector<16x128xf32>
    %500 = tpu.reciprocal %499 {approx = true} : vector<16x128xf32> -> vector<16x128xf32>
    %501 = arith.mulf %494, %500 : vector<16x128xf32>
    %c0_193 = arith.constant 0 : index
    %c8_194 = arith.constant 8 : index
    %c0_195 = arith.constant 0 : index
    %c0_196 = arith.constant 0 : index
    %502 = vector.load %arg16[%c0_193, %c8_194, %c0_195, %c0_196] : memref<1x16x16x128xf32, #tpu.memory_space<vmem>>, vector<1x1x16x128xf32>
    %503 = vector.shape_cast %502 : vector<1x1x16x128xf32> to vector<16x128xf32>
    %504 = vector.shape_cast %501 : vector<16x128xf32> to vector<1x1x16x128xf32>
    tpu.vector_store %arg16[%c0_193, %c8_194, %c0_195, %c0_196], %504 {strides = array<i32>} : memref<1x16x16x128xf32, #tpu.memory_space<vmem>>, vector<1x1x16x128xf32>,
    %c0_197 = arith.constant 0 : index
    %c8_198 = arith.constant 8 : index
    %c0_199 = arith.constant 0 : index
    %c0_200 = arith.constant 0 : index
    %505 = vector.load %arg17[%c0_197, %c8_198, %c0_199, %c0_200] : memref<1x16x16x128xf32, #tpu.memory_space<vmem>>, vector<1x1x16x128xf32>
    %506 = vector.shape_cast %505 : vector<1x1x16x128xf32> to vector<16x128xf32>
    %507 = vector.shape_cast %492 : vector<16x128xf32> to vector<1x1x16x128xf32>
    tpu.vector_store %arg17[%c0_197, %c8_198, %c0_199, %c0_200], %507 {strides = array<i32>} : memref<1x16x16x128xf32, #tpu.memory_space<vmem>>, vector<1x1x16x128xf32>,
    %cst_201 = arith.constant 2.000000e-01 : f32
    %508 = vector.broadcast %cst_201 : f32 to vector<16x128xf32>
    %509 = arith.mulf %508, %292 : vector<16x128xf32>
    %cst_202 = arith.constant 8.000000e-01 : f32
    %510 = vector.broadcast %cst_202 : f32 to vector<16x128xf32>
    %511 = arith.mulf %510, %295 : vector<16x128xf32>
    %512 = arith.addf %509, %511 : vector<16x128xf32>
    %cst_203 = arith.constant 2.000000e-01 : f32
    %513 = vector.broadcast %cst_203 : f32 to vector<16x128xf32>
    %514 = arith.mulf %513, %300 : vector<16x128xf32>
    %cst_204 = arith.constant 8.000000e-01 : f32
    %515 = vector.broadcast %cst_204 : f32 to vector<16x128xf32>
    %516 = arith.mulf %515, %301 : vector<16x128xf32>
    %517 = arith.addf %514, %516 : vector<16x128xf32>
    %518 = vector.extract_strided_slice %80 {offsets = [9, 0, 0], sizes = [1, 16, 128], strides = [1, 1, 1]} : vector<16x16x128xf32> to vector<1x16x128xf32>
    %519 = vector.shape_cast %518 : vector<1x16x128xf32> to vector<16x128xf32>
    %cst_205 = arith.constant 0.000000e+00 : f32
    %520 = vector.broadcast %cst_205 : f32 to vector<16x128xf32>
    %521 = arith.subf %520, %512 : vector<16x128xf32>
    %522 = math.exp %521 : vector<16x128xf32>
    %cst_206 = arith.constant 1.000000e+00 : f32
    %523 = vector.broadcast %cst_206 : f32 to vector<16x128xf32>
    %524 = arith.addf %523, %522 : vector<16x128xf32>
    %525 = tpu.reciprocal %524 {approx = true} : vector<16x128xf32> -> vector<16x128xf32>
    %526 = arith.mulf %519, %525 : vector<16x128xf32>
    %c0_207 = arith.constant 0 : index
    %c9 = arith.constant 9 : index
    %c0_208 = arith.constant 0 : index
    %c0_209 = arith.constant 0 : index
    %527 = vector.load %arg16[%c0_207, %c9, %c0_208, %c0_209] : memref<1x16x16x128xf32, #tpu.memory_space<vmem>>, vector<1x1x16x128xf32>
    %528 = vector.shape_cast %527 : vector<1x1x16x128xf32> to vector<16x128xf32>
    %529 = vector.shape_cast %526 : vector<16x128xf32> to vector<1x1x16x128xf32>
    tpu.vector_store %arg16[%c0_207, %c9, %c0_208, %c0_209], %529 {strides = array<i32>} : memref<1x16x16x128xf32, #tpu.memory_space<vmem>>, vector<1x1x16x128xf32>,
    %c0_210 = arith.constant 0 : index
    %c9_211 = arith.constant 9 : index
    %c0_212 = arith.constant 0 : index
    %c0_213 = arith.constant 0 : index
    %530 = vector.load %arg17[%c0_210, %c9_211, %c0_212, %c0_213] : memref<1x16x16x128xf32, #tpu.memory_space<vmem>>, vector<1x1x16x128xf32>
    %531 = vector.shape_cast %530 : vector<1x1x16x128xf32> to vector<16x128xf32>
    %532 = vector.shape_cast %517 : vector<16x128xf32> to vector<1x1x16x128xf32>
    tpu.vector_store %arg17[%c0_210, %c9_211, %c0_212, %c0_213], %532 {strides = array<i32>} : memref<1x16x16x128xf32, #tpu.memory_space<vmem>>, vector<1x1x16x128xf32>,
    %533 = vector.extract_strided_slice %80 {offsets = [10, 0, 0], sizes = [1, 16, 128], strides = [1, 1, 1]} : vector<16x16x128xf32> to vector<1x16x128xf32>
    %534 = vector.shape_cast %533 : vector<1x16x128xf32> to vector<16x128xf32>
    %cst_214 = arith.constant 0.000000e+00 : f32
    %535 = vector.broadcast %cst_214 : f32 to vector<16x128xf32>
    %536 = arith.subf %535, %295 : vector<16x128xf32>
    %537 = math.exp %536 : vector<16x128xf32>
    %cst_215 = arith.constant 1.000000e+00 : f32
    %538 = vector.broadcast %cst_215 : f32 to vector<16x128xf32>
    %539 = arith.addf %538, %537 : vector<16x128xf32>
    %540 = tpu.reciprocal %539 {approx = true} : vector<16x128xf32> -> vector<16x128xf32>
    %541 = arith.mulf %534, %540 : vector<16x128xf32>
    %c0_216 = arith.constant 0 : index
    %c10 = arith.constant 10 : index
    %c0_217 = arith.constant 0 : index
    %c0_218 = arith.constant 0 : index
    %542 = vector.load %arg16[%c0_216, %c10, %c0_217, %c0_218] : memref<1x16x16x128xf32, #tpu.memory_space<vmem>>, vector<1x1x16x128xf32>
    %543 = vector.shape_cast %542 : vector<1x1x16x128xf32> to vector<16x128xf32>
    %544 = vector.shape_cast %541 : vector<16x128xf32> to vector<1x1x16x128xf32>
    tpu.vector_store %arg16[%c0_216, %c10, %c0_217, %c0_218], %544 {strides = array<i32>} : memref<1x16x16x128xf32, #tpu.memory_space<vmem>>, vector<1x1x16x128xf32>,
    %c0_219 = arith.constant 0 : index
    %c10_220 = arith.constant 10 : index
    %c0_221 = arith.constant 0 : index
    %c0_222 = arith.constant 0 : index
    %545 = vector.load %arg17[%c0_219, %c10_220, %c0_221, %c0_222] : memref<1x16x16x128xf32, #tpu.memory_space<vmem>>, vector<1x1x16x128xf32>
    %546 = vector.shape_cast %545 : vector<1x1x16x128xf32> to vector<16x128xf32>
    %547 = vector.shape_cast %301 : vector<16x128xf32> to vector<1x1x16x128xf32>
    tpu.vector_store %arg17[%c0_219, %c10_220, %c0_221, %c0_222], %547 {strides = array<i32>} : memref<1x16x16x128xf32, #tpu.memory_space<vmem>>, vector<1x1x16x128xf32>,
    %cst_223 = arith.constant 8.000000e-01 : f32
    %548 = vector.broadcast %cst_223 : f32 to vector<16x128xf32>
    %549 = arith.mulf %548, %295 : vector<16x128xf32>
    %cst_224 = arith.constant 2.000000e-01 : f32
    %550 = vector.broadcast %cst_224 : f32 to vector<16x128xf32>
    %551 = arith.mulf %550, %298 : vector<16x128xf32>
    %552 = arith.addf %549, %551 : vector<16x128xf32>
    %cst_225 = arith.constant 8.000000e-01 : f32
    %553 = vector.broadcast %cst_225 : f32 to vector<16x128xf32>
    %554 = arith.mulf %553, %301 : vector<16x128xf32>
    %cst_226 = arith.constant 2.000000e-01 : f32
    %555 = vector.broadcast %cst_226 : f32 to vector<16x128xf32>
    %556 = arith.mulf %555, %302 : vector<16x128xf32>
    %557 = arith.addf %554, %556 : vector<16x128xf32>
    %558 = vector.extract_strided_slice %80 {offsets = [11, 0, 0], sizes = [1, 16, 128], strides = [1, 1, 1]} : vector<16x16x128xf32> to vector<1x16x128xf32>
    %559 = vector.shape_cast %558 : vector<1x16x128xf32> to vector<16x128xf32>
    %cst_227 = arith.constant 0.000000e+00 : f32
    %560 = vector.broadcast %cst_227 : f32 to vector<16x128xf32>
    %561 = arith.subf %560, %552 : vector<16x128xf32>
    %562 = math.exp %561 : vector<16x128xf32>
    %cst_228 = arith.constant 1.000000e+00 : f32
    %563 = vector.broadcast %cst_228 : f32 to vector<16x128xf32>
    %564 = arith.addf %563, %562 : vector<16x128xf32>
    %565 = tpu.reciprocal %564 {approx = true} : vector<16x128xf32> -> vector<16x128xf32>
    %566 = arith.mulf %559, %565 : vector<16x128xf32>
    %c0_229 = arith.constant 0 : index
    %c11 = arith.constant 11 : index
    %c0_230 = arith.constant 0 : index
    %c0_231 = arith.constant 0 : index
    %567 = vector.load %arg16[%c0_229, %c11, %c0_230, %c0_231] : memref<1x16x16x128xf32, #tpu.memory_space<vmem>>, vector<1x1x16x128xf32>
    %568 = vector.shape_cast %567 : vector<1x1x16x128xf32> to vector<16x128xf32>
    %569 = vector.shape_cast %566 : vector<16x128xf32> to vector<1x1x16x128xf32>
    tpu.vector_store %arg16[%c0_229, %c11, %c0_230, %c0_231], %569 {strides = array<i32>} : memref<1x16x16x128xf32, #tpu.memory_space<vmem>>, vector<1x1x16x128xf32>,
    %c0_232 = arith.constant 0 : index
    %c11_233 = arith.constant 11 : index
    %c0_234 = arith.constant 0 : index
    %c0_235 = arith.constant 0 : index
    %570 = vector.load %arg17[%c0_232, %c11_233, %c0_234, %c0_235] : memref<1x16x16x128xf32, #tpu.memory_space<vmem>>, vector<1x1x16x128xf32>
    %571 = vector.shape_cast %570 : vector<1x1x16x128xf32> to vector<16x128xf32>
    %572 = vector.shape_cast %557 : vector<16x128xf32> to vector<1x1x16x128xf32>
    tpu.vector_store %arg17[%c0_232, %c11_233, %c0_234, %c0_235], %572 {strides = array<i32>} : memref<1x16x16x128xf32, #tpu.memory_space<vmem>>, vector<1x1x16x128xf32>,
    %cst_236 = arith.constant 6.000000e-01 : f32
    %573 = vector.broadcast %cst_236 : f32 to vector<16x128xf32>
    %574 = arith.mulf %573, %295 : vector<16x128xf32>
    %cst_237 = arith.constant 4.000000e-01 : f32
    %575 = vector.broadcast %cst_237 : f32 to vector<16x128xf32>
    %576 = arith.mulf %575, %298 : vector<16x128xf32>
    %577 = arith.addf %574, %576 : vector<16x128xf32>
    %cst_238 = arith.constant 6.000000e-01 : f32
    %578 = vector.broadcast %cst_238 : f32 to vector<16x128xf32>
    %579 = arith.mulf %578, %301 : vector<16x128xf32>
    %cst_239 = arith.constant 4.000000e-01 : f32
    %580 = vector.broadcast %cst_239 : f32 to vector<16x128xf32>
    %581 = arith.mulf %580, %302 : vector<16x128xf32>
    %582 = arith.addf %579, %581 : vector<16x128xf32>
    %583 = vector.extract_strided_slice %80 {offsets = [12, 0, 0], sizes = [1, 16, 128], strides = [1, 1, 1]} : vector<16x16x128xf32> to vector<1x16x128xf32>
    %584 = vector.shape_cast %583 : vector<1x16x128xf32> to vector<16x128xf32>
    %cst_240 = arith.constant 0.000000e+00 : f32
    %585 = vector.broadcast %cst_240 : f32 to vector<16x128xf32>
    %586 = arith.subf %585, %577 : vector<16x128xf32>
    %587 = math.exp %586 : vector<16x128xf32>
    %cst_241 = arith.constant 1.000000e+00 : f32
    %588 = vector.broadcast %cst_241 : f32 to vector<16x128xf32>
    %589 = arith.addf %588, %587 : vector<16x128xf32>
    %590 = tpu.reciprocal %589 {approx = true} : vector<16x128xf32> -> vector<16x128xf32>
    %591 = arith.mulf %584, %590 : vector<16x128xf32>
    %c0_242 = arith.constant 0 : index
    %c12 = arith.constant 12 : index
    %c0_243 = arith.constant 0 : index
    %c0_244 = arith.constant 0 : index
    %592 = vector.load %arg16[%c0_242, %c12, %c0_243, %c0_244] : memref<1x16x16x128xf32, #tpu.memory_space<vmem>>, vector<1x1x16x128xf32>
    %593 = vector.shape_cast %592 : vector<1x1x16x128xf32> to vector<16x128xf32>
    %594 = vector.shape_cast %591 : vector<16x128xf32> to vector<1x1x16x128xf32>
    tpu.vector_store %arg16[%c0_242, %c12, %c0_243, %c0_244], %594 {strides = array<i32>} : memref<1x16x16x128xf32, #tpu.memory_space<vmem>>, vector<1x1x16x128xf32>,
    %c0_245 = arith.constant 0 : index
    %c12_246 = arith.constant 12 : index
    %c0_247 = arith.constant 0 : index
    %c0_248 = arith.constant 0 : index
    %595 = vector.load %arg17[%c0_245, %c12_246, %c0_247, %c0_248] : memref<1x16x16x128xf32, #tpu.memory_space<vmem>>, vector<1x1x16x128xf32>
    %596 = vector.shape_cast %595 : vector<1x1x16x128xf32> to vector<16x128xf32>
    %597 = vector.shape_cast %582 : vector<16x128xf32> to vector<1x1x16x128xf32>
    tpu.vector_store %arg17[%c0_245, %c12_246, %c0_247, %c0_248], %597 {strides = array<i32>} : memref<1x16x16x128xf32, #tpu.memory_space<vmem>>, vector<1x1x16x128xf32>,
    %cst_249 = arith.constant 4.000000e-01 : f32
    %598 = vector.broadcast %cst_249 : f32 to vector<16x128xf32>
    %599 = arith.mulf %598, %295 : vector<16x128xf32>
    %cst_250 = arith.constant 6.000000e-01 : f32
    %600 = vector.broadcast %cst_250 : f32 to vector<16x128xf32>
    %601 = arith.mulf %600, %298 : vector<16x128xf32>
    %602 = arith.addf %599, %601 : vector<16x128xf32>
    %cst_251 = arith.constant 4.000000e-01 : f32
    %603 = vector.broadcast %cst_251 : f32 to vector<16x128xf32>
    %604 = arith.mulf %603, %301 : vector<16x128xf32>
    %cst_252 = arith.constant 6.000000e-01 : f32
    %605 = vector.broadcast %cst_252 : f32 to vector<16x128xf32>
    %606 = arith.mulf %605, %302 : vector<16x128xf32>
    %607 = arith.addf %604, %606 : vector<16x128xf32>
    %608 = vector.extract_strided_slice %80 {offsets = [13, 0, 0], sizes = [1, 16, 128], strides = [1, 1, 1]} : vector<16x16x128xf32> to vector<1x16x128xf32>
    %609 = vector.shape_cast %608 : vector<1x16x128xf32> to vector<16x128xf32>
    %cst_253 = arith.constant 0.000000e+00 : f32
    %610 = vector.broadcast %cst_253 : f32 to vector<16x128xf32>
    %611 = arith.subf %610, %602 : vector<16x128xf32>
    %612 = math.exp %611 : vector<16x128xf32>
    %cst_254 = arith.constant 1.000000e+00 : f32
    %613 = vector.broadcast %cst_254 : f32 to vector<16x128xf32>
    %614 = arith.addf %613, %612 : vector<16x128xf32>
    %615 = tpu.reciprocal %614 {approx = true} : vector<16x128xf32> -> vector<16x128xf32>
    %616 = arith.mulf %609, %615 : vector<16x128xf32>
    %c0_255 = arith.constant 0 : index
    %c13 = arith.constant 13 : index
    %c0_256 = arith.constant 0 : index
    %c0_257 = arith.constant 0 : index
    %617 = vector.load %arg16[%c0_255, %c13, %c0_256, %c0_257] : memref<1x16x16x128xf32, #tpu.memory_space<vmem>>, vector<1x1x16x128xf32>
    %618 = vector.shape_cast %617 : vector<1x1x16x128xf32> to vector<16x128xf32>
    %619 = vector.shape_cast %616 : vector<16x128xf32> to vector<1x1x16x128xf32>
    tpu.vector_store %arg16[%c0_255, %c13, %c0_256, %c0_257], %619 {strides = array<i32>} : memref<1x16x16x128xf32, #tpu.memory_space<vmem>>, vector<1x1x16x128xf32>,
    %c0_258 = arith.constant 0 : index
    %c13_259 = arith.constant 13 : index
    %c0_260 = arith.constant 0 : index
    %c0_261 = arith.constant 0 : index
    %620 = vector.load %arg17[%c0_258, %c13_259, %c0_260, %c0_261] : memref<1x16x16x128xf32, #tpu.memory_space<vmem>>, vector<1x1x16x128xf32>
    %621 = vector.shape_cast %620 : vector<1x1x16x128xf32> to vector<16x128xf32>
    %622 = vector.shape_cast %607 : vector<16x128xf32> to vector<1x1x16x128xf32>
    tpu.vector_store %arg17[%c0_258, %c13_259, %c0_260, %c0_261], %622 {strides = array<i32>} : memref<1x16x16x128xf32, #tpu.memory_space<vmem>>, vector<1x1x16x128xf32>,
    %cst_262 = arith.constant 2.000000e-01 : f32
    %623 = vector.broadcast %cst_262 : f32 to vector<16x128xf32>
    %624 = arith.mulf %623, %295 : vector<16x128xf32>
    %cst_263 = arith.constant 8.000000e-01 : f32
    %625 = vector.broadcast %cst_263 : f32 to vector<16x128xf32>
    %626 = arith.mulf %625, %298 : vector<16x128xf32>
    %627 = arith.addf %624, %626 : vector<16x128xf32>
    %cst_264 = arith.constant 2.000000e-01 : f32
    %628 = vector.broadcast %cst_264 : f32 to vector<16x128xf32>
    %629 = arith.mulf %628, %301 : vector<16x128xf32>
    %cst_265 = arith.constant 8.000000e-01 : f32
    %630 = vector.broadcast %cst_265 : f32 to vector<16x128xf32>
    %631 = arith.mulf %630, %302 : vector<16x128xf32>
    %632 = arith.addf %629, %631 : vector<16x128xf32>
    %633 = vector.extract_strided_slice %80 {offsets = [14, 0, 0], sizes = [1, 16, 128], strides = [1, 1, 1]} : vector<16x16x128xf32> to vector<1x16x128xf32>
    %634 = vector.shape_cast %633 : vector<1x16x128xf32> to vector<16x128xf32>
    %cst_266 = arith.constant 0.000000e+00 : f32
    %635 = vector.broadcast %cst_266 : f32 to vector<16x128xf32>
    %636 = arith.subf %635, %627 : vector<16x128xf32>
    %637 = math.exp %636 : vector<16x128xf32>
    %cst_267 = arith.constant 1.000000e+00 : f32
    %638 = vector.broadcast %cst_267 : f32 to vector<16x128xf32>
    %639 = arith.addf %638, %637 : vector<16x128xf32>
    %640 = tpu.reciprocal %639 {approx = true} : vector<16x128xf32> -> vector<16x128xf32>
    %641 = arith.mulf %634, %640 : vector<16x128xf32>
    %c0_268 = arith.constant 0 : index
    %c14 = arith.constant 14 : index
    %c0_269 = arith.constant 0 : index
    %c0_270 = arith.constant 0 : index
    %642 = vector.load %arg16[%c0_268, %c14, %c0_269, %c0_270] : memref<1x16x16x128xf32, #tpu.memory_space<vmem>>, vector<1x1x16x128xf32>
    %643 = vector.shape_cast %642 : vector<1x1x16x128xf32> to vector<16x128xf32>
    %644 = vector.shape_cast %641 : vector<16x128xf32> to vector<1x1x16x128xf32>
    tpu.vector_store %arg16[%c0_268, %c14, %c0_269, %c0_270], %644 {strides = array<i32>} : memref<1x16x16x128xf32, #tpu.memory_space<vmem>>, vector<1x1x16x128xf32>,
    %c0_271 = arith.constant 0 : index
    %c14_272 = arith.constant 14 : index
    %c0_273 = arith.constant 0 : index
    %c0_274 = arith.constant 0 : index
    %645 = vector.load %arg17[%c0_271, %c14_272, %c0_273, %c0_274] : memref<1x16x16x128xf32, #tpu.memory_space<vmem>>, vector<1x1x16x128xf32>
    %646 = vector.shape_cast %645 : vector<1x1x16x128xf32> to vector<16x128xf32>
    %647 = vector.shape_cast %632 : vector<16x128xf32> to vector<1x1x16x128xf32>
    tpu.vector_store %arg17[%c0_271, %c14_272, %c0_273, %c0_274], %647 {strides = array<i32>} : memref<1x16x16x128xf32, #tpu.memory_space<vmem>>, vector<1x1x16x128xf32>,
    %cst_275 = arith.constant 0.000000e+00 : f32
    %648 = vector.broadcast %cst_275 : f32 to vector<16x128xf32>
    %649 = arith.mulf %648, %295 : vector<16x128xf32>
    %cst_276 = arith.constant 1.000000e+00 : f32
    %650 = vector.broadcast %cst_276 : f32 to vector<16x128xf32>
    %651 = arith.mulf %650, %298 : vector<16x128xf32>
    %652 = arith.addf %649, %651 : vector<16x128xf32>
    %cst_277 = arith.constant 0.000000e+00 : f32
    %653 = vector.broadcast %cst_277 : f32 to vector<16x128xf32>
    %654 = arith.mulf %653, %301 : vector<16x128xf32>
    %cst_278 = arith.constant 1.000000e+00 : f32
    %655 = vector.broadcast %cst_278 : f32 to vector<16x128xf32>
    %656 = arith.mulf %655, %302 : vector<16x128xf32>
    %657 = arith.addf %654, %656 : vector<16x128xf32>
    %658 = vector.extract_strided_slice %80 {offsets = [15, 0, 0], sizes = [1, 16, 128], strides = [1, 1, 1]} : vector<16x16x128xf32> to vector<1x16x128xf32>
    %659 = vector.shape_cast %658 : vector<1x16x128xf32> to vector<16x128xf32>
    %cst_279 = arith.constant 0.000000e+00 : f32
    %660 = vector.broadcast %cst_279 : f32 to vector<16x128xf32>
    %661 = arith.subf %660, %652 : vector<16x128xf32>
    %662 = math.exp %661 : vector<16x128xf32>
    %cst_280 = arith.constant 1.000000e+00 : f32
    %663 = vector.broadcast %cst_280 : f32 to vector<16x128xf32>
    %664 = arith.addf %663, %662 : vector<16x128xf32>
    %665 = tpu.reciprocal %664 {approx = true} : vector<16x128xf32> -> vector<16x128xf32>
    %666 = arith.mulf %659, %665 : vector<16x128xf32>
    %c0_281 = arith.constant 0 : index
    %c15 = arith.constant 15 : index
    %c0_282 = arith.constant 0 : index
    %c0_283 = arith.constant 0 : index
    %667 = vector.load %arg16[%c0_281, %c15, %c0_282, %c0_283] : memref<1x16x16x128xf32, #tpu.memory_space<vmem>>, vector<1x1x16x128xf32>
    %668 = vector.shape_cast %667 : vector<1x1x16x128xf32> to vector<16x128xf32>
    %669 = vector.shape_cast %666 : vector<16x128xf32> to vector<1x1x16x128xf32>
    tpu.vector_store %arg16[%c0_281, %c15, %c0_282, %c0_283], %669 {strides = array<i32>} : memref<1x16x16x128xf32, #tpu.memory_space<vmem>>, vector<1x1x16x128xf32>,
    %c0_284 = arith.constant 0 : index
    %c15_285 = arith.constant 15 : index
    %c0_286 = arith.constant 0 : index
    %c0_287 = arith.constant 0 : index
    %670 = vector.load %arg17[%c0_284, %c15_285, %c0_286, %c0_287] : memref<1x16x16x128xf32, #tpu.memory_space<vmem>>, vector<1x1x16x128xf32>
    %671 = vector.shape_cast %670 : vector<1x1x16x128xf32> to vector<16x128xf32>
    %672 = vector.shape_cast %657 : vector<16x128xf32> to vector<1x1x16x128xf32>
    tpu.vector_store %arg17[%c0_284, %c15_285, %c0_286, %c0_287], %672 {strides = array<i32>} : memref<1x16x16x128xf32, #tpu.memory_space<vmem>>, vector<1x1x16x128xf32>,
    return
  }
  func.func @transform_0(%arg0: i32) -> (i32, i32, i32, i32) {
    %c0_i32 = arith.constant 0 : i32
    %c0_i32_0 = arith.constant 0 : i32
    %c0_i32_1 = arith.constant 0 : i32
    %c0_i32_2 = arith.constant 0 : i32
    return %arg0, %c0_i32, %c0_i32_0, %c0_i32_1 : i32, i32, i32, i32
  }
  func.func @transform_1(%arg0: i32) -> (i32, i32, i32, i32, i32) {
    %c0_i32 = arith.constant 0 : i32
    %c0_i32_0 = arith.constant 0 : i32
    %c0_i32_1 = arith.constant 0 : i32
    %c0_i32_2 = arith.constant 0 : i32
    %c0_i32_3 = arith.constant 0 : i32
    return %arg0, %c0_i32, %c0_i32_0, %c0_i32_1, %c0_i32_2 : i32, i32, i32, i32, i32
  }
  func.func @transform_2(%arg0: i32) -> (i32, i32, i32, i32) {
    %c0_i32 = arith.constant 0 : i32
    %c0_i32_0 = arith.constant 0 : i32
    %c0_i32_1 = arith.constant 0 : i32
    %c0_i32_2 = arith.constant 0 : i32
    return %arg0, %c0_i32, %c0_i32_0, %c0_i32_1 : i32, i32, i32, i32
  }
  func.func @transform_3(%arg0: i32) -> (i32, i32) {
    %c0_i32 = arith.constant 0 : i32
    %c0_i32_0 = arith.constant 0 : i32
    %c0_i32_1 = arith.constant 0 : i32
    return %c0_i32, %c0_i32_0 : i32, i32
  }
  func.func @transform_4(%arg0: i32) -> (i32, i32) {
    %c0_i32 = arith.constant 0 : i32
    %c0_i32_0 = arith.constant 0 : i32
    %c0_i32_1 = arith.constant 0 : i32
    return %c0_i32, %c0_i32_0 : i32, i32
  }
  func.func @transform_5(%arg0: i32) -> (i32, i32) {
    %c0_i32 = arith.constant 0 : i32
    %c0_i32_0 = arith.constant 0 : i32
    %c0_i32_1 = arith.constant 0 : i32
    return %c0_i32, %c0_i32_0 : i32, i32
  }
  func.func @transform_6(%arg0: i32) -> (i32, i32) {
    %c0_i32 = arith.constant 0 : i32
    %c0_i32_0 = arith.constant 0 : i32
    %c0_i32_1 = arith.constant 0 : i32
    return %c0_i32, %c0_i32_0 : i32, i32
  }
  func.func @transform_7(%arg0: i32) -> (i32, i32) {
    %c0_i32 = arith.constant 0 : i32
    %c0_i32_0 = arith.constant 0 : i32
    %c0_i32_1 = arith.constant 0 : i32
    return %c0_i32, %c0_i32_0 : i32, i32
  }
  func.func @transform_8(%arg0: i32) -> (i32, i32) {
    %c0_i32 = arith.constant 0 : i32
    %c0_i32_0 = arith.constant 0 : i32
    %c0_i32_1 = arith.constant 0 : i32
    return %c0_i32, %c0_i32_0 : i32, i32
  }
  func.func @transform_9(%arg0: i32) -> (i32, i32) {
    %c0_i32 = arith.constant 0 : i32
    %c0_i32_0 = arith.constant 0 : i32
    %c0_i32_1 = arith.constant 0 : i32
    return %c0_i32, %c0_i32_0 : i32, i32
  }
  func.func @transform_10(%arg0: i32) -> (i32, i32) {
    %c0_i32 = arith.constant 0 : i32
    %c0_i32_0 = arith.constant 0 : i32
    %c0_i32_1 = arith.constant 0 : i32
    return %c0_i32, %c0_i32_0 : i32, i32
  }
  func.func @transform_11(%arg0: i32) -> (i32, i32) {
    %c0_i32 = arith.constant 0 : i32
    %c0_i32_0 = arith.constant 0 : i32
    %c0_i32_1 = arith.constant 0 : i32
    return %c0_i32, %c0_i32_0 : i32, i32
  }
  func.func @transform_12(%arg0: i32) -> (i32, i32) {
    %c0_i32 = arith.constant 0 : i32
    %c0_i32_0 = arith.constant 0 : i32
    %c0_i32_1 = arith.constant 0 : i32
    return %c0_i32, %c0_i32_0 : i32, i32
  }
  func.func @transform_13(%arg0: i32) -> (i32, i32) {
    %c0_i32 = arith.constant 0 : i32
    %c0_i32_0 = arith.constant 0 : i32
    %c0_i32_1 = arith.constant 0 : i32
    return %c0_i32, %c0_i32_0 : i32, i32
  }
  func.func @transform_14(%arg0: i32) -> (i32, i32) {
    %c0_i32 = arith.constant 0 : i32
    %c0_i32_0 = arith.constant 0 : i32
    %c0_i32_1 = arith.constant 0 : i32
    return %c0_i32, %c0_i32_0 : i32, i32
  }
  func.func @transform_15(%arg0: i32) -> (i32, i32, i32, i32) {
    %c0_i32 = arith.constant 0 : i32
    %c0_i32_0 = arith.constant 0 : i32
    %c0_i32_1 = arith.constant 0 : i32
    %c0_i32_2 = arith.constant 0 : i32
    return %arg0, %c0_i32, %c0_i32_0, %c0_i32_1 : i32, i32, i32, i32
  }
  func.func @transform_16(%arg0: i32) -> (i32, i32, i32, i32) {
    %c0_i32 = arith.constant 0 : i32
    %c0_i32_0 = arith.constant 0 : i32
    %c0_i32_1 = arith.constant 0 : i32
    %c0_i32_2 = arith.constant 0 : i32
    return %arg0, %c0_i32, %c0_i32_0, %c0_i32_1 : i32, i32, i32, i32
  }
}

</mosaic_0001>

<llo_original>
// kernel: tpu_custom_call.1
$region0: #{tpu_custom_call.1}
  #allocation0 [shape = 'u32[]', space=smem, size = 0x4, offset = 0x4, fixed_abs, tag = 'smem constant byte address 0x4 - core index']
  #allocation1 [shape = 'u32[144,128]{1,0:T(1,128)}', space=vmem, size = 0x12000, scoped, tag = 'internal scratch']
  %s0 = inlined_call_operand.vmem [shape: bf16[2,18,18,128], index: 0, kind: input, shape index: {}]
  %s1 = inlined_call_operand.vmem [shape: bf16[2,4,9,9,128], index: 1, kind: input, shape index: {}]
  %s2 = inlined_call_operand.vmem [shape: bf16[2,6,6,128], index: 2, kind: input, shape index: {}]
  %s3 = inlined_call_operand.vmem [shape: f32[9,128], index: 3, kind: input, shape index: {}]
  %s4 = inlined_call_operand.vmem [shape: bf16[128,128], index: 4, kind: input, shape index: {}]
  %s5 = inlined_call_operand.vmem [shape: f32[1,128], index: 5, kind: input, shape index: {}]
  %s6 = inlined_call_operand.vmem [shape: bf16[1152,128], index: 6, kind: input, shape index: {}]
  %s7 = inlined_call_operand.vmem [shape: f32[1,128], index: 7, kind: input, shape index: {}]
  %s8 = inlined_call_operand.vmem [shape: bf16[1152,128], index: 8, kind: input, shape index: {}]
  %s9 = inlined_call_operand.vmem [shape: f32[1,128], index: 9, kind: input, shape index: {}]
  %s10 = inlined_call_operand.vmem [shape: f32[9,128], index: 10, kind: input, shape index: {}]
  %s11 = inlined_call_operand.vmem [shape: bf16[128,128], index: 11, kind: input, shape index: {}]
  %s12 = inlined_call_operand.vmem [shape: f32[1,128], index: 12, kind: input, shape index: {}]
  %s13 = inlined_call_operand.vmem [shape: f32[16,4], index: 13, kind: input, shape index: {}]
  %s14 = inlined_call_operand.vmem [shape: f32[4,8], index: 14, kind: input, shape index: {}]
  %s15 = inlined_call_operand.hbm [shape: f32[2,16,16,128], index: 15, kind: output, shape index: {0}]
  %s16 = inlined_call_operand.hbm [shape: f32[2,16,16,128], index: 16, kind: output, shape index: {1}]
  %17 = xla_tuple %s15, %s16
  %s18 = sld [smem:[#allocation0]]
  $region101: #{tpu_custom_call.1} parent=0
    _
  %s20 = ssub.s32 1, %s18
  %s21 = scalar_select 0, %s20, %s18
  $region1: #{tpu_custom_call.1} parent=0
    #allocation2 [shape = 'u8[262144]{0}', space=vmem, size = 0x40000, scoped, tag = 'output window, operand 0']
    #allocation3 [shape = 's32[2]{0}', space=sflag, size = 0x8, scoped, tag = 'scoped memory for tpu_custom_call.1']
    #allocation4 [shape = 'u8[262144]{0}', space=vmem, size = 0x40000, scoped, tag = 'output window, operand 1']
    #allocation5 [shape = 's32[2]{0}', space=sflag, size = 0x8, scoped, tag = 'scoped memory for tpu_custom_call.1']
    %22 = vsyncpa [#allocation3], 0
    %s23 = scalar_lea.sflag [#allocation3], 1
    %24 = vsyncpa %s23, 0
    %25 = vsyncpa [#allocation5], 0
    %s26 = scalar_lea.sflag [#allocation5], 1
    %27 = vsyncpa %s26, 0
    loop: start=0, step=1, limit=4
    $region2: #{tpu_custom_call.1} parent=1 // loop_pre_header
      _
    $region3: #{tpu_custom_call.1} parent=1 // loop_header
      %s29 = sphi 0, %s33
      %p30 = scmp.ge.s32.totalorder %s29, 4
      %s39 = sphi 0, %s41
      %s42 = sphi 0, %s39
      %s43 = sphi 0, %s42
      %s59 = sphi 0, %s43
      %s65 = sphi 0, %s67
      %s68 = sphi 0, %s65
      %s69 = sphi 0, %s68
      %s85 = sphi 0, %s69
      %s91 = sphi 0, %s93
      %s94 = sphi 0, %s91
      %s95 = sphi 0, %s94
      %s111 = sphi 0, %s95
      %s115 = sphi 0, %s115
      %s117 = sphi 0, %s115
      %s118 = sphi 0, %s117
      %s132 = sphi 0, %s118
      %s136 = sphi 0, %s136
      %s138 = sphi 0, %s136
      %s139 = sphi 0, %s138
      %s153 = sphi 0, %s139
      %s157 = sphi 0, %s157
      %s159 = sphi 0, %s157
      %s160 = sphi 0, %s159
      %s174 = sphi 0, %s160
      %s178 = sphi 0, %s178
      %s180 = sphi 0, %s178
      %s181 = sphi 0, %s180
      %s195 = sphi 0, %s181
      %s199 = sphi 0, %s199
      %s201 = sphi 0, %s199
      %s202 = sphi 0, %s201
      %s216 = sphi 0, %s202
      %s220 = sphi 0, %s220
      %s222 = sphi 0, %s220
      %s223 = sphi 0, %s222
      %s237 = sphi 0, %s223
      %s241 = sphi 0, %s241
      %s243 = sphi 0, %s241
      %s244 = sphi 0, %s243
      %s258 = sphi 0, %s244
      %s262 = sphi 0, %s262
      %s264 = sphi 0, %s262
      %s265 = sphi 0, %s264
      %s279 = sphi 0, %s265
      %s283 = sphi 0, %s283
      %s285 = sphi 0, %s283
      %s286 = sphi 0, %s285
      %s300 = sphi 0, %s286
      %s304 = sphi 0, %s304
      %s306 = sphi 0, %s304
      %s307 = sphi 0, %s306
      %s321 = sphi 0, %s307
      %s325 = sphi 0, %s325
      %s327 = sphi 0, %s325
      %s328 = sphi 0, %s327
      %s342 = sphi 0, %s328
      %s346 = sphi 0, %s346
      %s348 = sphi 0, %s346
      %s349 = sphi 0, %s348
      %s363 = sphi 0, %s349
      %s369 = sphi 0, %s371
      %s372 = sphi 0, %s369
      %s373 = sphi 0, %s372
      %s389 = sphi 0, %s373
      %s395 = sphi 0, %s397
      %s398 = sphi 0, %s395
      %s399 = sphi 0, %s398
      %s415 = sphi 0, %s399
    $region4: #{tpu_custom_call.1} parent=1 // loop_header_branch
      %32 = sbr.rel (%p30) target = $region8
    $region5: #{tpu_custom_call.1} parent=1 // loop_body
      %s34 = ssub.s32 %s29, 1
      %s35 = ssub.s32 %s29, 2
      %s36 = sadd.s32 %s29, 1
      %s37 = ssub.s32 %s29, %s36
      %p38 = scmp.eq.s32.totalorder %s37, 0
      %s40 = sadd.s32 %s39, 1
      %s41 = scalar_select %p38, %s39, %s40
      %p44 = pneg %p38
      %p45 = scmp.eq.s32.totalorder %s29, 1
      %p46 = por %p44, %p45
      %p47 = scmp.ne.s32.totalorder %s39, %s42
      %p48 = scmp.eq.s32.totalorder %s29, 0
      %p49 = por %p47, %p48
      %p50 = scmp.ne.s32.totalorder %s39, %s42
      %p51 = scmp.eq.s32.totalorder %s34, 1
      %p52 = por %p50, %p51
      %p53 = scmp.ne.s32.totalorder %s42, %s43
      %p54 = scmp.eq.s32.totalorder %s34, 0
      %p55 = por %p53, %p54
      %p56 = scmp.ne.s32.totalorder %s42, %s43
      %p57 = scmp.eq.s32.totalorder %s35, 1
      %p58 = por %p56, %p57
      %p60 = scmp.ne.s32.totalorder %s43, %s59
      %p61 = scmp.eq.s32.totalorder %s35, 0
      %p62 = por %p60, %p61
      %s63 = ssub.s32 %s29, %s36
      %p64 = scmp.eq.s32.totalorder %s63, 0
      %s66 = sadd.s32 %s65, 1
      %s67 = scalar_select %p64, %s65, %s66
      %p70 = pneg %p64
      %p71 = scmp.eq.s32.totalorder %s29, 1
      %p72 = por %p70, %p71
      %p73 = scmp.ne.s32.totalorder %s65, %s68
      %p74 = scmp.eq.s32.totalorder %s29, 0
      %p75 = por %p73, %p74
      %p76 = scmp.ne.s32.totalorder %s65, %s68
      %p77 = scmp.eq.s32.totalorder %s34, 1
      %p78 = por %p76, %p77
      %p79 = scmp.ne.s32.totalorder %s68, %s69
      %p80 = scmp.eq.s32.totalorder %s34, 0
      %p81 = por %p79, %p80
      %p82 = scmp.ne.s32.totalorder %s68, %s69
      %p83 = scmp.eq.s32.totalorder %s35, 1
      %p84 = por %p82, %p83
      %p86 = scmp.ne.s32.totalorder %s69, %s85
      %p87 = scmp.eq.s32.totalorder %s35, 0
      %p88 = por %p86, %p87
      %s89 = ssub.s32 %s29, %s36
      %p90 = scmp.eq.s32.totalorder %s89, 0
      %s92 = sadd.s32 %s91, 1
      %s93 = scalar_select %p90, %s91, %s92
      %p96 = pneg %p90
      %p97 = scmp.eq.s32.totalorder %s29, 1
      %p98 = por %p96, %p97
      %p99 = scmp.ne.s32.totalorder %s91, %s94
      %p100 = scmp.eq.s32.totalorder %s29, 0
      %p101 = por %p99, %p100
      %p102 = scmp.ne.s32.totalorder %s91, %s94
      %p103 = scmp.eq.s32.totalorder %s34, 1
      %p104 = por %p102, %p103
      %p105 = scmp.ne.s32.totalorder %s94, %s95
      %p106 = scmp.eq.s32.totalorder %s34, 0
      %p107 = por %p105, %p106
      %p108 = scmp.ne.s32.totalorder %s94, %s95
      %p109 = scmp.eq.s32.totalorder %s35, 1
      %p110 = por %p108, %p109
      %p112 = scmp.ne.s32.totalorder %s95, %s111
      %p113 = scmp.eq.s32.totalorder %s35, 0
      %p114 = por %p112, %p113
      %s116 = sadd.s32 %s115, 1
      %p119 = scmp.eq.s32.totalorder %s29, 1
      %p120 = scmp.ne.s32.totalorder %s115, %s117
      %p121 = scmp.eq.s32.totalorder %s29, 0
      %p122 = por %p120, %p121
      %p123 = scmp.ne.s32.totalorder %s115, %s117
      %p124 = scmp.eq.s32.totalorder %s34, 1
      %p125 = por %p123, %p124
      %p126 = scmp.ne.s32.totalorder %s117, %s118
      %p127 = scmp.eq.s32.totalorder %s34, 0
      %p128 = por %p126, %p127
      %p129 = scmp.ne.s32.totalorder %s117, %s118
      %p130 = scmp.eq.s32.totalorder %s35, 1
      %p131 = por %p129, %p130
      %p133 = scmp.ne.s32.totalorder %s118, %s132
      %p134 = scmp.eq.s32.totalorder %s35, 0
      %p135 = por %p133, %p134
      %s137 = sadd.s32 %s136, 1
      %p140 = scmp.eq.s32.totalorder %s29, 1
      %p141 = scmp.ne.s32.totalorder %s136, %s138
      %p142 = scmp.eq.s32.totalorder %s29, 0
      %p143 = por %p141, %p142
      %p144 = scmp.ne.s32.totalorder %s136, %s138
      %p145 = scmp.eq.s32.totalorder %s34, 1
      %p146 = por %p144, %p145
      %p147 = scmp.ne.s32.totalorder %s138, %s139
      %p148 = scmp.eq.s32.totalorder %s34, 0
      %p149 = por %p147, %p148
      %p150 = scmp.ne.s32.totalorder %s138, %s139
      %p151 = scmp.eq.s32.totalorder %s35, 1
      %p152 = por %p150, %p151
      %p154 = scmp.ne.s32.totalorder %s139, %s153
      %p155 = scmp.eq.s32.totalorder %s35, 0
      %p156 = por %p154, %p155
      %s158 = sadd.s32 %s157, 1
      %p161 = scmp.eq.s32.totalorder %s29, 1
      %p162 = scmp.ne.s32.totalorder %s157, %s159
      %p163 = scmp.eq.s32.totalorder %s29, 0
      %p164 = por %p162, %p163
      %p165 = scmp.ne.s32.totalorder %s157, %s159
      %p166 = scmp.eq.s32.totalorder %s34, 1
      %p167 = por %p165, %p166
      %p168 = scmp.ne.s32.totalorder %s159, %s160
      %p169 = scmp.eq.s32.totalorder %s34, 0
      %p170 = por %p168, %p169
      %p171 = scmp.ne.s32.totalorder %s159, %s160
      %p172 = scmp.eq.s32.totalorder %s35, 1
      %p173 = por %p171, %p172
      %p175 = scmp.ne.s32.totalorder %s160, %s174
      %p176 = scmp.eq.s32.totalorder %s35, 0
      %p177 = por %p175, %p176
      %s179 = sadd.s32 %s178, 1
      %p182 = scmp.eq.s32.totalorder %s29, 1
      %p183 = scmp.ne.s32.totalorder %s178, %s180
      %p184 = scmp.eq.s32.totalorder %s29, 0
      %p185 = por %p183, %p184
      %p186 = scmp.ne.s32.totalorder %s178, %s180
      %p187 = scmp.eq.s32.totalorder %s34, 1
      %p188 = por %p186, %p187
      %p189 = scmp.ne.s32.totalorder %s180, %s181
      %p190 = scmp.eq.s32.totalorder %s34, 0
      %p191 = por %p189, %p190
      %p192 = scmp.ne.s32.totalorder %s180, %s181
      %p193 = scmp.eq.s32.totalorder %s35, 1
      %p194 = por %p192, %p193
      %p196 = scmp.ne.s32.totalorder %s181, %s195
      %p197 = scmp.eq.s32.totalorder %s35, 0
      %p198 = por %p196, %p197
      %s200 = sadd.s32 %s199, 1
      %p203 = scmp.eq.s32.totalorder %s29, 1
      %p204 = scmp.ne.s32.totalorder %s199, %s201
      %p205 = scmp.eq.s32.totalorder %s29, 0
      %p206 = por %p204, %p205
      %p207 = scmp.ne.s32.totalorder %s199, %s201
      %p208 = scmp.eq.s32.totalorder %s34, 1
      %p209 = por %p207, %p208
      %p210 = scmp.ne.s32.totalorder %s201, %s202
      %p211 = scmp.eq.s32.totalorder %s34, 0
      %p212 = por %p210, %p211
      %p213 = scmp.ne.s32.totalorder %s201, %s202
      %p214 = scmp.eq.s32.totalorder %s35, 1
      %p215 = por %p213, %p214
      %p217 = scmp.ne.s32.totalorder %s202, %s216
      %p218 = scmp.eq.s32.totalorder %s35, 0
      %p219 = por %p217, %p218
      %s221 = sadd.s32 %s220, 1
      %p224 = scmp.eq.s32.totalorder %s29, 1
      %p225 = scmp.ne.s32.totalorder %s220, %s222
      %p226 = scmp.eq.s32.totalorder %s29, 0
      %p227 = por %p225, %p226
      %p228 = scmp.ne.s32.totalorder %s220, %s222
      %p229 = scmp.eq.s32.totalorder %s34, 1
      %p230 = por %p228, %p229
      %p231 = scmp.ne.s32.totalorder %s222, %s223
      %p232 = scmp.eq.s32.totalorder %s34, 0
      %p233 = por %p231, %p232
      %p234 = scmp.ne.s32.totalorder %s222, %s223
      %p235 = scmp.eq.s32.totalorder %s35, 1
      %p236 = por %p234, %p235
      %p238 = scmp.ne.s32.totalorder %s223, %s237
      %p239 = scmp.eq.s32.totalorder %s35, 0
      %p240 = por %p238, %p239
      %s242 = sadd.s32 %s241, 1
      %p245 = scmp.eq.s32.totalorder %s29, 1
      %p246 = scmp.ne.s32.totalorder %s241, %s243
      %p247 = scmp.eq.s32.totalorder %s29, 0
      %p248 = por %p246, %p247
      %p249 = scmp.ne.s32.totalorder %s241, %s243
      %p250 = scmp.eq.s32.totalorder %s34, 1
      %p251 = por %p249, %p250
      %p252 = scmp.ne.s32.totalorder %s243, %s244
      %p253 = scmp.eq.s32.totalorder %s34, 0
      %p254 = por %p252, %p253
      %p255 = scmp.ne.s32.totalorder %s243, %s244
      %p256 = scmp.eq.s32.totalorder %s35, 1
      %p257 = por %p255, %p256
      %p259 = scmp.ne.s32.totalorder %s244, %s258
      %p260 = scmp.eq.s32.totalorder %s35, 0
      %p261 = por %p259, %p260
      %s263 = sadd.s32 %s262, 1
      %p266 = scmp.eq.s32.totalorder %s29, 1
      %p267 = scmp.ne.s32.totalorder %s262, %s264
      %p268 = scmp.eq.s32.totalorder %s29, 0
      %p269 = por %p267, %p268
      %p270 = scmp.ne.s32.totalorder %s262, %s264
      %p271 = scmp.eq.s32.totalorder %s34, 1
      %p272 = por %p270, %p271
      %p273 = scmp.ne.s32.totalorder %s264, %s265
      %p274 = scmp.eq.s32.totalorder %s34, 0
      %p275 = por %p273, %p274
      %p276 = scmp.ne.s32.totalorder %s264, %s265
      %p277 = scmp.eq.s32.totalorder %s35, 1
      %p278 = por %p276, %p277
      %p280 = scmp.ne.s32.totalorder %s265, %s279
      %p281 = scmp.eq.s32.totalorder %s35, 0
      %p282 = por %p280, %p281
      %s284 = sadd.s32 %s283, 1
      %p287 = scmp.eq.s32.totalorder %s29, 1
      %p288 = scmp.ne.s32.totalorder %s283, %s285
      %p289 = scmp.eq.s32.totalorder %s29, 0
      %p290 = por %p288, %p289
      %p291 = scmp.ne.s32.totalorder %s283, %s285
      %p292 = scmp.eq.s32.totalorder %s34, 1
      %p293 = por %p291, %p292
      %p294 = scmp.ne.s32.totalorder %s285, %s286
      %p295 = scmp.eq.s32.totalorder %s34, 0
      %p296 = por %p294, %p295
      %p297 = scmp.ne.s32.totalorder %s285, %s286
      %p298 = scmp.eq.s32.totalorder %s35, 1
      %p299 = por %p297, %p298
      %p301 = scmp.ne.s32.totalorder %s286, %s300
      %p302 = scmp.eq.s32.totalorder %s35, 0
      %p303 = por %p301, %p302
      %s305 = sadd.s32 %s304, 1
      %p308 = scmp.eq.s32.totalorder %s29, 1
      %p309 = scmp.ne.s32.totalorder %s304, %s306
      %p310 = scmp.eq.s32.totalorder %s29, 0
      %p311 = por %p309, %p310
      %p312 = scmp.ne.s32.totalorder %s304, %s306
      %p313 = scmp.eq.s32.totalorder %s34, 1
      %p314 = por %p312, %p313
      %p315 = scmp.ne.s32.totalorder %s306, %s307
      %p316 = scmp.eq.s32.totalorder %s34, 0
      %p317 = por %p315, %p316
      %p318 = scmp.ne.s32.totalorder %s306, %s307
      %p319 = scmp.eq.s32.totalorder %s35, 1
      %p320 = por %p318, %p319
      %p322 = scmp.ne.s32.totalorder %s307, %s321
      %p323 = scmp.eq.s32.totalorder %s35, 0
      %p324 = por %p322, %p323
      %s326 = sadd.s32 %s325, 1
      %p329 = scmp.eq.s32.totalorder %s29, 1
      %p330 = scmp.ne.s32.totalorder %s325, %s327
      %p331 = scmp.eq.s32.totalorder %s29, 0
      %p332 = por %p330, %p331
      %p333 = scmp.ne.s32.totalorder %s325, %s327
      %p334 = scmp.eq.s32.totalorder %s34, 1
      %p335 = por %p333, %p334
      %p336 = scmp.ne.s32.totalorder %s327, %s328
      %p337 = scmp.eq.s32.totalorder %s34, 0
      %p338 = por %p336, %p337
      %p339 = scmp.ne.s32.totalorder %s327, %s328
      %p340 = scmp.eq.s32.totalorder %s35, 1
      %p341 = por %p339, %p340
      %p343 = scmp.ne.s32.totalorder %s328, %s342
      %p344 = scmp.eq.s32.totalorder %s35, 0
      %p345 = por %p343, %p344
      %s347 = sadd.s32 %s346, 1
      %p350 = scmp.eq.s32.totalorder %s29, 1
      %p351 = scmp.ne.s32.totalorder %s346, %s348
      %p352 = scmp.eq.s32.totalorder %s29, 0
      %p353 = por %p351, %p352
      %p354 = scmp.ne.s32.totalorder %s346, %s348
      %p355 = scmp.eq.s32.totalorder %s34, 1
      %p356 = por %p354, %p355
      %p357 = scmp.ne.s32.totalorder %s348, %s349
      %p358 = scmp.eq.s32.totalorder %s34, 0
      %p359 = por %p357, %p358
      %p360 = scmp.ne.s32.totalorder %s348, %s349
      %p361 = scmp.eq.s32.totalorder %s35, 1
      %p362 = por %p360, %p361
      %p364 = scmp.ne.s32.totalorder %s349, %s363
      %p365 = scmp.eq.s32.totalorder %s35, 0
      %p366 = por %p364, %p365
      %s367 = ssub.s32 %s29, %s36
      %p368 = scmp.eq.s32.totalorder %s367, 0
      %s370 = sadd.s32 %s369, 1
      %s371 = scalar_select %p368, %s369, %s370
      %p374 = pneg %p368
      %p375 = scmp.eq.s32.totalorder %s29, 1
      %p376 = por %p374, %p375
      %p377 = scmp.ne.s32.totalorder %s369, %s372
      %p378 = scmp.eq.s32.totalorder %s29, 0
      %p379 = por %p377, %p378
      %p380 = scmp.ne.s32.totalorder %s369, %s372
      %p381 = scmp.eq.s32.totalorder %s34, 1
      %p382 = por %p380, %p381
      %p383 = scmp.ne.s32.totalorder %s372, %s373
      %p384 = scmp.eq.s32.totalorder %s34, 0
      %p385 = por %p383, %p384
      %p386 = scmp.ne.s32.totalorder %s372, %s373
      %p387 = scmp.eq.s32.totalorder %s35, 1
      %p388 = por %p386, %p387
      %p390 = scmp.ne.s32.totalorder %s373, %s389
      %p391 = scmp.eq.s32.totalorder %s35, 0
      %p392 = por %p390, %p391
      %s393 = ssub.s32 %s29, %s36
      %p394 = scmp.eq.s32.totalorder %s393, 0
      %s396 = sadd.s32 %s395, 1
      %s397 = scalar_select %p394, %s395, %s396
      %p400 = pneg %p394
      %p401 = scmp.eq.s32.totalorder %s29, 1
      %p402 = por %p400, %p401
      %p403 = scmp.ne.s32.totalorder %s395, %s398
      %p404 = scmp.eq.s32.totalorder %s29, 0
      %p405 = por %p403, %p404
      %p406 = scmp.ne.s32.totalorder %s395, %s398
      %p407 = scmp.eq.s32.totalorder %s34, 1
      %p408 = por %p406, %p407
      %p409 = scmp.ne.s32.totalorder %s398, %s399
      %p410 = scmp.eq.s32.totalorder %s34, 0
      %p411 = por %p409, %p410
      %p412 = scmp.ne.s32.totalorder %s398, %s399
      %p413 = scmp.eq.s32.totalorder %s35, 1
      %p414 = por %p412, %p413
      %p416 = scmp.ne.s32.totalorder %s399, %s415
      %p417 = scmp.eq.s32.totalorder %s35, 0
      %p418 = por %p416, %p417
      %p419 = scmp.le.s32.totalorder 1, %s29
      %p420 = scmp.lt.s32.totalorder %s29, 3
      %p421 = pnand %p419, %p420
      %p422 = pneg %p421
      // Predicated region
      $region9: #{tpu_custom_call.1} parent=5 // pred_check
        _
      $region10: #{tpu_custom_call.1} parent=5 // pred_check_branch
        %424 = sbr.rel (%p421) target = $region12
      $region11: #{tpu_custom_call.1} parent=5 // pred_region
        %s425 = ssub.s32 %s29, 1
        // Predicated region
        $region13: #{tpu_custom_call.1} parent=11 // pred_check
          %p426 = pneg %p128
        $region14: #{tpu_custom_call.1} parent=11 // pred_check_branch
          %428 = sbr.rel (%p426) target = $region16
        $region15: #{tpu_custom_call.1} parent=11 // pred_region
          _
        $region16: #{tpu_custom_call.1} parent=11 // pred_fallthru
          _
        // Predicated region
        $region17: #{tpu_custom_call.1} parent=11 // pred_check
          %p429 = pneg %p149
        $region18: #{tpu_custom_call.1} parent=11 // pred_check_branch
          %431 = sbr.rel (%p429) target = $region20
        $region19: #{tpu_custom_call.1} parent=11 // pred_region
          _
        $region20: #{tpu_custom_call.1} parent=11 // pred_fallthru
          _
        // Predicated region
        $region21: #{tpu_custom_call.1} parent=11 // pred_check
          %p432 = pneg %p170
        $region22: #{tpu_custom_call.1} parent=11 // pred_check_branch
          %434 = sbr.rel (%p432) target = $region24
        $region23: #{tpu_custom_call.1} parent=11 // pred_region
          _
        $region24: #{tpu_custom_call.1} parent=11 // pred_fallthru
          _
        // Predicated region
        $region25: #{tpu_custom_call.1} parent=11 // pred_check
          %p435 = pneg %p191
        $region26: #{tpu_custom_call.1} parent=11 // pred_check_branch
          %437 = sbr.rel (%p435) target = $region28
        $region27: #{tpu_custom_call.1} parent=11 // pred_region
          _
        $region28: #{tpu_custom_call.1} parent=11 // pred_fallthru
          _
        // Predicated region
        $region29: #{tpu_custom_call.1} parent=11 // pred_check
          %p438 = pneg %p212
        $region30: #{tpu_custom_call.1} parent=11 // pred_check_branch
          %440 = sbr.rel (%p438) target = $region32
        $region31: #{tpu_custom_call.1} parent=11 // pred_region
          _
        $region32: #{tpu_custom_call.1} parent=11 // pred_fallthru
          _
        // Predicated region
        $region33: #{tpu_custom_call.1} parent=11 // pred_check
          %p441 = pneg %p233
        $region34: #{tpu_custom_call.1} parent=11 // pred_check_branch
          %443 = sbr.rel (%p441) target = $region36
        $region35: #{tpu_custom_call.1} parent=11 // pred_region
          _
        $region36: #{tpu_custom_call.1} parent=11 // pred_fallthru
          _
        // Predicated region
        $region37: #{tpu_custom_call.1} parent=11 // pred_check
          %p444 = pneg %p254
        $region38: #{tpu_custom_call.1} parent=11 // pred_check_branch
          %446 = sbr.rel (%p444) target = $region40
        $region39: #{tpu_custom_call.1} parent=11 // pred_region
          _
        $region40: #{tpu_custom_call.1} parent=11 // pred_fallthru
          _
        // Predicated region
        $region41: #{tpu_custom_call.1} parent=11 // pred_check
          %p447 = pneg %p275
        $region42: #{tpu_custom_call.1} parent=11 // pred_check_branch
          %449 = sbr.rel (%p447) target = $region44
        $region43: #{tpu_custom_call.1} parent=11 // pred_region
          _
        $region44: #{tpu_custom_call.1} parent=11 // pred_fallthru
          _
        // Predicated region
        $region45: #{tpu_custom_call.1} parent=11 // pred_check
          %p450 = pneg %p296
        $region46: #{tpu_custom_call.1} parent=11 // pred_check_branch
          %452 = sbr.rel (%p450) target = $region48
        $region47: #{tpu_custom_call.1} parent=11 // pred_region
          _
        $region48: #{tpu_custom_call.1} parent=11 // pred_fallthru
          _
        // Predicated region
        $region49: #{tpu_custom_call.1} parent=11 // pred_check
          %p453 = pneg %p317
        $region50: #{tpu_custom_call.1} parent=11 // pred_check_branch
          %455 = sbr.rel (%p453) target = $region52
        $region51: #{tpu_custom_call.1} parent=11 // pred_region
          _
        $region52: #{tpu_custom_call.1} parent=11 // pred_fallthru
          _
        // Predicated region
        $region53: #{tpu_custom_call.1} parent=11 // pred_check
          %p456 = pneg %p338
        $region54: #{tpu_custom_call.1} parent=11 // pred_check_branch
          %458 = sbr.rel (%p456) target = $region56
        $region55: #{tpu_custom_call.1} parent=11 // pred_region
          _
        $region56: #{tpu_custom_call.1} parent=11 // pred_fallthru
          _
        // Predicated region
        $region57: #{tpu_custom_call.1} parent=11 // pred_check
          %p459 = pneg %p359
        $region58: #{tpu_custom_call.1} parent=11 // pred_check_branch
          %461 = sbr.rel (%p459) target = $region60
        $region59: #{tpu_custom_call.1} parent=11 // pred_region
          _
        $region60: #{tpu_custom_call.1} parent=11 // pred_fallthru
          _
      $region12: #{tpu_custom_call.1} parent=5 // pred_fallthru
        _
      %p462 = scmp.lt.s32.totalorder %s29, 2
      // Predicated region
      $region61: #{tpu_custom_call.1} parent=5 // pred_check
        %p463 = pneg %p462
      $region62: #{tpu_custom_call.1} parent=5 // pred_check_branch
        %465 = sbr.rel (%p463) target = $region64
      $region63: #{tpu_custom_call.1} parent=5 // pred_region
        // Predicated region
        $region65: #{tpu_custom_call.1} parent=63 // pred_check
          %p466 = pneg %p49
        $region66: #{tpu_custom_call.1} parent=63 // pred_check_branch
          %468 = sbr.rel (%p466) target = $region68
        $region67: #{tpu_custom_call.1} parent=63 // pred_region
          %p469 = scmp.lt.s32.totalorder %s29, 1
          %s470 = scalar_select %p469, %s29, 1
          %s471 = smul.addr %s470, 54
          %s472 = smul.addr %s471, 4
          %s473 = scalar_lea.vmem %s0, %s472
        $region68: #{tpu_custom_call.1} parent=63 // pred_fallthru
          _
        // Predicated region
        $region69: #{tpu_custom_call.1} parent=63 // pred_check
          %p474 = pneg %p75
        $region70: #{tpu_custom_call.1} parent=63 // pred_check_branch
          %476 = sbr.rel (%p474) target = $region72
        $region71: #{tpu_custom_call.1} parent=63 // pred_region
          %p477 = scmp.lt.s32.totalorder %s29, 1
          %s478 = scalar_select %p477, %s29, 1
          %s479 = smul.addr %s478, 72
          %s480 = smul.addr %s479, 4
          %s481 = scalar_lea.vmem %s1, %s480
        $region72: #{tpu_custom_call.1} parent=63 // pred_fallthru
          _
        // Predicated region
        $region73: #{tpu_custom_call.1} parent=63 // pred_check
          %p482 = pneg %p101
        $region74: #{tpu_custom_call.1} parent=63 // pred_check_branch
          %484 = sbr.rel (%p482) target = $region76
        $region75: #{tpu_custom_call.1} parent=63 // pred_region
          %p485 = scmp.lt.s32.totalorder %s29, 1
          %s486 = scalar_select %p485, %s29, 1
          %s487 = smul.addr %s486, 6
          %s488 = smul.addr %s487, 4
          %s489 = scalar_lea.vmem %s2, %s488
        $region76: #{tpu_custom_call.1} parent=63 // pred_fallthru
          _
      $region64: #{tpu_custom_call.1} parent=5 // pred_fallthru
        _
      %p490 = scmp.le.s32.totalorder 1, %s29
      %p491 = scmp.lt.s32.totalorder %s29, 3
      %p492 = pnand %p490, %p491
      %p493 = pneg %p492
      // Predicated region
      $region77: #{tpu_custom_call.1} parent=5 // pred_check
        _
      $region78: #{tpu_custom_call.1} parent=5 // pred_check_branch
        %495 = sbr.rel (%p492) target = $region80
      $region79: #{tpu_custom_call.1} parent=5 // pred_region
        %s496 = ssub.s32 %s29, 1
        %p497 = scmp.lt.s32.totalorder %s34, 1
        %s498 = scalar_select %p497, %s34, 1
        %s499 = smul.addr %s498, 54
        %s500 = smul.addr %s499, 4
        %s501 = scalar_lea.vmem %s0, %s500
        %p502 = pneg %p55
        %p503 = pneg %p52
        %p504 = scmp.lt.s32.totalorder %s34, 1
        %s505 = scalar_select %p504, %s34, 1
        %s506 = smul.addr %s505, 72
        %s507 = smul.addr %s506, 4
        %s508 = scalar_lea.vmem %s1, %s507
        %p509 = pneg %p81
        %p510 = pneg %p78
        %p511 = scmp.lt.s32.totalorder %s34, 1
        %s512 = scalar_select %p511, %s34, 1
        %s513 = smul.addr %s512, 6
        %s514 = smul.addr %s513, 4
        %s515 = scalar_lea.vmem %s2, %s514
        %p516 = pneg %p107
        %p517 = pneg %p104
        %p518 = pneg %p128
        %p519 = pneg %p125
        %p520 = pneg %p149
        %p521 = pneg %p146
        %p522 = pneg %p170
        %p523 = pneg %p167
        %p524 = pneg %p191
        %p525 = pneg %p188
        %p526 = pneg %p212
        %p527 = pneg %p209
        %p528 = pneg %p233
        %p529 = pneg %p230
        %p530 = pneg %p254
        %p531 = pneg %p251
        %p532 = pneg %p275
        %p533 = pneg %p272
        %p534 = pneg %p296
        %p535 = pneg %p293
        %p536 = pneg %p317
        %p537 = pneg %p314
        %p538 = pneg %p338
        %p539 = pneg %p335
        %p540 = pneg %p359
        %p541 = pneg %p356
        %p542 = pneg %p385
        %p543 = pneg %p382
        %s544 = sand.u32 %s372, 1
        %s545 = scalar_lea.sflag [#allocation3], %s544
        %s546 = sand.u32 %s372, 1
        %s547 = smul.addr %s546, 256
        %s548 = scalar_lea.vmem [#allocation2], %s547
        %p549 = pneg %p411
        %p550 = pneg %p408
        %s551 = sand.u32 %s398, 1
        %s552 = scalar_lea.sflag [#allocation5], %s551
        %s553 = sand.u32 %s398, 1
        %s554 = smul.addr %s553, 256
        %s555 = scalar_lea.vmem [#allocation4], %s554
        %p556 = scmp.lt.s32.totalorder %s34, 1
        %s557 = scalar_select %p556, %s34, 1
        %s558 = smul.addr %s557, 54
        %s559 = smul.addr %s558, 4
        %s560 = scalar_lea.vmem %s0, %s559
        %p561 = scmp.lt.s32.totalorder %s34, 1
        %s562 = scalar_select %p561, %s34, 1
        %s563 = smul.addr %s562, 72
        %s564 = smul.addr %s563, 4
        %s565 = scalar_lea.vmem %s1, %s564
        %p566 = scmp.lt.s32.totalorder %s34, 1
        %s567 = scalar_select %p566, %s34, 1
        %s568 = smul.addr %s567, 6
        %s569 = smul.addr %s568, 4
        %s570 = scalar_lea.vmem %s2, %s569
        %v572 = vld [vmem:[%s560] sm:$0xf]
        %v573 = vld [vmem:[%s560 + $0x4] sm:$0xf]
        %v574 = vld [vmem:[%s560 + $0x8] sm:$0x1]
        %v575 = vld [vmem:[%s560 + $0xc] sm:$0xf]
        %v576 = vld [vmem:[%s560 + $0x10] sm:$0xf]
        %v577 = vld [vmem:[%s560 + $0x14] sm:$0x1]
        %v578 = vld [vmem:[%s560 + $0x18] sm:$0xf]
        %v579 = vld [vmem:[%s560 + $0x1c] sm:$0xf]
        %v580 = vld [vmem:[%s560 + $0x20] sm:$0x1]
        %v581 = vld [vmem:[%s560 + $0x24] sm:$0xf]
        %v582 = vld [vmem:[%s560 + $0x28] sm:$0xf]
        %v583 = vld [vmem:[%s560 + $0x2c] sm:$0x1]
        %v584 = vld [vmem:[%s560 + $0x30] sm:$0xf]
        %v585 = vld [vmem:[%s560 + $0x34] sm:$0xf]
        %v586 = vld [vmem:[%s560 + $0x38] sm:$0x1]
        %v587 = vld [vmem:[%s560 + $0x3c] sm:$0xf]
        %v588 = vld [vmem:[%s560 + $0x40] sm:$0xf]
        %v589 = vld [vmem:[%s560 + $0x44] sm:$0x1]
        %v590 = vld [vmem:[%s560 + $0x48] sm:$0xf]
        %v591 = vld [vmem:[%s560 + $0x4c] sm:$0xf]
        %v592 = vld [vmem:[%s560 + $0x50] sm:$0x1]
        %v593 = vld [vmem:[%s560 + $0x54] sm:$0xf]
        %v594 = vld [vmem:[%s560 + $0x58] sm:$0xf]
        %v595 = vld [vmem:[%s560 + $0x5c] sm:$0x1]
        %v596 = vld [vmem:[%s560 + $0x60] sm:$0xf]
        %v597 = vld [vmem:[%s560 + $0x64] sm:$0xf]
        %v598 = vld [vmem:[%s560 + $0x68] sm:$0x1]
        %v599 = vld [vmem:[%s560 + $0x6c] sm:$0xf]
        %v600 = vld [vmem:[%s560 + $0x70] sm:$0xf]
        %v601 = vld [vmem:[%s560 + $0x74] sm:$0x1]
        %v602 = vld [vmem:[%s560 + $0x78] sm:$0xf]
        %v603 = vld [vmem:[%s560 + $0x7c] sm:$0xf]
        %v604 = vld [vmem:[%s560 + $0x80] sm:$0x1]
        %v605 = vld [vmem:[%s560 + $0x84] sm:$0xf]
        %v606 = vld [vmem:[%s560 + $0x88] sm:$0xf]
        %v607 = vld [vmem:[%s560 + $0x8c] sm:$0x1]
        %v608 = vld [vmem:[%s560 + $0x90] sm:$0xf]
        %v609 = vld [vmem:[%s560 + $0x94] sm:$0xf]
        %v610 = vld [vmem:[%s560 + $0x98] sm:$0x1]
        %v611 = vld [vmem:[%s560 + $0x9c] sm:$0xf]
        %v612 = vld [vmem:[%s560 + $0xa0] sm:$0xf]
        %v613 = vld [vmem:[%s560 + $0xa4] sm:$0x1]
        %v614 = vld [vmem:[%s560 + $0xa8] sm:$0xf]
        %v615 = vld [vmem:[%s560 + $0xac] sm:$0xf]
        %v616 = vld [vmem:[%s560 + $0xb0] sm:$0x1]
        %v617 = vld [vmem:[%s560 + $0xb4] sm:$0xf]
        %v618 = vld [vmem:[%s560 + $0xb8] sm:$0xf]
        %v619 = vld [vmem:[%s560 + $0xbc] sm:$0x1]
        %v620 = vld [vmem:[%s560 + $0xc0] sm:$0xf]
        %v621 = vld [vmem:[%s560 + $0xc4] sm:$0xf]
        %v622 = vld [vmem:[%s560 + $0xc8] sm:$0x1]
        %v623 = vld [vmem:[%s560 + $0xcc] sm:$0xf]
        %v624 = vld [vmem:[%s560 + $0xd0] sm:$0xf]
        %v625 = vld [vmem:[%s560 + $0xd4] sm:$0x1]
        %v626 = vld [vmem:[%s3] sm:$0x1]
        %v627 = vunpack.c.l.bf16 %v572
        %v628 = vunpack.c.l.bf16 %v573
        %v629 = vunpack.c.l.bf16 %v575
        %v630 = vunpack.c.l.bf16 %v576
        %v631 = vunpack.c.l.bf16 %v578
        %v632 = vunpack.c.l.bf16 %v579
        %v633 = vunpack.c.l.bf16 %v581
        %v634 = vunpack.c.l.bf16 %v582
        %v635 = vunpack.c.l.bf16 %v584
        %v636 = vunpack.c.l.bf16 %v585
        %v637 = vunpack.c.l.bf16 %v587
        %v638 = vunpack.c.l.bf16 %v588
        %v639 = vunpack.c.l.bf16 %v590
        %v640 = vunpack.c.l.bf16 %v591
        %v641 = vunpack.c.l.bf16 %v593
        %v642 = vunpack.c.l.bf16 %v594
        %v643 = vunpack.c.l.bf16 %v596
        %v644 = vunpack.c.l.bf16 %v597
        %v645 = vunpack.c.l.bf16 %v599
        %v646 = vunpack.c.l.bf16 %v600
        %v647 = vunpack.c.l.bf16 %v602
        %v648 = vunpack.c.l.bf16 %v603
        %v649 = vunpack.c.l.bf16 %v605
        %v650 = vunpack.c.l.bf16 %v606
        %v651 = vunpack.c.l.bf16 %v608
        %v652 = vunpack.c.l.bf16 %v609
        %v653 = vunpack.c.l.bf16 %v611
        %v654 = vunpack.c.l.bf16 %v612
        %v655 = vunpack.c.l.bf16 %v614
        %v656 = vunpack.c.l.bf16 %v615
        %v657 = vunpack.c.l.bf16 %v617
        %v658 = vunpack.c.l.bf16 %v618
        %v659 = vlaneseq
        %v660 = vshrl.u32 %v659, 7
        %v661 = vsub.s32 0, %v660
        %v662 = vrot.slane %v626, %v661
        %v663 = vmul.f32 %v627, %v662
        %v664 = vmul.f32 %v628, %v662
        %v665 = vmul.f32 %v629, %v662
        %v666 = vmul.f32 %v630, %v662
        %v667 = vmul.f32 %v631, %v662
        %v668 = vmul.f32 %v632, %v662
        %v669 = vmul.f32 %v633, %v662
        %v670 = vmul.f32 %v634, %v662
        %v671 = vmul.f32 %v635, %v662
        %v672 = vmul.f32 %v636, %v662
        %v673 = vmul.f32 %v637, %v662
        %v674 = vmul.f32 %v638, %v662
        %v675 = vmul.f32 %v639, %v662
        %v676 = vmul.f32 %v640, %v662
        %v677 = vmul.f32 %v641, %v662
        %v678 = vmul.f32 %v642, %v662
        %v679 = vmul.f32 %v643, %v662
        %v680 = vmul.f32 %v644, %v662
        %v681 = vmul.f32 %v645, %v662
        %v682 = vmul.f32 %v646, %v662
        %v683 = vmul.f32 %v647, %v662
        %v684 = vmul.f32 %v648, %v662
        %v685 = vmul.f32 %v649, %v662
        %v686 = vmul.f32 %v650, %v662
        %v687 = vmul.f32 %v651, %v662
        %v688 = vmul.f32 %v652, %v662
        %v689 = vmul.f32 %v653, %v662
        %v690 = vmul.f32 %v654, %v662
        %v691 = vmul.f32 %v655, %v662
        %v692 = vmul.f32 %v656, %v662
        %v693 = vmul.f32 %v657, %v662
        %v694 = vmul.f32 %v658, %v662
        %v695 = vld [vmem:[%s3 + $0x1] sm:$0x1]
        %v696 = vunpack.c.l.bf16 %v574
        %v697 = vunpack.c.l.bf16 %v577
        %v698 = vunpack.c.l.bf16 %v580
        %v699 = vunpack.c.l.bf16 %v583
        %v700 = vunpack.c.l.bf16 %v586
        %v701 = vunpack.c.l.bf16 %v589
        %v702 = vunpack.c.l.bf16 %v592
        %v703 = vunpack.c.l.bf16 %v595
        %v704 = vunpack.c.l.bf16 %v598
        %v705 = vunpack.c.l.bf16 %v601
        %v706 = vunpack.c.l.bf16 %v604
        %v707 = vunpack.c.l.bf16 %v607
        %v708 = vunpack.c.l.bf16 %v610
        %v709 = vunpack.c.l.bf16 %v613
        %v710 = vunpack.c.l.bf16 %v616
        %v711 = vunpack.c.l.bf16 %v619
        %v712 = vlaneseq
        %v713 = vshrl.u32 %v712, 7
        %v714 = vsub.s32 0, %v713
        %v715 = vrot.slane %v695, %v714
        %v716 = vmul.f32 %v627, %v715
        %v717 = vmul.f32 %v628, %v715
        %v718 = vmul.f32 %v696, %v715
        %v719 = vmul.f32 %v629, %v715
        %v720 = vmul.f32 %v630, %v715
        %v721 = vmul.f32 %v697, %v715
        %v722 = vmul.f32 %v631, %v715
        %v723 = vmul.f32 %v632, %v715
        %v724 = vmul.f32 %v698, %v715
        %v725 = vmul.f32 %v633, %v715
        %v726 = vmul.f32 %v634, %v715
        %v727 = vmul.f32 %v699, %v715
        %v728 = vmul.f32 %v635, %v715
        %v729 = vmul.f32 %v636, %v715
        %v730 = vmul.f32 %v700, %v715
        %v731 = vmul.f32 %v637, %v715
        %v732 = vmul.f32 %v638, %v715
        %v733 = vmul.f32 %v701, %v715
        %v734 = vmul.f32 %v639, %v715
        %v735 = vmul.f32 %v640, %v715
        %v736 = vmul.f32 %v702, %v715
        %v737 = vmul.f32 %v641, %v715
        %v738 = vmul.f32 %v642, %v715
        %v739 = vmul.f32 %v703, %v715
        %v740 = vmul.f32 %v643, %v715
        %v741 = vmul.f32 %v644, %v715
        %v742 = vmul.f32 %v704, %v715
        %v743 = vmul.f32 %v645, %v715
        %v744 = vmul.f32 %v646, %v715
        %v745 = vmul.f32 %v705, %v715
        %v746 = vmul.f32 %v647, %v715
        %v747 = vmul.f32 %v648, %v715
        %v748 = vmul.f32 %v706, %v715
        %v749 = vmul.f32 %v649, %v715
        %v750 = vmul.f32 %v650, %v715
        %v751 = vmul.f32 %v707, %v715
        %v752 = vmul.f32 %v651, %v715
        %v753 = vmul.f32 %v652, %v715
        %v754 = vmul.f32 %v708, %v715
        %v755 = vmul.f32 %v653, %v715
        %v756 = vmul.f32 %v654, %v715
        %v757 = vmul.f32 %v709, %v715
        %v758 = vmul.f32 %v655, %v715
        %v759 = vmul.f32 %v656, %v715
        %v760 = vmul.f32 %v710, %v715
        %v761 = vmul.f32 %v657, %v715
        %v762 = vmul.f32 %v658, %v715
        %v763 = vmul.f32 %v711, %v715
        %vm812 = vcmask 1046528
        %v813 = vrot.slane %v716, 1
        %v814 = vrot.slane %v717, 1
        %v815 = vsel %vm812, %v813, %v814
        %v816 = vrot.slane %v718, 1
        %v817 = vsel %vm812, %v814, %v816
        %v818 = vrot.slane %v719, 1
        %v819 = vrot.slane %v720, 1
        %v820 = vsel %vm812, %v818, %v819
        %v821 = vrot.slane %v721, 1
        %v822 = vsel %vm812, %v819, %v821
        %v823 = vrot.slane %v722, 1
        %v824 = vrot.slane %v723, 1
        %v825 = vsel %vm812, %v823, %v824
        %v826 = vrot.slane %v724, 1
        %v827 = vsel %vm812, %v824, %v826
        %v828 = vrot.slane %v725, 1
        %v829 = vrot.slane %v726, 1
        %v830 = vsel %vm812, %v828, %v829
        %v831 = vrot.slane %v727, 1
        %v832 = vsel %vm812, %v829, %v831
        %v833 = vrot.slane %v728, 1
        %v834 = vrot.slane %v729, 1
        %v835 = vsel %vm812, %v833, %v834
        %v836 = vrot.slane %v730, 1
        %v837 = vsel %vm812, %v834, %v836
        %v838 = vrot.slane %v731, 1
        %v839 = vrot.slane %v732, 1
        %v840 = vsel %vm812, %v838, %v839
        %v841 = vrot.slane %v733, 1
        %v842 = vsel %vm812, %v839, %v841
        %v843 = vrot.slane %v734, 1
        %v844 = vrot.slane %v735, 1
        %v845 = vsel %vm812, %v843, %v844
        %v846 = vrot.slane %v736, 1
        %v847 = vsel %vm812, %v844, %v846
        %v848 = vrot.slane %v737, 1
        %v849 = vrot.slane %v738, 1
        %v850 = vsel %vm812, %v848, %v849
        %v851 = vrot.slane %v739, 1
        %v852 = vsel %vm812, %v849, %v851
        %v853 = vrot.slane %v740, 1
        %v854 = vrot.slane %v741, 1
        %v855 = vsel %vm812, %v853, %v854
        %v856 = vrot.slane %v742, 1
        %v857 = vsel %vm812, %v854, %v856
        %v858 = vrot.slane %v743, 1
        %v859 = vrot.slane %v744, 1
        %v860 = vsel %vm812, %v858, %v859
        %v861 = vrot.slane %v745, 1
        %v862 = vsel %vm812, %v859, %v861
        %v863 = vrot.slane %v746, 1
        %v864 = vrot.slane %v747, 1
        %v865 = vsel %vm812, %v863, %v864
        %v866 = vrot.slane %v748, 1
        %v867 = vsel %vm812, %v864, %v866
        %v868 = vrot.slane %v749, 1
        %v869 = vrot.slane %v750, 1
        %v870 = vsel %vm812, %v868, %v869
        %v871 = vrot.slane %v751, 1
        %v872 = vsel %vm812, %v869, %v871
        %v873 = vrot.slane %v752, 1
        %v874 = vrot.slane %v753, 1
        %v875 = vsel %vm812, %v873, %v874
        %v876 = vrot.slane %v754, 1
        %v877 = vsel %vm812, %v874, %v876
        %v878 = vrot.slane %v755, 1
        %v879 = vrot.slane %v756, 1
        %v880 = vsel %vm812, %v878, %v879
        %v881 = vrot.slane %v757, 1
        %v882 = vsel %vm812, %v879, %v881
        %v883 = vrot.slane %v758, 1
        %v884 = vrot.slane %v759, 1
        %v885 = vsel %vm812, %v883, %v884
        %v886 = vrot.slane %v760, 1
        %v887 = vsel %vm812, %v884, %v886
        %v888 = vrot.slane %v761, 1
        %v889 = vrot.slane %v762, 1
        %v890 = vsel %vm812, %v888, %v889
        %v891 = vrot.slane %v763, 1
        %v892 = vsel %vm812, %v889, %v891
        %v925 = vadd.f32 %v663, %v815
        %v926 = vadd.f32 %v664, %v817
        %v927 = vadd.f32 %v665, %v820
        %v928 = vadd.f32 %v666, %v822
        %v929 = vadd.f32 %v667, %v825
        %v930 = vadd.f32 %v668, %v827
        %v931 = vadd.f32 %v669, %v830
        %v932 = vadd.f32 %v670, %v832
        %v933 = vadd.f32 %v671, %v835
        %v934 = vadd.f32 %v672, %v837
        %v935 = vadd.f32 %v673, %v840
        %v936 = vadd.f32 %v674, %v842
        %v937 = vadd.f32 %v675, %v845
        %v938 = vadd.f32 %v676, %v847
        %v939 = vadd.f32 %v677, %v850
        %v940 = vadd.f32 %v678, %v852
        %v941 = vadd.f32 %v679, %v855
        %v942 = vadd.f32 %v680, %v857
        %v943 = vadd.f32 %v681, %v860
        %v944 = vadd.f32 %v682, %v862
        %v945 = vadd.f32 %v683, %v865
        %v946 = vadd.f32 %v684, %v867
        %v947 = vadd.f32 %v685, %v870
        %v948 = vadd.f32 %v686, %v872
        %v949 = vadd.f32 %v687, %v875
        %v950 = vadd.f32 %v688, %v877
        %v951 = vadd.f32 %v689, %v880
        %v952 = vadd.f32 %v690, %v882
        %v953 = vadd.f32 %v691, %v885
        %v954 = vadd.f32 %v692, %v887
        %v955 = vadd.f32 %v693, %v890
        %v956 = vadd.f32 %v694, %v892
        %v957 = vld [vmem:[%s3 + $0x2] sm:$0x1]
        %v958 = vlaneseq
        %v959 = vshrl.u32 %v958, 7
        %v960 = vsub.s32 0, %v959
        %v961 = vrot.slane %v957, %v960
        %v962 = vmul.f32 %v627, %v961
        %v963 = vmul.f32 %v628, %v961
        %v964 = vmul.f32 %v696, %v961
        %v965 = vmul.f32 %v629, %v961
        %v966 = vmul.f32 %v630, %v961
        %v967 = vmul.f32 %v697, %v961
        %v968 = vmul.f32 %v631, %v961
        %v969 = vmul.f32 %v632, %v961
        %v970 = vmul.f32 %v698, %v961
        %v971 = vmul.f32 %v633, %v961
        %v972 = vmul.f32 %v634, %v961
        %v973 = vmul.f32 %v699, %v961
        %v974 = vmul.f32 %v635, %v961
        %v975 = vmul.f32 %v636, %v961
        %v976 = vmul.f32 %v700, %v961
        %v977 = vmul.f32 %v637, %v961
        %v978 = vmul.f32 %v638, %v961
        %v979 = vmul.f32 %v701, %v961
        %v980 = vmul.f32 %v639, %v961
        %v981 = vmul.f32 %v640, %v961
        %v982 = vmul.f32 %v702, %v961
        %v983 = vmul.f32 %v641, %v961
        %v984 = vmul.f32 %v642, %v961
        %v985 = vmul.f32 %v703, %v961
        %v986 = vmul.f32 %v643, %v961
        %v987 = vmul.f32 %v644, %v961
        %v988 = vmul.f32 %v704, %v961
        %v989 = vmul.f32 %v645, %v961
        %v990 = vmul.f32 %v646, %v961
        %v991 = vmul.f32 %v705, %v961
        %v992 = vmul.f32 %v647, %v961
        %v993 = vmul.f32 %v648, %v961
        %v994 = vmul.f32 %v706, %v961
        %v995 = vmul.f32 %v649, %v961
        %v996 = vmul.f32 %v650, %v961
        %v997 = vmul.f32 %v707, %v961
        %v998 = vmul.f32 %v651, %v961
        %v999 = vmul.f32 %v652, %v961
        %v1000 = vmul.f32 %v708, %v961
        %v1001 = vmul.f32 %v653, %v961
        %v1002 = vmul.f32 %v654, %v961
        %v1003 = vmul.f32 %v709, %v961
        %v1004 = vmul.f32 %v655, %v961
        %v1005 = vmul.f32 %v656, %v961
        %v1006 = vmul.f32 %v710, %v961
        %v1007 = vmul.f32 %v657, %v961
        %v1008 = vmul.f32 %v658, %v961
        %v1009 = vmul.f32 %v711, %v961
        %vm1058 = vcmask 1045504
        %v1059 = vrot.slane %v962, 2
        %v1060 = vrot.slane %v963, 2
        %v1061 = vsel %vm1058, %v1059, %v1060
        %v1062 = vrot.slane %v964, 2
        %v1063 = vsel %vm1058, %v1060, %v1062
        %v1064 = vrot.slane %v965, 2
        %v1065 = vrot.slane %v966, 2
        %v1066 = vsel %vm1058, %v1064, %v1065
        %v1067 = vrot.slane %v967, 2
        %v1068 = vsel %vm1058, %v1065, %v1067
        %v1069 = vrot.slane %v968, 2
        %v1070 = vrot.slane %v969, 2
        %v1071 = vsel %vm1058, %v1069, %v1070
        %v1072 = vrot.slane %v970, 2
        %v1073 = vsel %vm1058, %v1070, %v1072
        %v1074 = vrot.slane %v971, 2
        %v1075 = vrot.slane %v972, 2
        %v1076 = vsel %vm1058, %v1074, %v1075
        %v1077 = vrot.slane %v973, 2
        %v1078 = vsel %vm1058, %v1075, %v1077
        %v1079 = vrot.slane %v974, 2
        %v1080 = vrot.slane %v975, 2
        %v1081 = vsel %vm1058, %v1079, %v1080
        %v1082 = vrot.slane %v976, 2
        %v1083 = vsel %vm1058, %v1080, %v1082
        %v1084 = vrot.slane %v977, 2
        %v1085 = vrot.slane %v978, 2
        %v1086 = vsel %vm1058, %v1084, %v1085
        %v1087 = vrot.slane %v979, 2
        %v1088 = vsel %vm1058, %v1085, %v1087
        %v1089 = vrot.slane %v980, 2
        %v1090 = vrot.slane %v981, 2
        %v1091 = vsel %vm1058, %v1089, %v1090
        %v1092 = vrot.slane %v982, 2
        %v1093 = vsel %vm1058, %v1090, %v1092
        %v1094 = vrot.slane %v983, 2
        %v1095 = vrot.slane %v984, 2
        %v1096 = vsel %vm1058, %v1094, %v1095
        %v1097 = vrot.slane %v985, 2
        %v1098 = vsel %vm1058, %v1095, %v1097
        %v1099 = vrot.slane %v986, 2
        %v1100 = vrot.slane %v987, 2
        %v1101 = vsel %vm1058, %v1099, %v1100
        %v1102 = vrot.slane %v988, 2
        %v1103 = vsel %vm1058, %v1100, %v1102
        %v1104 = vrot.slane %v989, 2
        %v1105 = vrot.slane %v990, 2
        %v1106 = vsel %vm1058, %v1104, %v1105
        %v1107 = vrot.slane %v991, 2
        %v1108 = vsel %vm1058, %v1105, %v1107
        %v1109 = vrot.slane %v992, 2
        %v1110 = vrot.slane %v993, 2
        %v1111 = vsel %vm1058, %v1109, %v1110
        %v1112 = vrot.slane %v994, 2
        %v1113 = vsel %vm1058, %v1110, %v1112
        %v1114 = vrot.slane %v995, 2
        %v1115 = vrot.slane %v996, 2
        %v1116 = vsel %vm1058, %v1114, %v1115
        %v1117 = vrot.slane %v997, 2
        %v1118 = vsel %vm1058, %v1115, %v1117
        %v1119 = vrot.slane %v998, 2
        %v1120 = vrot.slane %v999, 2
        %v1121 = vsel %vm1058, %v1119, %v1120
        %v1122 = vrot.slane %v1000, 2
        %v1123 = vsel %vm1058, %v1120, %v1122
        %v1124 = vrot.slane %v1001, 2
        %v1125 = vrot.slane %v1002, 2
        %v1126 = vsel %vm1058, %v1124, %v1125
        %v1127 = vrot.slane %v1003, 2
        %v1128 = vsel %vm1058, %v1125, %v1127
        %v1129 = vrot.slane %v1004, 2
        %v1130 = vrot.slane %v1005, 2
        %v1131 = vsel %vm1058, %v1129, %v1130
        %v1132 = vrot.slane %v1006, 2
        %v1133 = vsel %vm1058, %v1130, %v1132
        %v1134 = vrot.slane %v1007, 2
        %v1135 = vrot.slane %v1008, 2
        %v1136 = vsel %vm1058, %v1134, %v1135
        %v1137 = vrot.slane %v1009, 2
        %v1138 = vsel %vm1058, %v1135, %v1137
        %v1171 = vadd.f32 %v925, %v1061
        %v1172 = vadd.f32 %v926, %v1063
        %v1173 = vadd.f32 %v927, %v1066
        %v1174 = vadd.f32 %v928, %v1068
        %v1175 = vadd.f32 %v929, %v1071
        %v1176 = vadd.f32 %v930, %v1073
        %v1177 = vadd.f32 %v931, %v1076
        %v1178 = vadd.f32 %v932, %v1078
        %v1179 = vadd.f32 %v933, %v1081
        %v1180 = vadd.f32 %v934, %v1083
        %v1181 = vadd.f32 %v935, %v1086
        %v1182 = vadd.f32 %v936, %v1088
        %v1183 = vadd.f32 %v937, %v1091
        %v1184 = vadd.f32 %v938, %v1093
        %v1185 = vadd.f32 %v939, %v1096
        %v1186 = vadd.f32 %v940, %v1098
        %v1187 = vadd.f32 %v941, %v1101
        %v1188 = vadd.f32 %v942, %v1103
        %v1189 = vadd.f32 %v943, %v1106
        %v1190 = vadd.f32 %v944, %v1108
        %v1191 = vadd.f32 %v945, %v1111
        %v1192 = vadd.f32 %v946, %v1113
        %v1193 = vadd.f32 %v947, %v1116
        %v1194 = vadd.f32 %v948, %v1118
        %v1195 = vadd.f32 %v949, %v1121
        %v1196 = vadd.f32 %v950, %v1123
        %v1197 = vadd.f32 %v951, %v1126
        %v1198 = vadd.f32 %v952, %v1128
        %v1199 = vadd.f32 %v953, %v1131
        %v1200 = vadd.f32 %v954, %v1133
        %v1201 = vadd.f32 %v955, %v1136
        %v1202 = vadd.f32 %v956, %v1138
        %v1203 = vld [vmem:[%s3 + $0x3] sm:$0x1]
        %v1204 = vunpack.c.l.bf16 %v620
        %v1205 = vunpack.c.l.bf16 %v621
        %v1206 = vlaneseq
        %v1207 = vshrl.u32 %v1206, 7
        %v1208 = vsub.s32 0, %v1207
        %v1209 = vrot.slane %v1203, %v1208
        %v1210 = vmul.f32 %v629, %v1209
        %v1211 = vmul.f32 %v630, %v1209
        %v1212 = vmul.f32 %v631, %v1209
        %v1213 = vmul.f32 %v632, %v1209
        %v1214 = vmul.f32 %v633, %v1209
        %v1215 = vmul.f32 %v634, %v1209
        %v1216 = vmul.f32 %v635, %v1209
        %v1217 = vmul.f32 %v636, %v1209
        %v1218 = vmul.f32 %v637, %v1209
        %v1219 = vmul.f32 %v638, %v1209
        %v1220 = vmul.f32 %v639, %v1209
        %v1221 = vmul.f32 %v640, %v1209
        %v1222 = vmul.f32 %v641, %v1209
        %v1223 = vmul.f32 %v642, %v1209
        %v1224 = vmul.f32 %v643, %v1209
        %v1225 = vmul.f32 %v644, %v1209
        %v1226 = vmul.f32 %v645, %v1209
        %v1227 = vmul.f32 %v646, %v1209
        %v1228 = vmul.f32 %v647, %v1209
        %v1229 = vmul.f32 %v648, %v1209
        %v1230 = vmul.f32 %v649, %v1209
        %v1231 = vmul.f32 %v650, %v1209
        %v1232 = vmul.f32 %v651, %v1209
        %v1233 = vmul.f32 %v652, %v1209
        %v1234 = vmul.f32 %v653, %v1209
        %v1235 = vmul.f32 %v654, %v1209
        %v1236 = vmul.f32 %v655, %v1209
        %v1237 = vmul.f32 %v656, %v1209
        %v1238 = vmul.f32 %v657, %v1209
        %v1239 = vmul.f32 %v658, %v1209
        %v1240 = vmul.f32 %v1204, %v1209
        %v1241 = vmul.f32 %v1205, %v1209
        %v1242 = vadd.f32 %v1171, %v1210
        %v1243 = vadd.f32 %v1172, %v1211
        %v1244 = vadd.f32 %v1173, %v1212
        %v1245 = vadd.f32 %v1174, %v1213
        %v1246 = vadd.f32 %v1175, %v1214
        %v1247 = vadd.f32 %v1176, %v1215
        %v1248 = vadd.f32 %v1177, %v1216
        %v1249 = vadd.f32 %v1178, %v1217
        %v1250 = vadd.f32 %v1179, %v1218
        %v1251 = vadd.f32 %v1180, %v1219
        %v1252 = vadd.f32 %v1181, %v1220
        %v1253 = vadd.f32 %v1182, %v1221
        %v1254 = vadd.f32 %v1183, %v1222
        %v1255 = vadd.f32 %v1184, %v1223
        %v1256 = vadd.f32 %v1185, %v1224
        %v1257 = vadd.f32 %v1186, %v1225
        %v1258 = vadd.f32 %v1187, %v1226
        %v1259 = vadd.f32 %v1188, %v1227
        %v1260 = vadd.f32 %v1189, %v1228
        %v1261 = vadd.f32 %v1190, %v1229
        %v1262 = vadd.f32 %v1191, %v1230
        %v1263 = vadd.f32 %v1192, %v1231
        %v1264 = vadd.f32 %v1193, %v1232
        %v1265 = vadd.f32 %v1194, %v1233
        %v1266 = vadd.f32 %v1195, %v1234
        %v1267 = vadd.f32 %v1196, %v1235
        %v1268 = vadd.f32 %v1197, %v1236
        %v1269 = vadd.f32 %v1198, %v1237
        %v1270 = vadd.f32 %v1199, %v1238
        %v1271 = vadd.f32 %v1200, %v1239
        %v1272 = vadd.f32 %v1201, %v1240
        %v1273 = vadd.f32 %v1202, %v1241
        %v1274 = vld [vmem:[%s3 + $0x4] sm:$0x1]
        %v1275 = vunpack.c.l.bf16 %v622
        %v1276 = vlaneseq
        %v1277 = vshrl.u32 %v1276, 7
        %v1278 = vsub.s32 0, %v1277
        %v1279 = vrot.slane %v1274, %v1278
        %v1280 = vmul.f32 %v629, %v1279
        %v1281 = vmul.f32 %v630, %v1279
        %v1282 = vmul.f32 %v697, %v1279
        %v1283 = vmul.f32 %v631, %v1279
        %v1284 = vmul.f32 %v632, %v1279
        %v1285 = vmul.f32 %v698, %v1279
        %v1286 = vmul.f32 %v633, %v1279
        %v1287 = vmul.f32 %v634, %v1279
        %v1288 = vmul.f32 %v699, %v1279
        %v1289 = vmul.f32 %v635, %v1279
        %v1290 = vmul.f32 %v636, %v1279
        %v1291 = vmul.f32 %v700, %v1279
        %v1292 = vmul.f32 %v637, %v1279
        %v1293 = vmul.f32 %v638, %v1279
        %v1294 = vmul.f32 %v701, %v1279
        %v1295 = vmul.f32 %v639, %v1279
        %v1296 = vmul.f32 %v640, %v1279
        %v1297 = vmul.f32 %v702, %v1279
        %v1298 = vmul.f32 %v641, %v1279
        %v1299 = vmul.f32 %v642, %v1279
        %v1300 = vmul.f32 %v703, %v1279
        %v1301 = vmul.f32 %v643, %v1279
        %v1302 = vmul.f32 %v644, %v1279
        %v1303 = vmul.f32 %v704, %v1279
        %v1304 = vmul.f32 %v645, %v1279
        %v1305 = vmul.f32 %v646, %v1279
        %v1306 = vmul.f32 %v705, %v1279
        %v1307 = vmul.f32 %v647, %v1279
        %v1308 = vmul.f32 %v648, %v1279
        %v1309 = vmul.f32 %v706, %v1279
        %v1310 = vmul.f32 %v649, %v1279
        %v1311 = vmul.f32 %v650, %v1279
        %v1312 = vmul.f32 %v707, %v1279
        %v1313 = vmul.f32 %v651, %v1279
        %v1314 = vmul.f32 %v652, %v1279
        %v1315 = vmul.f32 %v708, %v1279
        %v1316 = vmul.f32 %v653, %v1279
        %v1317 = vmul.f32 %v654, %v1279
        %v1318 = vmul.f32 %v709, %v1279
        %v1319 = vmul.f32 %v655, %v1279
        %v1320 = vmul.f32 %v656, %v1279
        %v1321 = vmul.f32 %v710, %v1279
        %v1322 = vmul.f32 %v657, %v1279
        %v1323 = vmul.f32 %v658, %v1279
        %v1324 = vmul.f32 %v711, %v1279
        %v1325 = vmul.f32 %v1204, %v1279
        %v1326 = vmul.f32 %v1205, %v1279
        %v1327 = vmul.f32 %v1275, %v1279
        %v1376 = vrot.slane %v1280, 1
        %v1377 = vrot.slane %v1281, 1
        %v1378 = vsel %vm812, %v1376, %v1377
        %v1379 = vrot.slane %v1282, 1
        %v1380 = vsel %vm812, %v1377, %v1379
        %v1381 = vrot.slane %v1283, 1
        %v1382 = vrot.slane %v1284, 1
        %v1383 = vsel %vm812, %v1381, %v1382
        %v1384 = vrot.slane %v1285, 1
        %v1385 = vsel %vm812, %v1382, %v1384
        %v1386 = vrot.slane %v1286, 1
        %v1387 = vrot.slane %v1287, 1
        %v1388 = vsel %vm812, %v1386, %v1387
        %v1389 = vrot.slane %v1288, 1
        %v1390 = vsel %vm812, %v1387, %v1389
        %v1391 = vrot.slane %v1289, 1
        %v1392 = vrot.slane %v1290, 1
        %v1393 = vsel %vm812, %v1391, %v1392
        %v1394 = vrot.slane %v1291, 1
        %v1395 = vsel %vm812, %v1392, %v1394
        %v1396 = vrot.slane %v1292, 1
        %v1397 = vrot.slane %v1293, 1
        %v1398 = vsel %vm812, %v1396, %v1397
        %v1399 = vrot.slane %v1294, 1
        %v1400 = vsel %vm812, %v1397, %v1399
        %v1401 = vrot.slane %v1295, 1
        %v1402 = vrot.slane %v1296, 1
        %v1403 = vsel %vm812, %v1401, %v1402
        %v1404 = vrot.slane %v1297, 1
        %v1405 = vsel %vm812, %v1402, %v1404
        %v1406 = vrot.slane %v1298, 1
        %v1407 = vrot.slane %v1299, 1
        %v1408 = vsel %vm812, %v1406, %v1407
        %v1409 = vrot.slane %v1300, 1
        %v1410 = vsel %vm812, %v1407, %v1409
        %v1411 = vrot.slane %v1301, 1
        %v1412 = vrot.slane %v1302, 1
        %v1413 = vsel %vm812, %v1411, %v1412
        %v1414 = vrot.slane %v1303, 1
        %v1415 = vsel %vm812, %v1412, %v1414
        %v1416 = vrot.slane %v1304, 1
        %v1417 = vrot.slane %v1305, 1
        %v1418 = vsel %vm812, %v1416, %v1417
        %v1419 = vrot.slane %v1306, 1
        %v1420 = vsel %vm812, %v1417, %v1419
        %v1421 = vrot.slane %v1307, 1
        %v1422 = vrot.slane %v1308, 1
        %v1423 = vsel %vm812, %v1421, %v1422
        %v1424 = vrot.slane %v1309, 1
        %v1425 = vsel %vm812, %v1422, %v1424
        %v1426 = vrot.slane %v1310, 1
        %v1427 = vrot.slane %v1311, 1
        %v1428 = vsel %vm812, %v1426, %v1427
        %v1429 = vrot.slane %v1312, 1
        %v1430 = vsel %vm812, %v1427, %v1429
        %v1431 = vrot.slane %v1313, 1
        %v1432 = vrot.slane %v1314, 1
        %v1433 = vsel %vm812, %v1431, %v1432
        %v1434 = vrot.slane %v1315, 1
        %v1435 = vsel %vm812, %v1432, %v1434
        %v1436 = vrot.slane %v1316, 1
        %v1437 = vrot.slane %v1317, 1
        %v1438 = vsel %vm812, %v1436, %v1437
        %v1439 = vrot.slane %v1318, 1
        %v1440 = vsel %vm812, %v1437, %v1439
        %v1441 = vrot.slane %v1319, 1
        %v1442 = vrot.slane %v1320, 1
        %v1443 = vsel %vm812, %v1441, %v1442
        %v1444 = vrot.slane %v1321, 1
        %v1445 = vsel %vm812, %v1442, %v1444
        %v1446 = vrot.slane %v1322, 1
        %v1447 = vrot.slane %v1323, 1
        %v1448 = vsel %vm812, %v1446, %v1447
        %v1449 = vrot.slane %v1324, 1
        %v1450 = vsel %vm812, %v1447, %v1449
        %v1451 = vrot.slane %v1325, 1
        %v1452 = vrot.slane %v1326, 1
        %v1453 = vsel %vm812, %v1451, %v1452
        %v1454 = vrot.slane %v1327, 1
        %v1455 = vsel %vm812, %v1452, %v1454
        %v1488 = vadd.f32 %v1242, %v1378
        %v1489 = vadd.f32 %v1243, %v1380
        %v1490 = vadd.f32 %v1244, %v1383
        %v1491 = vadd.f32 %v1245, %v1385
        %v1492 = vadd.f32 %v1246, %v1388
        %v1493 = vadd.f32 %v1247, %v1390
        %v1494 = vadd.f32 %v1248, %v1393
        %v1495 = vadd.f32 %v1249, %v1395
        %v1496 = vadd.f32 %v1250, %v1398
        %v1497 = vadd.f32 %v1251, %v1400
        %v1498 = vadd.f32 %v1252, %v1403
        %v1499 = vadd.f32 %v1253, %v1405
        %v1500 = vadd.f32 %v1254, %v1408
        %v1501 = vadd.f32 %v1255, %v1410
        %v1502 = vadd.f32 %v1256, %v1413
        %v1503 = vadd.f32 %v1257, %v1415
        %v1504 = vadd.f32 %v1258, %v1418
        %v1505 = vadd.f32 %v1259, %v1420
        %v1506 = vadd.f32 %v1260, %v1423
        %v1507 = vadd.f32 %v1261, %v1425
        %v1508 = vadd.f32 %v1262, %v1428
        %v1509 = vadd.f32 %v1263, %v1430
        %v1510 = vadd.f32 %v1264, %v1433
        %v1511 = vadd.f32 %v1265, %v1435
        %v1512 = vadd.f32 %v1266, %v1438
        %v1513 = vadd.f32 %v1267, %v1440
        %v1514 = vadd.f32 %v1268, %v1443
        %v1515 = vadd.f32 %v1269, %v1445
        %v1516 = vadd.f32 %v1270, %v1448
        %v1517 = vadd.f32 %v1271, %v1450
        %v1518 = vadd.f32 %v1272, %v1453
        %v1519 = vadd.f32 %v1273, %v1455
        %v1520 = vld [vmem:[%s3 + $0x5] sm:$0x1]
        %v1521 = vlaneseq
        %v1522 = vshrl.u32 %v1521, 7
        %v1523 = vsub.s32 0, %v1522
        %v1524 = vrot.slane %v1520, %v1523
        %v1525 = vmul.f32 %v629, %v1524
        %v1526 = vmul.f32 %v630, %v1524
        %v1527 = vmul.f32 %v697, %v1524
        %v1528 = vmul.f32 %v631, %v1524
        %v1529 = vmul.f32 %v632, %v1524
        %v1530 = vmul.f32 %v698, %v1524
        %v1531 = vmul.f32 %v633, %v1524
        %v1532 = vmul.f32 %v634, %v1524
        %v1533 = vmul.f32 %v699, %v1524
        %v1534 = vmul.f32 %v635, %v1524
        %v1535 = vmul.f32 %v636, %v1524
        %v1536 = vmul.f32 %v700, %v1524
        %v1537 = vmul.f32 %v637, %v1524
        %v1538 = vmul.f32 %v638, %v1524
        %v1539 = vmul.f32 %v701, %v1524
        %v1540 = vmul.f32 %v639, %v1524
        %v1541 = vmul.f32 %v640, %v1524
        %v1542 = vmul.f32 %v702, %v1524
        %v1543 = vmul.f32 %v641, %v1524
        %v1544 = vmul.f32 %v642, %v1524
        %v1545 = vmul.f32 %v703, %v1524
        %v1546 = vmul.f32 %v643, %v1524
        %v1547 = vmul.f32 %v644, %v1524
        %v1548 = vmul.f32 %v704, %v1524
        %v1549 = vmul.f32 %v645, %v1524
        %v1550 = vmul.f32 %v646, %v1524
        %v1551 = vmul.f32 %v705, %v1524
        %v1552 = vmul.f32 %v647, %v1524
        %v1553 = vmul.f32 %v648, %v1524
        %v1554 = vmul.f32 %v706, %v1524
        %v1555 = vmul.f32 %v649, %v1524
        %v1556 = vmul.f32 %v650, %v1524
        %v1557 = vmul.f32 %v707, %v1524
        %v1558 = vmul.f32 %v651, %v1524
        %v1559 = vmul.f32 %v652, %v1524
        %v1560 = vmul.f32 %v708, %v1524
        %v1561 = vmul.f32 %v653, %v1524
        %v1562 = vmul.f32 %v654, %v1524
        %v1563 = vmul.f32 %v709, %v1524
        %v1564 = vmul.f32 %v655, %v1524
        %v1565 = vmul.f32 %v656, %v1524
        %v1566 = vmul.f32 %v710, %v1524
        %v1567 = vmul.f32 %v657, %v1524
        %v1568 = vmul.f32 %v658, %v1524
        %v1569 = vmul.f32 %v711, %v1524
        %v1570 = vmul.f32 %v1204, %v1524
        %v1571 = vmul.f32 %v1205, %v1524
        %v1572 = vmul.f32 %v1275, %v1524
        %v1621 = vrot.slane %v1525, 2
        %v1622 = vrot.slane %v1526, 2
        %v1623 = vsel %vm1058, %v1621, %v1622
        %v1624 = vrot.slane %v1527, 2
        %v1625 = vsel %vm1058, %v1622, %v1624
        %v1626 = vrot.slane %v1528, 2
        %v1627 = vrot.slane %v1529, 2
        %v1628 = vsel %vm1058, %v1626, %v1627
        %v1629 = vrot.slane %v1530, 2
        %v1630 = vsel %vm1058, %v1627, %v1629
        %v1631 = vrot.slane %v1531, 2
        %v1632 = vrot.slane %v1532, 2
        %v1633 = vsel %vm1058, %v1631, %v1632
        %v1634 = vrot.slane %v1533, 2
        %v1635 = vsel %vm1058, %v1632, %v1634
        %v1636 = vrot.slane %v1534, 2
        %v1637 = vrot.slane %v1535, 2
        %v1638 = vsel %vm1058, %v1636, %v1637
        %v1639 = vrot.slane %v1536, 2
        %v1640 = vsel %vm1058, %v1637, %v1639
        %v1641 = vrot.slane %v1537, 2
        %v1642 = vrot.slane %v1538, 2
        %v1643 = vsel %vm1058, %v1641, %v1642
        %v1644 = vrot.slane %v1539, 2
        %v1645 = vsel %vm1058, %v1642, %v1644
        %v1646 = vrot.slane %v1540, 2
        %v1647 = vrot.slane %v1541, 2
        %v1648 = vsel %vm1058, %v1646, %v1647
        %v1649 = vrot.slane %v1542, 2
        %v1650 = vsel %vm1058, %v1647, %v1649
        %v1651 = vrot.slane %v1543, 2
        %v1652 = vrot.slane %v1544, 2
        %v1653 = vsel %vm1058, %v1651, %v1652
        %v1654 = vrot.slane %v1545, 2
        %v1655 = vsel %vm1058, %v1652, %v1654
        %v1656 = vrot.slane %v1546, 2
        %v1657 = vrot.slane %v1547, 2
        %v1658 = vsel %vm1058, %v1656, %v1657
        %v1659 = vrot.slane %v1548, 2
        %v1660 = vsel %vm1058, %v1657, %v1659
        %v1661 = vrot.slane %v1549, 2
        %v1662 = vrot.slane %v1550, 2
        %v1663 = vsel %vm1058, %v1661, %v1662
        %v1664 = vrot.slane %v1551, 2
        %v1665 = vsel %vm1058, %v1662, %v1664
        %v1666 = vrot.slane %v1552, 2
        %v1667 = vrot.slane %v1553, 2
        %v1668 = vsel %vm1058, %v1666, %v1667
        %v1669 = vrot.slane %v1554, 2
        %v1670 = vsel %vm1058, %v1667, %v1669
        %v1671 = vrot.slane %v1555, 2
        %v1672 = vrot.slane %v1556, 2
        %v1673 = vsel %vm1058, %v1671, %v1672
        %v1674 = vrot.slane %v1557, 2
        %v1675 = vsel %vm1058, %v1672, %v1674
        %v1676 = vrot.slane %v1558, 2
        %v1677 = vrot.slane %v1559, 2
        %v1678 = vsel %vm1058, %v1676, %v1677
        %v1679 = vrot.slane %v1560, 2
        %v1680 = vsel %vm1058, %v1677, %v1679
        %v1681 = vrot.slane %v1561, 2
        %v1682 = vrot.slane %v1562, 2
        %v1683 = vsel %vm1058, %v1681, %v1682
        %v1684 = vrot.slane %v1563, 2
        %v1685 = vsel %vm1058, %v1682, %v1684
        %v1686 = vrot.slane %v1564, 2
        %v1687 = vrot.slane %v1565, 2
        %v1688 = vsel %vm1058, %v1686, %v1687
        %v1689 = vrot.slane %v1566, 2
        %v1690 = vsel %vm1058, %v1687, %v1689
        %v1691 = vrot.slane %v1567, 2
        %v1692 = vrot.slane %v1568, 2
        %v1693 = vsel %vm1058, %v1691, %v1692
        %v1694 = vrot.slane %v1569, 2
        %v1695 = vsel %vm1058, %v1692, %v1694
        %v1696 = vrot.slane %v1570, 2
        %v1697 = vrot.slane %v1571, 2
        %v1698 = vsel %vm1058, %v1696, %v1697
        %v1699 = vrot.slane %v1572, 2
        %v1700 = vsel %vm1058, %v1697, %v1699
        %v1733 = vadd.f32 %v1488, %v1623
        %v1734 = vadd.f32 %v1489, %v1625
        %v1735 = vadd.f32 %v1490, %v1628
        %v1736 = vadd.f32 %v1491, %v1630
        %v1737 = vadd.f32 %v1492, %v1633
        %v1738 = vadd.f32 %v1493, %v1635
        %v1739 = vadd.f32 %v1494, %v1638
        %v1740 = vadd.f32 %v1495, %v1640
        %v1741 = vadd.f32 %v1496, %v1643
        %v1742 = vadd.f32 %v1497, %v1645
        %v1743 = vadd.f32 %v1498, %v1648
        %v1744 = vadd.f32 %v1499, %v1650
        %v1745 = vadd.f32 %v1500, %v1653
        %v1746 = vadd.f32 %v1501, %v1655
        %v1747 = vadd.f32 %v1502, %v1658
        %v1748 = vadd.f32 %v1503, %v1660
        %v1749 = vadd.f32 %v1504, %v1663
        %v1750 = vadd.f32 %v1505, %v1665
        %v1751 = vadd.f32 %v1506, %v1668
        %v1752 = vadd.f32 %v1507, %v1670
        %v1753 = vadd.f32 %v1508, %v1673
        %v1754 = vadd.f32 %v1509, %v1675
        %v1755 = vadd.f32 %v1510, %v1678
        %v1756 = vadd.f32 %v1511, %v1680
        %v1757 = vadd.f32 %v1512, %v1683
        %v1758 = vadd.f32 %v1513, %v1685
        %v1759 = vadd.f32 %v1514, %v1688
        %v1760 = vadd.f32 %v1515, %v1690
        %v1761 = vadd.f32 %v1516, %v1693
        %v1762 = vadd.f32 %v1517, %v1695
        %v1763 = vadd.f32 %v1518, %v1698
        %v1764 = vadd.f32 %v1519, %v1700
        %v1765 = vld [vmem:[%s3 + $0x6] sm:$0x1]
        %v1766 = vunpack.c.l.bf16 %v623
        %v1767 = vunpack.c.l.bf16 %v624
        %v1768 = vlaneseq
        %v1769 = vshrl.u32 %v1768, 7
        %v1770 = vsub.s32 0, %v1769
        %v1771 = vrot.slane %v1765, %v1770
        %v1772 = vmul.f32 %v631, %v1771
        %v1773 = vmul.f32 %v632, %v1771
        %v1774 = vmul.f32 %v633, %v1771
        %v1775 = vmul.f32 %v634, %v1771
        %v1776 = vmul.f32 %v635, %v1771
        %v1777 = vmul.f32 %v636, %v1771
        %v1778 = vmul.f32 %v637, %v1771
        %v1779 = vmul.f32 %v638, %v1771
        %v1780 = vmul.f32 %v639, %v1771
        %v1781 = vmul.f32 %v640, %v1771
        %v1782 = vmul.f32 %v641, %v1771
        %v1783 = vmul.f32 %v642, %v1771
        %v1784 = vmul.f32 %v643, %v1771
        %v1785 = vmul.f32 %v644, %v1771
        %v1786 = vmul.f32 %v645, %v1771
        %v1787 = vmul.f32 %v646, %v1771
        %v1788 = vmul.f32 %v647, %v1771
        %v1789 = vmul.f32 %v648, %v1771
        %v1790 = vmul.f32 %v649, %v1771
        %v1791 = vmul.f32 %v650, %v1771
        %v1792 = vmul.f32 %v651, %v1771
        %v1793 = vmul.f32 %v652, %v1771
        %v1794 = vmul.f32 %v653, %v1771
        %v1795 = vmul.f32 %v654, %v1771
        %v1796 = vmul.f32 %v655, %v1771
        %v1797 = vmul.f32 %v656, %v1771
        %v1798 = vmul.f32 %v657, %v1771
        %v1799 = vmul.f32 %v658, %v1771
        %v1800 = vmul.f32 %v1204, %v1771
        %v1801 = vmul.f32 %v1205, %v1771
        %v1802 = vmul.f32 %v1766, %v1771
        %v1803 = vmul.f32 %v1767, %v1771
        %v1804 = vadd.f32 %v1733, %v1772
        %v1805 = vadd.f32 %v1734, %v1773
        %v1806 = vadd.f32 %v1735, %v1774
        %v1807 = vadd.f32 %v1736, %v1775
        %v1808 = vadd.f32 %v1737, %v1776
        %v1809 = vadd.f32 %v1738, %v1777
        %v1810 = vadd.f32 %v1739, %v1778
        %v1811 = vadd.f32 %v1740, %v1779
        %v1812 = vadd.f32 %v1741, %v1780
        %v1813 = vadd.f32 %v1742, %v1781
        %v1814 = vadd.f32 %v1743, %v1782
        %v1815 = vadd.f32 %v1744, %v1783
        %v1816 = vadd.f32 %v1745, %v1784
        %v1817 = vadd.f32 %v1746, %v1785
        %v1818 = vadd.f32 %v1747, %v1786
        %v1819 = vadd.f32 %v1748, %v1787
        %v1820 = vadd.f32 %v1749, %v1788
        %v1821 = vadd.f32 %v1750, %v1789
        %v1822 = vadd.f32 %v1751, %v1790
        %v1823 = vadd.f32 %v1752, %v1791
        %v1824 = vadd.f32 %v1753, %v1792
        %v1825 = vadd.f32 %v1754, %v1793
        %v1826 = vadd.f32 %v1755, %v1794
        %v1827 = vadd.f32 %v1756, %v1795
        %v1828 = vadd.f32 %v1757, %v1796
        %v1829 = vadd.f32 %v1758, %v1797
        %v1830 = vadd.f32 %v1759, %v1798
        %v1831 = vadd.f32 %v1760, %v1799
        %v1832 = vadd.f32 %v1761, %v1800
        %v1833 = vadd.f32 %v1762, %v1801
        %v1834 = vadd.f32 %v1763, %v1802
        %v1835 = vadd.f32 %v1764, %v1803
        %v1836 = vld [vmem:[%s3 + $0x7] sm:$0x1]
        %v1837 = vunpack.c.l.bf16 %v625
        %v1838 = vlaneseq
        %v1839 = vshrl.u32 %v1838, 7
        %v1840 = vsub.s32 0, %v1839
        %v1841 = vrot.slane %v1836, %v1840
        %v1842 = vmul.f32 %v631, %v1841
        %v1843 = vmul.f32 %v632, %v1841
        %v1844 = vmul.f32 %v698, %v1841
        %v1845 = vmul.f32 %v633, %v1841
        %v1846 = vmul.f32 %v634, %v1841
        %v1847 = vmul.f32 %v699, %v1841
        %v1848 = vmul.f32 %v635, %v1841
        %v1849 = vmul.f32 %v636, %v1841
        %v1850 = vmul.f32 %v700, %v1841
        %v1851 = vmul.f32 %v637, %v1841
        %v1852 = vmul.f32 %v638, %v1841
        %v1853 = vmul.f32 %v701, %v1841
        %v1854 = vmul.f32 %v639, %v1841
        %v1855 = vmul.f32 %v640, %v1841
        %v1856 = vmul.f32 %v702, %v1841
        %v1857 = vmul.f32 %v641, %v1841
        %v1858 = vmul.f32 %v642, %v1841
        %v1859 = vmul.f32 %v703, %v1841
        %v1860 = vmul.f32 %v643, %v1841
        %v1861 = vmul.f32 %v644, %v1841
        %v1862 = vmul.f32 %v704, %v1841
        %v1863 = vmul.f32 %v645, %v1841
        %v1864 = vmul.f32 %v646, %v1841
        %v1865 = vmul.f32 %v705, %v1841
        %v1866 = vmul.f32 %v647, %v1841
        %v1867 = vmul.f32 %v648, %v1841
        %v1868 = vmul.f32 %v706, %v1841
        %v1869 = vmul.f32 %v649, %v1841
        %v1870 = vmul.f32 %v650, %v1841
        %v1871 = vmul.f32 %v707, %v1841
        %v1872 = vmul.f32 %v651, %v1841
        %v1873 = vmul.f32 %v652, %v1841
        %v1874 = vmul.f32 %v708, %v1841
        %v1875 = vmul.f32 %v653, %v1841
        %v1876 = vmul.f32 %v654, %v1841
        %v1877 = vmul.f32 %v709, %v1841
        %v1878 = vmul.f32 %v655, %v1841
        %v1879 = vmul.f32 %v656, %v1841
        %v1880 = vmul.f32 %v710, %v1841
        %v1881 = vmul.f32 %v657, %v1841
        %v1882 = vmul.f32 %v658, %v1841
        %v1883 = vmul.f32 %v711, %v1841
        %v1884 = vmul.f32 %v1204, %v1841
        %v1885 = vmul.f32 %v1205, %v1841
        %v1886 = vmul.f32 %v1275, %v1841
        %v1887 = vmul.f32 %v1766, %v1841
        %v1888 = vmul.f32 %v1767, %v1841
        %v1889 = vmul.f32 %v1837, %v1841
        %v1938 = vrot.slane %v1842, 1
        %v1939 = vrot.slane %v1843, 1
        %v1940 = vsel %vm812, %v1938, %v1939
        %v1941 = vrot.slane %v1844, 1
        %v1942 = vsel %vm812, %v1939, %v1941
        %v1943 = vrot.slane %v1845, 1
        %v1944 = vrot.slane %v1846, 1
        %v1945 = vsel %vm812, %v1943, %v1944
        %v1946 = vrot.slane %v1847, 1
        %v1947 = vsel %vm812, %v1944, %v1946
        %v1948 = vrot.slane %v1848, 1
        %v1949 = vrot.slane %v1849, 1
        %v1950 = vsel %vm812, %v1948, %v1949
        %v1951 = vrot.slane %v1850, 1
        %v1952 = vsel %vm812, %v1949, %v1951
        %v1953 = vrot.slane %v1851, 1
        %v1954 = vrot.slane %v1852, 1
        %v1955 = vsel %vm812, %v1953, %v1954
        %v1956 = vrot.slane %v1853, 1
        %v1957 = vsel %vm812, %v1954, %v1956
        %v1958 = vrot.slane %v1854, 1
        %v1959 = vrot.slane %v1855, 1
        %v1960 = vsel %vm812, %v1958, %v1959
        %v1961 = vrot.slane %v1856, 1
        %v1962 = vsel %vm812, %v1959, %v1961
        %v1963 = vrot.slane %v1857, 1
        %v1964 = vrot.slane %v1858, 1
        %v1965 = vsel %vm812, %v1963, %v1964
        %v1966 = vrot.slane %v1859, 1
        %v1967 = vsel %vm812, %v1964, %v1966
        %v1968 = vrot.slane %v1860, 1
        %v1969 = vrot.slane %v1861, 1
        %v1970 = vsel %vm812, %v1968, %v1969
        %v1971 = vrot.slane %v1862, 1
        %v1972 = vsel %vm812, %v1969, %v1971
        %v1973 = vrot.slane %v1863, 1
        %v1974 = vrot.slane %v1864, 1
        %v1975 = vsel %vm812, %v1973, %v1974
        %v1976 = vrot.slane %v1865, 1
        %v1977 = vsel %vm812, %v1974, %v1976
        %v1978 = vrot.slane %v1866, 1
        %v1979 = vrot.slane %v1867, 1
        %v1980 = vsel %vm812, %v1978, %v1979
        %v1981 = vrot.slane %v1868, 1
        %v1982 = vsel %vm812, %v1979, %v1981
        %v1983 = vrot.slane %v1869, 1
        %v1984 = vrot.slane %v1870, 1
        %v1985 = vsel %vm812, %v1983, %v1984
        %v1986 = vrot.slane %v1871, 1
        %v1987 = vsel %vm812, %v1984, %v1986
        %v1988 = vrot.slane %v1872, 1
        %v1989 = vrot.slane %v1873, 1
        %v1990 = vsel %vm812, %v1988, %v1989
        %v1991 = vrot.slane %v1874, 1
        %v1992 = vsel %vm812, %v1989, %v1991
        %v1993 = vrot.slane %v1875, 1
        %v1994 = vrot.slane %v1876, 1
        %v1995 = vsel %vm812, %v1993, %v1994
        %v1996 = vrot.slane %v1877, 1
        %v1997 = vsel %vm812, %v1994, %v1996
        %v1998 = vrot.slane %v1878, 1
        %v1999 = vrot.slane %v1879, 1
        %v2000 = vsel %vm812, %v1998, %v1999
        %v2001 = vrot.slane %v1880, 1
        %v2002 = vsel %vm812, %v1999, %v2001
        %v2003 = vrot.slane %v1881, 1
        %v2004 = vrot.slane %v1882, 1
        %v2005 = vsel %vm812, %v2003, %v2004
        %v2006 = vrot.slane %v1883, 1
        %v2007 = vsel %vm812, %v2004, %v2006
        %v2008 = vrot.slane %v1884, 1
        %v2009 = vrot.slane %v1885, 1
        %v2010 = vsel %vm812, %v2008, %v2009
        %v2011 = vrot.slane %v1886, 1
        %v2012 = vsel %vm812, %v2009, %v2011
        %v2013 = vrot.slane %v1887, 1
        %v2014 = vrot.slane %v1888, 1
        %v2015 = vsel %vm812, %v2013, %v2014
        %v2016 = vrot.slane %v1889, 1
        %v2017 = vsel %vm812, %v2014, %v2016
        %v2050 = vadd.f32 %v1804, %v1940
        %v2051 = vadd.f32 %v1805, %v1942
        %v2052 = vadd.f32 %v1806, %v1945
        %v2053 = vadd.f32 %v1807, %v1947
        %v2054 = vadd.f32 %v1808, %v1950
        %v2055 = vadd.f32 %v1809, %v1952
        %v2056 = vadd.f32 %v1810, %v1955
        %v2057 = vadd.f32 %v1811, %v1957
        %v2058 = vadd.f32 %v1812, %v1960
        %v2059 = vadd.f32 %v1813, %v1962
        %v2060 = vadd.f32 %v1814, %v1965
        %v2061 = vadd.f32 %v1815, %v1967
        %v2062 = vadd.f32 %v1816, %v1970
        %v2063 = vadd.f32 %v1817, %v1972
        %v2064 = vadd.f32 %v1818, %v1975
        %v2065 = vadd.f32 %v1819, %v1977
        %v2066 = vadd.f32 %v1820, %v1980
        %v2067 = vadd.f32 %v1821, %v1982
        %v2068 = vadd.f32 %v1822, %v1985
        %v2069 = vadd.f32 %v1823, %v1987
        %v2070 = vadd.f32 %v1824, %v1990
        %v2071 = vadd.f32 %v1825, %v1992
        %v2072 = vadd.f32 %v1826, %v1995
        %v2073 = vadd.f32 %v1827, %v1997
        %v2074 = vadd.f32 %v1828, %v2000
        %v2075 = vadd.f32 %v1829, %v2002
        %v2076 = vadd.f32 %v1830, %v2005
        %v2077 = vadd.f32 %v1831, %v2007
        %v2078 = vadd.f32 %v1832, %v2010
        %v2079 = vadd.f32 %v1833, %v2012
        %v2080 = vadd.f32 %v1834, %v2015
        %v2081 = vadd.f32 %v1835, %v2017
        %v2082 = vld [vmem:[%s3 + $0x8] sm:$0x1]
        %v2083 = vlaneseq
        %v2084 = vshrl.u32 %v2083, 7
        %v2085 = vsub.s32 0, %v2084
        %v2086 = vrot.slane %v2082, %v2085
        %v2087 = vmul.f32 %v631, %v2086
        %v2088 = vmul.f32 %v632, %v2086
        %v2089 = vmul.f32 %v698, %v2086
        %v2090 = vmul.f32 %v633, %v2086
        %v2091 = vmul.f32 %v634, %v2086
        %v2092 = vmul.f32 %v699, %v2086
        %v2093 = vmul.f32 %v635, %v2086
        %v2094 = vmul.f32 %v636, %v2086
        %v2095 = vmul.f32 %v700, %v2086
        %v2096 = vmul.f32 %v637, %v2086
        %v2097 = vmul.f32 %v638, %v2086
        %v2098 = vmul.f32 %v701, %v2086
        %v2099 = vmul.f32 %v639, %v2086
        %v2100 = vmul.f32 %v640, %v2086
        %v2101 = vmul.f32 %v702, %v2086
        %v2102 = vmul.f32 %v641, %v2086
        %v2103 = vmul.f32 %v642, %v2086
        %v2104 = vmul.f32 %v703, %v2086
        %v2105 = vmul.f32 %v643, %v2086
        %v2106 = vmul.f32 %v644, %v2086
        %v2107 = vmul.f32 %v704, %v2086
        %v2108 = vmul.f32 %v645, %v2086
        %v2109 = vmul.f32 %v646, %v2086
        %v2110 = vmul.f32 %v705, %v2086
        %v2111 = vmul.f32 %v647, %v2086
        %v2112 = vmul.f32 %v648, %v2086
        %v2113 = vmul.f32 %v706, %v2086
        %v2114 = vmul.f32 %v649, %v2086
        %v2115 = vmul.f32 %v650, %v2086
        %v2116 = vmul.f32 %v707, %v2086
        %v2117 = vmul.f32 %v651, %v2086
        %v2118 = vmul.f32 %v652, %v2086
        %v2119 = vmul.f32 %v708, %v2086
        %v2120 = vmul.f32 %v653, %v2086
        %v2121 = vmul.f32 %v654, %v2086
        %v2122 = vmul.f32 %v709, %v2086
        %v2123 = vmul.f32 %v655, %v2086
        %v2124 = vmul.f32 %v656, %v2086
        %v2125 = vmul.f32 %v710, %v2086
        %v2126 = vmul.f32 %v657, %v2086
        %v2127 = vmul.f32 %v658, %v2086
        %v2128 = vmul.f32 %v711, %v2086
        %v2129 = vmul.f32 %v1204, %v2086
        %v2130 = vmul.f32 %v1205, %v2086
        %v2131 = vmul.f32 %v1275, %v2086
        %v2132 = vmul.f32 %v1766, %v2086
        %v2133 = vmul.f32 %v1767, %v2086
        %v2134 = vmul.f32 %v1837, %v2086
        %v2183 = vrot.slane %v2087, 2
        %v2184 = vrot.slane %v2088, 2
        %v2185 = vsel %vm1058, %v2183, %v2184
        %v2186 = vrot.slane %v2089, 2
        %v2187 = vsel %vm1058, %v2184, %v2186
        %v2188 = vrot.slane %v2090, 2
        %v2189 = vrot.slane %v2091, 2
        %v2190 = vsel %vm1058, %v2188, %v2189
        %v2191 = vrot.slane %v2092, 2
        %v2192 = vsel %vm1058, %v2189, %v2191
        %v2193 = vrot.slane %v2093, 2
        %v2194 = vrot.slane %v2094, 2
        %v2195 = vsel %vm1058, %v2193, %v2194
        %v2196 = vrot.slane %v2095, 2
        %v2197 = vsel %vm1058, %v2194, %v2196
        %v2198 = vrot.slane %v2096, 2
        %v2199 = vrot.slane %v2097, 2
        %v2200 = vsel %vm1058, %v2198, %v2199
        %v2201 = vrot.slane %v2098, 2
        %v2202 = vsel %vm1058, %v2199, %v2201
        %v2203 = vrot.slane %v2099, 2
        %v2204 = vrot.slane %v2100, 2
        %v2205 = vsel %vm1058, %v2203, %v2204
        %v2206 = vrot.slane %v2101, 2
        %v2207 = vsel %vm1058, %v2204, %v2206
        %v2208 = vrot.slane %v2102, 2
        %v2209 = vrot.slane %v2103, 2
        %v2210 = vsel %vm1058, %v2208, %v2209
        %v2211 = vrot.slane %v2104, 2
        %v2212 = vsel %vm1058, %v2209, %v2211
        %v2213 = vrot.slane %v2105, 2
        %v2214 = vrot.slane %v2106, 2
        %v2215 = vsel %vm1058, %v2213, %v2214
        %v2216 = vrot.slane %v2107, 2
        %v2217 = vsel %vm1058, %v2214, %v2216
        %v2218 = vrot.slane %v2108, 2
        %v2219 = vrot.slane %v2109, 2
        %v2220 = vsel %vm1058, %v2218, %v2219
        %v2221 = vrot.slane %v2110, 2
        %v2222 = vsel %vm1058, %v2219, %v2221
        %v2223 = vrot.slane %v2111, 2
        %v2224 = vrot.slane %v2112, 2
        %v2225 = vsel %vm1058, %v2223, %v2224
        %v2226 = vrot.slane %v2113, 2
        %v2227 = vsel %vm1058, %v2224, %v2226
        %v2228 = vrot.slane %v2114, 2
        %v2229 = vrot.slane %v2115, 2
        %v2230 = vsel %vm1058, %v2228, %v2229
        %v2231 = vrot.slane %v2116, 2
        %v2232 = vsel %vm1058, %v2229, %v2231
        %v2233 = vrot.slane %v2117, 2
        %v2234 = vrot.slane %v2118, 2
        %v2235 = vsel %vm1058, %v2233, %v2234
        %v2236 = vrot.slane %v2119, 2
        %v2237 = vsel %vm1058, %v2234, %v2236
        %v2238 = vrot.slane %v2120, 2
        %v2239 = vrot.slane %v2121, 2
        %v2240 = vsel %vm1058, %v2238, %v2239
        %v2241 = vrot.slane %v2122, 2
        %v2242 = vsel %vm1058, %v2239, %v2241
        %v2243 = vrot.slane %v2123, 2
        %v2244 = vrot.slane %v2124, 2
        %v2245 = vsel %vm1058, %v2243, %v2244
        %v2246 = vrot.slane %v2125, 2
        %v2247 = vsel %vm1058, %v2244, %v2246
        %v2248 = vrot.slane %v2126, 2
        %v2249 = vrot.slane %v2127, 2
        %v2250 = vsel %vm1058, %v2248, %v2249
        %v2251 = vrot.slane %v2128, 2
        %v2252 = vsel %vm1058, %v2249, %v2251
        %v2253 = vrot.slane %v2129, 2
        %v2254 = vrot.slane %v2130, 2
        %v2255 = vsel %vm1058, %v2253, %v2254
        %v2256 = vrot.slane %v2131, 2
        %v2257 = vsel %vm1058, %v2254, %v2256
        %v2258 = vrot.slane %v2132, 2
        %v2259 = vrot.slane %v2133, 2
        %v2260 = vsel %vm1058, %v2258, %v2259
        %v2261 = vrot.slane %v2134, 2
        %v2262 = vsel %vm1058, %v2259, %v2261
        %v2295 = vadd.f32 %v2050, %v2185
        %v2296 = vadd.f32 %v2051, %v2187
        %v2297 = vadd.f32 %v2052, %v2190
        %v2298 = vadd.f32 %v2053, %v2192
        %v2299 = vadd.f32 %v2054, %v2195
        %v2300 = vadd.f32 %v2055, %v2197
        %v2301 = vadd.f32 %v2056, %v2200
        %v2302 = vadd.f32 %v2057, %v2202
        %v2303 = vadd.f32 %v2058, %v2205
        %v2304 = vadd.f32 %v2059, %v2207
        %v2305 = vadd.f32 %v2060, %v2210
        %v2306 = vadd.f32 %v2061, %v2212
        %v2307 = vadd.f32 %v2062, %v2215
        %v2308 = vadd.f32 %v2063, %v2217
        %v2309 = vadd.f32 %v2064, %v2220
        %v2310 = vadd.f32 %v2065, %v2222
        %v2311 = vadd.f32 %v2066, %v2225
        %v2312 = vadd.f32 %v2067, %v2227
        %v2313 = vadd.f32 %v2068, %v2230
        %v2314 = vadd.f32 %v2069, %v2232
        %v2315 = vadd.f32 %v2070, %v2235
        %v2316 = vadd.f32 %v2071, %v2237
        %v2317 = vadd.f32 %v2072, %v2240
        %v2318 = vadd.f32 %v2073, %v2242
        %v2319 = vadd.f32 %v2074, %v2245
        %v2320 = vadd.f32 %v2075, %v2247
        %v2321 = vadd.f32 %v2076, %v2250
        %v2322 = vadd.f32 %v2077, %v2252
        %v2323 = vadd.f32 %v2078, %v2255
        %v2324 = vadd.f32 %v2079, %v2257
        %v2325 = vadd.f32 %v2080, %v2260
        %v2326 = vadd.f32 %v2081, %v2262
        %v2327 = vpack.c.bf16 %v2296, %v2295
        %v2328 = vpack.c.bf16 %v2298, %v2297
        %v2329 = vpack.c.bf16 %v2300, %v2299
        %v2330 = vpack.c.bf16 %v2302, %v2301
        %v2331 = vpack.c.bf16 %v2304, %v2303
        %v2332 = vpack.c.bf16 %v2306, %v2305
        %v2333 = vpack.c.bf16 %v2308, %v2307
        %v2334 = vpack.c.bf16 %v2310, %v2309
        %v2335 = vpack.c.bf16 %v2312, %v2311
        %v2336 = vpack.c.bf16 %v2314, %v2313
        %v2337 = vpack.c.bf16 %v2316, %v2315
        %v2338 = vpack.c.bf16 %v2318, %v2317
        %v2339 = vpack.c.bf16 %v2320, %v2319
        %v2340 = vpack.c.bf16 %v2322, %v2321
        %v2341 = vpack.c.bf16 %v2324, %v2323
        %v2342 = vpack.c.bf16 %v2326, %v2325
        %v2343 = vld [vmem:[%s4] sm:$0xf]
        %v2344 = vld [vmem:[%s4 + $0x4] sm:$0xf]
        %v2345 = vld [vmem:[%s4 + $0x8] sm:$0xf]
        %v2346 = vld [vmem:[%s4 + $0xc] sm:$0xf]
        %v2347 = vld [vmem:[%s4 + $0x10] sm:$0xf]
        %v2348 = vld [vmem:[%s4 + $0x14] sm:$0xf]
        %v2349 = vld [vmem:[%s4 + $0x18] sm:$0xf]
        %v2350 = vld [vmem:[%s4 + $0x1c] sm:$0xf]
        %v2351 = vld [vmem:[%s4 + $0x20] sm:$0xf]
        %v2352 = vld [vmem:[%s4 + $0x24] sm:$0xf]
        %v2353 = vld [vmem:[%s4 + $0x28] sm:$0xf]
        %v2354 = vld [vmem:[%s4 + $0x2c] sm:$0xf]
        %v2355 = vld [vmem:[%s4 + $0x30] sm:$0xf]
        %v2356 = vld [vmem:[%s4 + $0x34] sm:$0xf]
        %v2357 = vld [vmem:[%s4 + $0x38] sm:$0xf]
        %v2358 = vld [vmem:[%s4 + $0x3c] sm:$0xf]
        %v2359 = vld [vmem:[%s5] sm:$0x1]
        %v2361 = vlaneseq
        %v2362 = vshrl.u32 %v2361, 7
        %v2363 = vsub.s32 0, %v2362
        %v2364 = vrot.slane %v2359, %v2363
        %v2382 = vunpack.c.l.b16 %v2343
        %v2383 = vunpack.c.l.b16 %v2344
        %v2384 = vunpack.c.l.b16 %v2345
        %v2385 = vunpack.c.l.b16 %v2346
        %v2386 = vunpack.c.l.b16 %v2347
        %v2387 = vunpack.c.l.b16 %v2348
        %v2388 = vunpack.c.l.b16 %v2349
        %v2389 = vunpack.c.l.b16 %v2350
        %v2390 = vunpack.c.l.b16 %v2351
        %v2391 = vunpack.c.l.b16 %v2352
        %v2392 = vunpack.c.l.b16 %v2353
        %v2393 = vunpack.c.l.b16 %v2354
        %v2394 = vunpack.c.l.b16 %v2355
        %v2395 = vunpack.c.l.b16 %v2356
        %v2396 = vunpack.c.l.b16 %v2357
        %v2397 = vunpack.c.l.b16 %v2358
        %v2398 = vpack.c.b16 %v2383, %v2382
        %v2399 = vpack.c.b16 %v2385, %v2384
        %v2400 = vpack.c.b16 %v2387, %v2386
        %v2401 = vpack.c.b16 %v2389, %v2388
        %v2402 = vpack.c.b16 %v2391, %v2390
        %v2403 = vpack.c.b16 %v2393, %v2392
        %v2404 = vpack.c.b16 %v2395, %v2394
        %v2405 = vpack.c.b16 %v2397, %v2396
        %2414 = vmatprep.subr.bf16.mxu0 0
        %2415 = vmatpush1.bf16.msra.mxu0 %v2398
        %2416 = vmatprep.subr.bf16.mxu0 0
        %2417 = vmatpush1.bf16.msra.mxu0 %v2399
        %2418 = vmatprep.subr.bf16.mxu0 0
        %2419 = vmatpush1.bf16.msra.mxu0 %v2400
        %2420 = vmatprep.subr.bf16.mxu0 0
        %2421 = vmatpush1.bf16.msra.mxu0 %v2401
        %2422 = vmatprep.subr.bf16.mxu0 0
        %2423 = vmatpush1.bf16.msra.mxu0 %v2402
        %2424 = vmatprep.subr.bf16.mxu0 0
        %2425 = vmatpush1.bf16.msra.mxu0 %v2403
        %2426 = vmatprep.subr.bf16.mxu0 0
        %2427 = vmatpush1.bf16.msra.mxu0 %v2404
        %2428 = vmatprep.subr.bf16.mxu0 0
        %2429 = vmatpush1.bf16.msra.mxu0 %v2405
        %2430 = vmatprep.subr.bf16.mxu0 0
        %2431 = vmatpush1.bf16.msra.mxu0 0
        %2432 = vmatprep.subr.bf16.mxu0 0
        %2433 = vmatpush1.bf16.msra.mxu0 0
        %2434 = vmatprep.subr.bf16.mxu0 0
        %2435 = vmatpush1.bf16.msra.mxu0 0
        %2436 = vmatprep.subr.bf16.mxu0 0
        %2437 = vmatpush1.bf16.msra.mxu0 0
        %2438 = vmatprep.subr.bf16.mxu0 0
        %2439 = vmatpush1.bf16.msra.mxu0 0
        %2440 = vmatprep.subr.bf16.mxu0 0
        %2441 = vmatpush1.bf16.msra.mxu0 0
        %2442 = vmatprep.subr.bf16.mxu0 0
        %2443 = vmatpush1.bf16.msra.mxu0 0
        %2444 = vmatprep.subr.bf16.mxu0 0
        %2445 = vmatpush1.bf16.msra.mxu0 0
        %2446 = vmatprep.mubr.bf16.mxu0 0
        %2447 = vmatmul.mubr.bf16.gmra.mrb[0].mxu0 %v2327
        %v2448 = vpop.f32.mrb[0].mxu0
        %v2449 = vadd.f32 %v2364, %v2448
        %v2450 = vpop.f32.mrb[0].mxu0
        %v2451 = vpop.f32.mrb[0].mxu0
        %v2452 = vadd.f32 %v2364, %v2451
        %v2453 = vpop.f32.mrb[0].mxu0
        %2454 = vmatprep.mubr.bf16.mxu0 0
        %2455 = vmatmul.mubr.bf16.gmra.mrb[0].mxu0 %v2328
        %v2456 = vpop.f32.mrb[0].mxu0
        %v2457 = vadd.f32 %v2364, %v2456
        %v2458 = vpop.f32.mrb[0].mxu0
        %v2459 = vpop.f32.mrb[0].mxu0
        %v2460 = vadd.f32 %v2364, %v2459
        %v2461 = vpop.f32.mrb[0].mxu0
        %2462 = vmatprep.mubr.bf16.mxu0 0
        %2463 = vmatmul.mubr.bf16.gmra.mrb[0].mxu0 %v2329
        %v2464 = vpop.f32.mrb[0].mxu0
        %v2465 = vadd.f32 %v2364, %v2464
        %v2466 = vpop.f32.mrb[0].mxu0
        %v2467 = vpop.f32.mrb[0].mxu0
        %v2468 = vadd.f32 %v2364, %v2467
        %v2469 = vpop.f32.mrb[0].mxu0
        %2470 = vmatprep.mubr.bf16.mxu0 0
        %2471 = vmatmul.mubr.bf16.gmra.mrb[0].mxu0 %v2330
        %v2472 = vpop.f32.mrb[0].mxu0
        %v2473 = vadd.f32 %v2364, %v2472
        %v2474 = vpop.f32.mrb[0].mxu0
        %v2475 = vpop.f32.mrb[0].mxu0
        %v2476 = vadd.f32 %v2364, %v2475
        %v2477 = vpop.f32.mrb[0].mxu0
        %2478 = vmatprep.mubr.bf16.mxu0 0
        %2479 = vmatmul.mubr.bf16.gmra.mrb[0].mxu0 %v2331
        %v2480 = vpop.f32.mrb[0].mxu0
        %v2481 = vadd.f32 %v2364, %v2480
        %v2482 = vpop.f32.mrb[0].mxu0
        %v2483 = vpop.f32.mrb[0].mxu0
        %v2484 = vadd.f32 %v2364, %v2483
        %v2485 = vpop.f32.mrb[0].mxu0
        %2486 = vmatprep.mubr.bf16.mxu0 0
        %2487 = vmatmul.mubr.bf16.gmra.mrb[0].mxu0 %v2332
        %v2488 = vpop.f32.mrb[0].mxu0
        %v2489 = vadd.f32 %v2364, %v2488
        %v2490 = vpop.f32.mrb[0].mxu0
        %v2491 = vpop.f32.mrb[0].mxu0
        %v2492 = vadd.f32 %v2364, %v2491
        %v2493 = vpop.f32.mrb[0].mxu0
        %2494 = vmatprep.mubr.bf16.mxu0 0
        %2495 = vmatmul.mubr.bf16.gmra.mrb[0].mxu0 %v2333
        %v2496 = vpop.f32.mrb[0].mxu0
        %v2497 = vadd.f32 %v2364, %v2496
        %v2498 = vpop.f32.mrb[0].mxu0
        %v2499 = vpop.f32.mrb[0].mxu0
        %v2500 = vadd.f32 %v2364, %v2499
        %v2501 = vpop.f32.mrb[0].mxu0
        %2502 = vmatprep.mubr.bf16.mxu0 0
        %2503 = vmatmul.mubr.bf16.gmra.mrb[0].mxu0 %v2334
        %v2504 = vpop.f32.mrb[0].mxu0
        %v2505 = vadd.f32 %v2364, %v2504
        %v2506 = vpop.f32.mrb[0].mxu0
        %v2507 = vpop.f32.mrb[0].mxu0
        %v2508 = vadd.f32 %v2364, %v2507
        %v2509 = vpop.f32.mrb[0].mxu0
        %2510 = vmatprep.mubr.bf16.mxu0 0
        %2511 = vmatmul.mubr.bf16.gmra.mrb[0].mxu0 %v2335
        %v2512 = vpop.f32.mrb[0].mxu0
        %v2513 = vadd.f32 %v2364, %v2512
        %v2514 = vpop.f32.mrb[0].mxu0
        %v2515 = vpop.f32.mrb[0].mxu0
        %v2516 = vadd.f32 %v2364, %v2515
        %v2517 = vpop.f32.mrb[0].mxu0
        %2518 = vmatprep.mubr.bf16.mxu0 0
        %2519 = vmatmul.mubr.bf16.gmra.mrb[0].mxu0 %v2336
        %v2520 = vpop.f32.mrb[0].mxu0
        %v2521 = vadd.f32 %v2364, %v2520
        %v2522 = vpop.f32.mrb[0].mxu0
        %v2523 = vpop.f32.mrb[0].mxu0
        %v2524 = vadd.f32 %v2364, %v2523
        %v2525 = vpop.f32.mrb[0].mxu0
        %2526 = vmatprep.mubr.bf16.mxu0 0
        %2527 = vmatmul.mubr.bf16.gmra.mrb[0].mxu0 %v2337
        %v2528 = vpop.f32.mrb[0].mxu0
        %v2529 = vadd.f32 %v2364, %v2528
        %v2530 = vpop.f32.mrb[0].mxu0
        %v2531 = vpop.f32.mrb[0].mxu0
        %v2532 = vadd.f32 %v2364, %v2531
        %v2533 = vpop.f32.mrb[0].mxu0
        %2534 = vmatprep.mubr.bf16.mxu0 0
        %2535 = vmatmul.mubr.bf16.gmra.mrb[0].mxu0 %v2338
        %v2536 = vpop.f32.mrb[0].mxu0
        %v2537 = vadd.f32 %v2364, %v2536
        %v2538 = vpop.f32.mrb[0].mxu0
        %v2539 = vpop.f32.mrb[0].mxu0
        %v2540 = vadd.f32 %v2364, %v2539
        %v2541 = vpop.f32.mrb[0].mxu0
        %2542 = vmatprep.mubr.bf16.mxu0 0
        %2543 = vmatmul.mubr.bf16.gmra.mrb[0].mxu0 %v2339
        %v2544 = vpop.f32.mrb[0].mxu0
        %v2545 = vadd.f32 %v2364, %v2544
        %v2546 = vpop.f32.mrb[0].mxu0
        %v2547 = vpop.f32.mrb[0].mxu0
        %v2548 = vadd.f32 %v2364, %v2547
        %v2549 = vpop.f32.mrb[0].mxu0
        %2550 = vmatprep.mubr.bf16.mxu0 0
        %2551 = vmatmul.mubr.bf16.gmra.mrb[0].mxu0 %v2340
        %v2552 = vpop.f32.mrb[0].mxu0
        %v2553 = vadd.f32 %v2364, %v2552
        %v2554 = vpop.f32.mrb[0].mxu0
        %v2555 = vpop.f32.mrb[0].mxu0
        %v2556 = vadd.f32 %v2364, %v2555
        %v2557 = vpop.f32.mrb[0].mxu0
        %2558 = vmatprep.mubr.bf16.mxu0 0
        %2559 = vmatmul.mubr.bf16.gmra.mrb[0].mxu0 %v2341
        %v2560 = vpop.f32.mrb[0].mxu0
        %v2561 = vadd.f32 %v2364, %v2560
        %v2562 = vpop.f32.mrb[0].mxu0
        %v2563 = vpop.f32.mrb[0].mxu0
        %v2564 = vadd.f32 %v2364, %v2563
        %v2565 = vpop.f32.mrb[0].mxu0
        %2566 = vmatprep.mubr.bf16.mxu0 0
        %2567 = vmatmul.mubr.bf16.gmra.mrb[0].mxu0 %v2342
        %v2568 = vpop.f32.mrb[0].mxu0
        %v2569 = vadd.f32 %v2364, %v2568
        %v2570 = vpop.f32.mrb[0].mxu0
        %v2571 = vpop.f32.mrb[0].mxu0
        %v2572 = vadd.f32 %v2364, %v2571
        %v2573 = vpop.f32.mrb[0].mxu0
        %2574 = vdwg.mxu0
        %v2575 = vld [vmem:[%s570] sm:$0x7]
        %v2576 = vld [vmem:[%s570 + $0x4] sm:$0x7]
        %v2577 = vld [vmem:[%s570 + $0x8] sm:$0x7]
        %v2578 = vld [vmem:[%s570 + $0xc] sm:$0x7]
        %v2579 = vld [vmem:[%s570 + $0x10] sm:$0x7]
        %v2580 = vld [vmem:[%s570 + $0x14] sm:$0x7]
        %v2585 = vunpack.c.l.b16 %v2575
        %v2586 = vunpack.c.l.b16 %v2576
        %v2587 = vunpack.c.l.b16 %v2577
        %v2588 = vunpack.c.l.b16 %v2578
        %v2589 = vpack.c.b16 %v2585, %v2585
        %v2590 = vpack.c.b16 %v2586, %v2586
        %v2591 = vpack.c.b16 %v2587, %v2587
        %v2592 = vpack.c.b16 %v2588, %v2588
        %v2594 = vshrl.u32 %v2589, 16
        %v2596 = vshll.u32 %v2589, 16
        %v2598 = vrot.slane %v2596, 1
        %v2599 = vor.u32 %v2594, %v2598
        %v2601 = vshrl.u32 %v2590, 16
        %v2603 = vshll.u32 %v2590, 16
        %v2605 = vrot.slane %v2603, 1
        %v2606 = vor.u32 %v2601, %v2605
        %v2608 = vshrl.u32 %v2591, 16
        %v2610 = vshll.u32 %v2591, 16
        %v2612 = vrot.slane %v2610, 1
        %v2613 = vor.u32 %v2608, %v2612
        %v2615 = vshrl.u32 %v2592, 16
        %v2617 = vshll.u32 %v2592, 16
        %v2619 = vrot.slane %v2617, 1
        %v2620 = vor.u32 %v2615, %v2619
        %v2621 = vrot.slane %v2589, 1
        %v2622 = vrot.slane %v2590, 1
        %v2623 = vrot.slane %v2591, 1
        %v2624 = vrot.slane %v2592, 1
        %v2626 = vunpack.c.l.b16 %v2579
        %v2627 = vpack.c.b16 %v2626, %v2626
        %v2629 = vshrl.u32 %v2627, 16
        %v2631 = vshll.u32 %v2627, 16
        %v2633 = vrot.slane %v2631, 1
        %v2634 = vor.u32 %v2629, %v2633
        %v2635 = vrot.slane %v2627, 1
        %v2637 = vunpack.c.l.b16 %v2580
        %v2638 = vpack.c.b16 %v2637, %v2637
        %v2640 = vshrl.u32 %v2638, 16
        %v2642 = vshll.u32 %v2638, 16
        %v2644 = vrot.slane %v2642, 1
        %v2645 = vor.u32 %v2640, %v2644
        %v2646 = vrot.slane %v2638, 1
        %v2647 = vcombine.low %v2575, %v2599
        %v2648 = vcombine.low %v2621, %v2576
        %v2650 = vunpack.c.l.s4 1983009808
        %v2651 = vunpack.c.0.s8 %v2650
        %v2652 = vlaneseq
        %v2653 = vshrl.u32 %v2652, 7
        %v2654 = vsub.s32 %v2651, %v2653
        %v2655 = vrot.slane %v2647, %v2654
        %v2657 = vunpack.c.l.s4 1983009808
        %v2658 = vunpack.c.0.s8 %v2657
        %v2659 = vlaneseq
        %v2660 = vshrl.u32 %v2659, 7
        %v2661 = vsub.s32 %v2658, %v2660
        %v2662 = vrot.slane %v2648, %v2661
        %v2663 = vcombine.low %v2655, %v2662
        %v2664 = vcombine.low %v2606, %v2622
        %v2665 = vcombine.low %v2577, %v2613
        %v2667 = vunpack.c.l.s4 1983009808
        %v2668 = vunpack.c.0.s8 %v2667
        %v2669 = vlaneseq
        %v2670 = vshrl.u32 %v2669, 7
        %v2671 = vsub.s32 %v2668, %v2670
        %v2672 = vrot.slane %v2664, %v2671
        %v2674 = vunpack.c.l.s4 1983009808
        %v2675 = vunpack.c.0.s8 %v2674
        %v2676 = vlaneseq
        %v2677 = vshrl.u32 %v2676, 7
        %v2678 = vsub.s32 %v2675, %v2677
        %v2679 = vrot.slane %v2665, %v2678
        %v2680 = vcombine.low %v2672, %v2679
        %v2682 = vunpack.c.l.s4 1983009808
        %v2683 = vunpack.c.0.s8 %v2682
        %v2684 = vlaneseq
        %v2685 = vshrl.u32 %v2684, 7
        %v2686 = vsub.s32 %v2683, %v2685
        %v2687 = vrot.slane %v2623, %v2686
        %v2688 = vcombine.low %v2576, %v2606
        %v2689 = vcombine.low %v2622, %v2577
        %v2691 = vunpack.c.l.s4 1983009808
        %v2692 = vunpack.c.0.s8 %v2691
        %v2693 = vlaneseq
        %v2694 = vshrl.u32 %v2693, 7
        %v2695 = vsub.s32 %v2692, %v2694
        %v2696 = vrot.slane %v2688, %v2695
        %v2698 = vunpack.c.l.s4 1983009808
        %v2699 = vunpack.c.0.s8 %v2698
        %v2700 = vlaneseq
        %v2701 = vshrl.u32 %v2700, 7
        %v2702 = vsub.s32 %v2699, %v2701
        %v2703 = vrot.slane %v2689, %v2702
        %v2704 = vcombine.low %v2696, %v2703
        %v2705 = vcombine.low %v2613, %v2623
        %v2706 = vcombine.low %v2578, %v2620
        %v2708 = vunpack.c.l.s4 1983009808
        %v2709 = vunpack.c.0.s8 %v2708
        %v2710 = vlaneseq
        %v2711 = vshrl.u32 %v2710, 7
        %v2712 = vsub.s32 %v2709, %v2711
        %v2713 = vrot.slane %v2705, %v2712
        %v2715 = vunpack.c.l.s4 1983009808
        %v2716 = vunpack.c.0.s8 %v2715
        %v2717 = vlaneseq
        %v2718 = vshrl.u32 %v2717, 7
        %v2719 = vsub.s32 %v2716, %v2718
        %v2720 = vrot.slane %v2706, %v2719
        %v2721 = vcombine.low %v2713, %v2720
        %v2723 = vunpack.c.l.s4 1983009808
        %v2724 = vunpack.c.0.s8 %v2723
        %v2725 = vlaneseq
        %v2726 = vshrl.u32 %v2725, 7
        %v2727 = vsub.s32 %v2724, %v2726
        %v2728 = vrot.slane %v2624, %v2727
        %v2729 = vcombine.low %v2623, %v2578
        %v2731 = vunpack.c.l.s4 1983009808
        %v2732 = vunpack.c.0.s8 %v2731
        %v2733 = vlaneseq
        %v2734 = vshrl.u32 %v2733, 7
        %v2735 = vsub.s32 %v2732, %v2734
        %v2736 = vrot.slane %v2729, %v2735
        %v2737 = vcombine.low %v2679, %v2736
        %v2738 = vcombine.low %v2620, %v2624
        %v2739 = vcombine.low %v2579, %v2634
        %v2741 = vunpack.c.l.s4 1983009808
        %v2742 = vunpack.c.0.s8 %v2741
        %v2743 = vlaneseq
        %v2744 = vshrl.u32 %v2743, 7
        %v2745 = vsub.s32 %v2742, %v2744
        %v2746 = vrot.slane %v2738, %v2745
        %v2748 = vunpack.c.l.s4 1983009808
        %v2749 = vunpack.c.0.s8 %v2748
        %v2750 = vlaneseq
        %v2751 = vshrl.u32 %v2750, 7
        %v2752 = vsub.s32 %v2749, %v2751
        %v2753 = vrot.slane %v2739, %v2752
        %v2754 = vcombine.low %v2746, %v2753
        %v2756 = vunpack.c.l.s4 1983009808
        %v2757 = vunpack.c.0.s8 %v2756
        %v2758 = vlaneseq
        %v2759 = vshrl.u32 %v2758, 7
        %v2760 = vsub.s32 %v2757, %v2759
        %v2761 = vrot.slane %v2635, %v2760
        %v2762 = vcombine.low %v2624, %v2579
        %v2764 = vunpack.c.l.s4 1983009808
        %v2765 = vunpack.c.0.s8 %v2764
        %v2766 = vlaneseq
        %v2767 = vshrl.u32 %v2766, 7
        %v2768 = vsub.s32 %v2765, %v2767
        %v2769 = vrot.slane %v2762, %v2768
        %v2770 = vcombine.low %v2720, %v2769
        %v2771 = vcombine.low %v2634, %v2635
        %v2772 = vcombine.low %v2580, %v2645
        %v2774 = vunpack.c.l.s4 1983009808
        %v2775 = vunpack.c.0.s8 %v2774
        %v2776 = vlaneseq
        %v2777 = vshrl.u32 %v2776, 7
        %v2778 = vsub.s32 %v2775, %v2777
        %v2779 = vrot.slane %v2771, %v2778
        %v2781 = vunpack.c.l.s4 1983009808
        %v2782 = vunpack.c.0.s8 %v2781
        %v2783 = vlaneseq
        %v2784 = vshrl.u32 %v2783, 7
        %v2785 = vsub.s32 %v2782, %v2784
        %v2786 = vrot.slane %v2772, %v2785
        %v2787 = vcombine.low %v2779, %v2786
        %v2789 = vunpack.c.l.s4 1983009808
        %v2790 = vunpack.c.0.s8 %v2789
        %v2791 = vlaneseq
        %v2792 = vshrl.u32 %v2791, 7
        %v2793 = vsub.s32 %v2790, %v2792
        %v2794 = vrot.slane %v2646, %v2793
        %v2795 = vld [vmem:[%s8] sm:$0xf]
        %v2796 = vld [vmem:[%s8 + $0x4] sm:$0xf]
        %v2797 = vld [vmem:[%s8 + $0x8] sm:$0xf]
        %v2798 = vld [vmem:[%s8 + $0xc] sm:$0xf]
        %v2799 = vld [vmem:[%s8 + $0x10] sm:$0xf]
        %v2800 = vld [vmem:[%s8 + $0x14] sm:$0xf]
        %v2801 = vld [vmem:[%s8 + $0x18] sm:$0xf]
        %v2802 = vld [vmem:[%s8 + $0x1c] sm:$0xf]
        %v2803 = vld [vmem:[%s8 + $0x20] sm:$0xf]
        %v2804 = vld [vmem:[%s8 + $0x24] sm:$0xf]
        %v2805 = vld [vmem:[%s8 + $0x28] sm:$0xf]
        %v2806 = vld [vmem:[%s8 + $0x2c] sm:$0xf]
        %v2807 = vld [vmem:[%s8 + $0x30] sm:$0xf]
        %v2808 = vld [vmem:[%s8 + $0x34] sm:$0xf]
        %v2809 = vld [vmem:[%s8 + $0x38] sm:$0xf]
        %v2810 = vld [vmem:[%s8 + $0x3c] sm:$0xf]
        %v2811 = vld [vmem:[%s8 + $0x40] sm:$0xf]
        %v2812 = vld [vmem:[%s8 + $0x44] sm:$0xf]
        %v2813 = vld [vmem:[%s8 + $0x48] sm:$0xf]
        %v2814 = vld [vmem:[%s8 + $0x4c] sm:$0xf]
        %v2815 = vld [vmem:[%s8 + $0x50] sm:$0xf]
        %v2816 = vld [vmem:[%s8 + $0x54] sm:$0xf]
        %v2817 = vld [vmem:[%s8 + $0x58] sm:$0xf]
        %v2818 = vld [vmem:[%s8 + $0x5c] sm:$0xf]
        %v2819 = vld [vmem:[%s8 + $0x60] sm:$0xf]
        %v2820 = vld [vmem:[%s8 + $0x64] sm:$0xf]
        %v2821 = vld [vmem:[%s8 + $0x68] sm:$0xf]
        %v2822 = vld [vmem:[%s8 + $0x6c] sm:$0xf]
        %v2823 = vld [vmem:[%s8 + $0x70] sm:$0xf]
        %v2824 = vld [vmem:[%s8 + $0x74] sm:$0xf]
        %v2825 = vld [vmem:[%s8 + $0x78] sm:$0xf]
        %v2826 = vld [vmem:[%s8 + $0x7c] sm:$0xf]
        %v2827 = vld [vmem:[%s8 + $0x80] sm:$0xf]
        %v2828 = vld [vmem:[%s8 + $0x84] sm:$0xf]
        %v2829 = vld [vmem:[%s8 + $0x88] sm:$0xf]
        %v2830 = vld [vmem:[%s8 + $0x8c] sm:$0xf]
        %v2831 = vld [vmem:[%s8 + $0x90] sm:$0xf]
        %v2832 = vld [vmem:[%s8 + $0x94] sm:$0xf]
        %v2833 = vld [vmem:[%s8 + $0x98] sm:$0xf]
        %v2834 = vld [vmem:[%s8 + $0x9c] sm:$0xf]
        %v2835 = vld [vmem:[%s8 + $0xa0] sm:$0xf]
        %v2836 = vld [vmem:[%s8 + $0xa4] sm:$0xf]
        %v2837 = vld [vmem:[%s8 + $0xa8] sm:$0xf]
        %v2838 = vld [vmem:[%s8 + $0xac] sm:$0xf]
        %v2839 = vld [vmem:[%s8 + $0xb0] sm:$0xf]
        %v2840 = vld [vmem:[%s8 + $0xb4] sm:$0xf]
        %v2841 = vld [vmem:[%s8 + $0xb8] sm:$0xf]
        %v2842 = vld [vmem:[%s8 + $0xbc] sm:$0xf]
        %v2843 = vld [vmem:[%s8 + $0xc0] sm:$0xf]
        %v2844 = vld [vmem:[%s8 + $0xc4] sm:$0xf]
        %v2845 = vld [vmem:[%s8 + $0xc8] sm:$0xf]
        %v2846 = vld [vmem:[%s8 + $0xcc] sm:$0xf]
        %v2847 = vld [vmem:[%s8 + $0xd0] sm:$0xf]
        %v2848 = vld [vmem:[%s8 + $0xd4] sm:$0xf]
        %v2849 = vld [vmem:[%s8 + $0xd8] sm:$0xf]
        %v2850 = vld [vmem:[%s8 + $0xdc] sm:$0xf]
        %v2851 = vld [vmem:[%s8 + $0xe0] sm:$0xf]
        %v2852 = vld [vmem:[%s8 + $0xe4] sm:$0xf]
        %v2853 = vld [vmem:[%s8 + $0xe8] sm:$0xf]
        %v2854 = vld [vmem:[%s8 + $0xec] sm:$0xf]
        %v2855 = vld [vmem:[%s8 + $0xf0] sm:$0xf]
        %v2856 = vld [vmem:[%s8 + $0xf4] sm:$0xf]
        %v2857 = vld [vmem:[%s8 + $0xf8] sm:$0xf]
        %v2858 = vld [vmem:[%s8 + $0xfc] sm:$0xf]
        %v2859 = vld [vmem:[%s8 + $0x100] sm:$0xf]
        %v2860 = vld [vmem:[%s8 + $0x104] sm:$0xf]
        %v2861 = vld [vmem:[%s8 + $0x108] sm:$0xf]
        %v2862 = vld [vmem:[%s8 + $0x10c] sm:$0xf]
        %v2863 = vld [vmem:[%s8 + $0x110] sm:$0xf]
        %v2864 = vld [vmem:[%s8 + $0x114] sm:$0xf]
        %v2865 = vld [vmem:[%s8 + $0x118] sm:$0xf]
        %v2866 = vld [vmem:[%s8 + $0x11c] sm:$0xf]
        %v2867 = vld [vmem:[%s8 + $0x120] sm:$0xf]
        %v2868 = vld [vmem:[%s8 + $0x124] sm:$0xf]
        %v2869 = vld [vmem:[%s8 + $0x128] sm:$0xf]
        %v2870 = vld [vmem:[%s8 + $0x12c] sm:$0xf]
        %v2871 = vld [vmem:[%s8 + $0x130] sm:$0xf]
        %v2872 = vld [vmem:[%s8 + $0x134] sm:$0xf]
        %v2873 = vld [vmem:[%s8 + $0x138] sm:$0xf]
        %v2874 = vld [vmem:[%s8 + $0x13c] sm:$0xf]
        %v2875 = vld [vmem:[%s8 + $0x140] sm:$0xf]
        %v2876 = vld [vmem:[%s8 + $0x144] sm:$0xf]
        %v2877 = vld [vmem:[%s8 + $0x148] sm:$0xf]
        %v2878 = vld [vmem:[%s8 + $0x14c] sm:$0xf]
        %v2879 = vld [vmem:[%s8 + $0x150] sm:$0xf]
        %v2880 = vld [vmem:[%s8 + $0x154] sm:$0xf]
        %v2881 = vld [vmem:[%s8 + $0x158] sm:$0xf]
        %v2882 = vld [vmem:[%s8 + $0x15c] sm:$0xf]
        %v2883 = vld [vmem:[%s8 + $0x160] sm:$0xf]
        %v2884 = vld [vmem:[%s8 + $0x164] sm:$0xf]
        %v2885 = vld [vmem:[%s8 + $0x168] sm:$0xf]
        %v2886 = vld [vmem:[%s8 + $0x16c] sm:$0xf]
        %v2887 = vld [vmem:[%s8 + $0x170] sm:$0xf]
        %v2888 = vld [vmem:[%s8 + $0x174] sm:$0xf]
        %v2889 = vld [vmem:[%s8 + $0x178] sm:$0xf]
        %v2890 = vld [vmem:[%s8 + $0x17c] sm:$0xf]
        %v2891 = vld [vmem:[%s8 + $0x180] sm:$0xf]
        %v2892 = vld [vmem:[%s8 + $0x184] sm:$0xf]
        %v2893 = vld [vmem:[%s8 + $0x188] sm:$0xf]
        %v2894 = vld [vmem:[%s8 + $0x18c] sm:$0xf]
        %v2895 = vld [vmem:[%s8 + $0x190] sm:$0xf]
        %v2896 = vld [vmem:[%s8 + $0x194] sm:$0xf]
        %v2897 = vld [vmem:[%s8 + $0x198] sm:$0xf]
        %v2898 = vld [vmem:[%s8 + $0x19c] sm:$0xf]
        %v2899 = vld [vmem:[%s8 + $0x1a0] sm:$0xf]
        %v2900 = vld [vmem:[%s8 + $0x1a4] sm:$0xf]
        %v2901 = vld [vmem:[%s8 + $0x1a8] sm:$0xf]
        %v2902 = vld [vmem:[%s8 + $0x1ac] sm:$0xf]
        %v2903 = vld [vmem:[%s8 + $0x1b0] sm:$0xf]
        %v2904 = vld [vmem:[%s8 + $0x1b4] sm:$0xf]
        %v2905 = vld [vmem:[%s8 + $0x1b8] sm:$0xf]
        %v2906 = vld [vmem:[%s8 + $0x1bc] sm:$0xf]
        %v2907 = vld [vmem:[%s8 + $0x1c0] sm:$0xf]
        %v2908 = vld [vmem:[%s8 + $0x1c4] sm:$0xf]
        %v2909 = vld [vmem:[%s8 + $0x1c8] sm:$0xf]
        %v2910 = vld [vmem:[%s8 + $0x1cc] sm:$0xf]
        %v2911 = vld [vmem:[%s8 + $0x1d0] sm:$0xf]
        %v2912 = vld [vmem:[%s8 + $0x1d4] sm:$0xf]
        %v2913 = vld [vmem:[%s8 + $0x1d8] sm:$0xf]
        %v2914 = vld [vmem:[%s8 + $0x1dc] sm:$0xf]
        %v2915 = vld [vmem:[%s8 + $0x1e0] sm:$0xf]
        %v2916 = vld [vmem:[%s8 + $0x1e4] sm:$0xf]
        %v2917 = vld [vmem:[%s8 + $0x1e8] sm:$0xf]
        %v2918 = vld [vmem:[%s8 + $0x1ec] sm:$0xf]
        %v2919 = vld [vmem:[%s8 + $0x1f0] sm:$0xf]
        %v2920 = vld [vmem:[%s8 + $0x1f4] sm:$0xf]
        %v2921 = vld [vmem:[%s8 + $0x1f8] sm:$0xf]
        %v2922 = vld [vmem:[%s8 + $0x1fc] sm:$0xf]
        %v2923 = vld [vmem:[%s8 + $0x200] sm:$0xf]
        %v2924 = vld [vmem:[%s8 + $0x204] sm:$0xf]
        %v2925 = vld [vmem:[%s8 + $0x208] sm:$0xf]
        %v2926 = vld [vmem:[%s8 + $0x20c] sm:$0xf]
        %v2927 = vld [vmem:[%s8 + $0x210] sm:$0xf]
        %v2928 = vld [vmem:[%s8 + $0x214] sm:$0xf]
        %v2929 = vld [vmem:[%s8 + $0x218] sm:$0xf]
        %v2930 = vld [vmem:[%s8 + $0x21c] sm:$0xf]
        %v2931 = vld [vmem:[%s8 + $0x220] sm:$0xf]
        %v2932 = vld [vmem:[%s8 + $0x224] sm:$0xf]
        %v2933 = vld [vmem:[%s8 + $0x228] sm:$0xf]
        %v2934 = vld [vmem:[%s8 + $0x22c] sm:$0xf]
        %v2935 = vld [vmem:[%s8 + $0x230] sm:$0xf]
        %v2936 = vld [vmem:[%s8 + $0x234] sm:$0xf]
        %v2937 = vld [vmem:[%s8 + $0x238] sm:$0xf]
        %v2938 = vld [vmem:[%s8 + $0x23c] sm:$0xf]
        %v2939 = vld [vmem:[%s9] sm:$0x1]
        %v2941 = vlaneseq
        %v2942 = vshrl.u32 %v2941, 7
        %v2943 = vsub.s32 0, %v2942
        %v2944 = vrot.slane %v2939, %v2943
        %v2946 = vcombine.low %v2663, %v2704
        %v2947 = vcombine.high %v2663, %v2704
        %v2948 = vcombine.low %v2737, %v2770
        %v2949 = vcombine.high %v2737, %v2770
        %v2951 = vunpack.c.l.s4 1983009808
        %v2952 = vunpack.c.0.s8 %v2951
        %v2953 = vlaneseq
        %v2954 = vshrl.u32 %v2953, 7
        %v2955 = vsub.s32 %v2952, %v2954
        %v2956 = vrot.slane %v2946, %v2955
        %v2958 = vunpack.c.l.s4 1983009808
        %v2959 = vunpack.c.0.s8 %v2958
        %v2960 = vlaneseq
        %v2961 = vshrl.u32 %v2960, 7
        %v2962 = vsub.s32 %v2959, %v2961
        %v2963 = vrot.slane %v2947, %v2962
        %v2965 = vunpack.c.l.s4 1983009808
        %v2966 = vunpack.c.0.s8 %v2965
        %v2967 = vlaneseq
        %v2968 = vshrl.u32 %v2967, 7
        %v2969 = vsub.s32 %v2966, %v2968
        %v2970 = vrot.slane %v2948, %v2969
        %v2972 = vunpack.c.l.s4 1983009808
        %v2973 = vunpack.c.0.s8 %v2972
        %v2974 = vlaneseq
        %v2975 = vshrl.u32 %v2974, 7
        %v2976 = vsub.s32 %v2973, %v2975
        %v2977 = vrot.slane %v2949, %v2976
        %v2978 = vcombine.low %v2956, %v2970
        %v2979 = vcombine.high %v2956, %v2970
        %v2980 = vcombine.low %v2963, %v2977
        %v2981 = vcombine.high %v2963, %v2977
        %v2982 = vcombine.low %v2680, %v2721
        %v2983 = vcombine.high %v2680, %v2721
        %v2984 = vcombine.low %v2754, %v2787
        %v2985 = vcombine.high %v2754, %v2787
        %v2987 = vunpack.c.l.s4 1983009808
        %v2988 = vunpack.c.0.s8 %v2987
        %v2989 = vlaneseq
        %v2990 = vshrl.u32 %v2989, 7
        %v2991 = vsub.s32 %v2988, %v2990
        %v2992 = vrot.slane %v2982, %v2991
        %v2994 = vunpack.c.l.s4 1983009808
        %v2995 = vunpack.c.0.s8 %v2994
        %v2996 = vlaneseq
        %v2997 = vshrl.u32 %v2996, 7
        %v2998 = vsub.s32 %v2995, %v2997
        %v2999 = vrot.slane %v2983, %v2998
        %v3001 = vunpack.c.l.s4 1983009808
        %v3002 = vunpack.c.0.s8 %v3001
        %v3003 = vlaneseq
        %v3004 = vshrl.u32 %v3003, 7
        %v3005 = vsub.s32 %v3002, %v3004
        %v3006 = vrot.slane %v2984, %v3005
        %v3008 = vunpack.c.l.s4 1983009808
        %v3009 = vunpack.c.0.s8 %v3008
        %v3010 = vlaneseq
        %v3011 = vshrl.u32 %v3010, 7
        %v3012 = vsub.s32 %v3009, %v3011
        %v3013 = vrot.slane %v2985, %v3012
        %v3014 = vcombine.low %v2992, %v3006
        %v3015 = vcombine.high %v2992, %v3006
        %v3016 = vcombine.low %v2999, %v3013
        %v3017 = vcombine.high %v2999, %v3013
        %v3018 = vcombine.low %v2687, %v2728
        %v3019 = vcombine.low %v2761, %v2794
        %v3021 = vunpack.c.l.s4 1983009808
        %v3022 = vunpack.c.0.s8 %v3021
        %v3023 = vlaneseq
        %v3024 = vshrl.u32 %v3023, 7
        %v3025 = vsub.s32 %v3022, %v3024
        %v3026 = vrot.slane %v3018, %v3025
        %v3028 = vunpack.c.l.s4 1983009808
        %v3029 = vunpack.c.0.s8 %v3028
        %v3030 = vlaneseq
        %v3031 = vshrl.u32 %v3030, 7
        %v3032 = vsub.s32 %v3029, %v3031
        %v3033 = vrot.slane %v3019, %v3032
        %v3034 = vcombine.low %v3026, %v3033
        %v3188 = vunpack.c.l.b16 %v2795
        %v3189 = vunpack.c.l.b16 %v2796
        %v3190 = vunpack.c.l.b16 %v2797
        %v3191 = vunpack.c.l.b16 %v2798
        %v3192 = vunpack.c.l.b16 %v2799
        %v3193 = vunpack.c.l.b16 %v2800
        %v3194 = vunpack.c.l.b16 %v2801
        %v3195 = vunpack.c.l.b16 %v2802
        %v3196 = vunpack.c.l.b16 %v2803
        %v3197 = vunpack.c.l.b16 %v2804
        %v3198 = vunpack.c.l.b16 %v2805
        %v3199 = vunpack.c.l.b16 %v2806
        %v3200 = vunpack.c.l.b16 %v2807
        %v3201 = vunpack.c.l.b16 %v2808
        %v3202 = vunpack.c.l.b16 %v2809
        %v3203 = vunpack.c.l.b16 %v2810
        %v3204 = vunpack.c.l.b16 %v2811
        %v3205 = vunpack.c.l.b16 %v2812
        %v3206 = vunpack.c.l.b16 %v2813
        %v3207 = vunpack.c.l.b16 %v2814
        %v3208 = vunpack.c.l.b16 %v2815
        %v3209 = vunpack.c.l.b16 %v2816
        %v3210 = vunpack.c.l.b16 %v2817
        %v3211 = vunpack.c.l.b16 %v2818
        %v3212 = vunpack.c.l.b16 %v2819
        %v3213 = vunpack.c.l.b16 %v2820
        %v3214 = vunpack.c.l.b16 %v2821
        %v3215 = vunpack.c.l.b16 %v2822
        %v3216 = vunpack.c.l.b16 %v2823
        %v3217 = vunpack.c.l.b16 %v2824
        %v3218 = vunpack.c.l.b16 %v2825
        %v3219 = vunpack.c.l.b16 %v2826
        %v3220 = vunpack.c.l.b16 %v2827
        %v3221 = vunpack.c.l.b16 %v2828
        %v3222 = vunpack.c.l.b16 %v2829
        %v3223 = vunpack.c.l.b16 %v2830
        %v3224 = vunpack.c.l.b16 %v2831
        %v3225 = vunpack.c.l.b16 %v2832
        %v3226 = vunpack.c.l.b16 %v2833
        %v3227 = vunpack.c.l.b16 %v2834
        %v3228 = vunpack.c.l.b16 %v2835
        %v3229 = vunpack.c.l.b16 %v2836
        %v3230 = vunpack.c.l.b16 %v2837
        %v3231 = vunpack.c.l.b16 %v2838
        %v3232 = vunpack.c.l.b16 %v2839
        %v3233 = vunpack.c.l.b16 %v2840
        %v3234 = vunpack.c.l.b16 %v2841
        %v3235 = vunpack.c.l.b16 %v2842
        %v3236 = vunpack.c.l.b16 %v2843
        %v3237 = vunpack.c.l.b16 %v2844
        %v3238 = vunpack.c.l.b16 %v2845
        %v3239 = vunpack.c.l.b16 %v2846
        %v3240 = vunpack.c.l.b16 %v2847
        %v3241 = vunpack.c.l.b16 %v2848
        %v3242 = vunpack.c.l.b16 %v2849
        %v3243 = vunpack.c.l.b16 %v2850
        %v3244 = vunpack.c.l.b16 %v2851
        %v3245 = vunpack.c.l.b16 %v2852
        %v3246 = vunpack.c.l.b16 %v2853
        %v3247 = vunpack.c.l.b16 %v2854
        %v3248 = vunpack.c.l.b16 %v2855
        %v3249 = vunpack.c.l.b16 %v2856
        %v3250 = vunpack.c.l.b16 %v2857
        %v3251 = vunpack.c.l.b16 %v2858
        %v3252 = vunpack.c.l.b16 %v2859
        %v3253 = vunpack.c.l.b16 %v2860
        %v3254 = vunpack.c.l.b16 %v2861
        %v3255 = vunpack.c.l.b16 %v2862
        %v3256 = vunpack.c.l.b16 %v2863
        %v3257 = vunpack.c.l.b16 %v2864
        %v3258 = vunpack.c.l.b16 %v2865
        %v3259 = vunpack.c.l.b16 %v2866
        %v3260 = vunpack.c.l.b16 %v2867
        %v3261 = vunpack.c.l.b16 %v2868
        %v3262 = vunpack.c.l.b16 %v2869
        %v3263 = vunpack.c.l.b16 %v2870
        %v3264 = vunpack.c.l.b16 %v2871
        %v3265 = vunpack.c.l.b16 %v2872
        %v3266 = vunpack.c.l.b16 %v2873
        %v3267 = vunpack.c.l.b16 %v2874
        %v3268 = vunpack.c.l.b16 %v2875
        %v3269 = vunpack.c.l.b16 %v2876
        %v3270 = vunpack.c.l.b16 %v2877
        %v3271 = vunpack.c.l.b16 %v2878
        %v3272 = vunpack.c.l.b16 %v2879
        %v3273 = vunpack.c.l.b16 %v2880
        %v3274 = vunpack.c.l.b16 %v2881
        %v3275 = vunpack.c.l.b16 %v2882
        %v3276 = vunpack.c.l.b16 %v2883
        %v3277 = vunpack.c.l.b16 %v2884
        %v3278 = vunpack.c.l.b16 %v2885
        %v3279 = vunpack.c.l.b16 %v2886
        %v3280 = vunpack.c.l.b16 %v2887
        %v3281 = vunpack.c.l.b16 %v2888
        %v3282 = vunpack.c.l.b16 %v2889
        %v3283 = vunpack.c.l.b16 %v2890
        %v3284 = vunpack.c.l.b16 %v2891
        %v3285 = vunpack.c.l.b16 %v2892
        %v3286 = vunpack.c.l.b16 %v2893
        %v3287 = vunpack.c.l.b16 %v2894
        %v3288 = vunpack.c.l.b16 %v2895
        %v3289 = vunpack.c.l.b16 %v2896
        %v3290 = vunpack.c.l.b16 %v2897
        %v3291 = vunpack.c.l.b16 %v2898
        %v3292 = vunpack.c.l.b16 %v2899
        %v3293 = vunpack.c.l.b16 %v2900
        %v3294 = vunpack.c.l.b16 %v2901
        %v3295 = vunpack.c.l.b16 %v2902
        %v3296 = vunpack.c.l.b16 %v2903
        %v3297 = vunpack.c.l.b16 %v2904
        %v3298 = vunpack.c.l.b16 %v2905
        %v3299 = vunpack.c.l.b16 %v2906
        %v3300 = vunpack.c.l.b16 %v2907
        %v3301 = vunpack.c.l.b16 %v2908
        %v3302 = vunpack.c.l.b16 %v2909
        %v3303 = vunpack.c.l.b16 %v2910
        %v3304 = vunpack.c.l.b16 %v2911
        %v3305 = vunpack.c.l.b16 %v2912
        %v3306 = vunpack.c.l.b16 %v2913
        %v3307 = vunpack.c.l.b16 %v2914
        %v3308 = vunpack.c.l.b16 %v2915
        %v3309 = vunpack.c.l.b16 %v2916
        %v3310 = vunpack.c.l.b16 %v2917
        %v3311 = vunpack.c.l.b16 %v2918
        %v3312 = vunpack.c.l.b16 %v2919
        %v3313 = vunpack.c.l.b16 %v2920
        %v3314 = vunpack.c.l.b16 %v2921
        %v3315 = vunpack.c.l.b16 %v2922
        %v3316 = vunpack.c.l.b16 %v2923
        %v3317 = vunpack.c.l.b16 %v2924
        %v3318 = vunpack.c.l.b16 %v2925
        %v3319 = vunpack.c.l.b16 %v2926
        %v3320 = vunpack.c.l.b16 %v2927
        %v3321 = vunpack.c.l.b16 %v2928
        %v3322 = vunpack.c.l.b16 %v2929
        %v3323 = vunpack.c.l.b16 %v2930
        %v3324 = vunpack.c.l.b16 %v2931
        %v3325 = vunpack.c.l.b16 %v2932
        %v3326 = vunpack.c.l.b16 %v2933
        %v3327 = vunpack.c.l.b16 %v2934
        %v3328 = vunpack.c.l.b16 %v2935
        %v3329 = vunpack.c.l.b16 %v2936
        %v3330 = vunpack.c.l.b16 %v2937
        %v3331 = vunpack.c.l.b16 %v2938
        %v3332 = vpack.c.b16 %v3189, %v3188
        %v3333 = vpack.c.b16 %v3191, %v3190
        %v3334 = vpack.c.b16 %v3193, %v3192
        %v3335 = vpack.c.b16 %v3195, %v3194
        %v3336 = vpack.c.b16 %v3197, %v3196
        %v3337 = vpack.c.b16 %v3199, %v3198
        %v3338 = vpack.c.b16 %v3201, %v3200
        %v3339 = vpack.c.b16 %v3203, %v3202
        %v3340 = vpack.c.b16 %v3205, %v3204
        %v3341 = vpack.c.b16 %v3207, %v3206
        %v3342 = vpack.c.b16 %v3209, %v3208
        %v3343 = vpack.c.b16 %v3211, %v3210
        %v3344 = vpack.c.b16 %v3213, %v3212
        %v3345 = vpack.c.b16 %v3215, %v3214
        %v3346 = vpack.c.b16 %v3217, %v3216
        %v3347 = vpack.c.b16 %v3219, %v3218
        %v3348 = vpack.c.b16 %v3221, %v3220
        %v3349 = vpack.c.b16 %v3223, %v3222
        %v3350 = vpack.c.b16 %v3225, %v3224
        %v3351 = vpack.c.b16 %v3227, %v3226
        %v3352 = vpack.c.b16 %v3229, %v3228
        %v3353 = vpack.c.b16 %v3231, %v3230
        %v3354 = vpack.c.b16 %v3233, %v3232
        %v3355 = vpack.c.b16 %v3235, %v3234
        %v3356 = vpack.c.b16 %v3237, %v3236
        %v3357 = vpack.c.b16 %v3239, %v3238
        %v3358 = vpack.c.b16 %v3241, %v3240
        %v3359 = vpack.c.b16 %v3243, %v3242
        %v3360 = vpack.c.b16 %v3245, %v3244
        %v3361 = vpack.c.b16 %v3247, %v3246
        %v3362 = vpack.c.b16 %v3249, %v3248
        %v3363 = vpack.c.b16 %v3251, %v3250
        %v3364 = vpack.c.b16 %v3253, %v3252
        %v3365 = vpack.c.b16 %v3255, %v3254
        %v3366 = vpack.c.b16 %v3257, %v3256
        %v3367 = vpack.c.b16 %v3259, %v3258
        %v3368 = vpack.c.b16 %v3261, %v3260
        %v3369 = vpack.c.b16 %v3263, %v3262
        %v3370 = vpack.c.b16 %v3265, %v3264
        %v3371 = vpack.c.b16 %v3267, %v3266
        %v3372 = vpack.c.b16 %v3269, %v3268
        %v3373 = vpack.c.b16 %v3271, %v3270
        %v3374 = vpack.c.b16 %v3273, %v3272
        %v3375 = vpack.c.b16 %v3275, %v3274
        %v3376 = vpack.c.b16 %v3277, %v3276
        %v3377 = vpack.c.b16 %v3279, %v3278
        %v3378 = vpack.c.b16 %v3281, %v3280
        %v3379 = vpack.c.b16 %v3283, %v3282
        %v3380 = vpack.c.b16 %v3285, %v3284
        %v3381 = vpack.c.b16 %v3287, %v3286
        %v3382 = vpack.c.b16 %v3289, %v3288
        %v3383 = vpack.c.b16 %v3291, %v3290
        %v3384 = vpack.c.b16 %v3293, %v3292
        %v3385 = vpack.c.b16 %v3295, %v3294
        %v3386 = vpack.c.b16 %v3297, %v3296
        %v3387 = vpack.c.b16 %v3299, %v3298
        %v3388 = vpack.c.b16 %v3301, %v3300
        %v3389 = vpack.c.b16 %v3303, %v3302
        %v3390 = vpack.c.b16 %v3305, %v3304
        %v3391 = vpack.c.b16 %v3307, %v3306
        %v3392 = vpack.c.b16 %v3309, %v3308
        %v3393 = vpack.c.b16 %v3311, %v3310
        %v3394 = vpack.c.b16 %v3313, %v3312
        %v3395 = vpack.c.b16 %v3315, %v3314
        %v3396 = vpack.c.b16 %v3317, %v3316
        %v3397 = vpack.c.b16 %v3319, %v3318
        %v3398 = vpack.c.b16 %v3321, %v3320
        %v3399 = vpack.c.b16 %v3323, %v3322
        %v3400 = vpack.c.b16 %v3325, %v3324
        %v3401 = vpack.c.b16 %v3327, %v3326
        %v3402 = vpack.c.b16 %v3329, %v3328
        %v3403 = vpack.c.b16 %v3331, %v3330
        %3476 = vmatprep.subr.bf16.mxu0 0
        %3477 = vmatpush1.bf16.msra.mxu0 %v3332
        %3478 = vmatprep.subr.bf16.mxu0 0
        %3479 = vmatpush1.bf16.msra.mxu0 %v3333
        %3480 = vmatprep.subr.bf16.mxu0 0
        %3481 = vmatpush1.bf16.msra.mxu0 %v3334
        %3482 = vmatprep.subr.bf16.mxu0 0
        %3483 = vmatpush1.bf16.msra.mxu0 %v3335
        %3484 = vmatprep.subr.bf16.mxu0 0
        %3485 = vmatpush1.bf16.msra.mxu0 %v3336
        %3486 = vmatprep.subr.bf16.mxu0 0
        %3487 = vmatpush1.bf16.msra.mxu0 %v3337
        %3488 = vmatprep.subr.bf16.mxu0 0
        %3489 = vmatpush1.bf16.msra.mxu0 %v3338
        %3490 = vmatprep.subr.bf16.mxu0 0
        %3491 = vmatpush1.bf16.msra.mxu0 %v3339
        %3492 = vmatprep.subr.bf16.mxu0 0
        %3493 = vmatpush1.bf16.msra.mxu0 %v3340
        %3494 = vmatprep.subr.bf16.mxu0 0
        %3495 = vmatpush1.bf16.msra.mxu0 %v3341
        %3496 = vmatprep.subr.bf16.mxu0 0
        %3497 = vmatpush1.bf16.msra.mxu0 %v3342
        %3498 = vmatprep.subr.bf16.mxu0 0
        %3499 = vmatpush1.bf16.msra.mxu0 %v3343
        %3500 = vmatprep.subr.bf16.mxu0 0
        %3501 = vmatpush1.bf16.msra.mxu0 %v3344
        %3502 = vmatprep.subr.bf16.mxu0 0
        %3503 = vmatpush1.bf16.msra.mxu0 %v3345
        %3504 = vmatprep.subr.bf16.mxu0 0
        %3505 = vmatpush1.bf16.msra.mxu0 %v3346
        %3506 = vmatprep.subr.bf16.mxu0 0
        %3507 = vmatpush1.bf16.msra.mxu0 %v3347
        %3508 = vmatprep.mubr.bf16.mxu0 %v2979
        %3509 = vmatmul.mubr.bf16.gmra.mrb[0].mxu0 %v2978
        %v3510 = vpop.f32.mrb[0].mxu0
        %v3511 = vadd.f32 %v2944, %v3510
        %v3512 = vpop.f32.mrb[0].mxu0
        %v3513 = vpop.f32.mrb[0].mxu0
        %v3514 = vadd.f32 %v2944, %v3513
        %v3515 = vpop.f32.mrb[0].mxu0
        %3516 = vdwg.mxu0
        %3517 = vmatprep.subr.bf16.mxu0 0
        %3518 = vmatpush1.bf16.msra.mxu0 %v3348
        %3519 = vmatprep.subr.bf16.mxu0 0
        %3520 = vmatpush1.bf16.msra.mxu0 %v3349
        %3521 = vmatprep.subr.bf16.mxu0 0
        %3522 = vmatpush1.bf16.msra.mxu0 %v3350
        %3523 = vmatprep.subr.bf16.mxu0 0
        %3524 = vmatpush1.bf16.msra.mxu0 %v3351
        %3525 = vmatprep.subr.bf16.mxu0 0
        %3526 = vmatpush1.bf16.msra.mxu0 %v3352
        %3527 = vmatprep.subr.bf16.mxu0 0
        %3528 = vmatpush1.bf16.msra.mxu0 %v3353
        %3529 = vmatprep.subr.bf16.mxu0 0
        %3530 = vmatpush1.bf16.msra.mxu0 %v3354
        %3531 = vmatprep.subr.bf16.mxu0 0
        %3532 = vmatpush1.bf16.msra.mxu0 %v3355
        %3533 = vmatprep.subr.bf16.mxu0 0
        %3534 = vmatpush1.bf16.msra.mxu0 %v3356
        %3535 = vmatprep.subr.bf16.mxu0 0
        %3536 = vmatpush1.bf16.msra.mxu0 %v3357
        %3537 = vmatprep.subr.bf16.mxu0 0
        %3538 = vmatpush1.bf16.msra.mxu0 %v3358
        %3539 = vmatprep.subr.bf16.mxu0 0
        %3540 = vmatpush1.bf16.msra.mxu0 %v3359
        %3541 = vmatprep.subr.bf16.mxu0 0
        %3542 = vmatpush1.bf16.msra.mxu0 %v3360
        %3543 = vmatprep.subr.bf16.mxu0 0
        %3544 = vmatpush1.bf16.msra.mxu0 %v3361
        %3545 = vmatprep.subr.bf16.mxu0 0
        %3546 = vmatpush1.bf16.msra.mxu0 %v3362
        %3547 = vmatprep.subr.bf16.mxu0 0
        %3548 = vmatpush1.bf16.msra.mxu0 %v3363
        %3549 = vmatprep.mubr.bf16.mxu0 %v2981
        %3550 = vmatmul.mubr.bf16.gmra.mrb[0].mxu0 %v2980
        %v3551 = vpop.f32.mrb[0].mxu0
        %v3552 = vadd.f32 %v3511, %v3551
        %v3553 = vpop.f32.mrb[0].mxu0
        %v3554 = vpop.f32.mrb[0].mxu0
        %v3555 = vadd.f32 %v3514, %v3554
        %v3556 = vpop.f32.mrb[0].mxu0
        %3557 = vdwg.mxu0
        %3558 = vmatprep.subr.bf16.mxu0 0
        %3559 = vmatpush1.bf16.msra.mxu0 %v3364
        %3560 = vmatprep.subr.bf16.mxu0 0
        %3561 = vmatpush1.bf16.msra.mxu0 %v3365
        %3562 = vmatprep.subr.bf16.mxu0 0
        %3563 = vmatpush1.bf16.msra.mxu0 %v3366
        %3564 = vmatprep.subr.bf16.mxu0 0
        %3565 = vmatpush1.bf16.msra.mxu0 %v3367
        %3566 = vmatprep.subr.bf16.mxu0 0
        %3567 = vmatpush1.bf16.msra.mxu0 %v3368
        %3568 = vmatprep.subr.bf16.mxu0 0
        %3569 = vmatpush1.bf16.msra.mxu0 %v3369
        %3570 = vmatprep.subr.bf16.mxu0 0
        %3571 = vmatpush1.bf16.msra.mxu0 %v3370
        %3572 = vmatprep.subr.bf16.mxu0 0
        %3573 = vmatpush1.bf16.msra.mxu0 %v3371
        %3574 = vmatprep.subr.bf16.mxu0 0
        %3575 = vmatpush1.bf16.msra.mxu0 %v3372
        %3576 = vmatprep.subr.bf16.mxu0 0
        %3577 = vmatpush1.bf16.msra.mxu0 %v3373
        %3578 = vmatprep.subr.bf16.mxu0 0
        %3579 = vmatpush1.bf16.msra.mxu0 %v3374
        %3580 = vmatprep.subr.bf16.mxu0 0
        %3581 = vmatpush1.bf16.msra.mxu0 %v3375
        %3582 = vmatprep.subr.bf16.mxu0 0
        %3583 = vmatpush1.bf16.msra.mxu0 %v3376
        %3584 = vmatprep.subr.bf16.mxu0 0
        %3585 = vmatpush1.bf16.msra.mxu0 %v3377
        %3586 = vmatprep.subr.bf16.mxu0 0
        %3587 = vmatpush1.bf16.msra.mxu0 %v3378
        %3588 = vmatprep.subr.bf16.mxu0 0
        %3589 = vmatpush1.bf16.msra.mxu0 %v3379
        %3590 = vmatprep.mubr.bf16.mxu0 %v3015
        %3591 = vmatmul.mubr.bf16.gmra.mrb[0].mxu0 %v3014
        %v3592 = vpop.f32.mrb[0].mxu0
        %v3593 = vadd.f32 %v3552, %v3592
        %v3594 = vpop.f32.mrb[0].mxu0
        %v3595 = vpop.f32.mrb[0].mxu0
        %v3596 = vadd.f32 %v3555, %v3595
        %v3597 = vpop.f32.mrb[0].mxu0
        %3598 = vdwg.mxu0
        %3599 = vmatprep.subr.bf16.mxu0 0
        %3600 = vmatpush1.bf16.msra.mxu0 %v3380
        %3601 = vmatprep.subr.bf16.mxu0 0
        %3602 = vmatpush1.bf16.msra.mxu0 %v3381
        %3603 = vmatprep.subr.bf16.mxu0 0
        %3604 = vmatpush1.bf16.msra.mxu0 %v3382
        %3605 = vmatprep.subr.bf16.mxu0 0
        %3606 = vmatpush1.bf16.msra.mxu0 %v3383
        %3607 = vmatprep.subr.bf16.mxu0 0
        %3608 = vmatpush1.bf16.msra.mxu0 %v3384
        %3609 = vmatprep.subr.bf16.mxu0 0
        %3610 = vmatpush1.bf16.msra.mxu0 %v3385
        %3611 = vmatprep.subr.bf16.mxu0 0
        %3612 = vmatpush1.bf16.msra.mxu0 %v3386
        %3613 = vmatprep.subr.bf16.mxu0 0
        %3614 = vmatpush1.bf16.msra.mxu0 %v3387
        %3615 = vmatprep.subr.bf16.mxu0 0
        %3616 = vmatpush1.bf16.msra.mxu0 %v3388
        %3617 = vmatprep.subr.bf16.mxu0 0
        %3618 = vmatpush1.bf16.msra.mxu0 %v3389
        %3619 = vmatprep.subr.bf16.mxu0 0
        %3620 = vmatpush1.bf16.msra.mxu0 %v3390
        %3621 = vmatprep.subr.bf16.mxu0 0
        %3622 = vmatpush1.bf16.msra.mxu0 %v3391
        %3623 = vmatprep.subr.bf16.mxu0 0
        %3624 = vmatpush1.bf16.msra.mxu0 %v3392
        %3625 = vmatprep.subr.bf16.mxu0 0
        %3626 = vmatpush1.bf16.msra.mxu0 %v3393
        %3627 = vmatprep.subr.bf16.mxu0 0
        %3628 = vmatpush1.bf16.msra.mxu0 %v3394
        %3629 = vmatprep.subr.bf16.mxu0 0
        %3630 = vmatpush1.bf16.msra.mxu0 %v3395
        %3631 = vmatprep.mubr.bf16.mxu0 %v3017
        %3632 = vmatmul.mubr.bf16.gmra.mrb[0].mxu0 %v3016
        %v3633 = vpop.f32.mrb[0].mxu0
        %v3634 = vadd.f32 %v3593, %v3633
        %v3635 = vpop.f32.mrb[0].mxu0
        %v3636 = vpop.f32.mrb[0].mxu0
        %v3637 = vadd.f32 %v3596, %v3636
        %v3638 = vpop.f32.mrb[0].mxu0
        %3639 = vdwg.mxu0
        %3640 = vmatprep.subr.bf16.mxu0 0
        %3641 = vmatpush1.bf16.msra.mxu0 %v3396
        %3642 = vmatprep.subr.bf16.mxu0 0
        %3643 = vmatpush1.bf16.msra.mxu0 %v3397
        %3644 = vmatprep.subr.bf16.mxu0 0
        %3645 = vmatpush1.bf16.msra.mxu0 %v3398
        %3646 = vmatprep.subr.bf16.mxu0 0
        %3647 = vmatpush1.bf16.msra.mxu0 %v3399
        %3648 = vmatprep.subr.bf16.mxu0 0
        %3649 = vmatpush1.bf16.msra.mxu0 %v3400
        %3650 = vmatprep.subr.bf16.mxu0 0
        %3651 = vmatpush1.bf16.msra.mxu0 %v3401
        %3652 = vmatprep.subr.bf16.mxu0 0
        %3653 = vmatpush1.bf16.msra.mxu0 %v3402
        %3654 = vmatprep.subr.bf16.mxu0 0
        %3655 = vmatpush1.bf16.msra.mxu0 %v3403
        %3656 = vmatprep.subr.bf16.mxu0 0
        %3657 = vmatpush1.bf16.msra.mxu0 0
        %3658 = vmatprep.subr.bf16.mxu0 0
        %3659 = vmatpush1.bf16.msra.mxu0 0
        %3660 = vmatprep.subr.bf16.mxu0 0
        %3661 = vmatpush1.bf16.msra.mxu0 0
        %3662 = vmatprep.subr.bf16.mxu0 0
        %3663 = vmatpush1.bf16.msra.mxu0 0
        %3664 = vmatprep.subr.bf16.mxu0 0
        %3665 = vmatpush1.bf16.msra.mxu0 0
        %3666 = vmatprep.subr.bf16.mxu0 0
        %3667 = vmatpush1.bf16.msra.mxu0 0
        %3668 = vmatprep.subr.bf16.mxu0 0
        %3669 = vmatpush1.bf16.msra.mxu0 0
        %3670 = vmatprep.subr.bf16.mxu0 0
        %3671 = vmatpush1.bf16.msra.mxu0 0
        %3672 = vmatprep.mubr.bf16.mxu0 0
        %3673 = vmatmul.mubr.bf16.gmra.mrb[0].mxu0 %v3034
        %v3674 = vpop.f32.mrb[0].mxu0
        %v3675 = vadd.f32 %v3634, %v3674
        %v3676 = vpop.f32.mrb[0].mxu0
        %v3677 = vpop.f32.mrb[0].mxu0
        %v3678 = vadd.f32 %v3637, %v3677
        %v3679 = vpop.f32.mrb[0].mxu0
        %3680 = vdwg.mxu0
        %v3683 = vcombine.high %v3675, %v3675
        %v3684 = vcombine.high %v3678, %v3678
        %v3685 = vld [vmem:[%s10] sm:$0x1]
        %v3686 = vunpack.c.l.bf16 %v2575
        %v3687 = vunpack.c.l.bf16 %v2576
        %v3688 = vunpack.c.l.bf16 %v2577
        %v3689 = vunpack.c.l.bf16 %v2578
        %v3690 = vlaneseq
        %v3691 = vshrl.u32 %v3690, 7
        %v3692 = vsub.s32 0, %v3691
        %v3693 = vrot.slane %v3685, %v3692
        %v3694 = vmul.f32 %v3686, %v3693
        %v3695 = vmul.f32 %v3687, %v3693
        %v3696 = vmul.f32 %v3688, %v3693
        %v3697 = vmul.f32 %v3689, %v3693
        %v3698 = vld [vmem:[%s10 + $0x1] sm:$0x1]
        %v3699 = vlaneseq
        %v3700 = vshrl.u32 %v3699, 7
        %v3701 = vsub.s32 0, %v3700
        %v3702 = vrot.slane %v3698, %v3701
        %v3703 = vmul.f32 %v3686, %v3702
        %v3704 = vmul.f32 %v3687, %v3702
        %v3705 = vmul.f32 %v3688, %v3702
        %v3706 = vmul.f32 %v3689, %v3702
        %v3711 = vrot.slane %v3703, 1
        %v3712 = vrot.slane %v3704, 1
        %v3713 = vrot.slane %v3705, 1
        %v3714 = vrot.slane %v3706, 1
        %v3719 = vadd.f32 %v3694, %v3711
        %v3720 = vadd.f32 %v3695, %v3712
        %v3721 = vadd.f32 %v3696, %v3713
        %v3722 = vadd.f32 %v3697, %v3714
        %v3723 = vld [vmem:[%s10 + $0x2] sm:$0x1]
        %v3724 = vlaneseq
        %v3725 = vshrl.u32 %v3724, 7
        %v3726 = vsub.s32 0, %v3725
        %v3727 = vrot.slane %v3723, %v3726
        %v3728 = vmul.f32 %v3686, %v3727
        %v3729 = vmul.f32 %v3687, %v3727
        %v3730 = vmul.f32 %v3688, %v3727
        %v3731 = vmul.f32 %v3689, %v3727
        %v3736 = vrot.slane %v3728, 2
        %v3737 = vrot.slane %v3729, 2
        %v3738 = vrot.slane %v3730, 2
        %v3739 = vrot.slane %v3731, 2
        %v3744 = vadd.f32 %v3719, %v3736
        %v3745 = vadd.f32 %v3720, %v3737
        %v3746 = vadd.f32 %v3721, %v3738
        %v3747 = vadd.f32 %v3722, %v3739
        %v3748 = vld [vmem:[%s10 + $0x3] sm:$0x1]
        %v3749 = vunpack.c.l.bf16 %v2579
        %v3750 = vlaneseq
        %v3751 = vshrl.u32 %v3750, 7
        %v3752 = vsub.s32 0, %v3751
        %v3753 = vrot.slane %v3748, %v3752
        %v3754 = vmul.f32 %v3687, %v3753
        %v3755 = vmul.f32 %v3688, %v3753
        %v3756 = vmul.f32 %v3689, %v3753
        %v3757 = vmul.f32 %v3749, %v3753
        %v3758 = vadd.f32 %v3744, %v3754
        %v3759 = vadd.f32 %v3745, %v3755
        %v3760 = vadd.f32 %v3746, %v3756
        %v3761 = vadd.f32 %v3747, %v3757
        %v3762 = vld [vmem:[%s10 + $0x4] sm:$0x1]
        %v3763 = vlaneseq
        %v3764 = vshrl.u32 %v3763, 7
        %v3765 = vsub.s32 0, %v3764
        %v3766 = vrot.slane %v3762, %v3765
        %v3767 = vmul.f32 %v3687, %v3766
        %v3768 = vmul.f32 %v3688, %v3766
        %v3769 = vmul.f32 %v3689, %v3766
        %v3770 = vmul.f32 %v3749, %v3766
        %v3775 = vrot.slane %v3767, 1
        %v3776 = vrot.slane %v3768, 1
        %v3777 = vrot.slane %v3769, 1
        %v3778 = vrot.slane %v3770, 1
        %v3783 = vadd.f32 %v3758, %v3775
        %v3784 = vadd.f32 %v3759, %v3776
        %v3785 = vadd.f32 %v3760, %v3777
        %v3786 = vadd.f32 %v3761, %v3778
        %v3787 = vld [vmem:[%s10 + $0x5] sm:$0x1]
        %v3788 = vlaneseq
        %v3789 = vshrl.u32 %v3788, 7
        %v3790 = vsub.s32 0, %v3789
        %v3791 = vrot.slane %v3787, %v3790
        %v3792 = vmul.f32 %v3687, %v3791
        %v3793 = vmul.f32 %v3688, %v3791
        %v3794 = vmul.f32 %v3689, %v3791
        %v3795 = vmul.f32 %v3749, %v3791
        %v3800 = vrot.slane %v3792, 2
        %v3801 = vrot.slane %v3793, 2
        %v3802 = vrot.slane %v3794, 2
        %v3803 = vrot.slane %v3795, 2
        %v3808 = vadd.f32 %v3783, %v3800
        %v3809 = vadd.f32 %v3784, %v3801
        %v3810 = vadd.f32 %v3785, %v3802
        %v3811 = vadd.f32 %v3786, %v3803
        %v3812 = vld [vmem:[%s10 + $0x6] sm:$0x1]
        %v3813 = vunpack.c.l.bf16 %v2580
        %v3814 = vlaneseq
        %v3815 = vshrl.u32 %v3814, 7
        %v3816 = vsub.s32 0, %v3815
        %v3817 = vrot.slane %v3812, %v3816
        %v3818 = vmul.f32 %v3688, %v3817
        %v3819 = vmul.f32 %v3689, %v3817
        %v3820 = vmul.f32 %v3749, %v3817
        %v3821 = vmul.f32 %v3813, %v3817
        %v3822 = vadd.f32 %v3808, %v3818
        %v3823 = vadd.f32 %v3809, %v3819
        %v3824 = vadd.f32 %v3810, %v3820
        %v3825 = vadd.f32 %v3811, %v3821
        %v3826 = vld [vmem:[%s10 + $0x7] sm:$0x1]
        %v3827 = vlaneseq
        %v3828 = vshrl.u32 %v3827, 7
        %v3829 = vsub.s32 0, %v3828
        %v3830 = vrot.slane %v3826, %v3829
        %v3831 = vmul.f32 %v3688, %v3830
        %v3832 = vmul.f32 %v3689, %v3830
        %v3833 = vmul.f32 %v3749, %v3830
        %v3834 = vmul.f32 %v3813, %v3830
        %v3839 = vrot.slane %v3831, 1
        %v3840 = vrot.slane %v3832, 1
        %v3841 = vrot.slane %v3833, 1
        %v3842 = vrot.slane %v3834, 1
        %v3847 = vadd.f32 %v3822, %v3839
        %v3848 = vadd.f32 %v3823, %v3840
        %v3849 = vadd.f32 %v3824, %v3841
        %v3850 = vadd.f32 %v3825, %v3842
        %v3851 = vld [vmem:[%s10 + $0x8] sm:$0x1]
        %v3852 = vlaneseq
        %v3853 = vshrl.u32 %v3852, 7
        %v3854 = vsub.s32 0, %v3853
        %v3855 = vrot.slane %v3851, %v3854
        %v3856 = vmul.f32 %v3688, %v3855
        %v3857 = vmul.f32 %v3689, %v3855
        %v3858 = vmul.f32 %v3749, %v3855
        %v3859 = vmul.f32 %v3813, %v3855
        %v3864 = vrot.slane %v3856, 2
        %v3865 = vrot.slane %v3857, 2
        %v3866 = vrot.slane %v3858, 2
        %v3867 = vrot.slane %v3859, 2
        %v3872 = vadd.f32 %v3847, %v3864
        %v3873 = vadd.f32 %v3848, %v3865
        %v3874 = vadd.f32 %v3849, %v3866
        %v3875 = vadd.f32 %v3850, %v3867
        %v3880 = vcombine.low %v3872, %v3873
        %v3881 = vcombine.low %v3874, %v3875
        %v3884 = vpack.c.bf16 %v3881, %v3880
        %v3885 = vld [vmem:[%s11] sm:$0xf]
        %v3886 = vld [vmem:[%s11 + $0x4] sm:$0xf]
        %v3887 = vld [vmem:[%s11 + $0x8] sm:$0xf]
        %v3888 = vld [vmem:[%s11 + $0xc] sm:$0xf]
        %v3889 = vld [vmem:[%s11 + $0x10] sm:$0xf]
        %v3890 = vld [vmem:[%s11 + $0x14] sm:$0xf]
        %v3891 = vld [vmem:[%s11 + $0x18] sm:$0xf]
        %v3892 = vld [vmem:[%s11 + $0x1c] sm:$0xf]
        %v3893 = vld [vmem:[%s11 + $0x20] sm:$0xf]
        %v3894 = vld [vmem:[%s11 + $0x24] sm:$0xf]
        %v3895 = vld [vmem:[%s11 + $0x28] sm:$0xf]
        %v3896 = vld [vmem:[%s11 + $0x2c] sm:$0xf]
        %v3897 = vld [vmem:[%s11 + $0x30] sm:$0xf]
        %v3898 = vld [vmem:[%s11 + $0x34] sm:$0xf]
        %v3899 = vld [vmem:[%s11 + $0x38] sm:$0xf]
        %v3900 = vld [vmem:[%s11 + $0x3c] sm:$0xf]
        %v3901 = vld [vmem:[%s12] sm:$0x1]
        %v3903 = vlaneseq
        %v3904 = vshrl.u32 %v3903, 7
        %v3905 = vsub.s32 0, %v3904
        %v3906 = vrot.slane %v3901, %v3905
        %v3924 = vunpack.c.l.b16 %v3885
        %v3925 = vunpack.c.l.b16 %v3886
        %v3926 = vunpack.c.l.b16 %v3887
        %v3927 = vunpack.c.l.b16 %v3888
        %v3928 = vunpack.c.l.b16 %v3889
        %v3929 = vunpack.c.l.b16 %v3890
        %v3930 = vunpack.c.l.b16 %v3891
        %v3931 = vunpack.c.l.b16 %v3892
        %v3932 = vunpack.c.l.b16 %v3893
        %v3933 = vunpack.c.l.b16 %v3894
        %v3934 = vunpack.c.l.b16 %v3895
        %v3935 = vunpack.c.l.b16 %v3896
        %v3936 = vunpack.c.l.b16 %v3897
        %v3937 = vunpack.c.l.b16 %v3898
        %v3938 = vunpack.c.l.b16 %v3899
        %v3939 = vunpack.c.l.b16 %v3900
        %v3940 = vpack.c.b16 %v3925, %v3924
        %v3941 = vpack.c.b16 %v3927, %v3926
        %v3942 = vpack.c.b16 %v3929, %v3928
        %v3943 = vpack.c.b16 %v3931, %v3930
        %v3944 = vpack.c.b16 %v3933, %v3932
        %v3945 = vpack.c.b16 %v3935, %v3934
        %v3946 = vpack.c.b16 %v3937, %v3936
        %v3947 = vpack.c.b16 %v3939, %v3938
        %3956 = vmatprep.subr.bf16.mxu0 0
        %3957 = vmatpush1.bf16.msra.mxu0 %v3940
        %3958 = vmatprep.subr.bf16.mxu0 0
        %3959 = vmatpush1.bf16.msra.mxu0 %v3941
        %3960 = vmatprep.subr.bf16.mxu0 0
        %3961 = vmatpush1.bf16.msra.mxu0 %v3942
        %3962 = vmatprep.subr.bf16.mxu0 0
        %3963 = vmatpush1.bf16.msra.mxu0 %v3943
        %3964 = vmatprep.subr.bf16.mxu0 0
        %3965 = vmatpush1.bf16.msra.mxu0 %v3944
        %3966 = vmatprep.subr.bf16.mxu0 0
        %3967 = vmatpush1.bf16.msra.mxu0 %v3945
        %3968 = vmatprep.subr.bf16.mxu0 0
        %3969 = vmatpush1.bf16.msra.mxu0 %v3946
        %3970 = vmatprep.subr.bf16.mxu0 0
        %3971 = vmatpush1.bf16.msra.mxu0 %v3947
        %3972 = vmatprep.subr.bf16.mxu0 0
        %3973 = vmatpush1.bf16.msra.mxu0 0
        %3974 = vmatprep.subr.bf16.mxu0 0
        %3975 = vmatpush1.bf16.msra.mxu0 0
        %3976 = vmatprep.subr.bf16.mxu0 0
        %3977 = vmatpush1.bf16.msra.mxu0 0
        %3978 = vmatprep.subr.bf16.mxu0 0
        %3979 = vmatpush1.bf16.msra.mxu0 0
        %3980 = vmatprep.subr.bf16.mxu0 0
        %3981 = vmatpush1.bf16.msra.mxu0 0
        %3982 = vmatprep.subr.bf16.mxu0 0
        %3983 = vmatpush1.bf16.msra.mxu0 0
        %3984 = vmatprep.subr.bf16.mxu0 0
        %3985 = vmatpush1.bf16.msra.mxu0 0
        %3986 = vmatprep.subr.bf16.mxu0 0
        %3987 = vmatpush1.bf16.msra.mxu0 0
        %3988 = vmatprep.mubr.bf16.mxu0 0
        %3989 = vmatmul.mubr.bf16.gmra.mrb[0].mxu0 %v3884
        %v3990 = vpop.f32.mrb[0].mxu0
        %v3991 = vadd.f32 %v3906, %v3990
        %v3992 = vpop.f32.mrb[0].mxu0
        %v3993 = vpop.f32.mrb[0].mxu0
        %v3994 = vadd.f32 %v3906, %v3993
        %v3995 = vpop.f32.mrb[0].mxu0
        %3996 = vdwg.mxu0
        %v3999 = vcombine.high %v3991, %v3991
        %v4000 = vcombine.high %v3994, %v3994
        %v4003 = vld [vmem:[%s565] sm:$0xf]
        %v4004 = vld [vmem:[%s565 + $0x4] sm:$0x1]
        %v4005 = vld [vmem:[%s565 + $0x8] sm:$0xf]
        %v4006 = vld [vmem:[%s565 + $0xc] sm:$0x1]
        %v4007 = vld [vmem:[%s565 + $0x10] sm:$0xf]
        %v4008 = vld [vmem:[%s565 + $0x14] sm:$0x1]
        %v4009 = vld [vmem:[%s565 + $0x18] sm:$0xf]
        %v4010 = vld [vmem:[%s565 + $0x1c] sm:$0x1]
        %v4011 = vld [vmem:[%s565 + $0x20] sm:$0xf]
        %v4012 = vld [vmem:[%s565 + $0x24] sm:$0x1]
        %v4013 = vld [vmem:[%s565 + $0x28] sm:$0xf]
        %v4014 = vld [vmem:[%s565 + $0x2c] sm:$0x1]
        %v4015 = vld [vmem:[%s565 + $0x30] sm:$0xf]
        %v4016 = vld [vmem:[%s565 + $0x34] sm:$0x1]
        %v4017 = vld [vmem:[%s565 + $0x38] sm:$0xf]
        %v4018 = vld [vmem:[%s565 + $0x3c] sm:$0x1]
        %v4019 = vld [vmem:[%s565 + $0x40] sm:$0xf]
        %v4020 = vld [vmem:[%s565 + $0x44] sm:$0x1]
        %v4021 = vld [vmem:[%s565 + $0x48] sm:$0xf]
        %v4022 = vld [vmem:[%s565 + $0x50] sm:$0xf]
        %v4023 = vld [vmem:[%s565 + $0x58] sm:$0xf]
        %v4024 = vld [vmem:[%s565 + $0x60] sm:$0xf]
        %v4025 = vld [vmem:[%s565 + $0x68] sm:$0xf]
        %v4026 = vld [vmem:[%s565 + $0x70] sm:$0xf]
        %v4027 = vld [vmem:[%s565 + $0x78] sm:$0xf]
        %v4028 = vld [vmem:[%s565 + $0x80] sm:$0xf]
        %v4029 = vld [vmem:[%s565 + $0x88] sm:$0xf]
        %v4030 = vld [vmem:[%s565 + $0x90] sm:$0xf]
        %v4031 = vld [vmem:[%s565 + $0x94] sm:$0x1]
        %v4032 = vld [vmem:[%s565 + $0x98] sm:$0xf]
        %v4033 = vld [vmem:[%s565 + $0x9c] sm:$0x1]
        %v4034 = vld [vmem:[%s565 + $0xa0] sm:$0xf]
        %v4035 = vld [vmem:[%s565 + $0xa4] sm:$0x1]
        %v4036 = vld [vmem:[%s565 + $0xa8] sm:$0xf]
        %v4037 = vld [vmem:[%s565 + $0xac] sm:$0x1]
        %v4038 = vld [vmem:[%s565 + $0xb0] sm:$0xf]
        %v4039 = vld [vmem:[%s565 + $0xb4] sm:$0x1]
        %v4040 = vld [vmem:[%s565 + $0xb8] sm:$0xf]
        %v4041 = vld [vmem:[%s565 + $0xbc] sm:$0x1]
        %v4042 = vld [vmem:[%s565 + $0xc0] sm:$0xf]
        %v4043 = vld [vmem:[%s565 + $0xc4] sm:$0x1]
        %v4044 = vld [vmem:[%s565 + $0xc8] sm:$0xf]
        %v4045 = vld [vmem:[%s565 + $0xcc] sm:$0x1]
        %v4046 = vld [vmem:[%s565 + $0xd8] sm:$0xf]
        %v4047 = vld [vmem:[%s565 + $0xe0] sm:$0xf]
        %v4048 = vld [vmem:[%s565 + $0xe8] sm:$0xf]
        %v4049 = vld [vmem:[%s565 + $0xf0] sm:$0xf]
        %v4050 = vld [vmem:[%s565 + $0xf8] sm:$0xf]
        %v4051 = vld [vmem:[%s565 + $0x100] sm:$0xf]
        %v4052 = vld [vmem:[%s565 + $0x108] sm:$0xf]
        %v4053 = vld [vmem:[%s565 + $0x110] sm:$0xf]
        %v4070 = vunpack.c.l.b16 %v4003
        %v4071 = vunpack.c.l.b16 %v4004
        %v4072 = vunpack.c.l.b16 %v4005
        %v4073 = vunpack.c.l.b16 %v4006
        %v4074 = vunpack.c.l.b16 %v4007
        %v4075 = vunpack.c.l.b16 %v4008
        %v4076 = vunpack.c.l.b16 %v4009
        %v4077 = vunpack.c.l.b16 %v4010
        %v4078 = vunpack.c.l.b16 %v4011
        %v4079 = vunpack.c.l.b16 %v4012
        %v4080 = vunpack.c.l.b16 %v4013
        %v4081 = vunpack.c.l.b16 %v4014
        %v4082 = vunpack.c.l.b16 %v4015
        %v4083 = vunpack.c.l.b16 %v4016
        %v4084 = vunpack.c.l.b16 %v4017
        %v4085 = vunpack.c.l.b16 %v4018
        %v4086 = vpack.c.b16 %v4071, %v4070
        %v4087 = vpack.c.b16 %v4073, %v4072
        %v4088 = vpack.c.b16 %v4075, %v4074
        %v4089 = vpack.c.b16 %v4077, %v4076
        %v4090 = vpack.c.b16 %v4079, %v4078
        %v4091 = vpack.c.b16 %v4081, %v4080
        %v4092 = vpack.c.b16 %v4083, %v4082
        %v4093 = vpack.c.b16 %v4085, %v4084
        %v4095 = vshrl.u32 %v4086, 16
        %v4097 = vshll.u32 %v4086, 16
        %v4099 = vrot.slane %v4097, 1
        %v4100 = vor.u32 %v4095, %v4099
        %v4102 = vshrl.u32 %v4087, 16
        %v4104 = vshll.u32 %v4087, 16
        %v4106 = vrot.slane %v4104, 1
        %v4107 = vor.u32 %v4102, %v4106
        %v4109 = vshrl.u32 %v4088, 16
        %v4111 = vshll.u32 %v4088, 16
        %v4113 = vrot.slane %v4111, 1
        %v4114 = vor.u32 %v4109, %v4113
        %v4116 = vshrl.u32 %v4089, 16
        %v4118 = vshll.u32 %v4089, 16
        %v4120 = vrot.slane %v4118, 1
        %v4121 = vor.u32 %v4116, %v4120
        %v4123 = vshrl.u32 %v4090, 16
        %v4125 = vshll.u32 %v4090, 16
        %v4127 = vrot.slane %v4125, 1
        %v4128 = vor.u32 %v4123, %v4127
        %v4130 = vshrl.u32 %v4091, 16
        %v4132 = vshll.u32 %v4091, 16
        %v4134 = vrot.slane %v4132, 1
        %v4135 = vor.u32 %v4130, %v4134
        %v4137 = vshrl.u32 %v4092, 16
        %v4139 = vshll.u32 %v4092, 16
        %v4141 = vrot.slane %v4139, 1
        %v4142 = vor.u32 %v4137, %v4141
        %v4144 = vshrl.u32 %v4093, 16
        %v4146 = vshll.u32 %v4093, 16
        %v4148 = vrot.slane %v4146, 1
        %v4149 = vor.u32 %v4144, %v4148
        %v4166 = vunpack.c.l.b16 %v4030
        %v4167 = vunpack.c.l.b16 %v4031
        %v4168 = vunpack.c.l.b16 %v4032
        %v4169 = vunpack.c.l.b16 %v4033
        %v4170 = vunpack.c.l.b16 %v4034
        %v4171 = vunpack.c.l.b16 %v4035
        %v4172 = vunpack.c.l.b16 %v4036
        %v4173 = vunpack.c.l.b16 %v4037
        %v4174 = vunpack.c.l.b16 %v4038
        %v4175 = vunpack.c.l.b16 %v4039
        %v4176 = vunpack.c.l.b16 %v4040
        %v4177 = vunpack.c.l.b16 %v4041
        %v4178 = vunpack.c.l.b16 %v4042
        %v4179 = vunpack.c.l.b16 %v4043
        %v4180 = vunpack.c.l.b16 %v4044
        %v4181 = vunpack.c.l.b16 %v4045
        %v4182 = vpack.c.b16 %v4167, %v4166
        %v4183 = vpack.c.b16 %v4169, %v4168
        %v4184 = vpack.c.b16 %v4171, %v4170
        %v4185 = vpack.c.b16 %v4173, %v4172
        %v4186 = vpack.c.b16 %v4175, %v4174
        %v4187 = vpack.c.b16 %v4177, %v4176
        %v4188 = vpack.c.b16 %v4179, %v4178
        %v4189 = vpack.c.b16 %v4181, %v4180
        %v4191 = vshrl.u32 %v4182, 16
        %v4193 = vshll.u32 %v4182, 16
        %v4195 = vrot.slane %v4193, 1
        %v4196 = vor.u32 %v4191, %v4195
        %v4198 = vshrl.u32 %v4183, 16
        %v4200 = vshll.u32 %v4183, 16
        %v4202 = vrot.slane %v4200, 1
        %v4203 = vor.u32 %v4198, %v4202
        %v4205 = vshrl.u32 %v4184, 16
        %v4207 = vshll.u32 %v4184, 16
        %v4209 = vrot.slane %v4207, 1
        %v4210 = vor.u32 %v4205, %v4209
        %v4212 = vshrl.u32 %v4185, 16
        %v4214 = vshll.u32 %v4185, 16
        %v4216 = vrot.slane %v4214, 1
        %v4217 = vor.u32 %v4212, %v4216
        %v4219 = vshrl.u32 %v4186, 16
        %v4221 = vshll.u32 %v4186, 16
        %v4223 = vrot.slane %v4221, 1
        %v4224 = vor.u32 %v4219, %v4223
        %v4226 = vshrl.u32 %v4187, 16
        %v4228 = vshll.u32 %v4187, 16
        %v4230 = vrot.slane %v4228, 1
        %v4231 = vor.u32 %v4226, %v4230
        %v4233 = vshrl.u32 %v4188, 16
        %v4235 = vshll.u32 %v4188, 16
        %v4237 = vrot.slane %v4235, 1
        %v4238 = vor.u32 %v4233, %v4237
        %v4240 = vshrl.u32 %v4189, 16
        %v4242 = vshll.u32 %v4189, 16
        %v4244 = vrot.slane %v4242, 1
        %v4245 = vor.u32 %v4240, %v4244
        %v4248 = vunpack.c.l.b16 %v4019
        %v4249 = vunpack.c.l.b16 %v4020
        %v4250 = vpack.c.b16 %v4249, %v4248
        %v4252 = vshrl.u32 %v4250, 16
        %v4254 = vshll.u32 %v4250, 16
        %v4256 = vrot.slane %v4254, 1
        %v4257 = vor.u32 %v4252, %v4256
        %v4275 = vunpack.c.l.b16 %v4021
        %v4276 = vunpack.c.l.b16 %v4100
        %v4277 = vunpack.c.l.b16 %v4046
        %v4278 = vunpack.c.l.b16 %v4196
        %v4279 = vunpack.c.l.b16 %v4022
        %v4280 = vunpack.c.l.b16 %v4107
        %v4281 = vunpack.c.l.b16 %v4047
        %v4282 = vunpack.c.l.b16 %v4203
        %v4283 = vunpack.c.l.b16 %v4023
        %v4284 = vunpack.c.l.b16 %v4114
        %v4285 = vunpack.c.l.b16 %v4048
        %v4286 = vunpack.c.l.b16 %v4210
        %v4287 = vunpack.c.l.b16 %v4024
        %v4288 = vunpack.c.l.b16 %v4121
        %v4289 = vunpack.c.l.b16 %v4049
        %v4290 = vunpack.c.l.b16 %v4217
        %v4291 = vunpack.c.l.b16 %v4025
        %v4292 = vunpack.c.l.b16 %v4128
        %v4293 = vunpack.c.l.b16 %v4050
        %v4294 = vunpack.c.l.b16 %v4224
        %v4295 = vunpack.c.l.b16 %v4026
        %v4296 = vunpack.c.l.b16 %v4135
        %v4297 = vunpack.c.l.b16 %v4051
        %v4298 = vunpack.c.l.b16 %v4231
        %v4299 = vunpack.c.l.b16 %v4027
        %v4300 = vunpack.c.l.b16 %v4142
        %v4301 = vunpack.c.l.b16 %v4052
        %v4302 = vunpack.c.l.b16 %v4238
        %v4303 = vunpack.c.l.b16 %v4028
        %v4304 = vunpack.c.l.b16 %v4149
        %v4305 = vunpack.c.l.b16 %v4053
        %v4306 = vunpack.c.l.b16 %v4245
        %v4307 = vunpack.c.l.b16 %v4029
        %v4308 = vunpack.c.l.b16 %v4257
        %v4309 = vld [vmem:[%s6] sm:$0xf]
        %v4310 = vld [vmem:[%s6 + $0x4] sm:$0xf]
        %v4311 = vld [vmem:[%s6 + $0x8] sm:$0xf]
        %v4312 = vld [vmem:[%s6 + $0xc] sm:$0xf]
        %v4313 = vld [vmem:[%s6 + $0x10] sm:$0xf]
        %v4314 = vld [vmem:[%s6 + $0x14] sm:$0xf]
        %v4315 = vld [vmem:[%s6 + $0x18] sm:$0xf]
        %v4316 = vld [vmem:[%s6 + $0x1c] sm:$0xf]
        %v4317 = vld [vmem:[%s6 + $0x20] sm:$0xf]
        %v4318 = vld [vmem:[%s6 + $0x24] sm:$0xf]
        %v4319 = vld [vmem:[%s6 + $0x28] sm:$0xf]
        %v4320 = vld [vmem:[%s6 + $0x2c] sm:$0xf]
        %v4321 = vld [vmem:[%s6 + $0x30] sm:$0xf]
        %v4322 = vld [vmem:[%s6 + $0x34] sm:$0xf]
        %v4323 = vld [vmem:[%s6 + $0x38] sm:$0xf]
        %v4324 = vld [vmem:[%s6 + $0x3c] sm:$0xf]
        %v4325 = vld [vmem:[%s6 + $0x40] sm:$0xf]
        %v4326 = vld [vmem:[%s6 + $0x44] sm:$0xf]
        %v4327 = vld [vmem:[%s6 + $0x48] sm:$0xf]
        %v4328 = vld [vmem:[%s6 + $0x4c] sm:$0xf]
        %v4329 = vld [vmem:[%s6 + $0x50] sm:$0xf]
        %v4330 = vld [vmem:[%s6 + $0x54] sm:$0xf]
        %v4331 = vld [vmem:[%s6 + $0x58] sm:$0xf]
        %v4332 = vld [vmem:[%s6 + $0x5c] sm:$0xf]
        %v4333 = vld [vmem:[%s6 + $0x60] sm:$0xf]
        %v4334 = vld [vmem:[%s6 + $0x64] sm:$0xf]
        %v4335 = vld [vmem:[%s6 + $0x68] sm:$0xf]
        %v4336 = vld [vmem:[%s6 + $0x6c] sm:$0xf]
        %v4337 = vld [vmem:[%s6 + $0x70] sm:$0xf]
        %v4338 = vld [vmem:[%s6 + $0x74] sm:$0xf]
        %v4339 = vld [vmem:[%s6 + $0x78] sm:$0xf]
        %v4340 = vld [vmem:[%s6 + $0x7c] sm:$0xf]
        %v4341 = vld [vmem:[%s6 + $0x80] sm:$0xf]
        %v4342 = vld [vmem:[%s6 + $0x84] sm:$0xf]
        %v4343 = vld [vmem:[%s6 + $0x88] sm:$0xf]
        %v4344 = vld [vmem:[%s6 + $0x8c] sm:$0xf]
        %v4345 = vld [vmem:[%s6 + $0x90] sm:$0xf]
        %v4346 = vld [vmem:[%s6 + $0x94] sm:$0xf]
        %v4347 = vld [vmem:[%s6 + $0x98] sm:$0xf]
        %v4348 = vld [vmem:[%s6 + $0x9c] sm:$0xf]
        %v4349 = vld [vmem:[%s6 + $0xa0] sm:$0xf]
        %v4350 = vld [vmem:[%s6 + $0xa4] sm:$0xf]
        %v4351 = vld [vmem:[%s6 + $0xa8] sm:$0xf]
        %v4352 = vld [vmem:[%s6 + $0xac] sm:$0xf]
        %v4353 = vld [vmem:[%s6 + $0xb0] sm:$0xf]
        %v4354 = vld [vmem:[%s6 + $0xb4] sm:$0xf]
        %v4355 = vld [vmem:[%s6 + $0xb8] sm:$0xf]
        %v4356 = vld [vmem:[%s6 + $0xbc] sm:$0xf]
        %v4357 = vld [vmem:[%s6 + $0xc0] sm:$0xf]
        %v4358 = vld [vmem:[%s6 + $0xc4] sm:$0xf]
        %v4359 = vld [vmem:[%s6 + $0xc8] sm:$0xf]
        %v4360 = vld [vmem:[%s6 + $0xcc] sm:$0xf]
        %v4361 = vld [vmem:[%s6 + $0xd0] sm:$0xf]
        %v4362 = vld [vmem:[%s6 + $0xd4] sm:$0xf]
        %v4363 = vld [vmem:[%s6 + $0xd8] sm:$0xf]
        %v4364 = vld [vmem:[%s6 + $0xdc] sm:$0xf]
        %v4365 = vld [vmem:[%s6 + $0xe0] sm:$0xf]
        %v4366 = vld [vmem:[%s6 + $0xe4] sm:$0xf]
        %v4367 = vld [vmem:[%s6 + $0xe8] sm:$0xf]
        %v4368 = vld [vmem:[%s6 + $0xec] sm:$0xf]
        %v4369 = vld [vmem:[%s6 + $0xf0] sm:$0xf]
        %v4370 = vld [vmem:[%s6 + $0xf4] sm:$0xf]
        %v4371 = vld [vmem:[%s6 + $0xf8] sm:$0xf]
        %v4372 = vld [vmem:[%s6 + $0xfc] sm:$0xf]
        %v4373 = vld [vmem:[%s6 + $0x100] sm:$0xf]
        %v4374 = vld [vmem:[%s6 + $0x104] sm:$0xf]
        %v4375 = vld [vmem:[%s6 + $0x108] sm:$0xf]
        %v4376 = vld [vmem:[%s6 + $0x10c] sm:$0xf]
        %v4377 = vld [vmem:[%s6 + $0x110] sm:$0xf]
        %v4378 = vld [vmem:[%s6 + $0x114] sm:$0xf]
        %v4379 = vld [vmem:[%s6 + $0x118] sm:$0xf]
        %v4380 = vld [vmem:[%s6 + $0x11c] sm:$0xf]
        %v4381 = vld [vmem:[%s6 + $0x120] sm:$0xf]
        %v4382 = vld [vmem:[%s6 + $0x124] sm:$0xf]
        %v4383 = vld [vmem:[%s6 + $0x128] sm:$0xf]
        %v4384 = vld [vmem:[%s6 + $0x12c] sm:$0xf]
        %v4385 = vld [vmem:[%s6 + $0x130] sm:$0xf]
        %v4386 = vld [vmem:[%s6 + $0x134] sm:$0xf]
        %v4387 = vld [vmem:[%s6 + $0x138] sm:$0xf]
        %v4388 = vld [vmem:[%s6 + $0x13c] sm:$0xf]
        %v4389 = vld [vmem:[%s6 + $0x140] sm:$0xf]
        %v4390 = vld [vmem:[%s6 + $0x144] sm:$0xf]
        %v4391 = vld [vmem:[%s6 + $0x148] sm:$0xf]
        %v4392 = vld [vmem:[%s6 + $0x14c] sm:$0xf]
        %v4393 = vld [vmem:[%s6 + $0x150] sm:$0xf]
        %v4394 = vld [vmem:[%s6 + $0x154] sm:$0xf]
        %v4395 = vld [vmem:[%s6 + $0x158] sm:$0xf]
        %v4396 = vld [vmem:[%s6 + $0x15c] sm:$0xf]
        %v4397 = vld [vmem:[%s6 + $0x160] sm:$0xf]
        %v4398 = vld [vmem:[%s6 + $0x164] sm:$0xf]
        %v4399 = vld [vmem:[%s6 + $0x168] sm:$0xf]
        %v4400 = vld [vmem:[%s6 + $0x16c] sm:$0xf]
        %v4401 = vld [vmem:[%s6 + $0x170] sm:$0xf]
        %v4402 = vld [vmem:[%s6 + $0x174] sm:$0xf]
        %v4403 = vld [vmem:[%s6 + $0x178] sm:$0xf]
        %v4404 = vld [vmem:[%s6 + $0x17c] sm:$0xf]
        %v4405 = vld [vmem:[%s6 + $0x180] sm:$0xf]
        %v4406 = vld [vmem:[%s6 + $0x184] sm:$0xf]
        %v4407 = vld [vmem:[%s6 + $0x188] sm:$0xf]
        %v4408 = vld [vmem:[%s6 + $0x18c] sm:$0xf]
        %v4409 = vld [vmem:[%s6 + $0x190] sm:$0xf]
        %v4410 = vld [vmem:[%s6 + $0x194] sm:$0xf]
        %v4411 = vld [vmem:[%s6 + $0x198] sm:$0xf]
        %v4412 = vld [vmem:[%s6 + $0x19c] sm:$0xf]
        %v4413 = vld [vmem:[%s6 + $0x1a0] sm:$0xf]
        %v4414 = vld [vmem:[%s6 + $0x1a4] sm:$0xf]
        %v4415 = vld [vmem:[%s6 + $0x1a8] sm:$0xf]
        %v4416 = vld [vmem:[%s6 + $0x1ac] sm:$0xf]
        %v4417 = vld [vmem:[%s6 + $0x1b0] sm:$0xf]
        %v4418 = vld [vmem:[%s6 + $0x1b4] sm:$0xf]
        %v4419 = vld [vmem:[%s6 + $0x1b8] sm:$0xf]
        %v4420 = vld [vmem:[%s6 + $0x1bc] sm:$0xf]
        %v4421 = vld [vmem:[%s6 + $0x1c0] sm:$0xf]
        %v4422 = vld [vmem:[%s6 + $0x1c4] sm:$0xf]
        %v4423 = vld [vmem:[%s6 + $0x1c8] sm:$0xf]
        %v4424 = vld [vmem:[%s6 + $0x1cc] sm:$0xf]
        %v4425 = vld [vmem:[%s6 + $0x1d0] sm:$0xf]
        %v4426 = vld [vmem:[%s6 + $0x1d4] sm:$0xf]
        %v4427 = vld [vmem:[%s6 + $0x1d8] sm:$0xf]
        %v4428 = vld [vmem:[%s6 + $0x1dc] sm:$0xf]
        %v4429 = vld [vmem:[%s6 + $0x1e0] sm:$0xf]
        %v4430 = vld [vmem:[%s6 + $0x1e4] sm:$0xf]
        %v4431 = vld [vmem:[%s6 + $0x1e8] sm:$0xf]
        %v4432 = vld [vmem:[%s6 + $0x1ec] sm:$0xf]
        %v4433 = vld [vmem:[%s6 + $0x1f0] sm:$0xf]
        %v4434 = vld [vmem:[%s6 + $0x1f4] sm:$0xf]
        %v4435 = vld [vmem:[%s6 + $0x1f8] sm:$0xf]
        %v4436 = vld [vmem:[%s6 + $0x1fc] sm:$0xf]
        %v4437 = vld [vmem:[%s6 + $0x200] sm:$0xf]
        %v4438 = vld [vmem:[%s6 + $0x204] sm:$0xf]
        %v4439 = vld [vmem:[%s6 + $0x208] sm:$0xf]
        %v4440 = vld [vmem:[%s6 + $0x20c] sm:$0xf]
        %v4441 = vld [vmem:[%s6 + $0x210] sm:$0xf]
        %v4442 = vld [vmem:[%s6 + $0x214] sm:$0xf]
        %v4443 = vld [vmem:[%s6 + $0x218] sm:$0xf]
        %v4444 = vld [vmem:[%s6 + $0x21c] sm:$0xf]
        %v4445 = vld [vmem:[%s6 + $0x220] sm:$0xf]
        %v4446 = vld [vmem:[%s6 + $0x224] sm:$0xf]
        %v4447 = vld [vmem:[%s6 + $0x228] sm:$0xf]
        %v4448 = vld [vmem:[%s6 + $0x22c] sm:$0xf]
        %v4449 = vld [vmem:[%s6 + $0x230] sm:$0xf]
        %v4450 = vld [vmem:[%s6 + $0x234] sm:$0xf]
        %v4451 = vld [vmem:[%s6 + $0x238] sm:$0xf]
        %v4452 = vld [vmem:[%s6 + $0x23c] sm:$0xf]
        %v4453 = vld [vmem:[%s7] sm:$0x1]
        %v4455 = vlaneseq
        %v4456 = vshrl.u32 %v4455, 7
        %v4457 = vsub.s32 0, %v4456
        %v4458 = vrot.slane %v4453, %v4457
        %v4460 = vpack.c.b16 %v4072, %v4070
        %v4461 = vpack.c.b16 %v4279, %v4275
        %v4462 = vpack.c.b16 %v4280, %v4276
        %v4463 = vpack.c.b16 %v4168, %v4166
        %v4464 = vpack.c.b16 %v4281, %v4277
        %v4465 = vpack.c.b16 %v4282, %v4278
        %v4466 = vpack.c.b16 %v4074, %v4072
        %v4467 = vpack.c.b16 %v4283, %v4279
        %v4468 = vpack.c.b16 %v4284, %v4280
        %v4469 = vpack.c.b16 %v4076, %v4074
        %v4470 = vpack.c.b16 %v4287, %v4283
        %v4471 = vpack.c.b16 %v4288, %v4284
        %v4472 = vpack.c.b16 %v4172, %v4170
        %v4473 = vpack.c.b16 %v4289, %v4285
        %v4474 = vpack.c.b16 %v4290, %v4286
        %v4475 = vpack.c.b16 %v4078, %v4076
        %v4476 = vpack.c.b16 %v4291, %v4287
        %v4477 = vpack.c.b16 %v4292, %v4288
        %v4478 = vpack.c.b16 %v4080, %v4078
        %v4479 = vpack.c.b16 %v4295, %v4291
        %v4480 = vpack.c.b16 %v4296, %v4292
        %v4481 = vpack.c.b16 %v4176, %v4174
        %v4482 = vpack.c.b16 %v4297, %v4293
        %v4483 = vpack.c.b16 %v4298, %v4294
        %v4484 = vpack.c.b16 %v4082, %v4080
        %v4485 = vpack.c.b16 %v4299, %v4295
        %v4486 = vpack.c.b16 %v4300, %v4296
        %v4487 = vpack.c.b16 %v4084, %v4082
        %v4488 = vpack.c.b16 %v4303, %v4299
        %v4489 = vpack.c.b16 %v4304, %v4300
        %v4490 = vpack.c.b16 %v4180, %v4178
        %v4491 = vpack.c.b16 %v4305, %v4301
        %v4492 = vpack.c.b16 %v4306, %v4302
        %v4493 = vpack.c.b16 %v4248, %v4084
        %v4494 = vpack.c.b16 %v4307, %v4303
        %v4495 = vpack.c.b16 %v4308, %v4304
        %v4676 = vunpack.c.l.b16 %v4309
        %v4677 = vunpack.c.l.b16 %v4310
        %v4678 = vunpack.c.l.b16 %v4311
        %v4679 = vunpack.c.l.b16 %v4312
        %v4680 = vunpack.c.l.b16 %v4313
        %v4681 = vunpack.c.l.b16 %v4314
        %v4682 = vunpack.c.l.b16 %v4315
        %v4683 = vunpack.c.l.b16 %v4316
        %v4684 = vunpack.c.l.b16 %v4317
        %v4685 = vunpack.c.l.b16 %v4318
        %v4686 = vunpack.c.l.b16 %v4319
        %v4687 = vunpack.c.l.b16 %v4320
        %v4688 = vunpack.c.l.b16 %v4321
        %v4689 = vunpack.c.l.b16 %v4322
        %v4690 = vunpack.c.l.b16 %v4323
        %v4691 = vunpack.c.l.b16 %v4324
        %v4692 = vunpack.c.l.b16 %v4325
        %v4693 = vunpack.c.l.b16 %v4326
        %v4694 = vunpack.c.l.b16 %v4327
        %v4695 = vunpack.c.l.b16 %v4328
        %v4696 = vunpack.c.l.b16 %v4329
        %v4697 = vunpack.c.l.b16 %v4330
        %v4698 = vunpack.c.l.b16 %v4331
        %v4699 = vunpack.c.l.b16 %v4332
        %v4700 = vunpack.c.l.b16 %v4333
        %v4701 = vunpack.c.l.b16 %v4334
        %v4702 = vunpack.c.l.b16 %v4335
        %v4703 = vunpack.c.l.b16 %v4336
        %v4704 = vunpack.c.l.b16 %v4337
        %v4705 = vunpack.c.l.b16 %v4338
        %v4706 = vunpack.c.l.b16 %v4339
        %v4707 = vunpack.c.l.b16 %v4340
        %v4708 = vunpack.c.l.b16 %v4341
        %v4709 = vunpack.c.l.b16 %v4342
        %v4710 = vunpack.c.l.b16 %v4343
        %v4711 = vunpack.c.l.b16 %v4344
        %v4712 = vunpack.c.l.b16 %v4345
        %v4713 = vunpack.c.l.b16 %v4346
        %v4714 = vunpack.c.l.b16 %v4347
        %v4715 = vunpack.c.l.b16 %v4348
        %v4716 = vunpack.c.l.b16 %v4349
        %v4717 = vunpack.c.l.b16 %v4350
        %v4718 = vunpack.c.l.b16 %v4351
        %v4719 = vunpack.c.l.b16 %v4352
        %v4720 = vunpack.c.l.b16 %v4353
        %v4721 = vunpack.c.l.b16 %v4354
        %v4722 = vunpack.c.l.b16 %v4355
        %v4723 = vunpack.c.l.b16 %v4356
        %v4724 = vunpack.c.l.b16 %v4357
        %v4725 = vunpack.c.l.b16 %v4358
        %v4726 = vunpack.c.l.b16 %v4359
        %v4727 = vunpack.c.l.b16 %v4360
        %v4728 = vunpack.c.l.b16 %v4361
        %v4729 = vunpack.c.l.b16 %v4362
        %v4730 = vunpack.c.l.b16 %v4363
        %v4731 = vunpack.c.l.b16 %v4364
        %v4732 = vunpack.c.l.b16 %v4365
        %v4733 = vunpack.c.l.b16 %v4366
        %v4734 = vunpack.c.l.b16 %v4367
        %v4735 = vunpack.c.l.b16 %v4368
        %v4736 = vunpack.c.l.b16 %v4369
        %v4737 = vunpack.c.l.b16 %v4370
        %v4738 = vunpack.c.l.b16 %v4371
        %v4739 = vunpack.c.l.b16 %v4372
        %v4740 = vunpack.c.l.b16 %v4373
        %v4741 = vunpack.c.l.b16 %v4374
        %v4742 = vunpack.c.l.b16 %v4375
        %v4743 = vunpack.c.l.b16 %v4376
        %v4744 = vunpack.c.l.b16 %v4377
        %v4745 = vunpack.c.l.b16 %v4378
        %v4746 = vunpack.c.l.b16 %v4379
        %v4747 = vunpack.c.l.b16 %v4380
        %v4748 = vunpack.c.l.b16 %v4381
        %v4749 = vunpack.c.l.b16 %v4382
        %v4750 = vunpack.c.l.b16 %v4383
        %v4751 = vunpack.c.l.b16 %v4384
        %v4752 = vunpack.c.l.b16 %v4385
        %v4753 = vunpack.c.l.b16 %v4386
        %v4754 = vunpack.c.l.b16 %v4387
        %v4755 = vunpack.c.l.b16 %v4388
        %v4756 = vunpack.c.l.b16 %v4389
        %v4757 = vunpack.c.l.b16 %v4390
        %v4758 = vunpack.c.l.b16 %v4391
        %v4759 = vunpack.c.l.b16 %v4392
        %v4760 = vunpack.c.l.b16 %v4393
        %v4761 = vunpack.c.l.b16 %v4394
        %v4762 = vunpack.c.l.b16 %v4395
        %v4763 = vunpack.c.l.b16 %v4396
        %v4764 = vunpack.c.l.b16 %v4397
        %v4765 = vunpack.c.l.b16 %v4398
        %v4766 = vunpack.c.l.b16 %v4399
        %v4767 = vunpack.c.l.b16 %v4400
        %v4768 = vunpack.c.l.b16 %v4401
        %v4769 = vunpack.c.l.b16 %v4402
        %v4770 = vunpack.c.l.b16 %v4403
        %v4771 = vunpack.c.l.b16 %v4404
        %v4772 = vunpack.c.l.b16 %v4405
        %v4773 = vunpack.c.l.b16 %v4406
        %v4774 = vunpack.c.l.b16 %v4407
        %v4775 = vunpack.c.l.b16 %v4408
        %v4776 = vunpack.c.l.b16 %v4409
        %v4777 = vunpack.c.l.b16 %v4410
        %v4778 = vunpack.c.l.b16 %v4411
        %v4779 = vunpack.c.l.b16 %v4412
        %v4780 = vunpack.c.l.b16 %v4413
        %v4781 = vunpack.c.l.b16 %v4414
        %v4782 = vunpack.c.l.b16 %v4415
        %v4783 = vunpack.c.l.b16 %v4416
        %v4784 = vunpack.c.l.b16 %v4417
        %v4785 = vunpack.c.l.b16 %v4418
        %v4786 = vunpack.c.l.b16 %v4419
        %v4787 = vunpack.c.l.b16 %v4420
        %v4788 = vunpack.c.l.b16 %v4421
        %v4789 = vunpack.c.l.b16 %v4422
        %v4790 = vunpack.c.l.b16 %v4423
        %v4791 = vunpack.c.l.b16 %v4424
        %v4792 = vunpack.c.l.b16 %v4425
        %v4793 = vunpack.c.l.b16 %v4426
        %v4794 = vunpack.c.l.b16 %v4427
        %v4795 = vunpack.c.l.b16 %v4428
        %v4796 = vunpack.c.l.b16 %v4429
        %v4797 = vunpack.c.l.b16 %v4430
        %v4798 = vunpack.c.l.b16 %v4431
        %v4799 = vunpack.c.l.b16 %v4432
        %v4800 = vunpack.c.l.b16 %v4433
        %v4801 = vunpack.c.l.b16 %v4434
        %v4802 = vunpack.c.l.b16 %v4435
        %v4803 = vunpack.c.l.b16 %v4436
        %v4804 = vunpack.c.l.b16 %v4437
        %v4805 = vunpack.c.l.b16 %v4438
        %v4806 = vunpack.c.l.b16 %v4439
        %v4807 = vunpack.c.l.b16 %v4440
        %v4808 = vunpack.c.l.b16 %v4441
        %v4809 = vunpack.c.l.b16 %v4442
        %v4810 = vunpack.c.l.b16 %v4443
        %v4811 = vunpack.c.l.b16 %v4444
        %v4812 = vunpack.c.l.b16 %v4445
        %v4813 = vunpack.c.l.b16 %v4446
        %v4814 = vunpack.c.l.b16 %v4447
        %v4815 = vunpack.c.l.b16 %v4448
        %v4816 = vunpack.c.l.b16 %v4449
        %v4817 = vunpack.c.l.b16 %v4450
        %v4818 = vunpack.c.l.b16 %v4451
        %v4819 = vunpack.c.l.b16 %v4452
        %v4820 = vpack.c.b16 %v4677, %v4676
        %v4821 = vpack.c.b16 %v4679, %v4678
        %v4822 = vpack.c.b16 %v4681, %v4680
        %v4823 = vpack.c.b16 %v4683, %v4682
        %v4824 = vpack.c.b16 %v4685, %v4684
        %v4825 = vpack.c.b16 %v4687, %v4686
        %v4826 = vpack.c.b16 %v4689, %v4688
        %v4827 = vpack.c.b16 %v4691, %v4690
        %v4828 = vpack.c.b16 %v4693, %v4692
        %v4829 = vpack.c.b16 %v4695, %v4694
        %v4830 = vpack.c.b16 %v4697, %v4696
        %v4831 = vpack.c.b16 %v4699, %v4698
        %v4832 = vpack.c.b16 %v4701, %v4700
        %v4833 = vpack.c.b16 %v4703, %v4702
        %v4834 = vpack.c.b16 %v4705, %v4704
        %v4835 = vpack.c.b16 %v4707, %v4706
        %v4836 = vpack.c.b16 %v4709, %v4708
        %v4837 = vpack.c.b16 %v4711, %v4710
        %v4838 = vpack.c.b16 %v4713, %v4712
        %v4839 = vpack.c.b16 %v4715, %v4714
        %v4840 = vpack.c.b16 %v4717, %v4716
        %v4841 = vpack.c.b16 %v4719, %v4718
        %v4842 = vpack.c.b16 %v4721, %v4720
        %v4843 = vpack.c.b16 %v4723, %v4722
        %v4844 = vpack.c.b16 %v4725, %v4724
        %v4845 = vpack.c.b16 %v4727, %v4726
        %v4846 = vpack.c.b16 %v4729, %v4728
        %v4847 = vpack.c.b16 %v4731, %v4730
        %v4848 = vpack.c.b16 %v4733, %v4732
        %v4849 = vpack.c.b16 %v4735, %v4734
        %v4850 = vpack.c.b16 %v4737, %v4736
        %v4851 = vpack.c.b16 %v4739, %v4738
        %v4852 = vpack.c.b16 %v4741, %v4740
        %v4853 = vpack.c.b16 %v4743, %v4742
        %v4854 = vpack.c.b16 %v4745, %v4744
        %v4855 = vpack.c.b16 %v4747, %v4746
        %v4856 = vpack.c.b16 %v4749, %v4748
        %v4857 = vpack.c.b16 %v4751, %v4750
        %v4858 = vpack.c.b16 %v4753, %v4752
        %v4859 = vpack.c.b16 %v4755, %v4754
        %v4860 = vpack.c.b16 %v4757, %v4756
        %v4861 = vpack.c.b16 %v4759, %v4758
        %v4862 = vpack.c.b16 %v4761, %v4760
        %v4863 = vpack.c.b16 %v4763, %v4762
        %v4864 = vpack.c.b16 %v4765, %v4764
        %v4865 = vpack.c.b16 %v4767, %v4766
        %v4866 = vpack.c.b16 %v4769, %v4768
        %v4867 = vpack.c.b16 %v4771, %v4770
        %v4868 = vpack.c.b16 %v4773, %v4772
        %v4869 = vpack.c.b16 %v4775, %v4774
        %v4870 = vpack.c.b16 %v4777, %v4776
        %v4871 = vpack.c.b16 %v4779, %v4778
        %v4872 = vpack.c.b16 %v4781, %v4780
        %v4873 = vpack.c.b16 %v4783, %v4782
        %v4874 = vpack.c.b16 %v4785, %v4784
        %v4875 = vpack.c.b16 %v4787, %v4786
        %v4876 = vpack.c.b16 %v4789, %v4788
        %v4877 = vpack.c.b16 %v4791, %v4790
        %v4878 = vpack.c.b16 %v4793, %v4792
        %v4879 = vpack.c.b16 %v4795, %v4794
        %v4880 = vpack.c.b16 %v4797, %v4796
        %v4881 = vpack.c.b16 %v4799, %v4798
        %v4882 = vpack.c.b16 %v4801, %v4800
        %v4883 = vpack.c.b16 %v4803, %v4802
        %v4884 = vpack.c.b16 %v4805, %v4804
        %v4885 = vpack.c.b16 %v4807, %v4806
        %v4886 = vpack.c.b16 %v4809, %v4808
        %v4887 = vpack.c.b16 %v4811, %v4810
        %v4888 = vpack.c.b16 %v4813, %v4812
        %v4889 = vpack.c.b16 %v4815, %v4814
        %v4890 = vpack.c.b16 %v4817, %v4816
        %v4891 = vpack.c.b16 %v4819, %v4818
        %4964 = vmatprep.subr.bf16.mxu0 0
        %4965 = vmatpush1.bf16.msra.mxu0 %v4820
        %4966 = vmatprep.subr.bf16.mxu0 0
        %4967 = vmatpush1.bf16.msra.mxu0 %v4821
        %4968 = vmatprep.subr.bf16.mxu0 0
        %4969 = vmatpush1.bf16.msra.mxu0 %v4822
        %4970 = vmatprep.subr.bf16.mxu0 0
        %4971 = vmatpush1.bf16.msra.mxu0 %v4823
        %4972 = vmatprep.subr.bf16.mxu0 0
        %4973 = vmatpush1.bf16.msra.mxu0 %v4824
        %4974 = vmatprep.subr.bf16.mxu0 0
        %4975 = vmatpush1.bf16.msra.mxu0 %v4825
        %4976 = vmatprep.subr.bf16.mxu0 0
        %4977 = vmatpush1.bf16.msra.mxu0 %v4826
        %4978 = vmatprep.subr.bf16.mxu0 0
        %4979 = vmatpush1.bf16.msra.mxu0 %v4827
        %4980 = vmatprep.subr.bf16.mxu0 0
        %4981 = vmatpush1.bf16.msra.mxu0 %v4828
        %4982 = vmatprep.subr.bf16.mxu0 0
        %4983 = vmatpush1.bf16.msra.mxu0 %v4829
        %4984 = vmatprep.subr.bf16.mxu0 0
        %4985 = vmatpush1.bf16.msra.mxu0 %v4830
        %4986 = vmatprep.subr.bf16.mxu0 0
        %4987 = vmatpush1.bf16.msra.mxu0 %v4831
        %4988 = vmatprep.subr.bf16.mxu0 0
        %4989 = vmatpush1.bf16.msra.mxu0 %v4832
        %4990 = vmatprep.subr.bf16.mxu0 0
        %4991 = vmatpush1.bf16.msra.mxu0 %v4833
        %4992 = vmatprep.subr.bf16.mxu0 0
        %4993 = vmatpush1.bf16.msra.mxu0 %v4834
        %4994 = vmatprep.subr.bf16.mxu0 0
        %4995 = vmatpush1.bf16.msra.mxu0 %v4835
        %4996 = vmatprep.mubr.bf16.mxu0 %v4461
        %4997 = vmatmul.mubr.bf16.gmra.mrb[0].mxu0 %v4460
        %v4998 = vpop.f32.mrb[0].mxu0
        %v4999 = vadd.f32 %v4458, %v4998
        %v5000 = vpop.f32.mrb[0].mxu0
        %v5001 = vpop.f32.mrb[0].mxu0
        %v5002 = vadd.f32 %v4458, %v5001
        %v5003 = vpop.f32.mrb[0].mxu0
        %5004 = vmatprep.mubr.bf16.mxu0 %v4470
        %5005 = vmatmul.mubr.bf16.gmra.mrb[0].mxu0 %v4469
        %v5006 = vpop.f32.mrb[0].mxu0
        %v5007 = vadd.f32 %v4458, %v5006
        %v5008 = vpop.f32.mrb[0].mxu0
        %v5009 = vpop.f32.mrb[0].mxu0
        %v5010 = vadd.f32 %v4458, %v5009
        %v5011 = vpop.f32.mrb[0].mxu0
        %5012 = vmatprep.mubr.bf16.mxu0 %v4479
        %5013 = vmatmul.mubr.bf16.gmra.mrb[0].mxu0 %v4478
        %v5014 = vpop.f32.mrb[0].mxu0
        %v5015 = vadd.f32 %v4458, %v5014
        %v5016 = vpop.f32.mrb[0].mxu0
        %v5017 = vpop.f32.mrb[0].mxu0
        %v5018 = vadd.f32 %v4458, %v5017
        %v5019 = vpop.f32.mrb[0].mxu0
        %5020 = vmatprep.mubr.bf16.mxu0 %v4488
        %5021 = vmatmul.mubr.bf16.gmra.mrb[0].mxu0 %v4487
        %v5022 = vpop.f32.mrb[0].mxu0
        %v5023 = vadd.f32 %v4458, %v5022
        %v5024 = vpop.f32.mrb[0].mxu0
        %v5025 = vpop.f32.mrb[0].mxu0
        %v5026 = vadd.f32 %v4458, %v5025
        %v5027 = vpop.f32.mrb[0].mxu0
        %5028 = vdwg.mxu0
        %5029 = vmatprep.subr.bf16.mxu0 0
        %5030 = vmatpush1.bf16.msra.mxu0 %v4836
        %5031 = vmatprep.subr.bf16.mxu0 0
        %5032 = vmatpush1.bf16.msra.mxu0 %v4837
        %5033 = vmatprep.subr.bf16.mxu0 0
        %5034 = vmatpush1.bf16.msra.mxu0 %v4838
        %5035 = vmatprep.subr.bf16.mxu0 0
        %5036 = vmatpush1.bf16.msra.mxu0 %v4839
        %5037 = vmatprep.subr.bf16.mxu0 0
        %5038 = vmatpush1.bf16.msra.mxu0 %v4840
        %5039 = vmatprep.subr.bf16.mxu0 0
        %5040 = vmatpush1.bf16.msra.mxu0 %v4841
        %5041 = vmatprep.subr.bf16.mxu0 0
        %5042 = vmatpush1.bf16.msra.mxu0 %v4842
        %5043 = vmatprep.subr.bf16.mxu0 0
        %5044 = vmatpush1.bf16.msra.mxu0 %v4843
        %5045 = vmatprep.subr.bf16.mxu0 0
        %5046 = vmatpush1.bf16.msra.mxu0 %v4844
        %5047 = vmatprep.subr.bf16.mxu0 0
        %5048 = vmatpush1.bf16.msra.mxu0 %v4845
        %5049 = vmatprep.subr.bf16.mxu0 0
        %5050 = vmatpush1.bf16.msra.mxu0 %v4846
        %5051 = vmatprep.subr.bf16.mxu0 0
        %5052 = vmatpush1.bf16.msra.mxu0 %v4847
        %5053 = vmatprep.subr.bf16.mxu0 0
        %5054 = vmatpush1.bf16.msra.mxu0 %v4848
        %5055 = vmatprep.subr.bf16.mxu0 0
        %5056 = vmatpush1.bf16.msra.mxu0 %v4849
        %5057 = vmatprep.subr.bf16.mxu0 0
        %5058 = vmatpush1.bf16.msra.mxu0 %v4850
        %5059 = vmatprep.subr.bf16.mxu0 0
        %5060 = vmatpush1.bf16.msra.mxu0 %v4851
        %5061 = vmatprep.mubr.bf16.mxu0 %v4463
        %5062 = vmatmul.mubr.bf16.gmra.mrb[0].mxu0 %v4462
        %v5063 = vpop.f32.mrb[0].mxu0
        %v5064 = vadd.f32 %v4999, %v5063
        %v5065 = vpop.f32.mrb[0].mxu0
        %v5066 = vpop.f32.mrb[0].mxu0
        %v5067 = vadd.f32 %v5002, %v5066
        %v5068 = vpop.f32.mrb[0].mxu0
        %5069 = vmatprep.mubr.bf16.mxu0 %v4472
        %5070 = vmatmul.mubr.bf16.gmra.mrb[0].mxu0 %v4471
        %v5071 = vpop.f32.mrb[0].mxu0
        %v5072 = vadd.f32 %v5007, %v5071
        %v5073 = vpop.f32.mrb[0].mxu0
        %v5074 = vpop.f32.mrb[0].mxu0
        %v5075 = vadd.f32 %v5010, %v5074
        %v5076 = vpop.f32.mrb[0].mxu0
        %5077 = vmatprep.mubr.bf16.mxu0 %v4481
        %5078 = vmatmul.mubr.bf16.gmra.mrb[0].mxu0 %v4480
        %v5079 = vpop.f32.mrb[0].mxu0
        %v5080 = vadd.f32 %v5015, %v5079
        %v5081 = vpop.f32.mrb[0].mxu0
        %v5082 = vpop.f32.mrb[0].mxu0
        %v5083 = vadd.f32 %v5018, %v5082
        %v5084 = vpop.f32.mrb[0].mxu0
        %5085 = vmatprep.mubr.bf16.mxu0 %v4490
        %5086 = vmatmul.mubr.bf16.gmra.mrb[0].mxu0 %v4489
        %v5087 = vpop.f32.mrb[0].mxu0
        %v5088 = vadd.f32 %v5023, %v5087
        %v5089 = vpop.f32.mrb[0].mxu0
        %v5090 = vpop.f32.mrb[0].mxu0
        %v5091 = vadd.f32 %v5026, %v5090
        %v5092 = vpop.f32.mrb[0].mxu0
        %5093 = vdwg.mxu0
        %5094 = vmatprep.subr.bf16.mxu0 0
        %5095 = vmatpush1.bf16.msra.mxu0 %v4852
        %5096 = vmatprep.subr.bf16.mxu0 0
        %5097 = vmatpush1.bf16.msra.mxu0 %v4853
        %5098 = vmatprep.subr.bf16.mxu0 0
        %5099 = vmatpush1.bf16.msra.mxu0 %v4854
        %5100 = vmatprep.subr.bf16.mxu0 0
        %5101 = vmatpush1.bf16.msra.mxu0 %v4855
        %5102 = vmatprep.subr.bf16.mxu0 0
        %5103 = vmatpush1.bf16.msra.mxu0 %v4856
        %5104 = vmatprep.subr.bf16.mxu0 0
        %5105 = vmatpush1.bf16.msra.mxu0 %v4857
        %5106 = vmatprep.subr.bf16.mxu0 0
        %5107 = vmatpush1.bf16.msra.mxu0 %v4858
        %5108 = vmatprep.subr.bf16.mxu0 0
        %5109 = vmatpush1.bf16.msra.mxu0 %v4859
        %5110 = vmatprep.subr.bf16.mxu0 0
        %5111 = vmatpush1.bf16.msra.mxu0 %v4860
        %5112 = vmatprep.subr.bf16.mxu0 0
        %5113 = vmatpush1.bf16.msra.mxu0 %v4861
        %5114 = vmatprep.subr.bf16.mxu0 0
        %5115 = vmatpush1.bf16.msra.mxu0 %v4862
        %5116 = vmatprep.subr.bf16.mxu0 0
        %5117 = vmatpush1.bf16.msra.mxu0 %v4863
        %5118 = vmatprep.subr.bf16.mxu0 0
        %5119 = vmatpush1.bf16.msra.mxu0 %v4864
        %5120 = vmatprep.subr.bf16.mxu0 0
        %5121 = vmatpush1.bf16.msra.mxu0 %v4865
        %5122 = vmatprep.subr.bf16.mxu0 0
        %5123 = vmatpush1.bf16.msra.mxu0 %v4866
        %5124 = vmatprep.subr.bf16.mxu0 0
        %5125 = vmatpush1.bf16.msra.mxu0 %v4867
        %5126 = vmatprep.mubr.bf16.mxu0 %v4465
        %5127 = vmatmul.mubr.bf16.gmra.mrb[0].mxu0 %v4464
        %v5128 = vpop.f32.mrb[0].mxu0
        %v5129 = vadd.f32 %v5064, %v5128
        %v5130 = vpop.f32.mrb[0].mxu0
        %v5131 = vpop.f32.mrb[0].mxu0
        %v5132 = vadd.f32 %v5067, %v5131
        %v5133 = vpop.f32.mrb[0].mxu0
        %5134 = vmatprep.mubr.bf16.mxu0 %v4474
        %5135 = vmatmul.mubr.bf16.gmra.mrb[0].mxu0 %v4473
        %v5136 = vpop.f32.mrb[0].mxu0
        %v5137 = vadd.f32 %v5072, %v5136
        %v5138 = vpop.f32.mrb[0].mxu0
        %v5139 = vpop.f32.mrb[0].mxu0
        %v5140 = vadd.f32 %v5075, %v5139
        %v5141 = vpop.f32.mrb[0].mxu0
        %5142 = vmatprep.mubr.bf16.mxu0 %v4483
        %5143 = vmatmul.mubr.bf16.gmra.mrb[0].mxu0 %v4482
        %v5144 = vpop.f32.mrb[0].mxu0
        %v5145 = vadd.f32 %v5080, %v5144
        %v5146 = vpop.f32.mrb[0].mxu0
        %v5147 = vpop.f32.mrb[0].mxu0
        %v5148 = vadd.f32 %v5083, %v5147
        %v5149 = vpop.f32.mrb[0].mxu0
        %5150 = vmatprep.mubr.bf16.mxu0 %v4492
        %5151 = vmatmul.mubr.bf16.gmra.mrb[0].mxu0 %v4491
        %v5152 = vpop.f32.mrb[0].mxu0
        %v5153 = vadd.f32 %v5088, %v5152
        %v5154 = vpop.f32.mrb[0].mxu0
        %v5155 = vpop.f32.mrb[0].mxu0
        %v5156 = vadd.f32 %v5091, %v5155
        %v5157 = vpop.f32.mrb[0].mxu0
        %5158 = vdwg.mxu0
        %5159 = vmatprep.subr.bf16.mxu0 0
        %5160 = vmatpush1.bf16.msra.mxu0 %v4868
        %5161 = vmatprep.subr.bf16.mxu0 0
        %5162 = vmatpush1.bf16.msra.mxu0 %v4869
        %5163 = vmatprep.subr.bf16.mxu0 0
        %5164 = vmatpush1.bf16.msra.mxu0 %v4870
        %5165 = vmatprep.subr.bf16.mxu0 0
        %5166 = vmatpush1.bf16.msra.mxu0 %v4871
        %5167 = vmatprep.subr.bf16.mxu0 0
        %5168 = vmatpush1.bf16.msra.mxu0 %v4872
        %5169 = vmatprep.subr.bf16.mxu0 0
        %5170 = vmatpush1.bf16.msra.mxu0 %v4873
        %5171 = vmatprep.subr.bf16.mxu0 0
        %5172 = vmatpush1.bf16.msra.mxu0 %v4874
        %5173 = vmatprep.subr.bf16.mxu0 0
        %5174 = vmatpush1.bf16.msra.mxu0 %v4875
        %5175 = vmatprep.subr.bf16.mxu0 0
        %5176 = vmatpush1.bf16.msra.mxu0 %v4876
        %5177 = vmatprep.subr.bf16.mxu0 0
        %5178 = vmatpush1.bf16.msra.mxu0 %v4877
        %5179 = vmatprep.subr.bf16.mxu0 0
        %5180 = vmatpush1.bf16.msra.mxu0 %v4878
        %5181 = vmatprep.subr.bf16.mxu0 0
        %5182 = vmatpush1.bf16.msra.mxu0 %v4879
        %5183 = vmatprep.subr.bf16.mxu0 0
        %5184 = vmatpush1.bf16.msra.mxu0 %v4880
        %5185 = vmatprep.subr.bf16.mxu0 0
        %5186 = vmatpush1.bf16.msra.mxu0 %v4881
        %5187 = vmatprep.subr.bf16.mxu0 0
        %5188 = vmatpush1.bf16.msra.mxu0 %v4882
        %5189 = vmatprep.subr.bf16.mxu0 0
        %5190 = vmatpush1.bf16.msra.mxu0 %v4883
        %5191 = vmatprep.mubr.bf16.mxu0 %v4467
        %5192 = vmatmul.mubr.bf16.gmra.mrb[0].mxu0 %v4466
        %v5193 = vpop.f32.mrb[0].mxu0
        %v5194 = vadd.f32 %v5129, %v5193
        %v5195 = vpop.f32.mrb[0].mxu0
        %v5196 = vpop.f32.mrb[0].mxu0
        %v5197 = vadd.f32 %v5132, %v5196
        %v5198 = vpop.f32.mrb[0].mxu0
        %5199 = vmatprep.mubr.bf16.mxu0 %v4476
        %5200 = vmatmul.mubr.bf16.gmra.mrb[0].mxu0 %v4475
        %v5201 = vpop.f32.mrb[0].mxu0
        %v5202 = vadd.f32 %v5137, %v5201
        %v5203 = vpop.f32.mrb[0].mxu0
        %v5204 = vpop.f32.mrb[0].mxu0
        %v5205 = vadd.f32 %v5140, %v5204
        %v5206 = vpop.f32.mrb[0].mxu0
        %5207 = vmatprep.mubr.bf16.mxu0 %v4485
        %5208 = vmatmul.mubr.bf16.gmra.mrb[0].mxu0 %v4484
        %v5209 = vpop.f32.mrb[0].mxu0
        %v5210 = vadd.f32 %v5145, %v5209
        %v5211 = vpop.f32.mrb[0].mxu0
        %v5212 = vpop.f32.mrb[0].mxu0
        %v5213 = vadd.f32 %v5148, %v5212
        %v5214 = vpop.f32.mrb[0].mxu0
        %5215 = vmatprep.mubr.bf16.mxu0 %v4494
        %5216 = vmatmul.mubr.bf16.gmra.mrb[0].mxu0 %v4493
        %v5217 = vpop.f32.mrb[0].mxu0
        %v5218 = vadd.f32 %v5153, %v5217
        %v5219 = vpop.f32.mrb[0].mxu0
        %v5220 = vpop.f32.mrb[0].mxu0
        %v5221 = vadd.f32 %v5156, %v5220
        %v5222 = vpop.f32.mrb[0].mxu0
        %5223 = vdwg.mxu0
        %5224 = vmatprep.subr.bf16.mxu0 0
        %5225 = vmatpush1.bf16.msra.mxu0 %v4884
        %5226 = vmatprep.subr.bf16.mxu0 0
        %5227 = vmatpush1.bf16.msra.mxu0 %v4885
        %5228 = vmatprep.subr.bf16.mxu0 0
        %5229 = vmatpush1.bf16.msra.mxu0 %v4886
        %5230 = vmatprep.subr.bf16.mxu0 0
        %5231 = vmatpush1.bf16.msra.mxu0 %v4887
        %5232 = vmatprep.subr.bf16.mxu0 0
        %5233 = vmatpush1.bf16.msra.mxu0 %v4888
        %5234 = vmatprep.subr.bf16.mxu0 0
        %5235 = vmatpush1.bf16.msra.mxu0 %v4889
        %5236 = vmatprep.subr.bf16.mxu0 0
        %5237 = vmatpush1.bf16.msra.mxu0 %v4890
        %5238 = vmatprep.subr.bf16.mxu0 0
        %5239 = vmatpush1.bf16.msra.mxu0 %v4891
        %5240 = vmatprep.subr.bf16.mxu0 0
        %5241 = vmatpush1.bf16.msra.mxu0 0
        %5242 = vmatprep.subr.bf16.mxu0 0
        %5243 = vmatpush1.bf16.msra.mxu0 0
        %5244 = vmatprep.subr.bf16.mxu0 0
        %5245 = vmatpush1.bf16.msra.mxu0 0
        %5246 = vmatprep.subr.bf16.mxu0 0
        %5247 = vmatpush1.bf16.msra.mxu0 0
        %5248 = vmatprep.subr.bf16.mxu0 0
        %5249 = vmatpush1.bf16.msra.mxu0 0
        %5250 = vmatprep.subr.bf16.mxu0 0
        %5251 = vmatpush1.bf16.msra.mxu0 0
        %5252 = vmatprep.subr.bf16.mxu0 0
        %5253 = vmatpush1.bf16.msra.mxu0 0
        %5254 = vmatprep.subr.bf16.mxu0 0
        %5255 = vmatpush1.bf16.msra.mxu0 0
        %5256 = vmatprep.mubr.bf16.mxu0 0
        %5257 = vmatmul.mubr.bf16.gmra.mrb[0].mxu0 %v4468
        %v5258 = vpop.f32.mrb[0].mxu0
        %v5259 = vadd.f32 %v5194, %v5258
        %v5260 = vpop.f32.mrb[0].mxu0
        %v5261 = vpop.f32.mrb[0].mxu0
        %v5262 = vadd.f32 %v5197, %v5261
        %v5263 = vpop.f32.mrb[0].mxu0
        %5264 = vmatprep.mubr.bf16.mxu0 0
        %5265 = vmatmul.mubr.bf16.gmra.mrb[0].mxu0 %v4477
        %v5266 = vpop.f32.mrb[0].mxu0
        %v5267 = vadd.f32 %v5202, %v5266
        %v5268 = vpop.f32.mrb[0].mxu0
        %v5269 = vpop.f32.mrb[0].mxu0
        %v5270 = vadd.f32 %v5205, %v5269
        %v5271 = vpop.f32.mrb[0].mxu0
        %5272 = vmatprep.mubr.bf16.mxu0 0
        %5273 = vmatmul.mubr.bf16.gmra.mrb[0].mxu0 %v4486
        %v5274 = vpop.f32.mrb[0].mxu0
        %v5275 = vadd.f32 %v5210, %v5274
        %v5276 = vpop.f32.mrb[0].mxu0
        %v5277 = vpop.f32.mrb[0].mxu0
        %v5278 = vadd.f32 %v5213, %v5277
        %v5279 = vpop.f32.mrb[0].mxu0
        %5280 = vmatprep.mubr.bf16.mxu0 0
        %5281 = vmatmul.mubr.bf16.gmra.mrb[0].mxu0 %v4495
        %v5282 = vpop.f32.mrb[0].mxu0
        %v5283 = vadd.f32 %v5218, %v5282
        %v5284 = vpop.f32.mrb[0].mxu0
        %v5285 = vpop.f32.mrb[0].mxu0
        %v5286 = vadd.f32 %v5221, %v5285
        %v5287 = vpop.f32.mrb[0].mxu0
        %5288 = vdwg.mxu0
        %v5289 = vld [vmem:[%s14] sm:$0xf]
        %v5290 = vld [vmem:[%s13] sm:$0xff]
        %v5291 = vld [vmem:[%s13 + $0x8] sm:$0xff]
        %v5292 = vadd.f32 %v5259, %v5262
        %vm5293 = vcmask 64512
        %v5295 = vsel %vm5293, %v5289, 0
        %5297 = vmatprep.subr.mxu0 0.0
        %5298 = vmatpush1.msra.mxu0 %v5292
        %5299 = vmatprep.subr.mxu0 0.0
        %5300 = vmatpush1.msra.mxu0 0.0
        %5301 = vmatprep.subr.mxu0 0.0
        %5302 = vmatpush1.msra.mxu0 0.0
        %5303 = vmatprep.subr.mxu0 0.0
        %5304 = vmatpush1.msra.mxu0 0.0
        %5305 = vmatprep.subr.mxu0 0.0
        %5306 = vmatpush1.msra.mxu0 0.0
        %5307 = vmatprep.subr.mxu0 0.0
        %5308 = vmatpush1.msra.mxu0 0.0
        %5309 = vmatprep.subr.mxu0 0.0
        %5310 = vmatpush1.msra.mxu0 0.0
        %5311 = vmatprep.subr.mxu0 0.0
        %5312 = vmatpush1.msra.mxu0 0.0
        %5313 = vmatprep.subr.mxu0 0.0
        %5314 = vmatpush1.msra.mxu0 0.0
        %5315 = vmatprep.subr.mxu0 0.0
        %5316 = vmatpush1.msra.mxu0 0.0
        %5317 = vmatprep.subr.mxu0 0.0
        %5318 = vmatpush1.msra.mxu0 0.0
        %5319 = vmatprep.subr.mxu0 0.0
        %5320 = vmatpush1.msra.mxu0 0.0
        %5321 = vmatprep.subr.mxu0 0.0
        %5322 = vmatpush1.msra.mxu0 0.0
        %5323 = vmatprep.subr.mxu0 0.0
        %5324 = vmatpush1.msra.mxu0 0.0
        %5325 = vmatprep.subr.mxu0 0.0
        %5326 = vmatpush1.msra.mxu0 0.0
        %5327 = vmatprep.subr.mxu0 0.0
        %5328 = vmatpush1.msra.mxu0 0.0
        %5329 = vmatprep.subr.mxu0 0.0
        %5330 = vmatpush1.msra.mxu0 0.0
        %5331 = vmatprep.subr.mxu0 0.0
        %5332 = vmatpush1.msra.mxu0 0.0
        %5333 = vmatprep.subr.mxu0 0.0
        %5334 = vmatpush1.msra.mxu0 0.0
        %5335 = vmatprep.subr.mxu0 0.0
        %5336 = vmatpush1.msra.mxu0 0.0
        %5337 = vmatprep.subr.mxu0 0.0
        %5338 = vmatpush1.msra.mxu0 0.0
        %5339 = vmatprep.subr.mxu0 0.0
        %5340 = vmatpush1.msra.mxu0 0.0
        %5341 = vmatprep.subr.mxu0 0.0
        %5342 = vmatpush1.msra.mxu0 0.0
        %5343 = vmatprep.subr.mxu0 0.0
        %5344 = vmatpush1.msra.mxu0 0.0
        %5345 = vmatprep.subr.mxu0 0.0
        %5346 = vmatpush1.msra.mxu0 0.0
        %5347 = vmatprep.subr.mxu0 0.0
        %5348 = vmatpush1.msra.mxu0 0.0
        %5349 = vmatprep.subr.mxu0 0.0
        %5350 = vmatpush1.msra.mxu0 0.0
        %5351 = vmatprep.subr.mxu0 0.0
        %5352 = vmatpush1.msra.mxu0 0.0
        %5353 = vmatprep.subr.mxu0 0.0
        %5354 = vmatpush1.msra.mxu0 0.0
        %5355 = vmatprep.subr.mxu0 0.0
        %5356 = vmatpush1.msra.mxu0 0.0
        %5357 = vmatprep.subr.mxu0 0.0
        %5358 = vmatpush1.msra.mxu0 0.0
        %5359 = vmatprep.subr.mxu0 0.0
        %5360 = vmatpush1.msra.mxu0 0.0
        %5361 = vmatprep.mubr.f32.mxu0 0.0
        %5362 = vmatmul.mubr.f32.gmra.mrb[0].mxu0 %v5295
        %v5363 = vpop.f32.mrb[0].mxu0
        %v5364 = vadd.f32 0.0, %v5363
        %v5365 = vpop.f32.mrb[0].mxu0
        %5366 = vdwg.mxu0
        %v5367 = vsub.f32 0.0, %v3991
        %v5368 = vmul.f32 %v5367, 1.442695
        %v5369 = vpow.pop %v5368
        %v5370 = vadd.f32 %v5369, 1.0
        %v5371 = vrcp.pop %v5370
        %v5372 = vmul.f32 %v5364, %v5371
        %v5373 = vadd.f32 %v5262, %v5267
        %v5374 = vadd.f32 %v5373, %v5270
        %5375 = vmatprep.subr.mxu0 0.0
        %5376 = vmatpush1.msra.mxu0 %v5374
        %5377 = vmatprep.subr.mxu0 0.0
        %5378 = vmatpush1.msra.mxu0 0.0
        %5379 = vmatprep.subr.mxu0 0.0
        %5380 = vmatpush1.msra.mxu0 0.0
        %5381 = vmatprep.subr.mxu0 0.0
        %5382 = vmatpush1.msra.mxu0 0.0
        %5383 = vmatprep.subr.mxu0 0.0
        %5384 = vmatpush1.msra.mxu0 0.0
        %5385 = vmatprep.subr.mxu0 0.0
        %5386 = vmatpush1.msra.mxu0 0.0
        %5387 = vmatprep.subr.mxu0 0.0
        %5388 = vmatpush1.msra.mxu0 0.0
        %5389 = vmatprep.subr.mxu0 0.0
        %5390 = vmatpush1.msra.mxu0 0.0
        %5391 = vmatprep.subr.mxu0 0.0
        %5392 = vmatpush1.msra.mxu0 0.0
        %5393 = vmatprep.subr.mxu0 0.0
        %5394 = vmatpush1.msra.mxu0 0.0
        %5395 = vmatprep.subr.mxu0 0.0
        %5396 = vmatpush1.msra.mxu0 0.0
        %5397 = vmatprep.subr.mxu0 0.0
        %5398 = vmatpush1.msra.mxu0 0.0
        %5399 = vmatprep.subr.mxu0 0.0
        %5400 = vmatpush1.msra.mxu0 0.0
        %5401 = vmatprep.subr.mxu0 0.0
        %5402 = vmatpush1.msra.mxu0 0.0
        %5403 = vmatprep.subr.mxu0 0.0
        %5404 = vmatpush1.msra.mxu0 0.0
        %5405 = vmatprep.subr.mxu0 0.0
        %5406 = vmatpush1.msra.mxu0 0.0
        %5407 = vmatprep.subr.mxu0 0.0
        %5408 = vmatpush1.msra.mxu0 0.0
        %5409 = vmatprep.subr.mxu0 0.0
        %5410 = vmatpush1.msra.mxu0 0.0
        %5411 = vmatprep.subr.mxu0 0.0
        %5412 = vmatpush1.msra.mxu0 0.0
        %5413 = vmatprep.subr.mxu0 0.0
        %5414 = vmatpush1.msra.mxu0 0.0
        %5415 = vmatprep.subr.mxu0 0.0
        %5416 = vmatpush1.msra.mxu0 0.0
        %5417 = vmatprep.subr.mxu0 0.0
        %5418 = vmatpush1.msra.mxu0 0.0
        %5419 = vmatprep.subr.mxu0 0.0
        %5420 = vmatpush1.msra.mxu0 0.0
        %5421 = vmatprep.subr.mxu0 0.0
        %5422 = vmatpush1.msra.mxu0 0.0
        %5423 = vmatprep.subr.mxu0 0.0
        %5424 = vmatpush1.msra.mxu0 0.0
        %5425 = vmatprep.subr.mxu0 0.0
        %5426 = vmatpush1.msra.mxu0 0.0
        %5427 = vmatprep.subr.mxu0 0.0
        %5428 = vmatpush1.msra.mxu0 0.0
        %5429 = vmatprep.subr.mxu0 0.0
        %5430 = vmatpush1.msra.mxu0 0.0
        %5431 = vmatprep.subr.mxu0 0.0
        %5432 = vmatpush1.msra.mxu0 0.0
        %5433 = vmatprep.subr.mxu0 0.0
        %5434 = vmatpush1.msra.mxu0 0.0
        %5435 = vmatprep.subr.mxu0 0.0
        %5436 = vmatpush1.msra.mxu0 0.0
        %5437 = vmatprep.subr.mxu0 0.0
        %5438 = vmatpush1.msra.mxu0 0.0
        %5439 = vmatprep.mubr.f32.mxu0 0.0
        %5440 = vmatmul.mubr.f32.gmra.mrb[0].mxu0 %v5295
        %v5441 = vpop.f32.mrb[0].mxu0
        %v5442 = vadd.f32 0.0, %v5441
        %v5443 = vpop.f32.mrb[0].mxu0
        %5444 = vdwg.mxu0
        %v5445 = vsub.f32 0.0, %v3999
        %v5446 = vmul.f32 %v5445, 1.442695
        %v5447 = vpow.pop %v5446
        %v5448 = vadd.f32 %v5447, 1.0
        %v5449 = vrcp.pop %v5448
        %v5450 = vmul.f32 %v5442, %v5449
        %v5451 = vadd.f32 %v5270, %v5275
        %v5452 = vadd.f32 %v5451, %v5278
        %5453 = vmatprep.subr.mxu0 0.0
        %5454 = vmatpush1.msra.mxu0 %v5452
        %5455 = vmatprep.subr.mxu0 0.0
        %5456 = vmatpush1.msra.mxu0 0.0
        %5457 = vmatprep.subr.mxu0 0.0
        %5458 = vmatpush1.msra.mxu0 0.0
        %5459 = vmatprep.subr.mxu0 0.0
        %5460 = vmatpush1.msra.mxu0 0.0
        %5461 = vmatprep.subr.mxu0 0.0
        %5462 = vmatpush1.msra.mxu0 0.0
        %5463 = vmatprep.subr.mxu0 0.0
        %5464 = vmatpush1.msra.mxu0 0.0
        %5465 = vmatprep.subr.mxu0 0.0
        %5466 = vmatpush1.msra.mxu0 0.0
        %5467 = vmatprep.subr.mxu0 0.0
        %5468 = vmatpush1.msra.mxu0 0.0
        %5469 = vmatprep.subr.mxu0 0.0
        %5470 = vmatpush1.msra.mxu0 0.0
        %5471 = vmatprep.subr.mxu0 0.0
        %5472 = vmatpush1.msra.mxu0 0.0
        %5473 = vmatprep.subr.mxu0 0.0
        %5474 = vmatpush1.msra.mxu0 0.0
        %5475 = vmatprep.subr.mxu0 0.0
        %5476 = vmatpush1.msra.mxu0 0.0
        %5477 = vmatprep.subr.mxu0 0.0
        %5478 = vmatpush1.msra.mxu0 0.0
        %5479 = vmatprep.subr.mxu0 0.0
        %5480 = vmatpush1.msra.mxu0 0.0
        %5481 = vmatprep.subr.mxu0 0.0
        %5482 = vmatpush1.msra.mxu0 0.0
        %5483 = vmatprep.subr.mxu0 0.0
        %5484 = vmatpush1.msra.mxu0 0.0
        %5485 = vmatprep.subr.mxu0 0.0
        %5486 = vmatpush1.msra.mxu0 0.0
        %5487 = vmatprep.subr.mxu0 0.0
        %5488 = vmatpush1.msra.mxu0 0.0
        %5489 = vmatprep.subr.mxu0 0.0
        %5490 = vmatpush1.msra.mxu0 0.0
        %5491 = vmatprep.subr.mxu0 0.0
        %5492 = vmatpush1.msra.mxu0 0.0
        %5493 = vmatprep.subr.mxu0 0.0
        %5494 = vmatpush1.msra.mxu0 0.0
        %5495 = vmatprep.subr.mxu0 0.0
        %5496 = vmatpush1.msra.mxu0 0.0
        %5497 = vmatprep.subr.mxu0 0.0
        %5498 = vmatpush1.msra.mxu0 0.0
        %5499 = vmatprep.subr.mxu0 0.0
        %5500 = vmatpush1.msra.mxu0 0.0
        %5501 = vmatprep.subr.mxu0 0.0
        %5502 = vmatpush1.msra.mxu0 0.0
        %5503 = vmatprep.subr.mxu0 0.0
        %5504 = vmatpush1.msra.mxu0 0.0
        %5505 = vmatprep.subr.mxu0 0.0
        %5506 = vmatpush1.msra.mxu0 0.0
        %5507 = vmatprep.subr.mxu0 0.0
        %5508 = vmatpush1.msra.mxu0 0.0
        %5509 = vmatprep.subr.mxu0 0.0
        %5510 = vmatpush1.msra.mxu0 0.0
        %5511 = vmatprep.subr.mxu0 0.0
        %5512 = vmatpush1.msra.mxu0 0.0
        %5513 = vmatprep.subr.mxu0 0.0
        %5514 = vmatpush1.msra.mxu0 0.0
        %5515 = vmatprep.subr.mxu0 0.0
        %5516 = vmatpush1.msra.mxu0 0.0
        %5517 = vmatprep.mubr.f32.mxu0 0.0
        %5518 = vmatmul.mubr.f32.gmra.mrb[0].mxu0 %v5295
        %v5519 = vpop.f32.mrb[0].mxu0
        %v5520 = vadd.f32 0.0, %v5519
        %v5521 = vpop.f32.mrb[0].mxu0
        %5522 = vdwg.mxu0
        %v5523 = vsub.f32 0.0, %v3994
        %v5524 = vmul.f32 %v5523, 1.442695
        %v5525 = vpow.pop %v5524
        %v5526 = vadd.f32 %v5525, 1.0
        %v5527 = vrcp.pop %v5526
        %v5528 = vmul.f32 %v5520, %v5527
        %v5529 = vadd.f32 %v5278, %v5283
        %v5530 = vadd.f32 %v5529, %v5286
        %5531 = vmatprep.subr.mxu0 0.0
        %5532 = vmatpush1.msra.mxu0 %v5530
        %5533 = vmatprep.subr.mxu0 0.0
        %5534 = vmatpush1.msra.mxu0 0.0
        %5535 = vmatprep.subr.mxu0 0.0
        %5536 = vmatpush1.msra.mxu0 0.0
        %5537 = vmatprep.subr.mxu0 0.0
        %5538 = vmatpush1.msra.mxu0 0.0
        %5539 = vmatprep.subr.mxu0 0.0
        %5540 = vmatpush1.msra.mxu0 0.0
        %5541 = vmatprep.subr.mxu0 0.0
        %5542 = vmatpush1.msra.mxu0 0.0
        %5543 = vmatprep.subr.mxu0 0.0
        %5544 = vmatpush1.msra.mxu0 0.0
        %5545 = vmatprep.subr.mxu0 0.0
        %5546 = vmatpush1.msra.mxu0 0.0
        %5547 = vmatprep.subr.mxu0 0.0
        %5548 = vmatpush1.msra.mxu0 0.0
        %5549 = vmatprep.subr.mxu0 0.0
        %5550 = vmatpush1.msra.mxu0 0.0
        %5551 = vmatprep.subr.mxu0 0.0
        %5552 = vmatpush1.msra.mxu0 0.0
        %5553 = vmatprep.subr.mxu0 0.0
        %5554 = vmatpush1.msra.mxu0 0.0
        %5555 = vmatprep.subr.mxu0 0.0
        %5556 = vmatpush1.msra.mxu0 0.0
        %5557 = vmatprep.subr.mxu0 0.0
        %5558 = vmatpush1.msra.mxu0 0.0
        %5559 = vmatprep.subr.mxu0 0.0
        %5560 = vmatpush1.msra.mxu0 0.0
        %5561 = vmatprep.subr.mxu0 0.0
        %5562 = vmatpush1.msra.mxu0 0.0
        %5563 = vmatprep.subr.mxu0 0.0
        %5564 = vmatpush1.msra.mxu0 0.0
        %5565 = vmatprep.subr.mxu0 0.0
        %5566 = vmatpush1.msra.mxu0 0.0
        %5567 = vmatprep.subr.mxu0 0.0
        %5568 = vmatpush1.msra.mxu0 0.0
        %5569 = vmatprep.subr.mxu0 0.0
        %5570 = vmatpush1.msra.mxu0 0.0
        %5571 = vmatprep.subr.mxu0 0.0
        %5572 = vmatpush1.msra.mxu0 0.0
        %5573 = vmatprep.subr.mxu0 0.0
        %5574 = vmatpush1.msra.mxu0 0.0
        %5575 = vmatprep.subr.mxu0 0.0
        %5576 = vmatpush1.msra.mxu0 0.0
        %5577 = vmatprep.subr.mxu0 0.0
        %5578 = vmatpush1.msra.mxu0 0.0
        %5579 = vmatprep.subr.mxu0 0.0
        %5580 = vmatpush1.msra.mxu0 0.0
        %5581 = vmatprep.subr.mxu0 0.0
        %5582 = vmatpush1.msra.mxu0 0.0
        %5583 = vmatprep.subr.mxu0 0.0
        %5584 = vmatpush1.msra.mxu0 0.0
        %5585 = vmatprep.subr.mxu0 0.0
        %5586 = vmatpush1.msra.mxu0 0.0
        %5587 = vmatprep.subr.mxu0 0.0
        %5588 = vmatpush1.msra.mxu0 0.0
        %5589 = vmatprep.subr.mxu0 0.0
        %5590 = vmatpush1.msra.mxu0 0.0
        %5591 = vmatprep.subr.mxu0 0.0
        %5592 = vmatpush1.msra.mxu0 0.0
        %5593 = vmatprep.subr.mxu0 0.0
        %5594 = vmatpush1.msra.mxu0 0.0
        %5595 = vmatprep.mubr.f32.mxu0 0.0
        %5596 = vmatmul.mubr.f32.gmra.mrb[0].mxu0 %v5295
        %v5597 = vpop.f32.mrb[0].mxu0
        %v5598 = vadd.f32 0.0, %v5597
        %v5599 = vpop.f32.mrb[0].mxu0
        %5600 = vdwg.mxu0
        %v5601 = vsub.f32 0.0, %v4000
        %v5602 = vmul.f32 %v5601, 1.442695
        %v5603 = vpow.pop %v5602
        %v5604 = vadd.f32 %v5603, 1.0
        %v5605 = vrcp.pop %v5604
        %v5606 = vmul.f32 %v5598, %v5605
        %vm5607 = vcmask 31744
        %v5609 = vsel %vm5607, %v5290, 0
        %v5612 = vsel %vm5607, %v5291, 0
        %vm5614 = vcmask 1043456
        %v5615 = vsel %vm5614, %v3675, 0
        %5617 = vmatprep.subr.mxu0 0.0
        %5618 = vmatpush1.msra.mxu0 %v5615
        %5619 = vmatprep.subr.mxu0 0.0
        %5620 = vmatpush1.msra.mxu0 0.0
        %5621 = vmatprep.subr.mxu0 0.0
        %5622 = vmatpush1.msra.mxu0 0.0
        %5623 = vmatprep.subr.mxu0 0.0
        %5624 = vmatpush1.msra.mxu0 0.0
        %5625 = vmatprep.subr.mxu0 0.0
        %5626 = vmatpush1.msra.mxu0 0.0
        %5627 = vmatprep.subr.mxu0 0.0
        %5628 = vmatpush1.msra.mxu0 0.0
        %5629 = vmatprep.subr.mxu0 0.0
        %5630 = vmatpush1.msra.mxu0 0.0
        %5631 = vmatprep.subr.mxu0 0.0
        %5632 = vmatpush1.msra.mxu0 0.0
        %5633 = vmatprep.subr.mxu0 0.0
        %5634 = vmatpush1.msra.mxu0 0.0
        %5635 = vmatprep.subr.mxu0 0.0
        %5636 = vmatpush1.msra.mxu0 0.0
        %5637 = vmatprep.subr.mxu0 0.0
        %5638 = vmatpush1.msra.mxu0 0.0
        %5639 = vmatprep.subr.mxu0 0.0
        %5640 = vmatpush1.msra.mxu0 0.0
        %5641 = vmatprep.subr.mxu0 0.0
        %5642 = vmatpush1.msra.mxu0 0.0
        %5643 = vmatprep.subr.mxu0 0.0
        %5644 = vmatpush1.msra.mxu0 0.0
        %5645 = vmatprep.subr.mxu0 0.0
        %5646 = vmatpush1.msra.mxu0 0.0
        %5647 = vmatprep.subr.mxu0 0.0
        %5648 = vmatpush1.msra.mxu0 0.0
        %5649 = vmatprep.subr.mxu0 0.0
        %5650 = vmatpush1.msra.mxu0 0.0
        %5651 = vmatprep.subr.mxu0 0.0
        %5652 = vmatpush1.msra.mxu0 0.0
        %5653 = vmatprep.subr.mxu0 0.0
        %5654 = vmatpush1.msra.mxu0 0.0
        %5655 = vmatprep.subr.mxu0 0.0
        %5656 = vmatpush1.msra.mxu0 0.0
        %5657 = vmatprep.subr.mxu0 0.0
        %5658 = vmatpush1.msra.mxu0 0.0
        %5659 = vmatprep.subr.mxu0 0.0
        %5660 = vmatpush1.msra.mxu0 0.0
        %5661 = vmatprep.subr.mxu0 0.0
        %5662 = vmatpush1.msra.mxu0 0.0
        %5663 = vmatprep.subr.mxu0 0.0
        %5664 = vmatpush1.msra.mxu0 0.0
        %5665 = vmatprep.subr.mxu0 0.0
        %5666 = vmatpush1.msra.mxu0 0.0
        %5667 = vmatprep.subr.mxu0 0.0
        %5668 = vmatpush1.msra.mxu0 0.0
        %5669 = vmatprep.subr.mxu0 0.0
        %5670 = vmatpush1.msra.mxu0 0.0
        %5671 = vmatprep.subr.mxu0 0.0
        %5672 = vmatpush1.msra.mxu0 0.0
        %5673 = vmatprep.subr.mxu0 0.0
        %5674 = vmatpush1.msra.mxu0 0.0
        %5675 = vmatprep.subr.mxu0 0.0
        %5676 = vmatpush1.msra.mxu0 0.0
        %5677 = vmatprep.subr.mxu0 0.0
        %5678 = vmatpush1.msra.mxu0 0.0
        %5679 = vmatprep.subr.mxu0 0.0
        %5680 = vmatpush1.msra.mxu0 0.0
        %5681 = vmatprep.mubr.f32.mxu0 0.0
        %5682 = vmatmul.mubr.f32.gmra.mrb[0].mxu0 %v5609
        %v5683 = vpop.f32.mrb[0].mxu0
        %v5684 = vadd.f32 0.0, %v5683
        %v5685 = vpop.f32.mrb[0].mxu0
        %5686 = vmatprep.mubr.f32.mxu0 0.0
        %5687 = vmatmul.mubr.f32.gmra.mrb[0].mxu0 %v5612
        %v5688 = vpop.f32.mrb[0].mxu0
        %v5689 = vadd.f32 0.0, %v5688
        %v5690 = vpop.f32.mrb[0].mxu0
        %5691 = vdwg.mxu0
        %v5692 = vsel %vm5614, %v3683, 0
        %5694 = vmatprep.subr.mxu0 0.0
        %5695 = vmatpush1.msra.mxu0 %v5692
        %5696 = vmatprep.subr.mxu0 0.0
        %5697 = vmatpush1.msra.mxu0 0.0
        %5698 = vmatprep.subr.mxu0 0.0
        %5699 = vmatpush1.msra.mxu0 0.0
        %5700 = vmatprep.subr.mxu0 0.0
        %5701 = vmatpush1.msra.mxu0 0.0
        %5702 = vmatprep.subr.mxu0 0.0
        %5703 = vmatpush1.msra.mxu0 0.0
        %5704 = vmatprep.subr.mxu0 0.0
        %5705 = vmatpush1.msra.mxu0 0.0
        %5706 = vmatprep.subr.mxu0 0.0
        %5707 = vmatpush1.msra.mxu0 0.0
        %5708 = vmatprep.subr.mxu0 0.0
        %5709 = vmatpush1.msra.mxu0 0.0
        %5710 = vmatprep.subr.mxu0 0.0
        %5711 = vmatpush1.msra.mxu0 0.0
        %5712 = vmatprep.subr.mxu0 0.0
        %5713 = vmatpush1.msra.mxu0 0.0
        %5714 = vmatprep.subr.mxu0 0.0
        %5715 = vmatpush1.msra.mxu0 0.0
        %5716 = vmatprep.subr.mxu0 0.0
        %5717 = vmatpush1.msra.mxu0 0.0
        %5718 = vmatprep.subr.mxu0 0.0
        %5719 = vmatpush1.msra.mxu0 0.0
        %5720 = vmatprep.subr.mxu0 0.0
        %5721 = vmatpush1.msra.mxu0 0.0
        %5722 = vmatprep.subr.mxu0 0.0
        %5723 = vmatpush1.msra.mxu0 0.0
        %5724 = vmatprep.subr.mxu0 0.0
        %5725 = vmatpush1.msra.mxu0 0.0
        %5726 = vmatprep.subr.mxu0 0.0
        %5727 = vmatpush1.msra.mxu0 0.0
        %5728 = vmatprep.subr.mxu0 0.0
        %5729 = vmatpush1.msra.mxu0 0.0
        %5730 = vmatprep.subr.mxu0 0.0
        %5731 = vmatpush1.msra.mxu0 0.0
        %5732 = vmatprep.subr.mxu0 0.0
        %5733 = vmatpush1.msra.mxu0 0.0
        %5734 = vmatprep.subr.mxu0 0.0
        %5735 = vmatpush1.msra.mxu0 0.0
        %5736 = vmatprep.subr.mxu0 0.0
        %5737 = vmatpush1.msra.mxu0 0.0
        %5738 = vmatprep.subr.mxu0 0.0
        %5739 = vmatpush1.msra.mxu0 0.0
        %5740 = vmatprep.subr.mxu0 0.0
        %5741 = vmatpush1.msra.mxu0 0.0
        %5742 = vmatprep.subr.mxu0 0.0
        %5743 = vmatpush1.msra.mxu0 0.0
        %5744 = vmatprep.subr.mxu0 0.0
        %5745 = vmatpush1.msra.mxu0 0.0
        %5746 = vmatprep.subr.mxu0 0.0
        %5747 = vmatpush1.msra.mxu0 0.0
        %5748 = vmatprep.subr.mxu0 0.0
        %5749 = vmatpush1.msra.mxu0 0.0
        %5750 = vmatprep.subr.mxu0 0.0
        %5751 = vmatpush1.msra.mxu0 0.0
        %5752 = vmatprep.subr.mxu0 0.0
        %5753 = vmatpush1.msra.mxu0 0.0
        %5754 = vmatprep.subr.mxu0 0.0
        %5755 = vmatpush1.msra.mxu0 0.0
        %5756 = vmatprep.subr.mxu0 0.0
        %5757 = vmatpush1.msra.mxu0 0.0
        %5758 = vmatprep.mubr.f32.mxu0 0.0
        %5759 = vmatmul.mubr.f32.gmra.mrb[0].mxu0 %v5609
        %v5760 = vpop.f32.mrb[0].mxu0
        %v5761 = vadd.f32 0.0, %v5760
        %v5762 = vpop.f32.mrb[0].mxu0
        %5763 = vmatprep.mubr.f32.mxu0 0.0
        %5764 = vmatmul.mubr.f32.gmra.mrb[0].mxu0 %v5612
        %v5765 = vpop.f32.mrb[0].mxu0
        %v5766 = vadd.f32 0.0, %v5765
        %v5767 = vpop.f32.mrb[0].mxu0
        %5768 = vdwg.mxu0
        %v5769 = vsel %vm5614, %v3678, 0
        %5771 = vmatprep.subr.mxu0 0.0
        %5772 = vmatpush1.msra.mxu0 %v5769
        %5773 = vmatprep.subr.mxu0 0.0
        %5774 = vmatpush1.msra.mxu0 0.0
        %5775 = vmatprep.subr.mxu0 0.0
        %5776 = vmatpush1.msra.mxu0 0.0
        %5777 = vmatprep.subr.mxu0 0.0
        %5778 = vmatpush1.msra.mxu0 0.0
        %5779 = vmatprep.subr.mxu0 0.0
        %5780 = vmatpush1.msra.mxu0 0.0
        %5781 = vmatprep.subr.mxu0 0.0
        %5782 = vmatpush1.msra.mxu0 0.0
        %5783 = vmatprep.subr.mxu0 0.0
        %5784 = vmatpush1.msra.mxu0 0.0
        %5785 = vmatprep.subr.mxu0 0.0
        %5786 = vmatpush1.msra.mxu0 0.0
        %5787 = vmatprep.subr.mxu0 0.0
        %5788 = vmatpush1.msra.mxu0 0.0
        %5789 = vmatprep.subr.mxu0 0.0
        %5790 = vmatpush1.msra.mxu0 0.0
        %5791 = vmatprep.subr.mxu0 0.0
        %5792 = vmatpush1.msra.mxu0 0.0
        %5793 = vmatprep.subr.mxu0 0.0
        %5794 = vmatpush1.msra.mxu0 0.0
        %5795 = vmatprep.subr.mxu0 0.0
        %5796 = vmatpush1.msra.mxu0 0.0
        %5797 = vmatprep.subr.mxu0 0.0
        %5798 = vmatpush1.msra.mxu0 0.0
        %5799 = vmatprep.subr.mxu0 0.0
        %5800 = vmatpush1.msra.mxu0 0.0
        %5801 = vmatprep.subr.mxu0 0.0
        %5802 = vmatpush1.msra.mxu0 0.0
        %5803 = vmatprep.subr.mxu0 0.0
        %5804 = vmatpush1.msra.mxu0 0.0
        %5805 = vmatprep.subr.mxu0 0.0
        %5806 = vmatpush1.msra.mxu0 0.0
        %5807 = vmatprep.subr.mxu0 0.0
        %5808 = vmatpush1.msra.mxu0 0.0
        %5809 = vmatprep.subr.mxu0 0.0
        %5810 = vmatpush1.msra.mxu0 0.0
        %5811 = vmatprep.subr.mxu0 0.0
        %5812 = vmatpush1.msra.mxu0 0.0
        %5813 = vmatprep.subr.mxu0 0.0
        %5814 = vmatpush1.msra.mxu0 0.0
        %5815 = vmatprep.subr.mxu0 0.0
        %5816 = vmatpush1.msra.mxu0 0.0
        %5817 = vmatprep.subr.mxu0 0.0
        %5818 = vmatpush1.msra.mxu0 0.0
        %5819 = vmatprep.subr.mxu0 0.0
        %5820 = vmatpush1.msra.mxu0 0.0
        %5821 = vmatprep.subr.mxu0 0.0
        %5822 = vmatpush1.msra.mxu0 0.0
        %5823 = vmatprep.subr.mxu0 0.0
        %5824 = vmatpush1.msra.mxu0 0.0
        %5825 = vmatprep.subr.mxu0 0.0
        %5826 = vmatpush1.msra.mxu0 0.0
        %5827 = vmatprep.subr.mxu0 0.0
        %5828 = vmatpush1.msra.mxu0 0.0
        %5829 = vmatprep.subr.mxu0 0.0
        %5830 = vmatpush1.msra.mxu0 0.0
        %5831 = vmatprep.subr.mxu0 0.0
        %5832 = vmatpush1.msra.mxu0 0.0
        %5833 = vmatprep.subr.mxu0 0.0
        %5834 = vmatpush1.msra.mxu0 0.0
        %5835 = vmatprep.mubr.f32.mxu0 0.0
        %5836 = vmatmul.mubr.f32.gmra.mrb[0].mxu0 %v5609
        %v5837 = vpop.f32.mrb[0].mxu0
        %v5838 = vadd.f32 0.0, %v5837
        %v5839 = vpop.f32.mrb[0].mxu0
        %5840 = vmatprep.mubr.f32.mxu0 0.0
        %5841 = vmatmul.mubr.f32.gmra.mrb[0].mxu0 %v5612
        %v5842 = vpop.f32.mrb[0].mxu0
        %v5843 = vadd.f32 0.0, %v5842
        %v5844 = vpop.f32.mrb[0].mxu0
        %5845 = vdwg.mxu0
        %v5846 = vsel %vm5614, %v3684, 0
        %5848 = vmatprep.subr.mxu0 0.0
        %5849 = vmatpush1.msra.mxu0 %v5846
        %5850 = vmatprep.subr.mxu0 0.0
        %5851 = vmatpush1.msra.mxu0 0.0
        %5852 = vmatprep.subr.mxu0 0.0
        %5853 = vmatpush1.msra.mxu0 0.0
        %5854 = vmatprep.subr.mxu0 0.0
        %5855 = vmatpush1.msra.mxu0 0.0
        %5856 = vmatprep.subr.mxu0 0.0
        %5857 = vmatpush1.msra.mxu0 0.0
        %5858 = vmatprep.subr.mxu0 0.0
        %5859 = vmatpush1.msra.mxu0 0.0
        %5860 = vmatprep.subr.mxu0 0.0
        %5861 = vmatpush1.msra.mxu0 0.0
        %5862 = vmatprep.subr.mxu0 0.0
        %5863 = vmatpush1.msra.mxu0 0.0
        %5864 = vmatprep.subr.mxu0 0.0
        %5865 = vmatpush1.msra.mxu0 0.0
        %5866 = vmatprep.subr.mxu0 0.0
        %5867 = vmatpush1.msra.mxu0 0.0
        %5868 = vmatprep.subr.mxu0 0.0
        %5869 = vmatpush1.msra.mxu0 0.0
        %5870 = vmatprep.subr.mxu0 0.0
        %5871 = vmatpush1.msra.mxu0 0.0
        %5872 = vmatprep.subr.mxu0 0.0
        %5873 = vmatpush1.msra.mxu0 0.0
        %5874 = vmatprep.subr.mxu0 0.0
        %5875 = vmatpush1.msra.mxu0 0.0
        %5876 = vmatprep.subr.mxu0 0.0
        %5877 = vmatpush1.msra.mxu0 0.0
        %5878 = vmatprep.subr.mxu0 0.0
        %5879 = vmatpush1.msra.mxu0 0.0
        %5880 = vmatprep.subr.mxu0 0.0
        %5881 = vmatpush1.msra.mxu0 0.0
        %5882 = vmatprep.subr.mxu0 0.0
        %5883 = vmatpush1.msra.mxu0 0.0
        %5884 = vmatprep.subr.mxu0 0.0
        %5885 = vmatpush1.msra.mxu0 0.0
        %5886 = vmatprep.subr.mxu0 0.0
        %5887 = vmatpush1.msra.mxu0 0.0
        %5888 = vmatprep.subr.mxu0 0.0
        %5889 = vmatpush1.msra.mxu0 0.0
        %5890 = vmatprep.subr.mxu0 0.0
        %5891 = vmatpush1.msra.mxu0 0.0
        %5892 = vmatprep.subr.mxu0 0.0
        %5893 = vmatpush1.msra.mxu0 0.0
        %5894 = vmatprep.subr.mxu0 0.0
        %5895 = vmatpush1.msra.mxu0 0.0
        %5896 = vmatprep.subr.mxu0 0.0
        %5897 = vmatpush1.msra.mxu0 0.0
        %5898 = vmatprep.subr.mxu0 0.0
        %5899 = vmatpush1.msra.mxu0 0.0
        %5900 = vmatprep.subr.mxu0 0.0
        %5901 = vmatpush1.msra.mxu0 0.0
        %5902 = vmatprep.subr.mxu0 0.0
        %5903 = vmatpush1.msra.mxu0 0.0
        %5904 = vmatprep.subr.mxu0 0.0
        %5905 = vmatpush1.msra.mxu0 0.0
        %5906 = vmatprep.subr.mxu0 0.0
        %5907 = vmatpush1.msra.mxu0 0.0
        %5908 = vmatprep.subr.mxu0 0.0
        %5909 = vmatpush1.msra.mxu0 0.0
        %5910 = vmatprep.subr.mxu0 0.0
        %5911 = vmatpush1.msra.mxu0 0.0
        %5912 = vmatprep.mubr.f32.mxu0 0.0
        %5913 = vmatmul.mubr.f32.gmra.mrb[0].mxu0 %v5609
        %v5914 = vpop.f32.mrb[0].mxu0
        %v5915 = vadd.f32 0.0, %v5914
        %v5916 = vpop.f32.mrb[0].mxu0
        %5917 = vmatprep.mubr.f32.mxu0 0.0
        %5918 = vmatmul.mubr.f32.gmra.mrb[0].mxu0 %v5612
        %v5919 = vpop.f32.mrb[0].mxu0
        %v5920 = vadd.f32 0.0, %v5919
        %v5921 = vpop.f32.mrb[0].mxu0
        %5922 = vdwg.mxu0
        %v5924 = vsel %vm5614, %v5372, 0
        %5926 = vmatprep.subr.mxu0 0.0
        %5927 = vmatpush1.msra.mxu0 %v5924
        %5928 = vmatprep.subr.mxu0 0.0
        %5929 = vmatpush1.msra.mxu0 0.0
        %5930 = vmatprep.subr.mxu0 0.0
        %5931 = vmatpush1.msra.mxu0 0.0
        %5932 = vmatprep.subr.mxu0 0.0
        %5933 = vmatpush1.msra.mxu0 0.0
        %5934 = vmatprep.subr.mxu0 0.0
        %5935 = vmatpush1.msra.mxu0 0.0
        %5936 = vmatprep.subr.mxu0 0.0
        %5937 = vmatpush1.msra.mxu0 0.0
        %5938 = vmatprep.subr.mxu0 0.0
        %5939 = vmatpush1.msra.mxu0 0.0
        %5940 = vmatprep.subr.mxu0 0.0
        %5941 = vmatpush1.msra.mxu0 0.0
        %5942 = vmatprep.subr.mxu0 0.0
        %5943 = vmatpush1.msra.mxu0 0.0
        %5944 = vmatprep.subr.mxu0 0.0
        %5945 = vmatpush1.msra.mxu0 0.0
        %5946 = vmatprep.subr.mxu0 0.0
        %5947 = vmatpush1.msra.mxu0 0.0
        %5948 = vmatprep.subr.mxu0 0.0
        %5949 = vmatpush1.msra.mxu0 0.0
        %5950 = vmatprep.subr.mxu0 0.0
        %5951 = vmatpush1.msra.mxu0 0.0
        %5952 = vmatprep.subr.mxu0 0.0
        %5953 = vmatpush1.msra.mxu0 0.0
        %5954 = vmatprep.subr.mxu0 0.0
        %5955 = vmatpush1.msra.mxu0 0.0
        %5956 = vmatprep.subr.mxu0 0.0
        %5957 = vmatpush1.msra.mxu0 0.0
        %5958 = vmatprep.subr.mxu0 0.0
        %5959 = vmatpush1.msra.mxu0 0.0
        %5960 = vmatprep.subr.mxu0 0.0
        %5961 = vmatpush1.msra.mxu0 0.0
        %5962 = vmatprep.subr.mxu0 0.0
        %5963 = vmatpush1.msra.mxu0 0.0
        %5964 = vmatprep.subr.mxu0 0.0
        %5965 = vmatpush1.msra.mxu0 0.0
        %5966 = vmatprep.subr.mxu0 0.0
        %5967 = vmatpush1.msra.mxu0 0.0
        %5968 = vmatprep.subr.mxu0 0.0
        %5969 = vmatpush1.msra.mxu0 0.0
        %5970 = vmatprep.subr.mxu0 0.0
        %5971 = vmatpush1.msra.mxu0 0.0
        %5972 = vmatprep.subr.mxu0 0.0
        %5973 = vmatpush1.msra.mxu0 0.0
        %5974 = vmatprep.subr.mxu0 0.0
        %5975 = vmatpush1.msra.mxu0 0.0
        %5976 = vmatprep.subr.mxu0 0.0
        %5977 = vmatpush1.msra.mxu0 0.0
        %5978 = vmatprep.subr.mxu0 0.0
        %5979 = vmatpush1.msra.mxu0 0.0
        %5980 = vmatprep.subr.mxu0 0.0
        %5981 = vmatpush1.msra.mxu0 0.0
        %5982 = vmatprep.subr.mxu0 0.0
        %5983 = vmatpush1.msra.mxu0 0.0
        %5984 = vmatprep.subr.mxu0 0.0
        %5985 = vmatpush1.msra.mxu0 0.0
        %5986 = vmatprep.subr.mxu0 0.0
        %5987 = vmatpush1.msra.mxu0 0.0
        %5988 = vmatprep.subr.mxu0 0.0
        %5989 = vmatpush1.msra.mxu0 0.0
        %5990 = vmatprep.mubr.f32.mxu0 0.0
        %5991 = vmatmul.mubr.f32.gmra.mrb[0].mxu0 %v5609
        %v5992 = vpop.f32.mrb[0].mxu0
        %v5993 = vadd.f32 0.0, %v5992
        %v5994 = vpop.f32.mrb[0].mxu0
        %5995 = vmatprep.mubr.f32.mxu0 0.0
        %5996 = vmatmul.mubr.f32.gmra.mrb[0].mxu0 %v5612
        %v5997 = vpop.f32.mrb[0].mxu0
        %v5998 = vadd.f32 0.0, %v5997
        %v5999 = vpop.f32.mrb[0].mxu0
        %6000 = vdwg.mxu0
        %v6002 = vsel %vm5614, %v5450, 0
        %6004 = vmatprep.subr.mxu0 0.0
        %6005 = vmatpush1.msra.mxu0 %v6002
        %6006 = vmatprep.subr.mxu0 0.0
        %6007 = vmatpush1.msra.mxu0 0.0
        %6008 = vmatprep.subr.mxu0 0.0
        %6009 = vmatpush1.msra.mxu0 0.0
        %6010 = vmatprep.subr.mxu0 0.0
        %6011 = vmatpush1.msra.mxu0 0.0
        %6012 = vmatprep.subr.mxu0 0.0
        %6013 = vmatpush1.msra.mxu0 0.0
        %6014 = vmatprep.subr.mxu0 0.0
        %6015 = vmatpush1.msra.mxu0 0.0
        %6016 = vmatprep.subr.mxu0 0.0
        %6017 = vmatpush1.msra.mxu0 0.0
        %6018 = vmatprep.subr.mxu0 0.0
        %6019 = vmatpush1.msra.mxu0 0.0
        %6020 = vmatprep.subr.mxu0 0.0
        %6021 = vmatpush1.msra.mxu0 0.0
        %6022 = vmatprep.subr.mxu0 0.0
        %6023 = vmatpush1.msra.mxu0 0.0
        %6024 = vmatprep.subr.mxu0 0.0
        %6025 = vmatpush1.msra.mxu0 0.0
        %6026 = vmatprep.subr.mxu0 0.0
        %6027 = vmatpush1.msra.mxu0 0.0
        %6028 = vmatprep.subr.mxu0 0.0
        %6029 = vmatpush1.msra.mxu0 0.0
        %6030 = vmatprep.subr.mxu0 0.0
        %6031 = vmatpush1.msra.mxu0 0.0
        %6032 = vmatprep.subr.mxu0 0.0
        %6033 = vmatpush1.msra.mxu0 0.0
        %6034 = vmatprep.subr.mxu0 0.0
        %6035 = vmatpush1.msra.mxu0 0.0
        %6036 = vmatprep.subr.mxu0 0.0
        %6037 = vmatpush1.msra.mxu0 0.0
        %6038 = vmatprep.subr.mxu0 0.0
        %6039 = vmatpush1.msra.mxu0 0.0
        %6040 = vmatprep.subr.mxu0 0.0
        %6041 = vmatpush1.msra.mxu0 0.0
        %6042 = vmatprep.subr.mxu0 0.0
        %6043 = vmatpush1.msra.mxu0 0.0
        %6044 = vmatprep.subr.mxu0 0.0
        %6045 = vmatpush1.msra.mxu0 0.0
        %6046 = vmatprep.subr.mxu0 0.0
        %6047 = vmatpush1.msra.mxu0 0.0
        %6048 = vmatprep.subr.mxu0 0.0
        %6049 = vmatpush1.msra.mxu0 0.0
        %6050 = vmatprep.subr.mxu0 0.0
        %6051 = vmatpush1.msra.mxu0 0.0
        %6052 = vmatprep.subr.mxu0 0.0
        %6053 = vmatpush1.msra.mxu0 0.0
        %6054 = vmatprep.subr.mxu0 0.0
        %6055 = vmatpush1.msra.mxu0 0.0
        %6056 = vmatprep.subr.mxu0 0.0
        %6057 = vmatpush1.msra.mxu0 0.0
        %6058 = vmatprep.subr.mxu0 0.0
        %6059 = vmatpush1.msra.mxu0 0.0
        %6060 = vmatprep.subr.mxu0 0.0
        %6061 = vmatpush1.msra.mxu0 0.0
        %6062 = vmatprep.subr.mxu0 0.0
        %6063 = vmatpush1.msra.mxu0 0.0
        %6064 = vmatprep.subr.mxu0 0.0
        %6065 = vmatpush1.msra.mxu0 0.0
        %6066 = vmatprep.subr.mxu0 0.0
        %6067 = vmatpush1.msra.mxu0 0.0
        %6068 = vmatprep.mubr.f32.mxu0 0.0
        %6069 = vmatmul.mubr.f32.gmra.mrb[0].mxu0 %v5609
        %v6070 = vpop.f32.mrb[0].mxu0
        %v6071 = vadd.f32 0.0, %v6070
        %v6072 = vpop.f32.mrb[0].mxu0
        %6073 = vmatprep.mubr.f32.mxu0 0.0
        %6074 = vmatmul.mubr.f32.gmra.mrb[0].mxu0 %v5612
        %v6075 = vpop.f32.mrb[0].mxu0
        %v6076 = vadd.f32 0.0, %v6075
        %v6077 = vpop.f32.mrb[0].mxu0
        %6078 = vdwg.mxu0
        %v6080 = vsel %vm5614, %v5528, 0
        %6082 = vmatprep.subr.mxu0 0.0
        %6083 = vmatpush1.msra.mxu0 %v6080
        %6084 = vmatprep.subr.mxu0 0.0
        %6085 = vmatpush1.msra.mxu0 0.0
        %6086 = vmatprep.subr.mxu0 0.0
        %6087 = vmatpush1.msra.mxu0 0.0
        %6088 = vmatprep.subr.mxu0 0.0
        %6089 = vmatpush1.msra.mxu0 0.0
        %6090 = vmatprep.subr.mxu0 0.0
        %6091 = vmatpush1.msra.mxu0 0.0
        %6092 = vmatprep.subr.mxu0 0.0
        %6093 = vmatpush1.msra.mxu0 0.0
        %6094 = vmatprep.subr.mxu0 0.0
        %6095 = vmatpush1.msra.mxu0 0.0
        %6096 = vmatprep.subr.mxu0 0.0
        %6097 = vmatpush1.msra.mxu0 0.0
        %6098 = vmatprep.subr.mxu0 0.0
        %6099 = vmatpush1.msra.mxu0 0.0
        %6100 = vmatprep.subr.mxu0 0.0
        %6101 = vmatpush1.msra.mxu0 0.0
        %6102 = vmatprep.subr.mxu0 0.0
        %6103 = vmatpush1.msra.mxu0 0.0
        %6104 = vmatprep.subr.mxu0 0.0
        %6105 = vmatpush1.msra.mxu0 0.0
        %6106 = vmatprep.subr.mxu0 0.0
        %6107 = vmatpush1.msra.mxu0 0.0
        %6108 = vmatprep.subr.mxu0 0.0
        %6109 = vmatpush1.msra.mxu0 0.0
        %6110 = vmatprep.subr.mxu0 0.0
        %6111 = vmatpush1.msra.mxu0 0.0
        %6112 = vmatprep.subr.mxu0 0.0
        %6113 = vmatpush1.msra.mxu0 0.0
        %6114 = vmatprep.subr.mxu0 0.0
        %6115 = vmatpush1.msra.mxu0 0.0
        %6116 = vmatprep.subr.mxu0 0.0
        %6117 = vmatpush1.msra.mxu0 0.0
        %6118 = vmatprep.subr.mxu0 0.0
        %6119 = vmatpush1.msra.mxu0 0.0
        %6120 = vmatprep.subr.mxu0 0.0
        %6121 = vmatpush1.msra.mxu0 0.0
        %6122 = vmatprep.subr.mxu0 0.0
        %6123 = vmatpush1.msra.mxu0 0.0
        %6124 = vmatprep.subr.mxu0 0.0
        %6125 = vmatpush1.msra.mxu0 0.0
        %6126 = vmatprep.subr.mxu0 0.0
        %6127 = vmatpush1.msra.mxu0 0.0
        %6128 = vmatprep.subr.mxu0 0.0
        %6129 = vmatpush1.msra.mxu0 0.0
        %6130 = vmatprep.subr.mxu0 0.0
        %6131 = vmatpush1.msra.mxu0 0.0
        %6132 = vmatprep.subr.mxu0 0.0
        %6133 = vmatpush1.msra.mxu0 0.0
        %6134 = vmatprep.subr.mxu0 0.0
        %6135 = vmatpush1.msra.mxu0 0.0
        %6136 = vmatprep.subr.mxu0 0.0
        %6137 = vmatpush1.msra.mxu0 0.0
        %6138 = vmatprep.subr.mxu0 0.0
        %6139 = vmatpush1.msra.mxu0 0.0
        %6140 = vmatprep.subr.mxu0 0.0
        %6141 = vmatpush1.msra.mxu0 0.0
        %6142 = vmatprep.subr.mxu0 0.0
        %6143 = vmatpush1.msra.mxu0 0.0
        %6144 = vmatprep.subr.mxu0 0.0
        %6145 = vmatpush1.msra.mxu0 0.0
        %6146 = vmatprep.mubr.f32.mxu0 0.0
        %6147 = vmatmul.mubr.f32.gmra.mrb[0].mxu0 %v5609
        %v6148 = vpop.f32.mrb[0].mxu0
        %v6149 = vadd.f32 0.0, %v6148
        %v6150 = vpop.f32.mrb[0].mxu0
        %6151 = vmatprep.mubr.f32.mxu0 0.0
        %6152 = vmatmul.mubr.f32.gmra.mrb[0].mxu0 %v5612
        %v6153 = vpop.f32.mrb[0].mxu0
        %v6154 = vadd.f32 0.0, %v6153
        %v6155 = vpop.f32.mrb[0].mxu0
        %6156 = vdwg.mxu0
        %v6158 = vsel %vm5614, %v5606, 0
        %6160 = vmatprep.subr.mxu0 0.0
        %6161 = vmatpush1.msra.mxu0 %v6158
        %6162 = vmatprep.subr.mxu0 0.0
        %6163 = vmatpush1.msra.mxu0 0.0
        %6164 = vmatprep.subr.mxu0 0.0
        %6165 = vmatpush1.msra.mxu0 0.0
        %6166 = vmatprep.subr.mxu0 0.0
        %6167 = vmatpush1.msra.mxu0 0.0
        %6168 = vmatprep.subr.mxu0 0.0
        %6169 = vmatpush1.msra.mxu0 0.0
        %6170 = vmatprep.subr.mxu0 0.0
        %6171 = vmatpush1.msra.mxu0 0.0
        %6172 = vmatprep.subr.mxu0 0.0
        %6173 = vmatpush1.msra.mxu0 0.0
        %6174 = vmatprep.subr.mxu0 0.0
        %6175 = vmatpush1.msra.mxu0 0.0
        %6176 = vmatprep.subr.mxu0 0.0
        %6177 = vmatpush1.msra.mxu0 0.0
        %6178 = vmatprep.subr.mxu0 0.0
        %6179 = vmatpush1.msra.mxu0 0.0
        %6180 = vmatprep.subr.mxu0 0.0
        %6181 = vmatpush1.msra.mxu0 0.0
        %6182 = vmatprep.subr.mxu0 0.0
        %6183 = vmatpush1.msra.mxu0 0.0
        %6184 = vmatprep.subr.mxu0 0.0
        %6185 = vmatpush1.msra.mxu0 0.0
        %6186 = vmatprep.subr.mxu0 0.0
        %6187 = vmatpush1.msra.mxu0 0.0
        %6188 = vmatprep.subr.mxu0 0.0
        %6189 = vmatpush1.msra.mxu0 0.0
        %6190 = vmatprep.subr.mxu0 0.0
        %6191 = vmatpush1.msra.mxu0 0.0
        %6192 = vmatprep.subr.mxu0 0.0
        %6193 = vmatpush1.msra.mxu0 0.0
        %6194 = vmatprep.subr.mxu0 0.0
        %6195 = vmatpush1.msra.mxu0 0.0
        %6196 = vmatprep.subr.mxu0 0.0
        %6197 = vmatpush1.msra.mxu0 0.0
        %6198 = vmatprep.subr.mxu0 0.0
        %6199 = vmatpush1.msra.mxu0 0.0
        %6200 = vmatprep.subr.mxu0 0.0
        %6201 = vmatpush1.msra.mxu0 0.0
        %6202 = vmatprep.subr.mxu0 0.0
        %6203 = vmatpush1.msra.mxu0 0.0
        %6204 = vmatprep.subr.mxu0 0.0
        %6205 = vmatpush1.msra.mxu0 0.0
        %6206 = vmatprep.subr.mxu0 0.0
        %6207 = vmatpush1.msra.mxu0 0.0
        %6208 = vmatprep.subr.mxu0 0.0
        %6209 = vmatpush1.msra.mxu0 0.0
        %6210 = vmatprep.subr.mxu0 0.0
        %6211 = vmatpush1.msra.mxu0 0.0
        %6212 = vmatprep.subr.mxu0 0.0
        %6213 = vmatpush1.msra.mxu0 0.0
        %6214 = vmatprep.subr.mxu0 0.0
        %6215 = vmatpush1.msra.mxu0 0.0
        %6216 = vmatprep.subr.mxu0 0.0
        %6217 = vmatpush1.msra.mxu0 0.0
        %6218 = vmatprep.subr.mxu0 0.0
        %6219 = vmatpush1.msra.mxu0 0.0
        %6220 = vmatprep.subr.mxu0 0.0
        %6221 = vmatpush1.msra.mxu0 0.0
        %6222 = vmatprep.subr.mxu0 0.0
        %6223 = vmatpush1.msra.mxu0 0.0
        %6224 = vmatprep.mubr.f32.mxu0 0.0
        %6225 = vmatmul.mubr.f32.gmra.mrb[0].mxu0 %v5609
        %v6226 = vpop.f32.mrb[0].mxu0
        %v6227 = vadd.f32 0.0, %v6226
        %v6228 = vpop.f32.mrb[0].mxu0
        %6229 = vmatprep.mubr.f32.mxu0 0.0
        %6230 = vmatmul.mubr.f32.gmra.mrb[0].mxu0 %v5612
        %v6231 = vpop.f32.mrb[0].mxu0
        %v6232 = vadd.f32 0.0, %v6231
        %v6233 = vpop.f32.mrb[0].mxu0
        %6234 = vdwg.mxu0
        %v6235 = vsub.f32 0.0, %v5684
        %v6236 = vsub.f32 0.0, %v5689
        %v6237 = vmul.f32 %v6235, 1.442695
        %v6238 = vpow.pop %v6237
        %v6239 = vmul.f32 %v6236, 1.442695
        %v6240 = vpow.pop %v6239
        %v6241 = vadd.f32 %v6238, 1.0
        %v6242 = vadd.f32 %v6240, 1.0
        %v6243 = vrcp.pop %v6241
        %v6244 = vrcp.pop %v6242
        %v6245 = vmul.f32 %v2449, %v6243
        %v6246 = vmul.f32 %v2452, %v6244
        %6247 = vst [vmem:[%s548] sm:$0xff] %v6245
        %6248 = vst [vmem:[%s548 + $0x8] sm:$0xff] %v6246
        %6249 = vst [vmem:[%s555] sm:$0xff] %v5993
        %6250 = vst [vmem:[%s555 + $0x8] sm:$0xff] %v5998
        %v6251 = vmul.f32 %v5684, 0.8
        %v6252 = vmul.f32 %v5689, 0.8
        %v6253 = vmul.f32 %v5761, 0.2
        %v6254 = vmul.f32 %v5766, 0.2
        %v6255 = vadd.f32 %v6251, %v6253
        %v6256 = vadd.f32 %v6252, %v6254
        %v6257 = vmul.f32 %v5993, 0.8
        %v6258 = vmul.f32 %v5998, 0.8
        %v6259 = vmul.f32 %v6071, 0.2
        %v6260 = vmul.f32 %v6076, 0.2
        %v6261 = vadd.f32 %v6257, %v6259
        %v6262 = vadd.f32 %v6258, %v6260
        %v6263 = vsub.f32 0.0, %v6255
        %v6264 = vsub.f32 0.0, %v6256
        %v6265 = vmul.f32 %v6263, 1.442695
        %v6266 = vpow.pop %v6265
        %v6267 = vmul.f32 %v6264, 1.442695
        %v6268 = vpow.pop %v6267
        %v6269 = vadd.f32 %v6266, 1.0
        %v6270 = vadd.f32 %v6268, 1.0
        %v6271 = vrcp.pop %v6269
        %v6272 = vrcp.pop %v6270
        %v6273 = vmul.f32 %v2457, %v6271
        %v6274 = vmul.f32 %v2460, %v6272
        %s6275 = scalar_lea.vmem %s548, 16 [#allocation2]
        %6276 = vst [vmem:[%s6275] sm:$0xff] %v6273
        %6277 = vst [vmem:[%s6275 + $0x8] sm:$0xff] %v6274
        %s6278 = scalar_lea.vmem %s555, 16 [#allocation4]
        %6279 = vst [vmem:[%s6278] sm:$0xff] %v6261
        %6280 = vst [vmem:[%s6278 + $0x8] sm:$0xff] %v6262
        %v6281 = vmul.f32 %v5684, 0.6
        %v6282 = vmul.f32 %v5689, 0.6
        %v6283 = vmul.f32 %v5761, 0.4
        %v6284 = vmul.f32 %v5766, 0.4
        %v6285 = vadd.f32 %v6281, %v6283
        %v6286 = vadd.f32 %v6282, %v6284
        %v6287 = vmul.f32 %v5993, 0.6
        %v6288 = vmul.f32 %v5998, 0.6
        %v6289 = vmul.f32 %v6071, 0.4
        %v6290 = vmul.f32 %v6076, 0.4
        %v6291 = vadd.f32 %v6287, %v6289
        %v6292 = vadd.f32 %v6288, %v6290
        %v6293 = vsub.f32 0.0, %v6285
        %v6294 = vsub.f32 0.0, %v6286
        %v6295 = vmul.f32 %v6293, 1.442695
        %v6296 = vpow.pop %v6295
        %v6297 = vmul.f32 %v6294, 1.442695
        %v6298 = vpow.pop %v6297
        %v6299 = vadd.f32 %v6296, 1.0
        %v6300 = vadd.f32 %v6298, 1.0
        %v6301 = vrcp.pop %v6299
        %v6302 = vrcp.pop %v6300
        %v6303 = vmul.f32 %v2465, %v6301
        %v6304 = vmul.f32 %v2468, %v6302
        %s6305 = scalar_lea.vmem %s548, 32 [#allocation2]
        %6306 = vst [vmem:[%s6305] sm:$0xff] %v6303
        %6307 = vst [vmem:[%s6305 + $0x8] sm:$0xff] %v6304
        %s6308 = scalar_lea.vmem %s555, 32 [#allocation4]
        %6309 = vst [vmem:[%s6308] sm:$0xff] %v6291
        %6310 = vst [vmem:[%s6308 + $0x8] sm:$0xff] %v6292
        %v6311 = vmul.f32 %v5684, 0.4
        %v6312 = vmul.f32 %v5689, 0.4
        %v6313 = vmul.f32 %v5761, 0.6
        %v6314 = vmul.f32 %v5766, 0.6
        %v6315 = vadd.f32 %v6311, %v6313
        %v6316 = vadd.f32 %v6312, %v6314
        %v6317 = vmul.f32 %v5993, 0.4
        %v6318 = vmul.f32 %v5998, 0.4
        %v6319 = vmul.f32 %v6071, 0.6
        %v6320 = vmul.f32 %v6076, 0.6
        %v6321 = vadd.f32 %v6317, %v6319
        %v6322 = vadd.f32 %v6318, %v6320
        %v6323 = vsub.f32 0.0, %v6315
        %v6324 = vsub.f32 0.0, %v6316
        %v6325 = vmul.f32 %v6323, 1.442695
        %v6326 = vpow.pop %v6325
        %v6327 = vmul.f32 %v6324, 1.442695
        %v6328 = vpow.pop %v6327
        %v6329 = vadd.f32 %v6326, 1.0
        %v6330 = vadd.f32 %v6328, 1.0
        %v6331 = vrcp.pop %v6329
        %v6332 = vrcp.pop %v6330
        %v6333 = vmul.f32 %v2473, %v6331
        %v6334 = vmul.f32 %v2476, %v6332
        %s6335 = scalar_lea.vmem %s548, 48 [#allocation2]
        %6336 = vst [vmem:[%s6335] sm:$0xff] %v6333
        %6337 = vst [vmem:[%s6335 + $0x8] sm:$0xff] %v6334
        %s6338 = scalar_lea.vmem %s555, 48 [#allocation4]
        %6339 = vst [vmem:[%s6338] sm:$0xff] %v6321
        %6340 = vst [vmem:[%s6338 + $0x8] sm:$0xff] %v6322
        %v6341 = vmul.f32 %v5684, 0.2
        %v6342 = vmul.f32 %v5689, 0.2
        %v6343 = vmul.f32 %v5761, 0.8
        %v6344 = vmul.f32 %v5766, 0.8
        %v6345 = vadd.f32 %v6341, %v6343
        %v6346 = vadd.f32 %v6342, %v6344
        %v6347 = vmul.f32 %v5993, 0.2
        %v6348 = vmul.f32 %v5998, 0.2
        %v6349 = vmul.f32 %v6071, 0.8
        %v6350 = vmul.f32 %v6076, 0.8
        %v6351 = vadd.f32 %v6347, %v6349
        %v6352 = vadd.f32 %v6348, %v6350
        %v6353 = vsub.f32 0.0, %v6345
        %v6354 = vsub.f32 0.0, %v6346
        %v6355 = vmul.f32 %v6353, 1.442695
        %v6356 = vpow.pop %v6355
        %v6357 = vmul.f32 %v6354, 1.442695
        %v6358 = vpow.pop %v6357
        %v6359 = vadd.f32 %v6356, 1.0
        %v6360 = vadd.f32 %v6358, 1.0
        %v6361 = vrcp.pop %v6359
        %v6362 = vrcp.pop %v6360
        %v6363 = vmul.f32 %v2481, %v6361
        %v6364 = vmul.f32 %v2484, %v6362
        %s6365 = scalar_lea.vmem %s548, 64 [#allocation2]
        %6366 = vst [vmem:[%s6365] sm:$0xff] %v6363
        %6367 = vst [vmem:[%s6365 + $0x8] sm:$0xff] %v6364
        %s6368 = scalar_lea.vmem %s555, 64 [#allocation4]
        %6369 = vst [vmem:[%s6368] sm:$0xff] %v6351
        %6370 = vst [vmem:[%s6368 + $0x8] sm:$0xff] %v6352
        %v6371 = vsub.f32 0.0, %v5761
        %v6372 = vsub.f32 0.0, %v5766
        %v6373 = vmul.f32 %v6371, 1.442695
        %v6374 = vpow.pop %v6373
        %v6375 = vmul.f32 %v6372, 1.442695
        %v6376 = vpow.pop %v6375
        %v6377 = vadd.f32 %v6374, 1.0
        %v6378 = vadd.f32 %v6376, 1.0
        %v6379 = vrcp.pop %v6377
        %v6380 = vrcp.pop %v6378
        %v6381 = vmul.f32 %v2489, %v6379
        %v6382 = vmul.f32 %v2492, %v6380
        %s6383 = scalar_lea.vmem %s548, 80 [#allocation2]
        %6384 = vst [vmem:[%s6383] sm:$0xff] %v6381
        %6385 = vst [vmem:[%s6383 + $0x8] sm:$0xff] %v6382
        %s6386 = scalar_lea.vmem %s555, 80 [#allocation4]
        %6387 = vst [vmem:[%s6386] sm:$0xff] %v6071
        %6388 = vst [vmem:[%s6386 + $0x8] sm:$0xff] %v6076
        %v6389 = vmul.f32 %v5838, 0.2
        %v6390 = vmul.f32 %v5843, 0.2
        %v6391 = vadd.f32 %v6343, %v6389
        %v6392 = vadd.f32 %v6344, %v6390
        %v6393 = vmul.f32 %v6149, 0.2
        %v6394 = vmul.f32 %v6154, 0.2
        %v6395 = vadd.f32 %v6349, %v6393
        %v6396 = vadd.f32 %v6350, %v6394
        %v6397 = vsub.f32 0.0, %v6391
        %v6398 = vsub.f32 0.0, %v6392
        %v6399 = vmul.f32 %v6397, 1.442695
        %v6400 = vpow.pop %v6399
        %v6401 = vmul.f32 %v6398, 1.442695
        %v6402 = vpow.pop %v6401
        %v6403 = vadd.f32 %v6400, 1.0
        %v6404 = vadd.f32 %v6402, 1.0
        %v6405 = vrcp.pop %v6403
        %v6406 = vrcp.pop %v6404
        %v6407 = vmul.f32 %v2497, %v6405
        %v6408 = vmul.f32 %v2500, %v6406
        %s6409 = scalar_lea.vmem %s548, 96 [#allocation2]
        %6410 = vst [vmem:[%s6409] sm:$0xff] %v6407
        %6411 = vst [vmem:[%s6409 + $0x8] sm:$0xff] %v6408
        %s6412 = scalar_lea.vmem %s555, 96 [#allocation4]
        %6413 = vst [vmem:[%s6412] sm:$0xff] %v6395
        %6414 = vst [vmem:[%s6412 + $0x8] sm:$0xff] %v6396
        %v6415 = vmul.f32 %v5838, 0.4
        %v6416 = vmul.f32 %v5843, 0.4
        %v6417 = vadd.f32 %v6313, %v6415
        %v6418 = vadd.f32 %v6314, %v6416
        %v6419 = vmul.f32 %v6149, 0.4
        %v6420 = vmul.f32 %v6154, 0.4
        %v6421 = vadd.f32 %v6319, %v6419
        %v6422 = vadd.f32 %v6320, %v6420
        %v6423 = vsub.f32 0.0, %v6417
        %v6424 = vsub.f32 0.0, %v6418
        %v6425 = vmul.f32 %v6423, 1.442695
        %v6426 = vpow.pop %v6425
        %v6427 = vmul.f32 %v6424, 1.442695
        %v6428 = vpow.pop %v6427
        %v6429 = vadd.f32 %v6426, 1.0
        %v6430 = vadd.f32 %v6428, 1.0
        %v6431 = vrcp.pop %v6429
        %v6432 = vrcp.pop %v6430
        %v6433 = vmul.f32 %v2505, %v6431
        %v6434 = vmul.f32 %v2508, %v6432
        %s6435 = scalar_lea.vmem %s548, 112 [#allocation2]
        %6436 = vst [vmem:[%s6435] sm:$0xff] %v6433
        %6437 = vst [vmem:[%s6435 + $0x8] sm:$0xff] %v6434
        %s6438 = scalar_lea.vmem %s555, 112 [#allocation4]
        %6439 = vst [vmem:[%s6438] sm:$0xff] %v6421
        %6440 = vst [vmem:[%s6438 + $0x8] sm:$0xff] %v6422
        %v6441 = vmul.f32 %v5838, 0.6
        %v6442 = vmul.f32 %v5843, 0.6
        %v6443 = vadd.f32 %v6283, %v6441
        %v6444 = vadd.f32 %v6284, %v6442
        %v6445 = vmul.f32 %v6149, 0.6
        %v6446 = vmul.f32 %v6154, 0.6
        %v6447 = vadd.f32 %v6289, %v6445
        %v6448 = vadd.f32 %v6290, %v6446
        %v6449 = vsub.f32 0.0, %v6443
        %v6450 = vsub.f32 0.0, %v6444
        %v6451 = vmul.f32 %v6449, 1.442695
        %v6452 = vpow.pop %v6451
        %v6453 = vmul.f32 %v6450, 1.442695
        %v6454 = vpow.pop %v6453
        %v6455 = vadd.f32 %v6452, 1.0
        %v6456 = vadd.f32 %v6454, 1.0
        %v6457 = vrcp.pop %v6455
        %v6458 = vrcp.pop %v6456
        %v6459 = vmul.f32 %v2513, %v6457
        %v6460 = vmul.f32 %v2516, %v6458
        %s6461 = scalar_lea.vmem %s548, 128 [#allocation2]
        %6462 = vst [vmem:[%s6461] sm:$0xff] %v6459
        %6463 = vst [vmem:[%s6461 + $0x8] sm:$0xff] %v6460
        %s6464 = scalar_lea.vmem %s555, 128 [#allocation4]
        %6465 = vst [vmem:[%s6464] sm:$0xff] %v6447
        %6466 = vst [vmem:[%s6464 + $0x8] sm:$0xff] %v6448
        %v6467 = vmul.f32 %v5838, 0.8
        %v6468 = vmul.f32 %v5843, 0.8
        %v6469 = vadd.f32 %v6253, %v6467
        %v6470 = vadd.f32 %v6254, %v6468
        %v6471 = vmul.f32 %v6149, 0.8
        %v6472 = vmul.f32 %v6154, 0.8
        %v6473 = vadd.f32 %v6259, %v6471
        %v6474 = vadd.f32 %v6260, %v6472
        %v6475 = vsub.f32 0.0, %v6469
        %v6476 = vsub.f32 0.0, %v6470
        %v6477 = vmul.f32 %v6475, 1.442695
        %v6478 = vpow.pop %v6477
        %v6479 = vmul.f32 %v6476, 1.442695
        %v6480 = vpow.pop %v6479
        %v6481 = vadd.f32 %v6478, 1.0
        %v6482 = vadd.f32 %v6480, 1.0
        %v6483 = vrcp.pop %v6481
        %v6484 = vrcp.pop %v6482
        %v6485 = vmul.f32 %v2521, %v6483
        %v6486 = vmul.f32 %v2524, %v6484
        %s6487 = scalar_lea.vmem %s548, 144 [#allocation2]
        %6488 = vst [vmem:[%s6487] sm:$0xff] %v6485
        %6489 = vst [vmem:[%s6487 + $0x8] sm:$0xff] %v6486
        %s6490 = scalar_lea.vmem %s555, 144 [#allocation4]
        %6491 = vst [vmem:[%s6490] sm:$0xff] %v6473
        %6492 = vst [vmem:[%s6490 + $0x8] sm:$0xff] %v6474
        %v6493 = vsub.f32 0.0, %v5838
        %v6494 = vsub.f32 0.0, %v5843
        %v6495 = vmul.f32 %v6493, 1.442695
        %v6496 = vpow.pop %v6495
        %v6497 = vmul.f32 %v6494, 1.442695
        %v6498 = vpow.pop %v6497
        %v6499 = vadd.f32 %v6496, 1.0
        %v6500 = vadd.f32 %v6498, 1.0
        %v6501 = vrcp.pop %v6499
        %v6502 = vrcp.pop %v6500
        %v6503 = vmul.f32 %v2529, %v6501
        %v6504 = vmul.f32 %v2532, %v6502
        %s6505 = scalar_lea.vmem %s548, 160 [#allocation2]
        %6506 = vst [vmem:[%s6505] sm:$0xff] %v6503
        %6507 = vst [vmem:[%s6505 + $0x8] sm:$0xff] %v6504
        %s6508 = scalar_lea.vmem %s555, 160 [#allocation4]
        %6509 = vst [vmem:[%s6508] sm:$0xff] %v6149
        %6510 = vst [vmem:[%s6508 + $0x8] sm:$0xff] %v6154
        %v6511 = vmul.f32 %v5915, 0.2
        %v6512 = vmul.f32 %v5920, 0.2
        %v6513 = vadd.f32 %v6467, %v6511
        %v6514 = vadd.f32 %v6468, %v6512
        %v6515 = vmul.f32 %v6227, 0.2
        %v6516 = vmul.f32 %v6232, 0.2
        %v6517 = vadd.f32 %v6471, %v6515
        %v6518 = vadd.f32 %v6472, %v6516
        %v6519 = vsub.f32 0.0, %v6513
        %v6520 = vsub.f32 0.0, %v6514
        %v6521 = vmul.f32 %v6519, 1.442695
        %v6522 = vpow.pop %v6521
        %v6523 = vmul.f32 %v6520, 1.442695
        %v6524 = vpow.pop %v6523
        %v6525 = vadd.f32 %v6522, 1.0
        %v6526 = vadd.f32 %v6524, 1.0
        %v6527 = vrcp.pop %v6525
        %v6528 = vrcp.pop %v6526
        %v6529 = vmul.f32 %v2537, %v6527
        %v6530 = vmul.f32 %v2540, %v6528
        %s6531 = scalar_lea.vmem %s548, 176 [#allocation2]
        %6532 = vst [vmem:[%s6531] sm:$0xff] %v6529
        %6533 = vst [vmem:[%s6531 + $0x8] sm:$0xff] %v6530
        %s6534 = scalar_lea.vmem %s555, 176 [#allocation4]
        %6535 = vst [vmem:[%s6534] sm:$0xff] %v6517
        %6536 = vst [vmem:[%s6534 + $0x8] sm:$0xff] %v6518
        %v6537 = vmul.f32 %v5915, 0.4
        %v6538 = vmul.f32 %v5920, 0.4
        %v6539 = vadd.f32 %v6441, %v6537
        %v6540 = vadd.f32 %v6442, %v6538
        %v6541 = vmul.f32 %v6227, 0.4
        %v6542 = vmul.f32 %v6232, 0.4
        %v6543 = vadd.f32 %v6445, %v6541
        %v6544 = vadd.f32 %v6446, %v6542
        %v6545 = vsub.f32 0.0, %v6539
        %v6546 = vsub.f32 0.0, %v6540
        %v6547 = vmul.f32 %v6545, 1.442695
        %v6548 = vpow.pop %v6547
        %v6549 = vmul.f32 %v6546, 1.442695
        %v6550 = vpow.pop %v6549
        %v6551 = vadd.f32 %v6548, 1.0
        %v6552 = vadd.f32 %v6550, 1.0
        %v6553 = vrcp.pop %v6551
        %v6554 = vrcp.pop %v6552
        %v6555 = vmul.f32 %v2545, %v6553
        %v6556 = vmul.f32 %v2548, %v6554
        %s6557 = scalar_lea.vmem %s548, 192 [#allocation2]
        %6558 = vst [vmem:[%s6557] sm:$0xff] %v6555
        %6559 = vst [vmem:[%s6557 + $0x8] sm:$0xff] %v6556
        %s6560 = scalar_lea.vmem %s555, 192 [#allocation4]
        %6561 = vst [vmem:[%s6560] sm:$0xff] %v6543
        %6562 = vst [vmem:[%s6560 + $0x8] sm:$0xff] %v6544
        %v6563 = vmul.f32 %v5915, 0.6
        %v6564 = vmul.f32 %v5920, 0.6
        %v6565 = vadd.f32 %v6415, %v6563
        %v6566 = vadd.f32 %v6416, %v6564
        %v6567 = vmul.f32 %v6227, 0.6
        %v6568 = vmul.f32 %v6232, 0.6
        %v6569 = vadd.f32 %v6419, %v6567
        %v6570 = vadd.f32 %v6420, %v6568
        %v6571 = vsub.f32 0.0, %v6565
        %v6572 = vsub.f32 0.0, %v6566
        %v6573 = vmul.f32 %v6571, 1.442695
        %v6574 = vpow.pop %v6573
        %v6575 = vmul.f32 %v6572, 1.442695
        %v6576 = vpow.pop %v6575
        %v6577 = vadd.f32 %v6574, 1.0
        %v6578 = vadd.f32 %v6576, 1.0
        %v6579 = vrcp.pop %v6577
        %v6580 = vrcp.pop %v6578
        %v6581 = vmul.f32 %v2553, %v6579
        %v6582 = vmul.f32 %v2556, %v6580
        %s6583 = scalar_lea.vmem %s548, 208 [#allocation2]
        %6584 = vst [vmem:[%s6583] sm:$0xff] %v6581
        %6585 = vst [vmem:[%s6583 + $0x8] sm:$0xff] %v6582
        %s6586 = scalar_lea.vmem %s555, 208 [#allocation4]
        %6587 = vst [vmem:[%s6586] sm:$0xff] %v6569
        %6588 = vst [vmem:[%s6586 + $0x8] sm:$0xff] %v6570
        %v6589 = vmul.f32 %v5915, 0.8
        %v6590 = vmul.f32 %v5920, 0.8
        %v6591 = vadd.f32 %v6389, %v6589
        %v6592 = vadd.f32 %v6390, %v6590
        %v6593 = vmul.f32 %v6227, 0.8
        %v6594 = vmul.f32 %v6232, 0.8
        %v6595 = vadd.f32 %v6393, %v6593
        %v6596 = vadd.f32 %v6394, %v6594
        %v6597 = vsub.f32 0.0, %v6591
        %v6598 = vsub.f32 0.0, %v6592
        %v6599 = vmul.f32 %v6597, 1.442695
        %v6600 = vpow.pop %v6599
        %v6601 = vmul.f32 %v6598, 1.442695
        %v6602 = vpow.pop %v6601
        %v6603 = vadd.f32 %v6600, 1.0
        %v6604 = vadd.f32 %v6602, 1.0
        %v6605 = vrcp.pop %v6603
        %v6606 = vrcp.pop %v6604
        %v6607 = vmul.f32 %v2561, %v6605
        %v6608 = vmul.f32 %v2564, %v6606
        %s6609 = scalar_lea.vmem %s548, 224 [#allocation2]
        %6610 = vst [vmem:[%s6609] sm:$0xff] %v6607
        %6611 = vst [vmem:[%s6609 + $0x8] sm:$0xff] %v6608
        %s6612 = scalar_lea.vmem %s555, 224 [#allocation4]
        %6613 = vst [vmem:[%s6612] sm:$0xff] %v6595
        %6614 = vst [vmem:[%s6612 + $0x8] sm:$0xff] %v6596
        %v6615 = vmul.f32 %v5838, 0.0
        %v6616 = vmul.f32 %v5843, 0.0
        %v6617 = vadd.f32 %v6615, %v5915
        %v6618 = vadd.f32 %v6616, %v5920
        %v6619 = vmul.f32 %v6149, 0.0
        %v6620 = vmul.f32 %v6154, 0.0
        %v6621 = vadd.f32 %v6619, %v6227
        %v6622 = vadd.f32 %v6620, %v6232
        %v6623 = vsub.f32 0.0, %v6617
        %v6624 = vsub.f32 0.0, %v6618
        %v6625 = vmul.f32 %v6623, 1.442695
        %v6626 = vpow.pop %v6625
        %v6627 = vmul.f32 %v6624, 1.442695
        %v6628 = vpow.pop %v6627
        %v6629 = vadd.f32 %v6626, 1.0
        %v6630 = vadd.f32 %v6628, 1.0
        %v6631 = vrcp.pop %v6629
        %v6632 = vrcp.pop %v6630
        %v6633 = vmul.f32 %v2569, %v6631
        %v6634 = vmul.f32 %v2572, %v6632
        %s6635 = scalar_lea.vmem %s548, 240 [#allocation2]
        %6636 = vst [vmem:[%s6635] sm:$0xff] %v6633
        %6637 = vst [vmem:[%s6635 + $0x8] sm:$0xff] %v6634
        %s6638 = scalar_lea.vmem %s555, 240 [#allocation4]
        %6639 = vst [vmem:[%s6638] sm:$0xff] %v6621
        %6640 = vst [vmem:[%s6638 + $0x8] sm:$0xff] %v6622
        %s6641 = sand.u32 %s372, 1
        %s6642 = scalar_lea.sflag [#allocation3], %s6641
        %s6643 = sand.u32 %s372, 1
        %s6644 = smul.addr %s6643, 256
        %s6645 = scalar_lea.vmem [#allocation2], %s6644
        %s6646 = sand.u32 %s398, 1
        %s6647 = scalar_lea.sflag [#allocation5], %s6646
        %s6648 = sand.u32 %s398, 1
        %s6649 = smul.addr %s6648, 256
        %s6650 = scalar_lea.vmem [#allocation4], %s6649
        // Predicated region
        $region81: #{tpu_custom_call.1} parent=79 // pred_check
          %p6651 = pneg %p382
        $region82: #{tpu_custom_call.1} parent=79 // pred_check_branch
          %6653 = sbr.rel (%p6651) target = $region84
        $region83: #{tpu_custom_call.1} parent=79 // pred_region
          %s6655 = ssub.s32 4096, 4096
          %6656 = vsyncadd %s6642, %s6655
          %s6657 = smul.addr %s34, 32
          %s6658 = smul.addr %s6657, 128
          %s6659 = scalar_lea.hbm %s15, %s6658
          %s6660 = sshll.u32 %s6645, 4
          %s6661 = int_to_ptr.vmem [resolvable:$true] %s6660
          %6666 = dma.vmem_to_hbm [thread:$0]  %s6661, 4096, %s6659, %s6642, 128, 128, 8
        $region84: #{tpu_custom_call.1} parent=79 // pred_fallthru
          _
        // Predicated region
        $region85: #{tpu_custom_call.1} parent=79 // pred_check
          %p6667 = pneg %p408
        $region86: #{tpu_custom_call.1} parent=79 // pred_check_branch
          %6669 = sbr.rel (%p6667) target = $region88
        $region87: #{tpu_custom_call.1} parent=79 // pred_region
          %s6671 = ssub.s32 4096, 4096
          %6672 = vsyncadd %s6647, %s6671
          %s6673 = smul.addr %s34, 32
          %s6674 = smul.addr %s6673, 128
          %s6675 = scalar_lea.hbm %s16, %s6674
          %s6676 = sshll.u32 %s6650, 4
          %s6677 = int_to_ptr.vmem [resolvable:$true] %s6676
          %6682 = dma.vmem_to_hbm [thread:$0]  %s6677, 4096, %s6675, %s6647, 128, 128, 8
        $region88: #{tpu_custom_call.1} parent=79 // pred_fallthru
          _
      $region80: #{tpu_custom_call.1} parent=5 // pred_fallthru
        _
      %p6683 = scmp.le.s32.totalorder 2, %s29
      // Predicated region
      $region89: #{tpu_custom_call.1} parent=5 // pred_check
        %p6684 = pneg %p6683
      $region90: #{tpu_custom_call.1} parent=5 // pred_check_branch
        %6686 = sbr.rel (%p6684) target = $region92
      $region91: #{tpu_custom_call.1} parent=5 // pred_region
        %s6687 = ssub.s32 %s29, 2
        // Predicated region
        $region93: #{tpu_custom_call.1} parent=91 // pred_check
          %p6688 = pneg %p388
        $region94: #{tpu_custom_call.1} parent=91 // pred_check_branch
          %6690 = sbr.rel (%p6688) target = $region96
        $region95: #{tpu_custom_call.1} parent=91 // pred_region
          %s6691 = sand.u32 %s373, 1
          %s6692 = scalar_lea.sflag [#allocation3], %s6691
          %s6693 = sand.u32 %s373, 1
          %s6694 = smul.addr %s6693, 256
          %s6695 = scalar_lea.vmem [#allocation2], %s6694
          %6696 = dma.done %s6692, 4096
        $region96: #{tpu_custom_call.1} parent=91 // pred_fallthru
          _
        // Predicated region
        $region97: #{tpu_custom_call.1} parent=91 // pred_check
          %p6697 = pneg %p414
        $region98: #{tpu_custom_call.1} parent=91 // pred_check_branch
          %6699 = sbr.rel (%p6697) target = $region100
        $region99: #{tpu_custom_call.1} parent=91 // pred_region
          %s6700 = sand.u32 %s399, 1
          %s6701 = scalar_lea.sflag [#allocation5], %s6700
          %s6702 = sand.u32 %s399, 1
          %s6703 = smul.addr %s6702, 256
          %s6704 = scalar_lea.vmem [#allocation4], %s6703
          %6705 = dma.done %s6701, 4096
        $region100: #{tpu_custom_call.1} parent=91 // pred_fallthru
          _
      $region92: #{tpu_custom_call.1} parent=5 // pred_fallthru
        _
    $region6: #{tpu_custom_call.1} parent=1 // loop_footer
      %s33 = sadd.s32 1, %s29
    $region7: #{tpu_custom_call.1} parent=1 // loop_footer_branch
      %28 = sbr.rel target = $region3
    $region8: #{tpu_custom_call.1} parent=1 // loop_exit
      _
    %6706 = vsyncpa [#allocation3], 1
    %s6707 = scalar_lea.sflag [#allocation3], 1
    %6708 = vsyncpa %s6707, 1
    %6709 = vsyncpa [#allocation5], 1
    %s6710 = scalar_lea.sflag [#allocation5], 1
    %6711 = vsyncpa %s6710, 1

</llo_original>
